<compile_context>
chip_gen: v5e
topology: v5e:2x2
jax: 0.10.0
libtpu: 0.0.40
codegen_flags: <defaults>
</compile_context>

<pallas_src>
import functools

import jax
import jax.numpy as jnp
from jax.experimental import pallas as pl
from jax.experimental.pallas import tpu as pltpu

LEAKY_SLOPE = 0.01
BN_EPS = 1e-5
COUT_PAD = 128       # output channels padded to one lane block -> unmasked full-lane stores
MAX_TILE_M = 512     # rows per grid step (whole problem at these sizes -> 1 step per call)


def _round_up(x, m):
    return ((x + m - 1) // m) * m


# ---------------------------------------------------------------------------
# Pallas kernels (one fused ConvBlock per pallas_call)
# ---------------------------------------------------------------------------
def _convblock_kernel(a_ref, scale_ref, shift_ref, w_ref, b_ref, o_ref):
    """Fused eval-BN + LeakyReLU + tap-packed conv matmul.

    a_ref     : (tile_m, Kpad) bf16  raw-activation patches, lanes = (tap, cin)-packed
    scale/shift: (1, Kpad) f32       eval-BN affine, replicated per tap (0 in K padding)
    w_ref     : (Kpad, 128) bf16     tap-packed conv weights (zero rows in K padding)
    b_ref     : (1, 128) f32         conv bias
    o_ref     : (tile_m, 128)        output rows (bf16)
    """
    z = a_ref[...].astype(jnp.float32) * scale_ref[...] + shift_ref[...]
    z = jnp.where(z > 0.0, z, LEAKY_SLOPE * z)
    acc = jnp.dot(z.astype(jnp.bfloat16), w_ref[...],
                  preferred_element_type=jnp.float32)
    o_ref[...] = (acc + b_ref[...]).astype(o_ref.dtype)


def _convblock_skip_kernel(a_ref, scale_ref, shift_ref, w_ref, b_ref, skip_ref, o_ref):
    """Same as above with a fused residual add (C04+=C01, C14+=C11, ...)."""
    z = a_ref[...].astype(jnp.float32) * scale_ref[...] + shift_ref[...]
    z = jnp.where(z > 0.0, z, LEAKY_SLOPE * z)
    acc = jnp.dot(z.astype(jnp.bfloat16), w_ref[...],
                  preferred_element_type=jnp.float32)
    o_ref[...] = (acc + b_ref[...] + skip_ref[...].astype(jnp.float32)).astype(o_ref.dtype)


def _convblock_tail_kernel(a_ref, scale_ref, shift_ref, w_ref, b_ref,
                           w2_ref, b2_ref, o_ref):
    """C62 ConvBlock fused with the trailing plain 1x1 conv C63 (f32 output)."""
    z = a_ref[...].astype(jnp.float32) * scale_ref[...] + shift_ref[...]
    z = jnp.where(z > 0.0, z, LEAKY_SLOPE * z)
    c62 = jnp.dot(z.astype(jnp.bfloat16), w_ref[...],
                  preferred_element_type=jnp.float32) + b_ref[...]
    out = jnp.dot(c62.astype(jnp.bfloat16), w2_ref[...],
                  preferred_element_type=jnp.float32) + b2_ref[...]
    o_ref[...] = out.astype(o_ref.dtype)


# ---------------------------------------------------------------------------
# Wrapper-side patch packing (cheap XLA glue: spatial rearrangement only,
# all pointwise math stays inside the kernel)
# ---------------------------------------------------------------------------
def _im2col(x, cin, k, stride, upsample):
    """Tap-packed patches over valid output positions only (native stride/upsample)."""
    x = x[..., :cin]                                        # drop channel-padding lanes
    if upsample:
        x = jnp.repeat(jnp.repeat(x, 2, axis=1), 2, axis=2)  # nearest, scale 2
        stride = 1
    pad = (k - 1) // 2
    xp = jnp.pad(x, ((0, 0), (pad, pad), (pad, pad), (0, 0)), mode="reflect")
    B, Hp, Wp, _ = xp.shape
    Ho = (Hp - k) // stride + 1
    Wo = (Wp - k) // stride + 1
    taps = [xp[:, i:i + (Ho - 1) * stride + 1:stride,
                  j:j + (Wo - 1) * stride + 1:stride, :]
            for i in range(k) for j in range(k)]
    patches = jnp.stack(taps, axis=3)                       # (B, Ho, Wo, k*k, cin)
    return patches.reshape(B * Ho * Wo, k * k * cin), (B, Ho, Wo)


def conv_block(x, p, *, k, stride, upsample, cin, skip=None, tail=None):
    """ConvBlock.forward: BN -> LeakyReLU -> [nearest x2] -> ReflectionPad -> Conv,
    optionally fused with a residual add (`skip`) and/or trailing 1x1 conv (`tail`).

    x / skip: (B, H, W, >=cin) activations (channels may be lane-padded to 128, bf16).
    Returns (B, Ho, Wo, 128): bf16 normally, f32 when `tail` (final 1x1 conv) is fused.
    """
    assert skip is None or tail is None
    a, (B, Ho, Wo) = _im2col(x, cin, k, stride, upsample)
    a = a.astype(jnp.bfloat16)
    M, K = a.shape
    Kpad = p["w"].shape[0]
    tile_m = min(_round_up(M, 8), MAX_TILE_M)
    Mpad = _round_up(M, tile_m)
    a = jnp.pad(a, ((0, Mpad - M), (0, Kpad - K)))

    row_spec = pl.BlockSpec((tile_m, COUT_PAD), lambda m: (m, 0))
    in_specs = [
        pl.BlockSpec((tile_m, Kpad), lambda m: (m, 0)),      # packed patches
        pl.BlockSpec((1, Kpad), lambda m: (0, 0)),           # bn scale (K-packed)
        pl.BlockSpec((1, Kpad), lambda m: (0, 0)),           # bn shift (K-packed)
        pl.BlockSpec((Kpad, COUT_PAD), lambda m: (0, 0)),    # tap-packed weights
        pl.BlockSpec((1, COUT_PAD), lambda m: (0, 0)),       # bias
    ]
    args = [a, p["scale"], p["shift"], p["w"], p["b"]]
    out_dtype = jnp.bfloat16

    if tail is not None:
        kernel = _convblock_tail_kernel
        in_specs += [pl.BlockSpec((COUT_PAD, COUT_PAD), lambda m: (0, 0)),
                     pl.BlockSpec((1, COUT_PAD), lambda m: (0, 0))]
        args += [tail["w"], tail["b"]]
        out_dtype = jnp.float32
    elif skip is not None:
        kernel = _convblock_skip_kernel
        s = skip.reshape(-1, skip.shape[-1]).astype(jnp.bfloat16)
        s = jnp.pad(s, ((0, Mpad - s.shape[0]), (0, COUT_PAD - s.shape[1])))
        in_specs.append(row_spec)
        args.append(s)
    else:
        kernel = _convblock_kernel

    out = pl.pallas_call(
        kernel,
        out_shape=jax.ShapeDtypeStruct((Mpad, COUT_PAD), out_dtype),
        grid=(Mpad // tile_m,),
        in_specs=in_specs,
        out_specs=row_spec,
        compiler_params=pltpu.CompilerParams(dimension_semantics=("parallel",)),
    )(*args)
    return out[:M].reshape(B, Ho, Wo, COUT_PAD)


# ---------------------------------------------------------------------------
# Glue: bilinear interpolation (plain JAX gathers; identity at these shapes)
# ---------------------------------------------------------------------------
def bilinear_resize(x, oh, ow):
    """torch F.interpolate(mode='bilinear', align_corners=False) on NHWC."""
    B, H, W, C = x.shape
    xf = x.astype(jnp.float32)
    sy = H / oh
    sx = W / ow
    ys = jnp.maximum((jnp.arange(oh, dtype=jnp.float32) + 0.5) * sy - 0.5, 0.0)
    xs = jnp.maximum((jnp.arange(ow, dtype=jnp.float32) + 0.5) * sx - 0.5, 0.0)
    y0 = jnp.clip(jnp.floor(ys).astype(jnp.int32), 0, H - 1)
    x0 = jnp.clip(jnp.floor(xs).astype(jnp.int32), 0, W - 1)
    y1 = jnp.minimum(y0 + 1, H - 1)
    x1 = jnp.minimum(x0 + 1, W - 1)
    wy = (ys - y0.astype(jnp.float32))[None, :, None, None]
    wx = (xs - x0.astype(jnp.float32))[None, None, :, None]
    r0 = xf[:, y0, :, :]
    r1 = xf[:, y1, :, :]
    c00, c01 = r0[:, :, x0, :], r0[:, :, x1, :]
    c10, c11 = r1[:, :, x0, :], r1[:, :, x1, :]
    top = c00 * (1.0 - wx) + c01 * wx
    bot = c10 * (1.0 - wx) + c11 * wx
    return (top * (1.0 - wy) + bot * wy).astype(x.dtype)


# ---------------------------------------------------------------------------
# Parameter construction (mirrors PyTorch __init__ shapes; tap-packed layout:
# packed row index = (i*k + j)*cin + c  <->  torch weight[co, c, i, j])
# ---------------------------------------------------------------------------
def _make_convblock_params(key, cin, cout, k):
    K = k * k * cin
    Kpad = _round_up(K, 128)
    std = (2.0 / K) ** 0.5                     # kaiming_normal_ (fan_in = cin*k*k)
    w = jax.random.normal(key, (K, cout), dtype=jnp.float32) * std
    w_p = jnp.zeros((Kpad, COUT_PAD), jnp.float32).at[:K, :cout].set(w)
    b_p = jnp.zeros((1, COUT_PAD), jnp.float32).at[0, :cout].set(0.1)
    # eval-mode BN with default params/stats: y = x / sqrt(1 + eps); per-channel
    # scale/shift replicated over the k*k taps (would be jnp.tile for real stats).
    scale = jnp.zeros((1, Kpad), jnp.float32).at[0, :K].set(1.0 / (1.0 + BN_EPS) ** 0.5)
    shift = jnp.zeros((1, Kpad), jnp.float32)
    return {"w": w_p.astype(jnp.bfloat16), "b": b_p, "scale": scale, "shift": shift}


def make_encoder_params(key, in_planes, out_planes, n):
    cfgs = [
        ("A01", in_planes, n, 9, 1, False),
        ("C01", n, 2 * n, 3, 2, False),
        ("C02", 2 * n, 2 * n, 3, 1, False),
        ("C03", 2 * n, 2 * n, 3, 1, False),
        ("C04", 2 * n, 2 * n, 3, 1, False),
        ("C11", 2 * n, 4 * n, 3, 2, False),
        ("C12", 4 * n, 4 * n, 3, 1, False),
        ("C13", 4 * n, 4 * n, 3, 1, False),
        ("C14", 4 * n, 4 * n, 3, 1, False),
        ("C21", 4 * n, 8 * n, 3, 2, False),
        ("C22", 8 * n, 8 * n, 3, 1, False),
        ("C23", 8 * n, 8 * n, 3, 1, False),
        ("C24", 8 * n, 8 * n, 3, 1, False),
        ("C31", 8 * n, 4 * n, 3, 1, True),
        ("C32", 4 * n, 4 * n, 3, 1, False),
        ("C33", 4 * n, 4 * n, 3, 1, False),
        ("C34", 4 * n, 4 * n, 3, 1, False),
        ("C41", 4 * n, 2 * n, 3, 1, True),
        ("C42", 2 * n, 2 * n, 3, 1, False),
        ("C43", 2 * n, 2 * n, 3, 1, False),
        ("C44", 2 * n, 2 * n, 3, 1, False),
        ("C51", 2 * n, n, 3, 1, True),
        ("C52", n, n, 3, 1, False),
        ("C53", n, n, 3, 1, False),
        ("C54", n, n, 3, 1, False),
        ("C61", n, n, 3, 1, False),
        ("C62", n, n, 3, 1, False),
    ]
    params, meta = {}, {}
    for idx, (name, cin, cout, k, stride, up) in enumerate(cfgs):
        params[name] = _make_convblock_params(jax.random.fold_in(key, idx), cin, cout, k)
        meta[name] = (k, stride, up, cin)
    # C63: plain 1x1 conv (no BN / activation), fused into C62's kernel.
    std = (2.0 / n) ** 0.5
    w63 = jax.random.normal(jax.random.fold_in(key, 999), (n, out_planes),
                            dtype=jnp.float32) * std
    params["C63"] = {
        "w": jnp.zeros((COUT_PAD, COUT_PAD), jnp.float32)
                .at[:n, :out_planes].set(w63).astype(jnp.bfloat16),
        "b": jnp.zeros((1, COUT_PAD), jnp.float32).at[0, :out_planes].set(0.1),
    }
    return params, meta


# ---------------------------------------------------------------------------
# encoder.forward   (meta / npix_out / out_planes are static, bound via partial)
# ---------------------------------------------------------------------------
def encoder_forward(x_nchw, params, *, meta, npix_out, out_planes):
    x = jnp.transpose(x_nchw, (0, 2, 3, 1))            # NCHW -> NHWC (real channels)

    def blk(name, inp, skip=None, tail=None):
        k, s, up, cin = meta[name]
        return conv_block(inp, params[name], k=k, stride=s, upsample=up, cin=cin,
                          skip=skip, tail=tail)

    A01 = blk("A01", x)
    C01 = blk("C01", A01)
    C02 = blk("C02", C01)
    C03 = blk("C03", C02)
    C04 = blk("C04", C03, skip=C01)        # Dropout(0.3) identity in eval mode
    C11 = blk("C11", C04)
    C12 = blk("C12", C11)
    C13 = blk("C13", C12)
    C14 = blk("C14", C13, skip=C11)
    C21 = blk("C21", C14)
    C22 = blk("C22", C21)
    C23 = blk("C23", C22)
    C24 = blk("C24", C23, skip=C21)
    C31 = blk("C31", C24)
    C32 = blk("C32", C31)
    C33 = blk("C33", C32)
    C34 = blk("C34", C33, skip=C31)
    C41 = blk("C41", C34)
    C42 = blk("C42", C41)
    C43 = blk("C43", C42)
    C44 = blk("C44", C43, skip=C41)
    C51 = blk("C51", C44)
    C52 = blk("C52", C51)
    C53 = blk("C53", C52)
    C54 = blk("C54", C53, skip=C51)
    out = bilinear_resize(C54, npix_out, npix_out)
    out = blk("C61", out)
    out = blk("C62", out, tail=params["C63"])          # C62 ConvBlock + 1x1 conv C63 fused
    out = out[..., :out_planes]                        # drop channel padding (f32)
    return jnp.transpose(out, (0, 3, 1, 2))            # NHWC -> NCHW


# ---------------------------------------------------------------------------
if __name__ == "__main__":
    key = jax.random.PRNGKey(0)
    in_planes, out_planes, npix_out, n = 2, 1, 16, 8
    batch, spatial = 2, 16

    params, meta = make_encoder_params(jax.random.fold_in(key, 1), in_planes,
                                       out_planes, n)
    x = jax.random.normal(jax.random.fold_in(key, 2),
                          (batch, in_planes, spatial, spatial), dtype=jnp.float32)

    fwd = jax.jit(functools.partial(encoder_forward, meta=meta,
                                    npix_out=npix_out, out_planes=out_planes))
    out = fwd(x, params)
    out = jax.block_until_ready(out)

    assert out.shape == (batch, out_planes, npix_out, npix_out), out.shape
    assert bool(jnp.all(jnp.isfinite(out)))
    print("KERNEL_OK")
</pallas_src>

<mosaic_0001>
module attributes {stable_mosaic.version = 11 : i64} {
  func.func @_convblock_kernel(%arg0: i32, %arg1: memref<512x256xbf16, #tpu.memory_space<vmem>>, %arg2: memref<1x256xf32, #tpu.memory_space<vmem>>, %arg3: memref<1x256xf32, #tpu.memory_space<vmem>>, %arg4: memref<256x128xbf16, #tpu.memory_space<vmem>>, %arg5: memref<1x128xf32, #tpu.memory_space<vmem>>, %arg6: memref<512x128xbf16, #tpu.memory_space<vmem>>) attributes {dimension_semantics = [#tpu.dimension_semantics<parallel>], iteration_bounds = array<i64: 1>, scalar_prefetch = 0 : i64, scratch_operands = 0 : i64, tpu.core_type = #tpu.core_type<tc>, window_params = [{transform_indices = @transform_0, window_bounds = array<i64: 512, 256>}, {pipeline_mode = #tpu.pipeline_mode<synchronous>, transform_indices = @transform_1, window_bounds = array<i64: 1, 256>}, {pipeline_mode = #tpu.pipeline_mode<synchronous>, transform_indices = @transform_2, window_bounds = array<i64: 1, 256>}, {pipeline_mode = #tpu.pipeline_mode<synchronous>, transform_indices = @transform_3, window_bounds = array<i64: 256, 128>}, {pipeline_mode = #tpu.pipeline_mode<synchronous>, transform_indices = @transform_4, window_bounds = array<i64: 1, 128>}, {transform_indices = @transform_5, window_bounds = array<i64: 512, 128>}]} {
    %c0 = arith.constant 0 : index
    %c0_0 = arith.constant 0 : index
    %0 = vector.load %arg1[%c0, %c0_0] : memref<512x256xbf16, #tpu.memory_space<vmem>>, vector<512x256xbf16>
    %1 = arith.extf %0 : vector<512x256xbf16> to vector<512x256xf32>
    %c0_1 = arith.constant 0 : index
    %c0_2 = arith.constant 0 : index
    %2 = vector.load %arg2[%c0_1, %c0_2] : memref<1x256xf32, #tpu.memory_space<vmem>>, vector<1x256xf32>
    %3 = vector.broadcast %2 : vector<1x256xf32> to vector<512x256xf32>
    %4 = arith.mulf %1, %3 : vector<512x256xf32>
    %c0_3 = arith.constant 0 : index
    %c0_4 = arith.constant 0 : index
    %5 = vector.load %arg3[%c0_3, %c0_4] : memref<1x256xf32, #tpu.memory_space<vmem>>, vector<1x256xf32>
    %6 = vector.broadcast %5 : vector<1x256xf32> to vector<512x256xf32>
    %7 = arith.addf %4, %6 : vector<512x256xf32>
    %cst = arith.constant 0.000000e+00 : f32
    %8 = vector.broadcast %cst : f32 to vector<512x256xf32>
    %9 = arith.cmpf ogt, %7, %8 : vector<512x256xf32>
    %cst_5 = arith.constant 0.00999999977 : f32
    %10 = vector.broadcast %cst_5 : f32 to vector<512x256xf32>
    %11 = arith.mulf %10, %7 : vector<512x256xf32>
    %12 = arith.select %9, %7, %11 : vector<512x256xi1>, vector<512x256xf32>
    %13 = arith.truncf %12 : vector<512x256xf32> to vector<512x256xbf16>
    %c0_6 = arith.constant 0 : index
    %c0_7 = arith.constant 0 : index
    %14 = vector.load %arg4[%c0_6, %c0_7] : memref<256x128xbf16, #tpu.memory_space<vmem>>, vector<256x128xbf16>
    %cst_8 = arith.constant dense<0.000000e+00> : vector<512x128xf32>
    %15 = tpu.matmul %13, %14, %cst_8 {dimension_numbers = #tpu.dot_dimension_numbers<[1], [0], [0], [1], [0, 0, 1, 1], [], []>} : vector<512x256xbf16>, vector<256x128xbf16>, vector<512x128xf32> -> vector<512x128xf32>
    %c0_9 = arith.constant 0 : index
    %c0_10 = arith.constant 0 : index
    %16 = vector.load %arg5[%c0_9, %c0_10] : memref<1x128xf32, #tpu.memory_space<vmem>>, vector<1x128xf32>
    %17 = vector.broadcast %16 : vector<1x128xf32> to vector<512x128xf32>
    %18 = arith.addf %15, %17 : vector<512x128xf32>
    %19 = arith.truncf %18 : vector<512x128xf32> to vector<512x128xbf16>
    %c0_11 = arith.constant 0 : index
    %c0_12 = arith.constant 0 : index
    %20 = vector.load %arg6[%c0_11, %c0_12] : memref<512x128xbf16, #tpu.memory_space<vmem>>, vector<512x128xbf16>
    tpu.vector_store %arg6[%c0_11, %c0_12], %19 {strides = array<i32>} : memref<512x128xbf16, #tpu.memory_space<vmem>>, vector<512x128xbf16>,
    return
  }
  func.func @transform_0(%arg0: i32) -> (i32, i32) {
    %c0_i32 = arith.constant 0 : i32
    %c0_i32_0 = arith.constant 0 : i32
    return %arg0, %c0_i32 : i32, i32
  }
  func.func @transform_1(%arg0: i32) -> (i32, i32) {
    %c0_i32 = arith.constant 0 : i32
    %c0_i32_0 = arith.constant 0 : i32
    %c0_i32_1 = arith.constant 0 : i32
    return %c0_i32, %c0_i32_0 : i32, i32
  }
  func.func @transform_2(%arg0: i32) -> (i32, i32) {
    %c0_i32 = arith.constant 0 : i32
    %c0_i32_0 = arith.constant 0 : i32
    %c0_i32_1 = arith.constant 0 : i32
    return %c0_i32, %c0_i32_0 : i32, i32
  }
  func.func @transform_3(%arg0: i32) -> (i32, i32) {
    %c0_i32 = arith.constant 0 : i32
    %c0_i32_0 = arith.constant 0 : i32
    %c0_i32_1 = arith.constant 0 : i32
    return %c0_i32, %c0_i32_0 : i32, i32
  }
  func.func @transform_4(%arg0: i32) -> (i32, i32) {
    %c0_i32 = arith.constant 0 : i32
    %c0_i32_0 = arith.constant 0 : i32
    %c0_i32_1 = arith.constant 0 : i32
    return %c0_i32, %c0_i32_0 : i32, i32
  }
  func.func @transform_5(%arg0: i32) -> (i32, i32) {
    %c0_i32 = arith.constant 0 : i32
    %c0_i32_0 = arith.constant 0 : i32
    return %arg0, %c0_i32 : i32, i32
  }
}

module attributes {stable_mosaic.version = 11 : i64} {
  func.func @_convblock_kernel(%arg0: i32, %arg1: memref<128x128xbf16, #tpu.memory_space<vmem>>, %arg2: memref<1x128xf32, #tpu.memory_space<vmem>>, %arg3: memref<1x128xf32, #tpu.memory_space<vmem>>, %arg4: memref<128x128xbf16, #tpu.memory_space<vmem>>, %arg5: memref<1x128xf32, #tpu.memory_space<vmem>>, %arg6: memref<128x128xbf16, #tpu.memory_space<vmem>>) attributes {dimension_semantics = [#tpu.dimension_semantics<parallel>], iteration_bounds = array<i64: 1>, scalar_prefetch = 0 : i64, scratch_operands = 0 : i64, tpu.core_type = #tpu.core_type<tc>, window_params = [{transform_indices = @transform_0, window_bounds = array<i64: 128, 128>}, {pipeline_mode = #tpu.pipeline_mode<synchronous>, transform_indices = @transform_1, window_bounds = array<i64: 1, 128>}, {pipeline_mode = #tpu.pipeline_mode<synchronous>, transform_indices = @transform_2, window_bounds = array<i64: 1, 128>}, {pipeline_mode = #tpu.pipeline_mode<synchronous>, transform_indices = @transform_3, window_bounds = array<i64: 128, 128>}, {pipeline_mode = #tpu.pipeline_mode<synchronous>, transform_indices = @transform_4, window_bounds = array<i64: 1, 128>}, {transform_indices = @transform_5, window_bounds = array<i64: 128, 128>}]} {
    %c0 = arith.constant 0 : index
    %c0_0 = arith.constant 0 : index
    %0 = vector.load %arg1[%c0, %c0_0] : memref<128x128xbf16, #tpu.memory_space<vmem>>, vector<128x128xbf16>
    %1 = arith.extf %0 : vector<128x128xbf16> to vector<128x128xf32>
    %c0_1 = arith.constant 0 : index
    %c0_2 = arith.constant 0 : index
    %2 = vector.load %arg2[%c0_1, %c0_2] : memref<1x128xf32, #tpu.memory_space<vmem>>, vector<1x128xf32>
    %3 = vector.broadcast %2 : vector<1x128xf32> to vector<128x128xf32>
    %4 = arith.mulf %1, %3 : vector<128x128xf32>
    %c0_3 = arith.constant 0 : index
    %c0_4 = arith.constant 0 : index
    %5 = vector.load %arg3[%c0_3, %c0_4] : memref<1x128xf32, #tpu.memory_space<vmem>>, vector<1x128xf32>
    %6 = vector.broadcast %5 : vector<1x128xf32> to vector<128x128xf32>
    %7 = arith.addf %4, %6 : vector<128x128xf32>
    %cst = arith.constant 0.000000e+00 : f32
    %8 = vector.broadcast %cst : f32 to vector<128x128xf32>
    %9 = arith.cmpf ogt, %7, %8 : vector<128x128xf32>
    %cst_5 = arith.constant 0.00999999977 : f32
    %10 = vector.broadcast %cst_5 : f32 to vector<128x128xf32>
    %11 = arith.mulf %10, %7 : vector<128x128xf32>
    %12 = arith.select %9, %7, %11 : vector<128x128xi1>, vector<128x128xf32>
    %13 = arith.truncf %12 : vector<128x128xf32> to vector<128x128xbf16>
    %c0_6 = arith.constant 0 : index
    %c0_7 = arith.constant 0 : index
    %14 = vector.load %arg4[%c0_6, %c0_7] : memref<128x128xbf16, #tpu.memory_space<vmem>>, vector<128x128xbf16>
    %cst_8 = arith.constant dense<0.000000e+00> : vector<128x128xf32>
    %15 = tpu.matmul %13, %14, %cst_8 {dimension_numbers = #tpu.dot_dimension_numbers<[1], [0], [0], [1], [0, 0, 1, 1], [], []>} : vector<128x128xbf16>, vector<128x128xbf16>, vector<128x128xf32> -> vector<128x128xf32>
    %c0_9 = arith.constant 0 : index
    %c0_10 = arith.constant 0 : index
    %16 = vector.load %arg5[%c0_9, %c0_10] : memref<1x128xf32, #tpu.memory_space<vmem>>, vector<1x128xf32>
    %17 = vector.broadcast %16 : vector<1x128xf32> to vector<128x128xf32>
    %18 = arith.addf %15, %17 : vector<128x128xf32>
    %19 = arith.truncf %18 : vector<128x128xf32> to vector<128x128xbf16>
    %c0_11 = arith.constant 0 : index
    %c0_12 = arith.constant 0 : index
    %20 = vector.load %arg6[%c0_11, %c0_12] : memref<128x128xbf16, #tpu.memory_space<vmem>>, vector<128x128xbf16>
    tpu.vector_store %arg6[%c0_11, %c0_12], %19 {strides = array<i32>} : memref<128x128xbf16, #tpu.memory_space<vmem>>, vector<128x128xbf16>,
    return
  }
  func.func @transform_0(%arg0: i32) -> (i32, i32) {
    %c0_i32 = arith.constant 0 : i32
    %c0_i32_0 = arith.constant 0 : i32
    return %arg0, %c0_i32 : i32, i32
  }
  func.func @transform_1(%arg0: i32) -> (i32, i32) {
    %c0_i32 = arith.constant 0 : i32
    %c0_i32_0 = arith.constant 0 : i32
    %c0_i32_1 = arith.constant 0 : i32
    return %c0_i32, %c0_i32_0 : i32, i32
  }
  func.func @transform_2(%arg0: i32) -> (i32, i32) {
    %c0_i32 = arith.constant 0 : i32
    %c0_i32_0 = arith.constant 0 : i32
    %c0_i32_1 = arith.constant 0 : i32
    return %c0_i32, %c0_i32_0 : i32, i32
  }
  func.func @transform_3(%arg0: i32) -> (i32, i32) {
    %c0_i32 = arith.constant 0 : i32
    %c0_i32_0 = arith.constant 0 : i32
    %c0_i32_1 = arith.constant 0 : i32
    return %c0_i32, %c0_i32_0 : i32, i32
  }
  func.func @transform_4(%arg0: i32) -> (i32, i32) {
    %c0_i32 = arith.constant 0 : i32
    %c0_i32_0 = arith.constant 0 : i32
    %c0_i32_1 = arith.constant 0 : i32
    return %c0_i32, %c0_i32_0 : i32, i32
  }
  func.func @transform_5(%arg0: i32) -> (i32, i32) {
    %c0_i32 = arith.constant 0 : i32
    %c0_i32_0 = arith.constant 0 : i32
    return %arg0, %c0_i32 : i32, i32
  }
}

module attributes {stable_mosaic.version = 11 : i64} {
  func.func @_convblock_kernel(%arg0: i32, %arg1: memref<128x256xbf16, #tpu.memory_space<vmem>>, %arg2: memref<1x256xf32, #tpu.memory_space<vmem>>, %arg3: memref<1x256xf32, #tpu.memory_space<vmem>>, %arg4: memref<256x128xbf16, #tpu.memory_space<vmem>>, %arg5: memref<1x128xf32, #tpu.memory_space<vmem>>, %arg6: memref<128x128xbf16, #tpu.memory_space<vmem>>) attributes {dimension_semantics = [#tpu.dimension_semantics<parallel>], iteration_bounds = array<i64: 1>, scalar_prefetch = 0 : i64, scratch_operands = 0 : i64, tpu.core_type = #tpu.core_type<tc>, window_params = [{transform_indices = @transform_0, window_bounds = array<i64: 128, 256>}, {pipeline_mode = #tpu.pipeline_mode<synchronous>, transform_indices = @transform_1, window_bounds = array<i64: 1, 256>}, {pipeline_mode = #tpu.pipeline_mode<synchronous>, transform_indices = @transform_2, window_bounds = array<i64: 1, 256>}, {pipeline_mode = #tpu.pipeline_mode<synchronous>, transform_indices = @transform_3, window_bounds = array<i64: 256, 128>}, {pipeline_mode = #tpu.pipeline_mode<synchronous>, transform_indices = @transform_4, window_bounds = array<i64: 1, 128>}, {transform_indices = @transform_5, window_bounds = array<i64: 128, 128>}]} {
    %c0 = arith.constant 0 : index
    %c0_0 = arith.constant 0 : index
    %0 = vector.load %arg1[%c0, %c0_0] : memref<128x256xbf16, #tpu.memory_space<vmem>>, vector<128x256xbf16>
    %1 = arith.extf %0 : vector<128x256xbf16> to vector<128x256xf32>
    %c0_1 = arith.constant 0 : index
    %c0_2 = arith.constant 0 : index
    %2 = vector.load %arg2[%c0_1, %c0_2] : memref<1x256xf32, #tpu.memory_space<vmem>>, vector<1x256xf32>
    %3 = vector.broadcast %2 : vector<1x256xf32> to vector<128x256xf32>
    %4 = arith.mulf %1, %3 : vector<128x256xf32>
    %c0_3 = arith.constant 0 : index
    %c0_4 = arith.constant 0 : index
    %5 = vector.load %arg3[%c0_3, %c0_4] : memref<1x256xf32, #tpu.memory_space<vmem>>, vector<1x256xf32>
    %6 = vector.broadcast %5 : vector<1x256xf32> to vector<128x256xf32>
    %7 = arith.addf %4, %6 : vector<128x256xf32>
    %cst = arith.constant 0.000000e+00 : f32
    %8 = vector.broadcast %cst : f32 to vector<128x256xf32>
    %9 = arith.cmpf ogt, %7, %8 : vector<128x256xf32>
    %cst_5 = arith.constant 0.00999999977 : f32
    %10 = vector.broadcast %cst_5 : f32 to vector<128x256xf32>
    %11 = arith.mulf %10, %7 : vector<128x256xf32>
    %12 = arith.select %9, %7, %11 : vector<128x256xi1>, vector<128x256xf32>
    %13 = arith.truncf %12 : vector<128x256xf32> to vector<128x256xbf16>
    %c0_6 = arith.constant 0 : index
    %c0_7 = arith.constant 0 : index
    %14 = vector.load %arg4[%c0_6, %c0_7] : memref<256x128xbf16, #tpu.memory_space<vmem>>, vector<256x128xbf16>
    %cst_8 = arith.constant dense<0.000000e+00> : vector<128x128xf32>
    %15 = tpu.matmul %13, %14, %cst_8 {dimension_numbers = #tpu.dot_dimension_numbers<[1], [0], [0], [1], [0, 0, 1, 1], [], []>} : vector<128x256xbf16>, vector<256x128xbf16>, vector<128x128xf32> -> vector<128x128xf32>
    %c0_9 = arith.constant 0 : index
    %c0_10 = arith.constant 0 : index
    %16 = vector.load %arg5[%c0_9, %c0_10] : memref<1x128xf32, #tpu.memory_space<vmem>>, vector<1x128xf32>
    %17 = vector.broadcast %16 : vector<1x128xf32> to vector<128x128xf32>
    %18 = arith.addf %15, %17 : vector<128x128xf32>
    %19 = arith.truncf %18 : vector<128x128xf32> to vector<128x128xbf16>
    %c0_11 = arith.constant 0 : index
    %c0_12 = arith.constant 0 : index
    %20 = vector.load %arg6[%c0_11, %c0_12] : memref<128x128xbf16, #tpu.memory_space<vmem>>, vector<128x128xbf16>
    tpu.vector_store %arg6[%c0_11, %c0_12], %19 {strides = array<i32>} : memref<128x128xbf16, #tpu.memory_space<vmem>>, vector<128x128xbf16>,
    return
  }
  func.func @transform_0(%arg0: i32) -> (i32, i32) {
    %c0_i32 = arith.constant 0 : i32
    %c0_i32_0 = arith.constant 0 : i32
    return %arg0, %c0_i32 : i32, i32
  }
  func.func @transform_1(%arg0: i32) -> (i32, i32) {
    %c0_i32 = arith.constant 0 : i32
    %c0_i32_0 = arith.constant 0 : i32
    %c0_i32_1 = arith.constant 0 : i32
    return %c0_i32, %c0_i32_0 : i32, i32
  }
  func.func @transform_2(%arg0: i32) -> (i32, i32) {
    %c0_i32 = arith.constant 0 : i32
    %c0_i32_0 = arith.constant 0 : i32
    %c0_i32_1 = arith.constant 0 : i32
    return %c0_i32, %c0_i32_0 : i32, i32
  }
  func.func @transform_3(%arg0: i32) -> (i32, i32) {
    %c0_i32 = arith.constant 0 : i32
    %c0_i32_0 = arith.constant 0 : i32
    %c0_i32_1 = arith.constant 0 : i32
    return %c0_i32, %c0_i32_0 : i32, i32
  }
  func.func @transform_4(%arg0: i32) -> (i32, i32) {
    %c0_i32 = arith.constant 0 : i32
    %c0_i32_0 = arith.constant 0 : i32
    %c0_i32_1 = arith.constant 0 : i32
    return %c0_i32, %c0_i32_0 : i32, i32
  }
  func.func @transform_5(%arg0: i32) -> (i32, i32) {
    %c0_i32 = arith.constant 0 : i32
    %c0_i32_0 = arith.constant 0 : i32
    return %arg0, %c0_i32 : i32, i32
  }
}

module attributes {stable_mosaic.version = 11 : i64} {
  func.func @_convblock_skip_kernel(%arg0: i32, %arg1: memref<128x256xbf16, #tpu.memory_space<vmem>>, %arg2: memref<1x256xf32, #tpu.memory_space<vmem>>, %arg3: memref<1x256xf32, #tpu.memory_space<vmem>>, %arg4: memref<256x128xbf16, #tpu.memory_space<vmem>>, %arg5: memref<1x128xf32, #tpu.memory_space<vmem>>, %arg6: memref<128x128xbf16, #tpu.memory_space<vmem>>, %arg7: memref<128x128xbf16, #tpu.memory_space<vmem>>) attributes {dimension_semantics = [#tpu.dimension_semantics<parallel>], iteration_bounds = array<i64: 1>, scalar_prefetch = 0 : i64, scratch_operands = 0 : i64, tpu.core_type = #tpu.core_type<tc>, window_params = [{transform_indices = @transform_0, window_bounds = array<i64: 128, 256>}, {pipeline_mode = #tpu.pipeline_mode<synchronous>, transform_indices = @transform_1, window_bounds = array<i64: 1, 256>}, {pipeline_mode = #tpu.pipeline_mode<synchronous>, transform_indices = @transform_2, window_bounds = array<i64: 1, 256>}, {pipeline_mode = #tpu.pipeline_mode<synchronous>, transform_indices = @transform_3, window_bounds = array<i64: 256, 128>}, {pipeline_mode = #tpu.pipeline_mode<synchronous>, transform_indices = @transform_4, window_bounds = array<i64: 1, 128>}, {transform_indices = @transform_5, window_bounds = array<i64: 128, 128>}, {transform_indices = @transform_6, window_bounds = array<i64: 128, 128>}]} {
    %c0 = arith.constant 0 : index
    %c0_0 = arith.constant 0 : index
    %0 = vector.load %arg1[%c0, %c0_0] : memref<128x256xbf16, #tpu.memory_space<vmem>>, vector<128x256xbf16>
    %1 = arith.extf %0 : vector<128x256xbf16> to vector<128x256xf32>
    %c0_1 = arith.constant 0 : index
    %c0_2 = arith.constant 0 : index
    %2 = vector.load %arg2[%c0_1, %c0_2] : memref<1x256xf32, #tpu.memory_space<vmem>>, vector<1x256xf32>
    %3 = vector.broadcast %2 : vector<1x256xf32> to vector<128x256xf32>
    %4 = arith.mulf %1, %3 : vector<128x256xf32>
    %c0_3 = arith.constant 0 : index
    %c0_4 = arith.constant 0 : index
    %5 = vector.load %arg3[%c0_3, %c0_4] : memref<1x256xf32, #tpu.memory_space<vmem>>, vector<1x256xf32>
    %6 = vector.broadcast %5 : vector<1x256xf32> to vector<128x256xf32>
    %7 = arith.addf %4, %6 : vector<128x256xf32>
    %cst = arith.constant 0.000000e+00 : f32
    %8 = vector.broadcast %cst : f32 to vector<128x256xf32>
    %9 = arith.cmpf ogt, %7, %8 : vector<128x256xf32>
    %cst_5 = arith.constant 0.00999999977 : f32
    %10 = vector.broadcast %cst_5 : f32 to vector<128x256xf32>
    %11 = arith.mulf %10, %7 : vector<128x256xf32>
    %12 = arith.select %9, %7, %11 : vector<128x256xi1>, vector<128x256xf32>
    %13 = arith.truncf %12 : vector<128x256xf32> to vector<128x256xbf16>
    %c0_6 = arith.constant 0 : index
    %c0_7 = arith.constant 0 : index
    %14 = vector.load %arg4[%c0_6, %c0_7] : memref<256x128xbf16, #tpu.memory_space<vmem>>, vector<256x128xbf16>
    %cst_8 = arith.constant dense<0.000000e+00> : vector<128x128xf32>
    %15 = tpu.matmul %13, %14, %cst_8 {dimension_numbers = #tpu.dot_dimension_numbers<[1], [0], [0], [1], [0, 0, 1, 1], [], []>} : vector<128x256xbf16>, vector<256x128xbf16>, vector<128x128xf32> -> vector<128x128xf32>
    %c0_9 = arith.constant 0 : index
    %c0_10 = arith.constant 0 : index
    %16 = vector.load %arg5[%c0_9, %c0_10] : memref<1x128xf32, #tpu.memory_space<vmem>>, vector<1x128xf32>
    %17 = vector.broadcast %16 : vector<1x128xf32> to vector<128x128xf32>
    %18 = arith.addf %15, %17 : vector<128x128xf32>
    %c0_11 = arith.constant 0 : index
    %c0_12 = arith.constant 0 : index
    %19 = vector.load %arg6[%c0_11, %c0_12] : memref<128x128xbf16, #tpu.memory_space<vmem>>, vector<128x128xbf16>
    %20 = arith.extf %19 : vector<128x128xbf16> to vector<128x128xf32>
    %21 = arith.addf %18, %20 : vector<128x128xf32>
    %22 = arith.truncf %21 : vector<128x128xf32> to vector<128x128xbf16>
    %c0_13 = arith.constant 0 : index
    %c0_14 = arith.constant 0 : index
    %23 = vector.load %arg7[%c0_13, %c0_14] : memref<128x128xbf16, #tpu.memory_space<vmem>>, vector<128x128xbf16>
    tpu.vector_store %arg7[%c0_13, %c0_14], %22 {strides = array<i32>} : memref<128x128xbf16, #tpu.memory_space<vmem>>, vector<128x128xbf16>,
    return
  }
  func.func @transform_0(%arg0: i32) -> (i32, i32) {
    %c0_i32 = arith.constant 0 : i32
    %c0_i32_0 = arith.constant 0 : i32
    return %arg0, %c0_i32 : i32, i32
  }
  func.func @transform_1(%arg0: i32) -> (i32, i32) {
    %c0_i32 = arith.constant 0 : i32
    %c0_i32_0 = arith.constant 0 : i32
    %c0_i32_1 = arith.constant 0 : i32
    return %c0_i32, %c0_i32_0 : i32, i32
  }
  func.func @transform_2(%arg0: i32) -> (i32, i32) {
    %c0_i32 = arith.constant 0 : i32
    %c0_i32_0 = arith.constant 0 : i32
    %c0_i32_1 = arith.constant 0 : i32
    return %c0_i32, %c0_i32_0 : i32, i32
  }
  func.func @transform_3(%arg0: i32) -> (i32, i32) {
    %c0_i32 = arith.constant 0 : i32
    %c0_i32_0 = arith.constant 0 : i32
    %c0_i32_1 = arith.constant 0 : i32
    return %c0_i32, %c0_i32_0 : i32, i32
  }
  func.func @transform_4(%arg0: i32) -> (i32, i32) {
    %c0_i32 = arith.constant 0 : i32
    %c0_i32_0 = arith.constant 0 : i32
    %c0_i32_1 = arith.constant 0 : i32
    return %c0_i32, %c0_i32_0 : i32, i32
  }
  func.func @transform_5(%arg0: i32) -> (i32, i32) {
    %c0_i32 = arith.constant 0 : i32
    %c0_i32_0 = arith.constant 0 : i32
    return %arg0, %c0_i32 : i32, i32
  }
  func.func @transform_6(%arg0: i32) -> (i32, i32) {
    %c0_i32 = arith.constant 0 : i32
    %c0_i32_0 = arith.constant 0 : i32
    return %arg0, %c0_i32 : i32, i32
  }
}

module attributes {stable_mosaic.version = 11 : i64} {
  func.func @_convblock_kernel(%arg0: i32, %arg1: memref<32x256xbf16, #tpu.memory_space<vmem>>, %arg2: memref<1x256xf32, #tpu.memory_space<vmem>>, %arg3: memref<1x256xf32, #tpu.memory_space<vmem>>, %arg4: memref<256x128xbf16, #tpu.memory_space<vmem>>, %arg5: memref<1x128xf32, #tpu.memory_space<vmem>>, %arg6: memref<32x128xbf16, #tpu.memory_space<vmem>>) attributes {dimension_semantics = [#tpu.dimension_semantics<parallel>], iteration_bounds = array<i64: 1>, scalar_prefetch = 0 : i64, scratch_operands = 0 : i64, tpu.core_type = #tpu.core_type<tc>, window_params = [{transform_indices = @transform_0, window_bounds = array<i64: 32, 256>}, {pipeline_mode = #tpu.pipeline_mode<synchronous>, transform_indices = @transform_1, window_bounds = array<i64: 1, 256>}, {pipeline_mode = #tpu.pipeline_mode<synchronous>, transform_indices = @transform_2, window_bounds = array<i64: 1, 256>}, {pipeline_mode = #tpu.pipeline_mode<synchronous>, transform_indices = @transform_3, window_bounds = array<i64: 256, 128>}, {pipeline_mode = #tpu.pipeline_mode<synchronous>, transform_indices = @transform_4, window_bounds = array<i64: 1, 128>}, {transform_indices = @transform_5, window_bounds = array<i64: 32, 128>}]} {
    %c0 = arith.constant 0 : index
    %c0_0 = arith.constant 0 : index
    %0 = vector.load %arg1[%c0, %c0_0] : memref<32x256xbf16, #tpu.memory_space<vmem>>, vector<32x256xbf16>
    %1 = arith.extf %0 : vector<32x256xbf16> to vector<32x256xf32>
    %c0_1 = arith.constant 0 : index
    %c0_2 = arith.constant 0 : index
    %2 = vector.load %arg2[%c0_1, %c0_2] : memref<1x256xf32, #tpu.memory_space<vmem>>, vector<1x256xf32>
    %3 = vector.broadcast %2 : vector<1x256xf32> to vector<32x256xf32>
    %4 = arith.mulf %1, %3 : vector<32x256xf32>
    %c0_3 = arith.constant 0 : index
    %c0_4 = arith.constant 0 : index
    %5 = vector.load %arg3[%c0_3, %c0_4] : memref<1x256xf32, #tpu.memory_space<vmem>>, vector<1x256xf32>
    %6 = vector.broadcast %5 : vector<1x256xf32> to vector<32x256xf32>
    %7 = arith.addf %4, %6 : vector<32x256xf32>
    %cst = arith.constant 0.000000e+00 : f32
    %8 = vector.broadcast %cst : f32 to vector<32x256xf32>
    %9 = arith.cmpf ogt, %7, %8 : vector<32x256xf32>
    %cst_5 = arith.constant 0.00999999977 : f32
    %10 = vector.broadcast %cst_5 : f32 to vector<32x256xf32>
    %11 = arith.mulf %10, %7 : vector<32x256xf32>
    %12 = arith.select %9, %7, %11 : vector<32x256xi1>, vector<32x256xf32>
    %13 = arith.truncf %12 : vector<32x256xf32> to vector<32x256xbf16>
    %c0_6 = arith.constant 0 : index
    %c0_7 = arith.constant 0 : index
    %14 = vector.load %arg4[%c0_6, %c0_7] : memref<256x128xbf16, #tpu.memory_space<vmem>>, vector<256x128xbf16>
    %cst_8 = arith.constant dense<0.000000e+00> : vector<32x128xf32>
    %15 = tpu.matmul %13, %14, %cst_8 {dimension_numbers = #tpu.dot_dimension_numbers<[1], [0], [0], [1], [0, 0, 1, 1], [], []>} : vector<32x256xbf16>, vector<256x128xbf16>, vector<32x128xf32> -> vector<32x128xf32>
    %c0_9 = arith.constant 0 : index
    %c0_10 = arith.constant 0 : index
    %16 = vector.load %arg5[%c0_9, %c0_10] : memref<1x128xf32, #tpu.memory_space<vmem>>, vector<1x128xf32>
    %17 = vector.broadcast %16 : vector<1x128xf32> to vector<32x128xf32>
    %18 = arith.addf %15, %17 : vector<32x128xf32>
    %19 = arith.truncf %18 : vector<32x128xf32> to vector<32x128xbf16>
    %c0_11 = arith.constant 0 : index
    %c0_12 = arith.constant 0 : index
    %20 = vector.load %arg6[%c0_11, %c0_12] : memref<32x128xbf16, #tpu.memory_space<vmem>>, vector<32x128xbf16>
    tpu.vector_store %arg6[%c0_11, %c0_12], %19 {strides = array<i32>} : memref<32x128xbf16, #tpu.memory_space<vmem>>, vector<32x128xbf16>,
    return
  }
  func.func @transform_0(%arg0: i32) -> (i32, i32) {
    %c0_i32 = arith.constant 0 : i32
    %c0_i32_0 = arith.constant 0 : i32
    return %arg0, %c0_i32 : i32, i32
  }
  func.func @transform_1(%arg0: i32) -> (i32, i32) {
    %c0_i32 = arith.constant 0 : i32
    %c0_i32_0 = arith.constant 0 : i32
    %c0_i32_1 = arith.constant 0 : i32
    return %c0_i32, %c0_i32_0 : i32, i32
  }
  func.func @transform_2(%arg0: i32) -> (i32, i32) {
    %c0_i32 = arith.constant 0 : i32
    %c0_i32_0 = arith.constant 0 : i32
    %c0_i32_1 = arith.constant 0 : i32
    return %c0_i32, %c0_i32_0 : i32, i32
  }
  func.func @transform_3(%arg0: i32) -> (i32, i32) {
    %c0_i32 = arith.constant 0 : i32
    %c0_i32_0 = arith.constant 0 : i32
    %c0_i32_1 = arith.constant 0 : i32
    return %c0_i32, %c0_i32_0 : i32, i32
  }
  func.func @transform_4(%arg0: i32) -> (i32, i32) {
    %c0_i32 = arith.constant 0 : i32
    %c0_i32_0 = arith.constant 0 : i32
    %c0_i32_1 = arith.constant 0 : i32
    return %c0_i32, %c0_i32_0 : i32, i32
  }
  func.func @transform_5(%arg0: i32) -> (i32, i32) {
    %c0_i32 = arith.constant 0 : i32
    %c0_i32_0 = arith.constant 0 : i32
    return %arg0, %c0_i32 : i32, i32
  }
}

module attributes {stable_mosaic.version = 11 : i64} {
  func.func @_convblock_kernel(%arg0: i32, %arg1: memref<32x384xbf16, #tpu.memory_space<vmem>>, %arg2: memref<1x384xf32, #tpu.memory_space<vmem>>, %arg3: memref<1x384xf32, #tpu.memory_space<vmem>>, %arg4: memref<384x128xbf16, #tpu.memory_space<vmem>>, %arg5: memref<1x128xf32, #tpu.memory_space<vmem>>, %arg6: memref<32x128xbf16, #tpu.memory_space<vmem>>) attributes {dimension_semantics = [#tpu.dimension_semantics<parallel>], iteration_bounds = array<i64: 1>, scalar_prefetch = 0 : i64, scratch_operands = 0 : i64, tpu.core_type = #tpu.core_type<tc>, window_params = [{transform_indices = @transform_0, window_bounds = array<i64: 32, 384>}, {pipeline_mode = #tpu.pipeline_mode<synchronous>, transform_indices = @transform_1, window_bounds = array<i64: 1, 384>}, {pipeline_mode = #tpu.pipeline_mode<synchronous>, transform_indices = @transform_2, window_bounds = array<i64: 1, 384>}, {pipeline_mode = #tpu.pipeline_mode<synchronous>, transform_indices = @transform_3, window_bounds = array<i64: 384, 128>}, {pipeline_mode = #tpu.pipeline_mode<synchronous>, transform_indices = @transform_4, window_bounds = array<i64: 1, 128>}, {transform_indices = @transform_5, window_bounds = array<i64: 32, 128>}]} {
    %c0 = arith.constant 0 : index
    %c0_0 = arith.constant 0 : index
    %0 = vector.load %arg1[%c0, %c0_0] : memref<32x384xbf16, #tpu.memory_space<vmem>>, vector<32x384xbf16>
    %1 = arith.extf %0 : vector<32x384xbf16> to vector<32x384xf32>
    %c0_1 = arith.constant 0 : index
    %c0_2 = arith.constant 0 : index
    %2 = vector.load %arg2[%c0_1, %c0_2] : memref<1x384xf32, #tpu.memory_space<vmem>>, vector<1x384xf32>
    %3 = vector.broadcast %2 : vector<1x384xf32> to vector<32x384xf32>
    %4 = arith.mulf %1, %3 : vector<32x384xf32>
    %c0_3 = arith.constant 0 : index
    %c0_4 = arith.constant 0 : index
    %5 = vector.load %arg3[%c0_3, %c0_4] : memref<1x384xf32, #tpu.memory_space<vmem>>, vector<1x384xf32>
    %6 = vector.broadcast %5 : vector<1x384xf32> to vector<32x384xf32>
    %7 = arith.addf %4, %6 : vector<32x384xf32>
    %cst = arith.constant 0.000000e+00 : f32
    %8 = vector.broadcast %cst : f32 to vector<32x384xf32>
    %9 = arith.cmpf ogt, %7, %8 : vector<32x384xf32>
    %cst_5 = arith.constant 0.00999999977 : f32
    %10 = vector.broadcast %cst_5 : f32 to vector<32x384xf32>
    %11 = arith.mulf %10, %7 : vector<32x384xf32>
    %12 = arith.select %9, %7, %11 : vector<32x384xi1>, vector<32x384xf32>
    %13 = arith.truncf %12 : vector<32x384xf32> to vector<32x384xbf16>
    %c0_6 = arith.constant 0 : index
    %c0_7 = arith.constant 0 : index
    %14 = vector.load %arg4[%c0_6, %c0_7] : memref<384x128xbf16, #tpu.memory_space<vmem>>, vector<384x128xbf16>
    %cst_8 = arith.constant dense<0.000000e+00> : vector<32x128xf32>
    %15 = tpu.matmul %13, %14, %cst_8 {dimension_numbers = #tpu.dot_dimension_numbers<[1], [0], [0], [1], [0, 0, 1, 1], [], []>} : vector<32x384xbf16>, vector<384x128xbf16>, vector<32x128xf32> -> vector<32x128xf32>
    %c0_9 = arith.constant 0 : index
    %c0_10 = arith.constant 0 : index
    %16 = vector.load %arg5[%c0_9, %c0_10] : memref<1x128xf32, #tpu.memory_space<vmem>>, vector<1x128xf32>
    %17 = vector.broadcast %16 : vector<1x128xf32> to vector<32x128xf32>
    %18 = arith.addf %15, %17 : vector<32x128xf32>
    %19 = arith.truncf %18 : vector<32x128xf32> to vector<32x128xbf16>
    %c0_11 = arith.constant 0 : index
    %c0_12 = arith.constant 0 : index
    %20 = vector.load %arg6[%c0_11, %c0_12] : memref<32x128xbf16, #tpu.memory_space<vmem>>, vector<32x128xbf16>
    tpu.vector_store %arg6[%c0_11, %c0_12], %19 {strides = array<i32>} : memref<32x128xbf16, #tpu.memory_space<vmem>>, vector<32x128xbf16>,
    return
  }
  func.func @transform_0(%arg0: i32) -> (i32, i32) {
    %c0_i32 = arith.constant 0 : i32
    %c0_i32_0 = arith.constant 0 : i32
    return %arg0, %c0_i32 : i32, i32
  }
  func.func @transform_1(%arg0: i32) -> (i32, i32) {
    %c0_i32 = arith.constant 0 : i32
    %c0_i32_0 = arith.constant 0 : i32
    %c0_i32_1 = arith.constant 0 : i32
    return %c0_i32, %c0_i32_0 : i32, i32
  }
  func.func @transform_2(%arg0: i32) -> (i32, i32) {
    %c0_i32 = arith.constant 0 : i32
    %c0_i32_0 = arith.constant 0 : i32
    %c0_i32_1 = arith.constant 0 : i32
    return %c0_i32, %c0_i32_0 : i32, i32
  }
  func.func @transform_3(%arg0: i32) -> (i32, i32) {
    %c0_i32 = arith.constant 0 : i32
    %c0_i32_0 = arith.constant 0 : i32
    %c0_i32_1 = arith.constant 0 : i32
    return %c0_i32, %c0_i32_0 : i32, i32
  }
  func.func @transform_4(%arg0: i32) -> (i32, i32) {
    %c0_i32 = arith.constant 0 : i32
    %c0_i32_0 = arith.constant 0 : i32
    %c0_i32_1 = arith.constant 0 : i32
    return %c0_i32, %c0_i32_0 : i32, i32
  }
  func.func @transform_5(%arg0: i32) -> (i32, i32) {
    %c0_i32 = arith.constant 0 : i32
    %c0_i32_0 = arith.constant 0 : i32
    return %arg0, %c0_i32 : i32, i32
  }
}

module attributes {stable_mosaic.version = 11 : i64} {
  func.func @_convblock_skip_kernel(%arg0: i32, %arg1: memref<32x384xbf16, #tpu.memory_space<vmem>>, %arg2: memref<1x384xf32, #tpu.memory_space<vmem>>, %arg3: memref<1x384xf32, #tpu.memory_space<vmem>>, %arg4: memref<384x128xbf16, #tpu.memory_space<vmem>>, %arg5: memref<1x128xf32, #tpu.memory_space<vmem>>, %arg6: memref<32x128xbf16, #tpu.memory_space<vmem>>, %arg7: memref<32x128xbf16, #tpu.memory_space<vmem>>) attributes {dimension_semantics = [#tpu.dimension_semantics<parallel>], iteration_bounds = array<i64: 1>, scalar_prefetch = 0 : i64, scratch_operands = 0 : i64, tpu.core_type = #tpu.core_type<tc>, window_params = [{transform_indices = @transform_0, window_bounds = array<i64: 32, 384>}, {pipeline_mode = #tpu.pipeline_mode<synchronous>, transform_indices = @transform_1, window_bounds = array<i64: 1, 384>}, {pipeline_mode = #tpu.pipeline_mode<synchronous>, transform_indices = @transform_2, window_bounds = array<i64: 1, 384>}, {pipeline_mode = #tpu.pipeline_mode<synchronous>, transform_indices = @transform_3, window_bounds = array<i64: 384, 128>}, {pipeline_mode = #tpu.pipeline_mode<synchronous>, transform_indices = @transform_4, window_bounds = array<i64: 1, 128>}, {transform_indices = @transform_5, window_bounds = array<i64: 32, 128>}, {transform_indices = @transform_6, window_bounds = array<i64: 32, 128>}]} {
    %c0 = arith.constant 0 : index
    %c0_0 = arith.constant 0 : index
    %0 = vector.load %arg1[%c0, %c0_0] : memref<32x384xbf16, #tpu.memory_space<vmem>>, vector<32x384xbf16>
    %1 = arith.extf %0 : vector<32x384xbf16> to vector<32x384xf32>
    %c0_1 = arith.constant 0 : index
    %c0_2 = arith.constant 0 : index
    %2 = vector.load %arg2[%c0_1, %c0_2] : memref<1x384xf32, #tpu.memory_space<vmem>>, vector<1x384xf32>
    %3 = vector.broadcast %2 : vector<1x384xf32> to vector<32x384xf32>
    %4 = arith.mulf %1, %3 : vector<32x384xf32>
    %c0_3 = arith.constant 0 : index
    %c0_4 = arith.constant 0 : index
    %5 = vector.load %arg3[%c0_3, %c0_4] : memref<1x384xf32, #tpu.memory_space<vmem>>, vector<1x384xf32>
    %6 = vector.broadcast %5 : vector<1x384xf32> to vector<32x384xf32>
    %7 = arith.addf %4, %6 : vector<32x384xf32>
    %cst = arith.constant 0.000000e+00 : f32
    %8 = vector.broadcast %cst : f32 to vector<32x384xf32>
    %9 = arith.cmpf ogt, %7, %8 : vector<32x384xf32>
    %cst_5 = arith.constant 0.00999999977 : f32
    %10 = vector.broadcast %cst_5 : f32 to vector<32x384xf32>
    %11 = arith.mulf %10, %7 : vector<32x384xf32>
    %12 = arith.select %9, %7, %11 : vector<32x384xi1>, vector<32x384xf32>
    %13 = arith.truncf %12 : vector<32x384xf32> to vector<32x384xbf16>
    %c0_6 = arith.constant 0 : index
    %c0_7 = arith.constant 0 : index
    %14 = vector.load %arg4[%c0_6, %c0_7] : memref<384x128xbf16, #tpu.memory_space<vmem>>, vector<384x128xbf16>
    %cst_8 = arith.constant dense<0.000000e+00> : vector<32x128xf32>
    %15 = tpu.matmul %13, %14, %cst_8 {dimension_numbers = #tpu.dot_dimension_numbers<[1], [0], [0], [1], [0, 0, 1, 1], [], []>} : vector<32x384xbf16>, vector<384x128xbf16>, vector<32x128xf32> -> vector<32x128xf32>
    %c0_9 = arith.constant 0 : index
    %c0_10 = arith.constant 0 : index
    %16 = vector.load %arg5[%c0_9, %c0_10] : memref<1x128xf32, #tpu.memory_space<vmem>>, vector<1x128xf32>
    %17 = vector.broadcast %16 : vector<1x128xf32> to vector<32x128xf32>
    %18 = arith.addf %15, %17 : vector<32x128xf32>
    %c0_11 = arith.constant 0 : index
    %c0_12 = arith.constant 0 : index
    %19 = vector.load %arg6[%c0_11, %c0_12] : memref<32x128xbf16, #tpu.memory_space<vmem>>, vector<32x128xbf16>
    %20 = arith.extf %19 : vector<32x128xbf16> to vector<32x128xf32>
    %21 = arith.addf %18, %20 : vector<32x128xf32>
    %22 = arith.truncf %21 : vector<32x128xf32> to vector<32x128xbf16>
    %c0_13 = arith.constant 0 : index
    %c0_14 = arith.constant 0 : index
    %23 = vector.load %arg7[%c0_13, %c0_14] : memref<32x128xbf16, #tpu.memory_space<vmem>>, vector<32x128xbf16>
    tpu.vector_store %arg7[%c0_13, %c0_14], %22 {strides = array<i32>} : memref<32x128xbf16, #tpu.memory_space<vmem>>, vector<32x128xbf16>,
    return
  }
  func.func @transform_0(%arg0: i32) -> (i32, i32) {
    %c0_i32 = arith.constant 0 : i32
    %c0_i32_0 = arith.constant 0 : i32
    return %arg0, %c0_i32 : i32, i32
  }
  func.func @transform_1(%arg0: i32) -> (i32, i32) {
    %c0_i32 = arith.constant 0 : i32
    %c0_i32_0 = arith.constant 0 : i32
    %c0_i32_1 = arith.constant 0 : i32
    return %c0_i32, %c0_i32_0 : i32, i32
  }
  func.func @transform_2(%arg0: i32) -> (i32, i32) {
    %c0_i32 = arith.constant 0 : i32
    %c0_i32_0 = arith.constant 0 : i32
    %c0_i32_1 = arith.constant 0 : i32
    return %c0_i32, %c0_i32_0 : i32, i32
  }
  func.func @transform_3(%arg0: i32) -> (i32, i32) {
    %c0_i32 = arith.constant 0 : i32
    %c0_i32_0 = arith.constant 0 : i32
    %c0_i32_1 = arith.constant 0 : i32
    return %c0_i32, %c0_i32_0 : i32, i32
  }
  func.func @transform_4(%arg0: i32) -> (i32, i32) {
    %c0_i32 = arith.constant 0 : i32
    %c0_i32_0 = arith.constant 0 : i32
    %c0_i32_1 = arith.constant 0 : i32
    return %c0_i32, %c0_i32_0 : i32, i32
  }
  func.func @transform_5(%arg0: i32) -> (i32, i32) {
    %c0_i32 = arith.constant 0 : i32
    %c0_i32_0 = arith.constant 0 : i32
    return %arg0, %c0_i32 : i32, i32
  }
  func.func @transform_6(%arg0: i32) -> (i32, i32) {
    %c0_i32 = arith.constant 0 : i32
    %c0_i32_0 = arith.constant 0 : i32
    return %arg0, %c0_i32 : i32, i32
  }
}

module attributes {stable_mosaic.version = 11 : i64} {
  func.func @_convblock_kernel(%arg0: i32, %arg1: memref<8x384xbf16, #tpu.memory_space<vmem>>, %arg2: memref<1x384xf32, #tpu.memory_space<vmem>>, %arg3: memref<1x384xf32, #tpu.memory_space<vmem>>, %arg4: memref<384x128xbf16, #tpu.memory_space<vmem>>, %arg5: memref<1x128xf32, #tpu.memory_space<vmem>>, %arg6: memref<8x128xbf16, #tpu.memory_space<vmem>>) attributes {dimension_semantics = [#tpu.dimension_semantics<parallel>], iteration_bounds = array<i64: 1>, scalar_prefetch = 0 : i64, scratch_operands = 0 : i64, tpu.core_type = #tpu.core_type<tc>, window_params = [{transform_indices = @transform_0, window_bounds = array<i64: 8, 384>}, {pipeline_mode = #tpu.pipeline_mode<synchronous>, transform_indices = @transform_1, window_bounds = array<i64: 1, 384>}, {pipeline_mode = #tpu.pipeline_mode<synchronous>, transform_indices = @transform_2, window_bounds = array<i64: 1, 384>}, {pipeline_mode = #tpu.pipeline_mode<synchronous>, transform_indices = @transform_3, window_bounds = array<i64: 384, 128>}, {pipeline_mode = #tpu.pipeline_mode<synchronous>, transform_indices = @transform_4, window_bounds = array<i64: 1, 128>}, {transform_indices = @transform_5, window_bounds = array<i64: 8, 128>}]} {
    %c0 = arith.constant 0 : index
    %c0_0 = arith.constant 0 : index
    %0 = vector.load %arg1[%c0, %c0_0] : memref<8x384xbf16, #tpu.memory_space<vmem>>, vector<8x384xbf16>
    %1 = arith.extf %0 : vector<8x384xbf16> to vector<8x384xf32>
    %c0_1 = arith.constant 0 : index
    %c0_2 = arith.constant 0 : index
    %2 = vector.load %arg2[%c0_1, %c0_2] : memref<1x384xf32, #tpu.memory_space<vmem>>, vector<1x384xf32>
    %3 = vector.broadcast %2 : vector<1x384xf32> to vector<8x384xf32>
    %4 = arith.mulf %1, %3 : vector<8x384xf32>
    %c0_3 = arith.constant 0 : index
    %c0_4 = arith.constant 0 : index
    %5 = vector.load %arg3[%c0_3, %c0_4] : memref<1x384xf32, #tpu.memory_space<vmem>>, vector<1x384xf32>
    %6 = vector.broadcast %5 : vector<1x384xf32> to vector<8x384xf32>
    %7 = arith.addf %4, %6 : vector<8x384xf32>
    %cst = arith.constant 0.000000e+00 : f32
    %8 = vector.broadcast %cst : f32 to vector<8x384xf32>
    %9 = arith.cmpf ogt, %7, %8 : vector<8x384xf32>
    %cst_5 = arith.constant 0.00999999977 : f32
    %10 = vector.broadcast %cst_5 : f32 to vector<8x384xf32>
    %11 = arith.mulf %10, %7 : vector<8x384xf32>
    %12 = arith.select %9, %7, %11 : vector<8x384xi1>, vector<8x384xf32>
    %13 = arith.truncf %12 : vector<8x384xf32> to vector<8x384xbf16>
    %c0_6 = arith.constant 0 : index
    %c0_7 = arith.constant 0 : index
    %14 = vector.load %arg4[%c0_6, %c0_7] : memref<384x128xbf16, #tpu.memory_space<vmem>>, vector<384x128xbf16>
    %cst_8 = arith.constant dense<0.000000e+00> : vector<8x128xf32>
    %15 = tpu.matmul %13, %14, %cst_8 {dimension_numbers = #tpu.dot_dimension_numbers<[1], [0], [0], [1], [0, 0, 1, 1], [], []>} : vector<8x384xbf16>, vector<384x128xbf16>, vector<8x128xf32> -> vector<8x128xf32>
    %c0_9 = arith.constant 0 : index
    %c0_10 = arith.constant 0 : index
    %16 = vector.load %arg5[%c0_9, %c0_10] : memref<1x128xf32, #tpu.memory_space<vmem>>, vector<1x128xf32>
    %17 = vector.broadcast %16 : vector<1x128xf32> to vector<8x128xf32>
    %18 = arith.addf %15, %17 : vector<8x128xf32>
    %19 = arith.truncf %18 : vector<8x128xf32> to vector<8x128xbf16>
    %c0_11 = arith.constant 0 : index
    %c0_12 = arith.constant 0 : index
    %20 = vector.load %arg6[%c0_11, %c0_12] : memref<8x128xbf16, #tpu.memory_space<vmem>>, vector<8x128xbf16>
    tpu.vector_store %arg6[%c0_11, %c0_12], %19 {strides = array<i32>} : memref<8x128xbf16, #tpu.memory_space<vmem>>, vector<8x128xbf16>,
    return
  }
  func.func @transform_0(%arg0: i32) -> (i32, i32) {
    %c0_i32 = arith.constant 0 : i32
    %c0_i32_0 = arith.constant 0 : i32
    return %arg0, %c0_i32 : i32, i32
  }
  func.func @transform_1(%arg0: i32) -> (i32, i32) {
    %c0_i32 = arith.constant 0 : i32
    %c0_i32_0 = arith.constant 0 : i32
    %c0_i32_1 = arith.constant 0 : i32
    return %c0_i32, %c0_i32_0 : i32, i32
  }
  func.func @transform_2(%arg0: i32) -> (i32, i32) {
    %c0_i32 = arith.constant 0 : i32
    %c0_i32_0 = arith.constant 0 : i32
    %c0_i32_1 = arith.constant 0 : i32
    return %c0_i32, %c0_i32_0 : i32, i32
  }
  func.func @transform_3(%arg0: i32) -> (i32, i32) {
    %c0_i32 = arith.constant 0 : i32
    %c0_i32_0 = arith.constant 0 : i32
    %c0_i32_1 = arith.constant 0 : i32
    return %c0_i32, %c0_i32_0 : i32, i32
  }
  func.func @transform_4(%arg0: i32) -> (i32, i32) {
    %c0_i32 = arith.constant 0 : i32
    %c0_i32_0 = arith.constant 0 : i32
    %c0_i32_1 = arith.constant 0 : i32
    return %c0_i32, %c0_i32_0 : i32, i32
  }
  func.func @transform_5(%arg0: i32) -> (i32, i32) {
    %c0_i32 = arith.constant 0 : i32
    %c0_i32_0 = arith.constant 0 : i32
    return %arg0, %c0_i32 : i32, i32
  }
}

module attributes {stable_mosaic.version = 11 : i64} {
  func.func @_convblock_skip_kernel(%arg0: i32, %arg1: memref<8x640xbf16, #tpu.memory_space<vmem>>, %arg2: memref<1x640xf32, #tpu.memory_space<vmem>>, %arg3: memref<1x640xf32, #tpu.memory_space<vmem>>, %arg4: memref<640x128xbf16, #tpu.memory_space<vmem>>, %arg5: memref<1x128xf32, #tpu.memory_space<vmem>>, %arg6: memref<8x128xbf16, #tpu.memory_space<vmem>>, %arg7: memref<8x128xbf16, #tpu.memory_space<vmem>>) attributes {dimension_semantics = [#tpu.dimension_semantics<parallel>], iteration_bounds = array<i64: 1>, scalar_prefetch = 0 : i64, scratch_operands = 0 : i64, tpu.core_type = #tpu.core_type<tc>, window_params = [{transform_indices = @transform_0, window_bounds = array<i64: 8, 640>}, {pipeline_mode = #tpu.pipeline_mode<synchronous>, transform_indices = @transform_1, window_bounds = array<i64: 1, 640>}, {pipeline_mode = #tpu.pipeline_mode<synchronous>, transform_indices = @transform_2, window_bounds = array<i64: 1, 640>}, {pipeline_mode = #tpu.pipeline_mode<synchronous>, transform_indices = @transform_3, window_bounds = array<i64: 640, 128>}, {pipeline_mode = #tpu.pipeline_mode<synchronous>, transform_indices = @transform_4, window_bounds = array<i64: 1, 128>}, {transform_indices = @transform_5, window_bounds = array<i64: 8, 128>}, {transform_indices = @transform_6, window_bounds = array<i64: 8, 128>}]} {
    %c0 = arith.constant 0 : index
    %c0_0 = arith.constant 0 : index
    %0 = vector.load %arg1[%c0, %c0_0] : memref<8x640xbf16, #tpu.memory_space<vmem>>, vector<8x640xbf16>
    %1 = arith.extf %0 : vector<8x640xbf16> to vector<8x640xf32>
    %c0_1 = arith.constant 0 : index
    %c0_2 = arith.constant 0 : index
    %2 = vector.load %arg2[%c0_1, %c0_2] : memref<1x640xf32, #tpu.memory_space<vmem>>, vector<1x640xf32>
    %3 = vector.broadcast %2 : vector<1x640xf32> to vector<8x640xf32>
    %4 = arith.mulf %1, %3 : vector<8x640xf32>
    %c0_3 = arith.constant 0 : index
    %c0_4 = arith.constant 0 : index
    %5 = vector.load %arg3[%c0_3, %c0_4] : memref<1x640xf32, #tpu.memory_space<vmem>>, vector<1x640xf32>
    %6 = vector.broadcast %5 : vector<1x640xf32> to vector<8x640xf32>
    %7 = arith.addf %4, %6 : vector<8x640xf32>
    %cst = arith.constant 0.000000e+00 : f32
    %8 = vector.broadcast %cst : f32 to vector<8x640xf32>
    %9 = arith.cmpf ogt, %7, %8 : vector<8x640xf32>
    %cst_5 = arith.constant 0.00999999977 : f32
    %10 = vector.broadcast %cst_5 : f32 to vector<8x640xf32>
    %11 = arith.mulf %10, %7 : vector<8x640xf32>
    %12 = arith.select %9, %7, %11 : vector<8x640xi1>, vector<8x640xf32>
    %13 = arith.truncf %12 : vector<8x640xf32> to vector<8x640xbf16>
    %c0_6 = arith.constant 0 : index
    %c0_7 = arith.constant 0 : index
    %14 = vector.load %arg4[%c0_6, %c0_7] : memref<640x128xbf16, #tpu.memory_space<vmem>>, vector<640x128xbf16>
    %cst_8 = arith.constant dense<0.000000e+00> : vector<8x128xf32>
    %15 = tpu.matmul %13, %14, %cst_8 {dimension_numbers = #tpu.dot_dimension_numbers<[1], [0], [0], [1], [0, 0, 1, 1], [], []>} : vector<8x640xbf16>, vector<640x128xbf16>, vector<8x128xf32> -> vector<8x128xf32>
    %c0_9 = arith.constant 0 : index
    %c0_10 = arith.constant 0 : index
    %16 = vector.load %arg5[%c0_9, %c0_10] : memref<1x128xf32, #tpu.memory_space<vmem>>, vector<1x128xf32>
    %17 = vector.broadcast %16 : vector<1x128xf32> to vector<8x128xf32>
    %18 = arith.addf %15, %17 : vector<8x128xf32>
    %c0_11 = arith.constant 0 : index
    %c0_12 = arith.constant 0 : index
    %19 = vector.load %arg6[%c0_11, %c0_12] : memref<8x128xbf16, #tpu.memory_space<vmem>>, vector<8x128xbf16>
    %20 = arith.extf %19 : vector<8x128xbf16> to vector<8x128xf32>
    %21 = arith.addf %18, %20 : vector<8x128xf32>
    %22 = arith.truncf %21 : vector<8x128xf32> to vector<8x128xbf16>
    %c0_13 = arith.constant 0 : index
    %c0_14 = arith.constant 0 : index
    %23 = vector.load %arg7[%c0_13, %c0_14] : memref<8x128xbf16, #tpu.memory_space<vmem>>, vector<8x128xbf16>
    tpu.vector_store %arg7[%c0_13, %c0_14], %22 {strides = array<i32>} : memref<8x128xbf16, #tpu.memory_space<vmem>>, vector<8x128xbf16>,
    return
  }
  func.func @transform_0(%arg0: i32) -> (i32, i32) {
    %c0_i32 = arith.constant 0 : i32
    %c0_i32_0 = arith.constant 0 : i32
    return %arg0, %c0_i32 : i32, i32
  }
  func.func @transform_1(%arg0: i32) -> (i32, i32) {
    %c0_i32 = arith.constant 0 : i32
    %c0_i32_0 = arith.constant 0 : i32
    %c0_i32_1 = arith.constant 0 : i32
    return %c0_i32, %c0_i32_0 : i32, i32
  }
  func.func @transform_2(%arg0: i32) -> (i32, i32) {
    %c0_i32 = arith.constant 0 : i32
    %c0_i32_0 = arith.constant 0 : i32
    %c0_i32_1 = arith.constant 0 : i32
    return %c0_i32, %c0_i32_0 : i32, i32
  }
  func.func @transform_3(%arg0: i32) -> (i32, i32) {
    %c0_i32 = arith.constant 0 : i32
    %c0_i32_0 = arith.constant 0 : i32
    %c0_i32_1 = arith.constant 0 : i32
    return %c0_i32, %c0_i32_0 : i32, i32
  }
  func.func @transform_4(%arg0: i32) -> (i32, i32) {
    %c0_i32 = arith.constant 0 : i32
    %c0_i32_0 = arith.constant 0 : i32
    %c0_i32_1 = arith.constant 0 : i32
    return %c0_i32, %c0_i32_0 : i32, i32
  }
  func.func @transform_5(%arg0: i32) -> (i32, i32) {
    %c0_i32 = arith.constant 0 : i32
    %c0_i32_0 = arith.constant 0 : i32
    return %arg0, %c0_i32 : i32, i32
  }
  func.func @transform_6(%arg0: i32) -> (i32, i32) {
    %c0_i32 = arith.constant 0 : i32
    %c0_i32_0 = arith.constant 0 : i32
    return %arg0, %c0_i32 : i32, i32
  }
}

module attributes {stable_mosaic.version = 11 : i64} {
  func.func @_convblock_kernel(%arg0: i32, %arg1: memref<8x640xbf16, #tpu.memory_space<vmem>>, %arg2: memref<1x640xf32, #tpu.memory_space<vmem>>, %arg3: memref<1x640xf32, #tpu.memory_space<vmem>>, %arg4: memref<640x128xbf16, #tpu.memory_space<vmem>>, %arg5: memref<1x128xf32, #tpu.memory_space<vmem>>, %arg6: memref<8x128xbf16, #tpu.memory_space<vmem>>) attributes {dimension_semantics = [#tpu.dimension_semantics<parallel>], iteration_bounds = array<i64: 1>, scalar_prefetch = 0 : i64, scratch_operands = 0 : i64, tpu.core_type = #tpu.core_type<tc>, window_params = [{transform_indices = @transform_0, window_bounds = array<i64: 8, 640>}, {pipeline_mode = #tpu.pipeline_mode<synchronous>, transform_indices = @transform_1, window_bounds = array<i64: 1, 640>}, {pipeline_mode = #tpu.pipeline_mode<synchronous>, transform_indices = @transform_2, window_bounds = array<i64: 1, 640>}, {pipeline_mode = #tpu.pipeline_mode<synchronous>, transform_indices = @transform_3, window_bounds = array<i64: 640, 128>}, {pipeline_mode = #tpu.pipeline_mode<synchronous>, transform_indices = @transform_4, window_bounds = array<i64: 1, 128>}, {transform_indices = @transform_5, window_bounds = array<i64: 8, 128>}]} {
    %c0 = arith.constant 0 : index
    %c0_0 = arith.constant 0 : index
    %0 = vector.load %arg1[%c0, %c0_0] : memref<8x640xbf16, #tpu.memory_space<vmem>>, vector<8x640xbf16>
    %1 = arith.extf %0 : vector<8x640xbf16> to vector<8x640xf32>
    %c0_1 = arith.constant 0 : index
    %c0_2 = arith.constant 0 : index
    %2 = vector.load %arg2[%c0_1, %c0_2] : memref<1x640xf32, #tpu.memory_space<vmem>>, vector<1x640xf32>
    %3 = vector.broadcast %2 : vector<1x640xf32> to vector<8x640xf32>
    %4 = arith.mulf %1, %3 : vector<8x640xf32>
    %c0_3 = arith.constant 0 : index
    %c0_4 = arith.constant 0 : index
    %5 = vector.load %arg3[%c0_3, %c0_4] : memref<1x640xf32, #tpu.memory_space<vmem>>, vector<1x640xf32>
    %6 = vector.broadcast %5 : vector<1x640xf32> to vector<8x640xf32>
    %7 = arith.addf %4, %6 : vector<8x640xf32>
    %cst = arith.constant 0.000000e+00 : f32
    %8 = vector.broadcast %cst : f32 to vector<8x640xf32>
    %9 = arith.cmpf ogt, %7, %8 : vector<8x640xf32>
    %cst_5 = arith.constant 0.00999999977 : f32
    %10 = vector.broadcast %cst_5 : f32 to vector<8x640xf32>
    %11 = arith.mulf %10, %7 : vector<8x640xf32>
    %12 = arith.select %9, %7, %11 : vector<8x640xi1>, vector<8x640xf32>
    %13 = arith.truncf %12 : vector<8x640xf32> to vector<8x640xbf16>
    %c0_6 = arith.constant 0 : index
    %c0_7 = arith.constant 0 : index
    %14 = vector.load %arg4[%c0_6, %c0_7] : memref<640x128xbf16, #tpu.memory_space<vmem>>, vector<640x128xbf16>
    %cst_8 = arith.constant dense<0.000000e+00> : vector<8x128xf32>
    %15 = tpu.matmul %13, %14, %cst_8 {dimension_numbers = #tpu.dot_dimension_numbers<[1], [0], [0], [1], [0, 0, 1, 1], [], []>} : vector<8x640xbf16>, vector<640x128xbf16>, vector<8x128xf32> -> vector<8x128xf32>
    %c0_9 = arith.constant 0 : index
    %c0_10 = arith.constant 0 : index
    %16 = vector.load %arg5[%c0_9, %c0_10] : memref<1x128xf32, #tpu.memory_space<vmem>>, vector<1x128xf32>
    %17 = vector.broadcast %16 : vector<1x128xf32> to vector<8x128xf32>
    %18 = arith.addf %15, %17 : vector<8x128xf32>
    %19 = arith.truncf %18 : vector<8x128xf32> to vector<8x128xbf16>
    %c0_11 = arith.constant 0 : index
    %c0_12 = arith.constant 0 : index
    %20 = vector.load %arg6[%c0_11, %c0_12] : memref<8x128xbf16, #tpu.memory_space<vmem>>, vector<8x128xbf16>
    tpu.vector_store %arg6[%c0_11, %c0_12], %19 {strides = array<i32>} : memref<8x128xbf16, #tpu.memory_space<vmem>>, vector<8x128xbf16>,
    return
  }
  func.func @transform_0(%arg0: i32) -> (i32, i32) {
    %c0_i32 = arith.constant 0 : i32
    %c0_i32_0 = arith.constant 0 : i32
    return %arg0, %c0_i32 : i32, i32
  }
  func.func @transform_1(%arg0: i32) -> (i32, i32) {
    %c0_i32 = arith.constant 0 : i32
    %c0_i32_0 = arith.constant 0 : i32
    %c0_i32_1 = arith.constant 0 : i32
    return %c0_i32, %c0_i32_0 : i32, i32
  }
  func.func @transform_2(%arg0: i32) -> (i32, i32) {
    %c0_i32 = arith.constant 0 : i32
    %c0_i32_0 = arith.constant 0 : i32
    %c0_i32_1 = arith.constant 0 : i32
    return %c0_i32, %c0_i32_0 : i32, i32
  }
  func.func @transform_3(%arg0: i32) -> (i32, i32) {
    %c0_i32 = arith.constant 0 : i32
    %c0_i32_0 = arith.constant 0 : i32
    %c0_i32_1 = arith.constant 0 : i32
    return %c0_i32, %c0_i32_0 : i32, i32
  }
  func.func @transform_4(%arg0: i32) -> (i32, i32) {
    %c0_i32 = arith.constant 0 : i32
    %c0_i32_0 = arith.constant 0 : i32
    %c0_i32_1 = arith.constant 0 : i32
    return %c0_i32, %c0_i32_0 : i32, i32
  }
  func.func @transform_5(%arg0: i32) -> (i32, i32) {
    %c0_i32 = arith.constant 0 : i32
    %c0_i32_0 = arith.constant 0 : i32
    return %arg0, %c0_i32 : i32, i32
  }
}

module attributes {stable_mosaic.version = 11 : i64} {
  func.func @_convblock_kernel(%arg0: i32, %arg1: memref<32x640xbf16, #tpu.memory_space<vmem>>, %arg2: memref<1x640xf32, #tpu.memory_space<vmem>>, %arg3: memref<1x640xf32, #tpu.memory_space<vmem>>, %arg4: memref<640x128xbf16, #tpu.memory_space<vmem>>, %arg5: memref<1x128xf32, #tpu.memory_space<vmem>>, %arg6: memref<32x128xbf16, #tpu.memory_space<vmem>>) attributes {dimension_semantics = [#tpu.dimension_semantics<parallel>], iteration_bounds = array<i64: 1>, scalar_prefetch = 0 : i64, scratch_operands = 0 : i64, tpu.core_type = #tpu.core_type<tc>, window_params = [{transform_indices = @transform_0, window_bounds = array<i64: 32, 640>}, {pipeline_mode = #tpu.pipeline_mode<synchronous>, transform_indices = @transform_1, window_bounds = array<i64: 1, 640>}, {pipeline_mode = #tpu.pipeline_mode<synchronous>, transform_indices = @transform_2, window_bounds = array<i64: 1, 640>}, {pipeline_mode = #tpu.pipeline_mode<synchronous>, transform_indices = @transform_3, window_bounds = array<i64: 640, 128>}, {pipeline_mode = #tpu.pipeline_mode<synchronous>, transform_indices = @transform_4, window_bounds = array<i64: 1, 128>}, {transform_indices = @transform_5, window_bounds = array<i64: 32, 128>}]} {
    %c0 = arith.constant 0 : index
    %c0_0 = arith.constant 0 : index
    %0 = vector.load %arg1[%c0, %c0_0] : memref<32x640xbf16, #tpu.memory_space<vmem>>, vector<32x640xbf16>
    %1 = arith.extf %0 : vector<32x640xbf16> to vector<32x640xf32>
    %c0_1 = arith.constant 0 : index
    %c0_2 = arith.constant 0 : index
    %2 = vector.load %arg2[%c0_1, %c0_2] : memref<1x640xf32, #tpu.memory_space<vmem>>, vector<1x640xf32>
    %3 = vector.broadcast %2 : vector<1x640xf32> to vector<32x640xf32>
    %4 = arith.mulf %1, %3 : vector<32x640xf32>
    %c0_3 = arith.constant 0 : index
    %c0_4 = arith.constant 0 : index
    %5 = vector.load %arg3[%c0_3, %c0_4] : memref<1x640xf32, #tpu.memory_space<vmem>>, vector<1x640xf32>
    %6 = vector.broadcast %5 : vector<1x640xf32> to vector<32x640xf32>
    %7 = arith.addf %4, %6 : vector<32x640xf32>
    %cst = arith.constant 0.000000e+00 : f32
    %8 = vector.broadcast %cst : f32 to vector<32x640xf32>
    %9 = arith.cmpf ogt, %7, %8 : vector<32x640xf32>
    %cst_5 = arith.constant 0.00999999977 : f32
    %10 = vector.broadcast %cst_5 : f32 to vector<32x640xf32>
    %11 = arith.mulf %10, %7 : vector<32x640xf32>
    %12 = arith.select %9, %7, %11 : vector<32x640xi1>, vector<32x640xf32>
    %13 = arith.truncf %12 : vector<32x640xf32> to vector<32x640xbf16>
    %c0_6 = arith.constant 0 : index
    %c0_7 = arith.constant 0 : index
    %14 = vector.load %arg4[%c0_6, %c0_7] : memref<640x128xbf16, #tpu.memory_space<vmem>>, vector<640x128xbf16>
    %cst_8 = arith.constant dense<0.000000e+00> : vector<32x128xf32>
    %15 = tpu.matmul %13, %14, %cst_8 {dimension_numbers = #tpu.dot_dimension_numbers<[1], [0], [0], [1], [0, 0, 1, 1], [], []>} : vector<32x640xbf16>, vector<640x128xbf16>, vector<32x128xf32> -> vector<32x128xf32>
    %c0_9 = arith.constant 0 : index
    %c0_10 = arith.constant 0 : index
    %16 = vector.load %arg5[%c0_9, %c0_10] : memref<1x128xf32, #tpu.memory_space<vmem>>, vector<1x128xf32>
    %17 = vector.broadcast %16 : vector<1x128xf32> to vector<32x128xf32>
    %18 = arith.addf %15, %17 : vector<32x128xf32>
    %19 = arith.truncf %18 : vector<32x128xf32> to vector<32x128xbf16>
    %c0_11 = arith.constant 0 : index
    %c0_12 = arith.constant 0 : index
    %20 = vector.load %arg6[%c0_11, %c0_12] : memref<32x128xbf16, #tpu.memory_space<vmem>>, vector<32x128xbf16>
    tpu.vector_store %arg6[%c0_11, %c0_12], %19 {strides = array<i32>} : memref<32x128xbf16, #tpu.memory_space<vmem>>, vector<32x128xbf16>,
    return
  }
  func.func @transform_0(%arg0: i32) -> (i32, i32) {
    %c0_i32 = arith.constant 0 : i32
    %c0_i32_0 = arith.constant 0 : i32
    return %arg0, %c0_i32 : i32, i32
  }
  func.func @transform_1(%arg0: i32) -> (i32, i32) {
    %c0_i32 = arith.constant 0 : i32
    %c0_i32_0 = arith.constant 0 : i32
    %c0_i32_1 = arith.constant 0 : i32
    return %c0_i32, %c0_i32_0 : i32, i32
  }
  func.func @transform_2(%arg0: i32) -> (i32, i32) {
    %c0_i32 = arith.constant 0 : i32
    %c0_i32_0 = arith.constant 0 : i32
    %c0_i32_1 = arith.constant 0 : i32
    return %c0_i32, %c0_i32_0 : i32, i32
  }
  func.func @transform_3(%arg0: i32) -> (i32, i32) {
    %c0_i32 = arith.constant 0 : i32
    %c0_i32_0 = arith.constant 0 : i32
    %c0_i32_1 = arith.constant 0 : i32
    return %c0_i32, %c0_i32_0 : i32, i32
  }
  func.func @transform_4(%arg0: i32) -> (i32, i32) {
    %c0_i32 = arith.constant 0 : i32
    %c0_i32_0 = arith.constant 0 : i32
    %c0_i32_1 = arith.constant 0 : i32
    return %c0_i32, %c0_i32_0 : i32, i32
  }
  func.func @transform_5(%arg0: i32) -> (i32, i32) {
    %c0_i32 = arith.constant 0 : i32
    %c0_i32_0 = arith.constant 0 : i32
    return %arg0, %c0_i32 : i32, i32
  }
}

module attributes {stable_mosaic.version = 11 : i64} {
  func.func @_convblock_kernel(%arg0: i32, %arg1: memref<128x384xbf16, #tpu.memory_space<vmem>>, %arg2: memref<1x384xf32, #tpu.memory_space<vmem>>, %arg3: memref<1x384xf32, #tpu.memory_space<vmem>>, %arg4: memref<384x128xbf16, #tpu.memory_space<vmem>>, %arg5: memref<1x128xf32, #tpu.memory_space<vmem>>, %arg6: memref<128x128xbf16, #tpu.memory_space<vmem>>) attributes {dimension_semantics = [#tpu.dimension_semantics<parallel>], iteration_bounds = array<i64: 1>, scalar_prefetch = 0 : i64, scratch_operands = 0 : i64, tpu.core_type = #tpu.core_type<tc>, window_params = [{transform_indices = @transform_0, window_bounds = array<i64: 128, 384>}, {pipeline_mode = #tpu.pipeline_mode<synchronous>, transform_indices = @transform_1, window_bounds = array<i64: 1, 384>}, {pipeline_mode = #tpu.pipeline_mode<synchronous>, transform_indices = @transform_2, window_bounds = array<i64: 1, 384>}, {pipeline_mode = #tpu.pipeline_mode<synchronous>, transform_indices = @transform_3, window_bounds = array<i64: 384, 128>}, {pipeline_mode = #tpu.pipeline_mode<synchronous>, transform_indices = @transform_4, window_bounds = array<i64: 1, 128>}, {transform_indices = @transform_5, window_bounds = array<i64: 128, 128>}]} {
    %c0 = arith.constant 0 : index
    %c0_0 = arith.constant 0 : index
    %0 = vector.load %arg1[%c0, %c0_0] : memref<128x384xbf16, #tpu.memory_space<vmem>>, vector<128x384xbf16>
    %1 = arith.extf %0 : vector<128x384xbf16> to vector<128x384xf32>
    %c0_1 = arith.constant 0 : index
    %c0_2 = arith.constant 0 : index
    %2 = vector.load %arg2[%c0_1, %c0_2] : memref<1x384xf32, #tpu.memory_space<vmem>>, vector<1x384xf32>
    %3 = vector.broadcast %2 : vector<1x384xf32> to vector<128x384xf32>
    %4 = arith.mulf %1, %3 : vector<128x384xf32>
    %c0_3 = arith.constant 0 : index
    %c0_4 = arith.constant 0 : index
    %5 = vector.load %arg3[%c0_3, %c0_4] : memref<1x384xf32, #tpu.memory_space<vmem>>, vector<1x384xf32>
    %6 = vector.broadcast %5 : vector<1x384xf32> to vector<128x384xf32>
    %7 = arith.addf %4, %6 : vector<128x384xf32>
    %cst = arith.constant 0.000000e+00 : f32
    %8 = vector.broadcast %cst : f32 to vector<128x384xf32>
    %9 = arith.cmpf ogt, %7, %8 : vector<128x384xf32>
    %cst_5 = arith.constant 0.00999999977 : f32
    %10 = vector.broadcast %cst_5 : f32 to vector<128x384xf32>
    %11 = arith.mulf %10, %7 : vector<128x384xf32>
    %12 = arith.select %9, %7, %11 : vector<128x384xi1>, vector<128x384xf32>
    %13 = arith.truncf %12 : vector<128x384xf32> to vector<128x384xbf16>
    %c0_6 = arith.constant 0 : index
    %c0_7 = arith.constant 0 : index
    %14 = vector.load %arg4[%c0_6, %c0_7] : memref<384x128xbf16, #tpu.memory_space<vmem>>, vector<384x128xbf16>
    %cst_8 = arith.constant dense<0.000000e+00> : vector<128x128xf32>
    %15 = tpu.matmul %13, %14, %cst_8 {dimension_numbers = #tpu.dot_dimension_numbers<[1], [0], [0], [1], [0, 0, 1, 1], [], []>} : vector<128x384xbf16>, vector<384x128xbf16>, vector<128x128xf32> -> vector<128x128xf32>
    %c0_9 = arith.constant 0 : index
    %c0_10 = arith.constant 0 : index
    %16 = vector.load %arg5[%c0_9, %c0_10] : memref<1x128xf32, #tpu.memory_space<vmem>>, vector<1x128xf32>
    %17 = vector.broadcast %16 : vector<1x128xf32> to vector<128x128xf32>
    %18 = arith.addf %15, %17 : vector<128x128xf32>
    %19 = arith.truncf %18 : vector<128x128xf32> to vector<128x128xbf16>
    %c0_11 = arith.constant 0 : index
    %c0_12 = arith.constant 0 : index
    %20 = vector.load %arg6[%c0_11, %c0_12] : memref<128x128xbf16, #tpu.memory_space<vmem>>, vector<128x128xbf16>
    tpu.vector_store %arg6[%c0_11, %c0_12], %19 {strides = array<i32>} : memref<128x128xbf16, #tpu.memory_space<vmem>>, vector<128x128xbf16>,
    return
  }
  func.func @transform_0(%arg0: i32) -> (i32, i32) {
    %c0_i32 = arith.constant 0 : i32
    %c0_i32_0 = arith.constant 0 : i32
    return %arg0, %c0_i32 : i32, i32
  }
  func.func @transform_1(%arg0: i32) -> (i32, i32) {
    %c0_i32 = arith.constant 0 : i32
    %c0_i32_0 = arith.constant 0 : i32
    %c0_i32_1 = arith.constant 0 : i32
    return %c0_i32, %c0_i32_0 : i32, i32
  }
  func.func @transform_2(%arg0: i32) -> (i32, i32) {
    %c0_i32 = arith.constant 0 : i32
    %c0_i32_0 = arith.constant 0 : i32
    %c0_i32_1 = arith.constant 0 : i32
    return %c0_i32, %c0_i32_0 : i32, i32
  }
  func.func @transform_3(%arg0: i32) -> (i32, i32) {
    %c0_i32 = arith.constant 0 : i32
    %c0_i32_0 = arith.constant 0 : i32
    %c0_i32_1 = arith.constant 0 : i32
    return %c0_i32, %c0_i32_0 : i32, i32
  }
  func.func @transform_4(%arg0: i32) -> (i32, i32) {
    %c0_i32 = arith.constant 0 : i32
    %c0_i32_0 = arith.constant 0 : i32
    %c0_i32_1 = arith.constant 0 : i32
    return %c0_i32, %c0_i32_0 : i32, i32
  }
  func.func @transform_5(%arg0: i32) -> (i32, i32) {
    %c0_i32 = arith.constant 0 : i32
    %c0_i32_0 = arith.constant 0 : i32
    return %arg0, %c0_i32 : i32, i32
  }
}

module attributes {stable_mosaic.version = 11 : i64} {
  func.func @_convblock_skip_kernel(%arg0: i32, %arg1: memref<512x128xbf16, #tpu.memory_space<vmem>>, %arg2: memref<1x128xf32, #tpu.memory_space<vmem>>, %arg3: memref<1x128xf32, #tpu.memory_space<vmem>>, %arg4: memref<128x128xbf16, #tpu.memory_space<vmem>>, %arg5: memref<1x128xf32, #tpu.memory_space<vmem>>, %arg6: memref<512x128xbf16, #tpu.memory_space<vmem>>, %arg7: memref<512x128xbf16, #tpu.memory_space<vmem>>) attributes {dimension_semantics = [#tpu.dimension_semantics<parallel>], iteration_bounds = array<i64: 1>, scalar_prefetch = 0 : i64, scratch_operands = 0 : i64, tpu.core_type = #tpu.core_type<tc>, window_params = [{transform_indices = @transform_0, window_bounds = array<i64: 512, 128>}, {pipeline_mode = #tpu.pipeline_mode<synchronous>, transform_indices = @transform_1, window_bounds = array<i64: 1, 128>}, {pipeline_mode = #tpu.pipeline_mode<synchronous>, transform_indices = @transform_2, window_bounds = array<i64: 1, 128>}, {pipeline_mode = #tpu.pipeline_mode<synchronous>, transform_indices = @transform_3, window_bounds = array<i64: 128, 128>}, {pipeline_mode = #tpu.pipeline_mode<synchronous>, transform_indices = @transform_4, window_bounds = array<i64: 1, 128>}, {transform_indices = @transform_5, window_bounds = array<i64: 512, 128>}, {transform_indices = @transform_6, window_bounds = array<i64: 512, 128>}]} {
    %c0 = arith.constant 0 : index
    %c0_0 = arith.constant 0 : index
    %0 = vector.load %arg1[%c0, %c0_0] : memref<512x128xbf16, #tpu.memory_space<vmem>>, vector<512x128xbf16>
    %1 = arith.extf %0 : vector<512x128xbf16> to vector<512x128xf32>
    %c0_1 = arith.constant 0 : index
    %c0_2 = arith.constant 0 : index
    %2 = vector.load %arg2[%c0_1, %c0_2] : memref<1x128xf32, #tpu.memory_space<vmem>>, vector<1x128xf32>
    %3 = vector.broadcast %2 : vector<1x128xf32> to vector<512x128xf32>
    %4 = arith.mulf %1, %3 : vector<512x128xf32>
    %c0_3 = arith.constant 0 : index
    %c0_4 = arith.constant 0 : index
    %5 = vector.load %arg3[%c0_3, %c0_4] : memref<1x128xf32, #tpu.memory_space<vmem>>, vector<1x128xf32>
    %6 = vector.broadcast %5 : vector<1x128xf32> to vector<512x128xf32>
    %7 = arith.addf %4, %6 : vector<512x128xf32>
    %cst = arith.constant 0.000000e+00 : f32
    %8 = vector.broadcast %cst : f32 to vector<512x128xf32>
    %9 = arith.cmpf ogt, %7, %8 : vector<512x128xf32>
    %cst_5 = arith.constant 0.00999999977 : f32
    %10 = vector.broadcast %cst_5 : f32 to vector<512x128xf32>
    %11 = arith.mulf %10, %7 : vector<512x128xf32>
    %12 = arith.select %9, %7, %11 : vector<512x128xi1>, vector<512x128xf32>
    %13 = arith.truncf %12 : vector<512x128xf32> to vector<512x128xbf16>
    %c0_6 = arith.constant 0 : index
    %c0_7 = arith.constant 0 : index
    %14 = vector.load %arg4[%c0_6, %c0_7] : memref<128x128xbf16, #tpu.memory_space<vmem>>, vector<128x128xbf16>
    %cst_8 = arith.constant dense<0.000000e+00> : vector<512x128xf32>
    %15 = tpu.matmul %13, %14, %cst_8 {dimension_numbers = #tpu.dot_dimension_numbers<[1], [0], [0], [1], [0, 0, 1, 1], [], []>} : vector<512x128xbf16>, vector<128x128xbf16>, vector<512x128xf32> -> vector<512x128xf32>
    %c0_9 = arith.constant 0 : index
    %c0_10 = arith.constant 0 : index
    %16 = vector.load %arg5[%c0_9, %c0_10] : memref<1x128xf32, #tpu.memory_space<vmem>>, vector<1x128xf32>
    %17 = vector.broadcast %16 : vector<1x128xf32> to vector<512x128xf32>
    %18 = arith.addf %15, %17 : vector<512x128xf32>
    %c0_11 = arith.constant 0 : index
    %c0_12 = arith.constant 0 : index
    %19 = vector.load %arg6[%c0_11, %c0_12] : memref<512x128xbf16, #tpu.memory_space<vmem>>, vector<512x128xbf16>
    %20 = arith.extf %19 : vector<512x128xbf16> to vector<512x128xf32>
    %21 = arith.addf %18, %20 : vector<512x128xf32>
    %22 = arith.truncf %21 : vector<512x128xf32> to vector<512x128xbf16>
    %c0_13 = arith.constant 0 : index
    %c0_14 = arith.constant 0 : index
    %23 = vector.load %arg7[%c0_13, %c0_14] : memref<512x128xbf16, #tpu.memory_space<vmem>>, vector<512x128xbf16>
    tpu.vector_store %arg7[%c0_13, %c0_14], %22 {strides = array<i32>} : memref<512x128xbf16, #tpu.memory_space<vmem>>, vector<512x128xbf16>,
    return
  }
  func.func @transform_0(%arg0: i32) -> (i32, i32) {
    %c0_i32 = arith.constant 0 : i32
    %c0_i32_0 = arith.constant 0 : i32
    return %arg0, %c0_i32 : i32, i32
  }
  func.func @transform_1(%arg0: i32) -> (i32, i32) {
    %c0_i32 = arith.constant 0 : i32
    %c0_i32_0 = arith.constant 0 : i32
    %c0_i32_1 = arith.constant 0 : i32
    return %c0_i32, %c0_i32_0 : i32, i32
  }
  func.func @transform_2(%arg0: i32) -> (i32, i32) {
    %c0_i32 = arith.constant 0 : i32
    %c0_i32_0 = arith.constant 0 : i32
    %c0_i32_1 = arith.constant 0 : i32
    return %c0_i32, %c0_i32_0 : i32, i32
  }
  func.func @transform_3(%arg0: i32) -> (i32, i32) {
    %c0_i32 = arith.constant 0 : i32
    %c0_i32_0 = arith.constant 0 : i32
    %c0_i32_1 = arith.constant 0 : i32
    return %c0_i32, %c0_i32_0 : i32, i32
  }
  func.func @transform_4(%arg0: i32) -> (i32, i32) {
    %c0_i32 = arith.constant 0 : i32
    %c0_i32_0 = arith.constant 0 : i32
    %c0_i32_1 = arith.constant 0 : i32
    return %c0_i32, %c0_i32_0 : i32, i32
  }
  func.func @transform_5(%arg0: i32) -> (i32, i32) {
    %c0_i32 = arith.constant 0 : i32
    %c0_i32_0 = arith.constant 0 : i32
    return %arg0, %c0_i32 : i32, i32
  }
  func.func @transform_6(%arg0: i32) -> (i32, i32) {
    %c0_i32 = arith.constant 0 : i32
    %c0_i32_0 = arith.constant 0 : i32
    return %arg0, %c0_i32 : i32, i32
  }
}

module attributes {stable_mosaic.version = 11 : i64} {
  func.func @_convblock_kernel(%arg0: i32, %arg1: memref<512x128xbf16, #tpu.memory_space<vmem>>, %arg2: memref<1x128xf32, #tpu.memory_space<vmem>>, %arg3: memref<1x128xf32, #tpu.memory_space<vmem>>, %arg4: memref<128x128xbf16, #tpu.memory_space<vmem>>, %arg5: memref<1x128xf32, #tpu.memory_space<vmem>>, %arg6: memref<512x128xbf16, #tpu.memory_space<vmem>>) attributes {dimension_semantics = [#tpu.dimension_semantics<parallel>], iteration_bounds = array<i64: 1>, scalar_prefetch = 0 : i64, scratch_operands = 0 : i64, tpu.core_type = #tpu.core_type<tc>, window_params = [{transform_indices = @transform_0, window_bounds = array<i64: 512, 128>}, {pipeline_mode = #tpu.pipeline_mode<synchronous>, transform_indices = @transform_1, window_bounds = array<i64: 1, 128>}, {pipeline_mode = #tpu.pipeline_mode<synchronous>, transform_indices = @transform_2, window_bounds = array<i64: 1, 128>}, {pipeline_mode = #tpu.pipeline_mode<synchronous>, transform_indices = @transform_3, window_bounds = array<i64: 128, 128>}, {pipeline_mode = #tpu.pipeline_mode<synchronous>, transform_indices = @transform_4, window_bounds = array<i64: 1, 128>}, {transform_indices = @transform_5, window_bounds = array<i64: 512, 128>}]} {
    %c0 = arith.constant 0 : index
    %c0_0 = arith.constant 0 : index
    %0 = vector.load %arg1[%c0, %c0_0] : memref<512x128xbf16, #tpu.memory_space<vmem>>, vector<512x128xbf16>
    %1 = arith.extf %0 : vector<512x128xbf16> to vector<512x128xf32>
    %c0_1 = arith.constant 0 : index
    %c0_2 = arith.constant 0 : index
    %2 = vector.load %arg2[%c0_1, %c0_2] : memref<1x128xf32, #tpu.memory_space<vmem>>, vector<1x128xf32>
    %3 = vector.broadcast %2 : vector<1x128xf32> to vector<512x128xf32>
    %4 = arith.mulf %1, %3 : vector<512x128xf32>
    %c0_3 = arith.constant 0 : index
    %c0_4 = arith.constant 0 : index
    %5 = vector.load %arg3[%c0_3, %c0_4] : memref<1x128xf32, #tpu.memory_space<vmem>>, vector<1x128xf32>
    %6 = vector.broadcast %5 : vector<1x128xf32> to vector<512x128xf32>
    %7 = arith.addf %4, %6 : vector<512x128xf32>
    %cst = arith.constant 0.000000e+00 : f32
    %8 = vector.broadcast %cst : f32 to vector<512x128xf32>
    %9 = arith.cmpf ogt, %7, %8 : vector<512x128xf32>
    %cst_5 = arith.constant 0.00999999977 : f32
    %10 = vector.broadcast %cst_5 : f32 to vector<512x128xf32>
    %11 = arith.mulf %10, %7 : vector<512x128xf32>
    %12 = arith.select %9, %7, %11 : vector<512x128xi1>, vector<512x128xf32>
    %13 = arith.truncf %12 : vector<512x128xf32> to vector<512x128xbf16>
    %c0_6 = arith.constant 0 : index
    %c0_7 = arith.constant 0 : index
    %14 = vector.load %arg4[%c0_6, %c0_7] : memref<128x128xbf16, #tpu.memory_space<vmem>>, vector<128x128xbf16>
    %cst_8 = arith.constant dense<0.000000e+00> : vector<512x128xf32>
    %15 = tpu.matmul %13, %14, %cst_8 {dimension_numbers = #tpu.dot_dimension_numbers<[1], [0], [0], [1], [0, 0, 1, 1], [], []>} : vector<512x128xbf16>, vector<128x128xbf16>, vector<512x128xf32> -> vector<512x128xf32>
    %c0_9 = arith.constant 0 : index
    %c0_10 = arith.constant 0 : index
    %16 = vector.load %arg5[%c0_9, %c0_10] : memref<1x128xf32, #tpu.memory_space<vmem>>, vector<1x128xf32>
    %17 = vector.broadcast %16 : vector<1x128xf32> to vector<512x128xf32>
    %18 = arith.addf %15, %17 : vector<512x128xf32>
    %19 = arith.truncf %18 : vector<512x128xf32> to vector<512x128xbf16>
    %c0_11 = arith.constant 0 : index
    %c0_12 = arith.constant 0 : index
    %20 = vector.load %arg6[%c0_11, %c0_12] : memref<512x128xbf16, #tpu.memory_space<vmem>>, vector<512x128xbf16>
    tpu.vector_store %arg6[%c0_11, %c0_12], %19 {strides = array<i32>} : memref<512x128xbf16, #tpu.memory_space<vmem>>, vector<512x128xbf16>,
    return
  }
  func.func @transform_0(%arg0: i32) -> (i32, i32) {
    %c0_i32 = arith.constant 0 : i32
    %c0_i32_0 = arith.constant 0 : i32
    return %arg0, %c0_i32 : i32, i32
  }
  func.func @transform_1(%arg0: i32) -> (i32, i32) {
    %c0_i32 = arith.constant 0 : i32
    %c0_i32_0 = arith.constant 0 : i32
    %c0_i32_1 = arith.constant 0 : i32
    return %c0_i32, %c0_i32_0 : i32, i32
  }
  func.func @transform_2(%arg0: i32) -> (i32, i32) {
    %c0_i32 = arith.constant 0 : i32
    %c0_i32_0 = arith.constant 0 : i32
    %c0_i32_1 = arith.constant 0 : i32
    return %c0_i32, %c0_i32_0 : i32, i32
  }
  func.func @transform_3(%arg0: i32) -> (i32, i32) {
    %c0_i32 = arith.constant 0 : i32
    %c0_i32_0 = arith.constant 0 : i32
    %c0_i32_1 = arith.constant 0 : i32
    return %c0_i32, %c0_i32_0 : i32, i32
  }
  func.func @transform_4(%arg0: i32) -> (i32, i32) {
    %c0_i32 = arith.constant 0 : i32
    %c0_i32_0 = arith.constant 0 : i32
    %c0_i32_1 = arith.constant 0 : i32
    return %c0_i32, %c0_i32_0 : i32, i32
  }
  func.func @transform_5(%arg0: i32) -> (i32, i32) {
    %c0_i32 = arith.constant 0 : i32
    %c0_i32_0 = arith.constant 0 : i32
    return %arg0, %c0_i32 : i32, i32
  }
}

module attributes {stable_mosaic.version = 11 : i64} {
  func.func @_convblock_tail_kernel(%arg0: i32, %arg1: memref<512x128xbf16, #tpu.memory_space<vmem>>, %arg2: memref<1x128xf32, #tpu.memory_space<vmem>>, %arg3: memref<1x128xf32, #tpu.memory_space<vmem>>, %arg4: memref<128x128xbf16, #tpu.memory_space<vmem>>, %arg5: memref<1x128xf32, #tpu.memory_space<vmem>>, %arg6: memref<128x128xbf16, #tpu.memory_space<vmem>>, %arg7: memref<1x128xf32, #tpu.memory_space<vmem>>, %arg8: memref<512x128xf32, #tpu.memory_space<vmem>>) attributes {dimension_semantics = [#tpu.dimension_semantics<parallel>], iteration_bounds = array<i64: 1>, scalar_prefetch = 0 : i64, scratch_operands = 0 : i64, tpu.core_type = #tpu.core_type<tc>, window_params = [{transform_indices = @transform_0, window_bounds = array<i64: 512, 128>}, {pipeline_mode = #tpu.pipeline_mode<synchronous>, transform_indices = @transform_1, window_bounds = array<i64: 1, 128>}, {pipeline_mode = #tpu.pipeline_mode<synchronous>, transform_indices = @transform_2, window_bounds = array<i64: 1, 128>}, {pipeline_mode = #tpu.pipeline_mode<synchronous>, transform_indices = @transform_3, window_bounds = array<i64: 128, 128>}, {pipeline_mode = #tpu.pipeline_mode<synchronous>, transform_indices = @transform_4, window_bounds = array<i64: 1, 128>}, {pipeline_mode = #tpu.pipeline_mode<synchronous>, transform_indices = @transform_5, window_bounds = array<i64: 128, 128>}, {pipeline_mode = #tpu.pipeline_mode<synchronous>, transform_indices = @transform_6, window_bounds = array<i64: 1, 128>}, {transform_indices = @transform_7, window_bounds = array<i64: 512, 128>}]} {
    %c0 = arith.constant 0 : index
    %c0_0 = arith.constant 0 : index
    %0 = vector.load %arg1[%c0, %c0_0] : memref<512x128xbf16, #tpu.memory_space<vmem>>, vector<512x128xbf16>
    %1 = arith.extf %0 : vector<512x128xbf16> to vector<512x128xf32>
    %c0_1 = arith.constant 0 : index
    %c0_2 = arith.constant 0 : index
    %2 = vector.load %arg2[%c0_1, %c0_2] : memref<1x128xf32, #tpu.memory_space<vmem>>, vector<1x128xf32>
    %3 = vector.broadcast %2 : vector<1x128xf32> to vector<512x128xf32>
    %4 = arith.mulf %1, %3 : vector<512x128xf32>
    %c0_3 = arith.constant 0 : index
    %c0_4 = arith.constant 0 : index
    %5 = vector.load %arg3[%c0_3, %c0_4] : memref<1x128xf32, #tpu.memory_space<vmem>>, vector<1x128xf32>
    %6 = vector.broadcast %5 : vector<1x128xf32> to vector<512x128xf32>
    %7 = arith.addf %4, %6 : vector<512x128xf32>
    %cst = arith.constant 0.000000e+00 : f32
    %8 = vector.broadcast %cst : f32 to vector<512x128xf32>
    %9 = arith.cmpf ogt, %7, %8 : vector<512x128xf32>
    %cst_5 = arith.constant 0.00999999977 : f32
    %10 = vector.broadcast %cst_5 : f32 to vector<512x128xf32>
    %11 = arith.mulf %10, %7 : vector<512x128xf32>
    %12 = arith.select %9, %7, %11 : vector<512x128xi1>, vector<512x128xf32>
    %13 = arith.truncf %12 : vector<512x128xf32> to vector<512x128xbf16>
    %c0_6 = arith.constant 0 : index
    %c0_7 = arith.constant 0 : index
    %14 = vector.load %arg4[%c0_6, %c0_7] : memref<128x128xbf16, #tpu.memory_space<vmem>>, vector<128x128xbf16>
    %cst_8 = arith.constant dense<0.000000e+00> : vector<512x128xf32>
    %15 = tpu.matmul %13, %14, %cst_8 {dimension_numbers = #tpu.dot_dimension_numbers<[1], [0], [0], [1], [0, 0, 1, 1], [], []>} : vector<512x128xbf16>, vector<128x128xbf16>, vector<512x128xf32> -> vector<512x128xf32>
    %c0_9 = arith.constant 0 : index
    %c0_10 = arith.constant 0 : index
    %16 = vector.load %arg5[%c0_9, %c0_10] : memref<1x128xf32, #tpu.memory_space<vmem>>, vector<1x128xf32>
    %17 = vector.broadcast %16 : vector<1x128xf32> to vector<512x128xf32>
    %18 = arith.addf %15, %17 : vector<512x128xf32>
    %19 = arith.truncf %18 : vector<512x128xf32> to vector<512x128xbf16>
    %c0_11 = arith.constant 0 : index
    %c0_12 = arith.constant 0 : index
    %20 = vector.load %arg6[%c0_11, %c0_12] : memref<128x128xbf16, #tpu.memory_space<vmem>>, vector<128x128xbf16>
    %cst_13 = arith.constant dense<0.000000e+00> : vector<512x128xf32>
    %21 = tpu.matmul %19, %20, %cst_13 {dimension_numbers = #tpu.dot_dimension_numbers<[1], [0], [0], [1], [0, 0, 1, 1], [], []>} : vector<512x128xbf16>, vector<128x128xbf16>, vector<512x128xf32> -> vector<512x128xf32>
    %c0_14 = arith.constant 0 : index
    %c0_15 = arith.constant 0 : index
    %22 = vector.load %arg7[%c0_14, %c0_15] : memref<1x128xf32, #tpu.memory_space<vmem>>, vector<1x128xf32>
    %23 = vector.broadcast %22 : vector<1x128xf32> to vector<512x128xf32>
    %24 = arith.addf %21, %23 : vector<512x128xf32>
    %c0_16 = arith.constant 0 : index
    %c0_17 = arith.constant 0 : index
    %25 = vector.load %arg8[%c0_16, %c0_17] : memref<512x128xf32, #tpu.memory_space<vmem>>, vector<512x128xf32>
    tpu.vector_store %arg8[%c0_16, %c0_17], %24 {strides = array<i32>} : memref<512x128xf32, #tpu.memory_space<vmem>>, vector<512x128xf32>,
    return
  }
  func.func @transform_0(%arg0: i32) -> (i32, i32) {
    %c0_i32 = arith.constant 0 : i32
    %c0_i32_0 = arith.constant 0 : i32
    return %arg0, %c0_i32 : i32, i32
  }
  func.func @transform_1(%arg0: i32) -> (i32, i32) {
    %c0_i32 = arith.constant 0 : i32
    %c0_i32_0 = arith.constant 0 : i32
    %c0_i32_1 = arith.constant 0 : i32
    return %c0_i32, %c0_i32_0 : i32, i32
  }
  func.func @transform_2(%arg0: i32) -> (i32, i32) {
    %c0_i32 = arith.constant 0 : i32
    %c0_i32_0 = arith.constant 0 : i32
    %c0_i32_1 = arith.constant 0 : i32
    return %c0_i32, %c0_i32_0 : i32, i32
  }
  func.func @transform_3(%arg0: i32) -> (i32, i32) {
    %c0_i32 = arith.constant 0 : i32
    %c0_i32_0 = arith.constant 0 : i32
    %c0_i32_1 = arith.constant 0 : i32
    return %c0_i32, %c0_i32_0 : i32, i32
  }
  func.func @transform_4(%arg0: i32) -> (i32, i32) {
    %c0_i32 = arith.constant 0 : i32
    %c0_i32_0 = arith.constant 0 : i32
    %c0_i32_1 = arith.constant 0 : i32
    return %c0_i32, %c0_i32_0 : i32, i32
  }
  func.func @transform_5(%arg0: i32) -> (i32, i32) {
    %c0_i32 = arith.constant 0 : i32
    %c0_i32_0 = arith.constant 0 : i32
    %c0_i32_1 = arith.constant 0 : i32
    return %c0_i32, %c0_i32_0 : i32, i32
  }
  func.func @transform_6(%arg0: i32) -> (i32, i32) {
    %c0_i32 = arith.constant 0 : i32
    %c0_i32_0 = arith.constant 0 : i32
    %c0_i32_1 = arith.constant 0 : i32
    return %c0_i32, %c0_i32_0 : i32, i32
  }
  func.func @transform_7(%arg0: i32) -> (i32, i32) {
    %c0_i32 = arith.constant 0 : i32
    %c0_i32_0 = arith.constant 0 : i32
    return %arg0, %c0_i32 : i32, i32
  }
}

</mosaic_0001>

<llo_original>
// kernel: encoder_forward.27
$region0: #{encoder_forward.27}
  #allocation0 [shape = 'u32[]', space=smem, size = 0x4, offset = 0x4, fixed_abs, tag = 'smem constant byte address 0x4 - core index']
  #allocation1 [shape = 'u32[72,128]{1,0:T(1,128)}', space=vmem, size = 0x9000, scoped, tag = 'internal scratch']
  %s0 = inlined_call_operand.vmem [shape: bf16[512,256], index: 0, kind: input, shape index: {}]
  %s1 = inlined_call_operand.vmem [shape: f32[1,256], index: 1, kind: input, shape index: {}]
  %s2 = inlined_call_operand.vmem [shape: f32[1,256], index: 2, kind: input, shape index: {}]
  %s3 = inlined_call_operand.vmem [shape: bf16[256,128], index: 3, kind: input, shape index: {}]
  %s4 = inlined_call_operand.vmem [shape: f32[1,128], index: 4, kind: input, shape index: {}]
  %s5 = inlined_call_operand.vmem [shape: bf16[512,128], index: 5, kind: output, shape index: {}]
  %s6 = sld [smem:[#allocation0]]
  $region30: #{encoder_forward.27} parent=0
    _
  %s8 = ssub.s32 1, %s6
  %s9 = scalar_select 0, %s8, %s6
  // Predicated region
  $region2: #{encoder_forward.27} parent=0 // pred_check
    _
  $region3: #{encoder_forward.27} parent=0 // pred_check_branch
    %11 = sbr.rel (0) target = $region5
  $region4: #{encoder_forward.27} parent=0 // pred_region
    _
  $region5: #{encoder_forward.27} parent=0 // pred_fallthru
    _
  // Predicated region
  $region6: #{encoder_forward.27} parent=0 // pred_check
    _
  $region7: #{encoder_forward.27} parent=0 // pred_check_branch
    %13 = sbr.rel (0) target = $region9
  $region8: #{encoder_forward.27} parent=0 // pred_region
    _
  $region9: #{encoder_forward.27} parent=0 // pred_fallthru
    _
  // Predicated region
  $region10: #{encoder_forward.27} parent=0 // pred_check
    _
  $region11: #{encoder_forward.27} parent=0 // pred_check_branch
    %15 = sbr.rel (0) target = $region13
  $region12: #{encoder_forward.27} parent=0 // pred_region
    _
  $region13: #{encoder_forward.27} parent=0 // pred_fallthru
    _
  // Predicated region
  $region14: #{encoder_forward.27} parent=0 // pred_check
    _
  $region15: #{encoder_forward.27} parent=0 // pred_check_branch
    %17 = sbr.rel (0) target = $region17
  $region16: #{encoder_forward.27} parent=0 // pred_region
    _
  $region17: #{encoder_forward.27} parent=0 // pred_fallthru
    _
  // Predicated region
  $region18: #{encoder_forward.27} parent=0 // pred_check
    _
  $region19: #{encoder_forward.27} parent=0 // pred_check_branch
    %19 = sbr.rel (0) target = $region21
  $region20: #{encoder_forward.27} parent=0 // pred_region
    _
  $region21: #{encoder_forward.27} parent=0 // pred_fallthru
    _
  %v20 = vld [vmem:[%s0] sm:$0xff]
  %v21 = vld [vmem:[%s0 + $0x8] sm:$0xff]
  %v22 = vld [vmem:[%s0 + $0x10] sm:$0xff]
  %v23 = vld [vmem:[%s0 + $0x18] sm:$0xff]
  %v24 = vld [vmem:[%s0 + $0x20] sm:$0xff]
  %v25 = vld [vmem:[%s0 + $0x28] sm:$0xff]
  %v26 = vld [vmem:[%s0 + $0x30] sm:$0xff]
  %v27 = vld [vmem:[%s0 + $0x38] sm:$0xff]
  %v28 = vld [vmem:[%s0 + $0x40] sm:$0xff]
  %v29 = vld [vmem:[%s0 + $0x48] sm:$0xff]
  %v30 = vld [vmem:[%s0 + $0x50] sm:$0xff]
  %v31 = vld [vmem:[%s0 + $0x58] sm:$0xff]
  %v32 = vld [vmem:[%s0 + $0x60] sm:$0xff]
  %v33 = vld [vmem:[%s0 + $0x68] sm:$0xff]
  %v34 = vld [vmem:[%s0 + $0x70] sm:$0xff]
  %v35 = vld [vmem:[%s0 + $0x78] sm:$0xff]
  %v36 = vld [vmem:[%s0 + $0x80] sm:$0xff]
  %v37 = vld [vmem:[%s0 + $0x88] sm:$0xff]
  %v38 = vld [vmem:[%s0 + $0x90] sm:$0xff]
  %v39 = vld [vmem:[%s0 + $0x98] sm:$0xff]
  %v40 = vld [vmem:[%s0 + $0xa0] sm:$0xff]
  %v41 = vld [vmem:[%s0 + $0xa8] sm:$0xff]
  %v42 = vld [vmem:[%s0 + $0xb0] sm:$0xff]
  %v43 = vld [vmem:[%s0 + $0xb8] sm:$0xff]
  %v44 = vld [vmem:[%s0 + $0xc0] sm:$0xff]
  %v45 = vld [vmem:[%s0 + $0xc8] sm:$0xff]
  %v46 = vld [vmem:[%s0 + $0xd0] sm:$0xff]
  %v47 = vld [vmem:[%s0 + $0xd8] sm:$0xff]
  %v48 = vld [vmem:[%s0 + $0xe0] sm:$0xff]
  %v49 = vld [vmem:[%s0 + $0xe8] sm:$0xff]
  %v50 = vld [vmem:[%s0 + $0xf0] sm:$0xff]
  %v51 = vld [vmem:[%s0 + $0xf8] sm:$0xff]
  %v52 = vld [vmem:[%s0 + $0x100] sm:$0xff]
  %v53 = vld [vmem:[%s0 + $0x108] sm:$0xff]
  %v54 = vld [vmem:[%s0 + $0x110] sm:$0xff]
  %v55 = vld [vmem:[%s0 + $0x118] sm:$0xff]
  %v56 = vld [vmem:[%s0 + $0x120] sm:$0xff]
  %v57 = vld [vmem:[%s0 + $0x128] sm:$0xff]
  %v58 = vld [vmem:[%s0 + $0x130] sm:$0xff]
  %v59 = vld [vmem:[%s0 + $0x138] sm:$0xff]
  %v60 = vld [vmem:[%s0 + $0x140] sm:$0xff]
  %v61 = vld [vmem:[%s0 + $0x148] sm:$0xff]
  %v62 = vld [vmem:[%s0 + $0x150] sm:$0xff]
  %v63 = vld [vmem:[%s0 + $0x158] sm:$0xff]
  %v64 = vld [vmem:[%s0 + $0x160] sm:$0xff]
  %v65 = vld [vmem:[%s0 + $0x168] sm:$0xff]
  %v66 = vld [vmem:[%s0 + $0x170] sm:$0xff]
  %v67 = vld [vmem:[%s0 + $0x178] sm:$0xff]
  %v68 = vld [vmem:[%s0 + $0x180] sm:$0xff]
  %v69 = vld [vmem:[%s0 + $0x188] sm:$0xff]
  %v70 = vld [vmem:[%s0 + $0x190] sm:$0xff]
  %v71 = vld [vmem:[%s0 + $0x198] sm:$0xff]
  %v72 = vld [vmem:[%s0 + $0x1a0] sm:$0xff]
  %v73 = vld [vmem:[%s0 + $0x1a8] sm:$0xff]
  %v74 = vld [vmem:[%s0 + $0x1b0] sm:$0xff]
  %v75 = vld [vmem:[%s0 + $0x1b8] sm:$0xff]
  %v76 = vld [vmem:[%s0 + $0x1c0] sm:$0xff]
  %v77 = vld [vmem:[%s0 + $0x1c8] sm:$0xff]
  %v78 = vld [vmem:[%s0 + $0x1d0] sm:$0xff]
  %v79 = vld [vmem:[%s0 + $0x1d8] sm:$0xff]
  %v80 = vld [vmem:[%s0 + $0x1e0] sm:$0xff]
  %v81 = vld [vmem:[%s0 + $0x1e8] sm:$0xff]
  %v82 = vld [vmem:[%s0 + $0x1f0] sm:$0xff]
  %v83 = vld [vmem:[%s0 + $0x1f8] sm:$0xff]
  %v84 = vunpack.c.l.bf16 %v20
  %v85 = vunpack.c.h.bf16 %v20
  %v86 = vunpack.c.l.bf16 %v21
  %v87 = vunpack.c.h.bf16 %v21
  %v88 = vunpack.c.l.bf16 %v22
  %v89 = vunpack.c.h.bf16 %v22
  %v90 = vunpack.c.l.bf16 %v23
  %v91 = vunpack.c.h.bf16 %v23
  %v92 = vunpack.c.l.bf16 %v24
  %v93 = vunpack.c.h.bf16 %v24
  %v94 = vunpack.c.l.bf16 %v25
  %v95 = vunpack.c.h.bf16 %v25
  %v96 = vunpack.c.l.bf16 %v26
  %v97 = vunpack.c.h.bf16 %v26
  %v98 = vunpack.c.l.bf16 %v27
  %v99 = vunpack.c.h.bf16 %v27
  %v100 = vunpack.c.l.bf16 %v28
  %v101 = vunpack.c.h.bf16 %v28
  %v102 = vunpack.c.l.bf16 %v29
  %v103 = vunpack.c.h.bf16 %v29
  %v104 = vunpack.c.l.bf16 %v30
  %v105 = vunpack.c.h.bf16 %v30
  %v106 = vunpack.c.l.bf16 %v31
  %v107 = vunpack.c.h.bf16 %v31
  %v108 = vunpack.c.l.bf16 %v32
  %v109 = vunpack.c.h.bf16 %v32
  %v110 = vunpack.c.l.bf16 %v33
  %v111 = vunpack.c.h.bf16 %v33
  %v112 = vunpack.c.l.bf16 %v34
  %v113 = vunpack.c.h.bf16 %v34
  %v114 = vunpack.c.l.bf16 %v35
  %v115 = vunpack.c.h.bf16 %v35
  %v116 = vunpack.c.l.bf16 %v36
  %v117 = vunpack.c.h.bf16 %v36
  %v118 = vunpack.c.l.bf16 %v37
  %v119 = vunpack.c.h.bf16 %v37
  %v120 = vunpack.c.l.bf16 %v38
  %v121 = vunpack.c.h.bf16 %v38
  %v122 = vunpack.c.l.bf16 %v39
  %v123 = vunpack.c.h.bf16 %v39
  %v124 = vunpack.c.l.bf16 %v40
  %v125 = vunpack.c.h.bf16 %v40
  %v126 = vunpack.c.l.bf16 %v41
  %v127 = vunpack.c.h.bf16 %v41
  %v128 = vunpack.c.l.bf16 %v42
  %v129 = vunpack.c.h.bf16 %v42
  %v130 = vunpack.c.l.bf16 %v43
  %v131 = vunpack.c.h.bf16 %v43
  %v132 = vunpack.c.l.bf16 %v44
  %v133 = vunpack.c.h.bf16 %v44
  %v134 = vunpack.c.l.bf16 %v45
  %v135 = vunpack.c.h.bf16 %v45
  %v136 = vunpack.c.l.bf16 %v46
  %v137 = vunpack.c.h.bf16 %v46
  %v138 = vunpack.c.l.bf16 %v47
  %v139 = vunpack.c.h.bf16 %v47
  %v140 = vunpack.c.l.bf16 %v48
  %v141 = vunpack.c.h.bf16 %v48
  %v142 = vunpack.c.l.bf16 %v49
  %v143 = vunpack.c.h.bf16 %v49
  %v144 = vunpack.c.l.bf16 %v50
  %v145 = vunpack.c.h.bf16 %v50
  %v146 = vunpack.c.l.bf16 %v51
  %v147 = vunpack.c.h.bf16 %v51
  %v148 = vunpack.c.l.bf16 %v52
  %v149 = vunpack.c.h.bf16 %v52
  %v150 = vunpack.c.l.bf16 %v53
  %v151 = vunpack.c.h.bf16 %v53
  %v152 = vunpack.c.l.bf16 %v54
  %v153 = vunpack.c.h.bf16 %v54
  %v154 = vunpack.c.l.bf16 %v55
  %v155 = vunpack.c.h.bf16 %v55
  %v156 = vunpack.c.l.bf16 %v56
  %v157 = vunpack.c.h.bf16 %v56
  %v158 = vunpack.c.l.bf16 %v57
  %v159 = vunpack.c.h.bf16 %v57
  %v160 = vunpack.c.l.bf16 %v58
  %v161 = vunpack.c.h.bf16 %v58
  %v162 = vunpack.c.l.bf16 %v59
  %v163 = vunpack.c.h.bf16 %v59
  %v164 = vunpack.c.l.bf16 %v60
  %v165 = vunpack.c.h.bf16 %v60
  %v166 = vunpack.c.l.bf16 %v61
  %v167 = vunpack.c.h.bf16 %v61
  %v168 = vunpack.c.l.bf16 %v62
  %v169 = vunpack.c.h.bf16 %v62
  %v170 = vunpack.c.l.bf16 %v63
  %v171 = vunpack.c.h.bf16 %v63
  %v172 = vunpack.c.l.bf16 %v64
  %v173 = vunpack.c.h.bf16 %v64
  %v174 = vunpack.c.l.bf16 %v65
  %v175 = vunpack.c.h.bf16 %v65
  %v176 = vunpack.c.l.bf16 %v66
  %v177 = vunpack.c.h.bf16 %v66
  %v178 = vunpack.c.l.bf16 %v67
  %v179 = vunpack.c.h.bf16 %v67
  %v180 = vunpack.c.l.bf16 %v68
  %v181 = vunpack.c.h.bf16 %v68
  %v182 = vunpack.c.l.bf16 %v69
  %v183 = vunpack.c.h.bf16 %v69
  %v184 = vunpack.c.l.bf16 %v70
  %v185 = vunpack.c.h.bf16 %v70
  %v186 = vunpack.c.l.bf16 %v71
  %v187 = vunpack.c.h.bf16 %v71
  %v188 = vunpack.c.l.bf16 %v72
  %v189 = vunpack.c.h.bf16 %v72
  %v190 = vunpack.c.l.bf16 %v73
  %v191 = vunpack.c.h.bf16 %v73
  %v192 = vunpack.c.l.bf16 %v74
  %v193 = vunpack.c.h.bf16 %v74
  %v194 = vunpack.c.l.bf16 %v75
  %v195 = vunpack.c.h.bf16 %v75
  %v196 = vunpack.c.l.bf16 %v76
  %v197 = vunpack.c.h.bf16 %v76
  %v198 = vunpack.c.l.bf16 %v77
  %v199 = vunpack.c.h.bf16 %v77
  %v200 = vunpack.c.l.bf16 %v78
  %v201 = vunpack.c.h.bf16 %v78
  %v202 = vunpack.c.l.bf16 %v79
  %v203 = vunpack.c.h.bf16 %v79
  %v204 = vunpack.c.l.bf16 %v80
  %v205 = vunpack.c.h.bf16 %v80
  %v206 = vunpack.c.l.bf16 %v81
  %v207 = vunpack.c.h.bf16 %v81
  %v208 = vunpack.c.l.bf16 %v82
  %v209 = vunpack.c.h.bf16 %v82
  %v210 = vunpack.c.l.bf16 %v83
  %v211 = vunpack.c.h.bf16 %v83
  %v212 = vld [vmem:[%s1] sm:$0x3]
  %v214 = vperm.slane %v212, 0
  %v215 = vperm.slane %v212, 1
  %v218 = vmul.f32 %v84, %v214
  %v219 = vmul.f32 %v85, %v215
  %v220 = vmul.f32 %v86, %v214
  %v221 = vmul.f32 %v87, %v215
  %v222 = vmul.f32 %v88, %v214
  %v223 = vmul.f32 %v89, %v215
  %v224 = vmul.f32 %v90, %v214
  %v225 = vmul.f32 %v91, %v215
  %v226 = vmul.f32 %v92, %v214
  %v227 = vmul.f32 %v93, %v215
  %v228 = vmul.f32 %v94, %v214
  %v229 = vmul.f32 %v95, %v215
  %v230 = vmul.f32 %v96, %v214
  %v231 = vmul.f32 %v97, %v215
  %v232 = vmul.f32 %v98, %v214
  %v233 = vmul.f32 %v99, %v215
  %v234 = vmul.f32 %v100, %v214
  %v235 = vmul.f32 %v101, %v215
  %v236 = vmul.f32 %v102, %v214
  %v237 = vmul.f32 %v103, %v215
  %v238 = vmul.f32 %v104, %v214
  %v239 = vmul.f32 %v105, %v215
  %v240 = vmul.f32 %v106, %v214
  %v241 = vmul.f32 %v107, %v215
  %v242 = vmul.f32 %v108, %v214
  %v243 = vmul.f32 %v109, %v215
  %v244 = vmul.f32 %v110, %v214
  %v245 = vmul.f32 %v111, %v215
  %v246 = vmul.f32 %v112, %v214
  %v247 = vmul.f32 %v113, %v215
  %v248 = vmul.f32 %v114, %v214
  %v249 = vmul.f32 %v115, %v215
  %v250 = vmul.f32 %v116, %v214
  %v251 = vmul.f32 %v117, %v215
  %v252 = vmul.f32 %v118, %v214
  %v253 = vmul.f32 %v119, %v215
  %v254 = vmul.f32 %v120, %v214
  %v255 = vmul.f32 %v121, %v215
  %v256 = vmul.f32 %v122, %v214
  %v257 = vmul.f32 %v123, %v215
  %v258 = vmul.f32 %v124, %v214
  %v259 = vmul.f32 %v125, %v215
  %v260 = vmul.f32 %v126, %v214
  %v261 = vmul.f32 %v127, %v215
  %v262 = vmul.f32 %v128, %v214
  %v263 = vmul.f32 %v129, %v215
  %v264 = vmul.f32 %v130, %v214
  %v265 = vmul.f32 %v131, %v215
  %v266 = vmul.f32 %v132, %v214
  %v267 = vmul.f32 %v133, %v215
  %v268 = vmul.f32 %v134, %v214
  %v269 = vmul.f32 %v135, %v215
  %v270 = vmul.f32 %v136, %v214
  %v271 = vmul.f32 %v137, %v215
  %v272 = vmul.f32 %v138, %v214
  %v273 = vmul.f32 %v139, %v215
  %v274 = vmul.f32 %v140, %v214
  %v275 = vmul.f32 %v141, %v215
  %v276 = vmul.f32 %v142, %v214
  %v277 = vmul.f32 %v143, %v215
  %v278 = vmul.f32 %v144, %v214
  %v279 = vmul.f32 %v145, %v215
  %v280 = vmul.f32 %v146, %v214
  %v281 = vmul.f32 %v147, %v215
  %v282 = vmul.f32 %v148, %v214
  %v283 = vmul.f32 %v149, %v215
  %v284 = vmul.f32 %v150, %v214
  %v285 = vmul.f32 %v151, %v215
  %v286 = vmul.f32 %v152, %v214
  %v287 = vmul.f32 %v153, %v215
  %v288 = vmul.f32 %v154, %v214
  %v289 = vmul.f32 %v155, %v215
  %v290 = vmul.f32 %v156, %v214
  %v291 = vmul.f32 %v157, %v215
  %v292 = vmul.f32 %v158, %v214
  %v293 = vmul.f32 %v159, %v215
  %v294 = vmul.f32 %v160, %v214
  %v295 = vmul.f32 %v161, %v215
  %v296 = vmul.f32 %v162, %v214
  %v297 = vmul.f32 %v163, %v215
  %v298 = vmul.f32 %v164, %v214
  %v299 = vmul.f32 %v165, %v215
  %v300 = vmul.f32 %v166, %v214
  %v301 = vmul.f32 %v167, %v215
  %v302 = vmul.f32 %v168, %v214
  %v303 = vmul.f32 %v169, %v215
  %v304 = vmul.f32 %v170, %v214
  %v305 = vmul.f32 %v171, %v215
  %v306 = vmul.f32 %v172, %v214
  %v307 = vmul.f32 %v173, %v215
  %v308 = vmul.f32 %v174, %v214
  %v309 = vmul.f32 %v175, %v215
  %v310 = vmul.f32 %v176, %v214
  %v311 = vmul.f32 %v177, %v215
  %v312 = vmul.f32 %v178, %v214
  %v313 = vmul.f32 %v179, %v215
  %v314 = vmul.f32 %v180, %v214
  %v315 = vmul.f32 %v181, %v215
  %v316 = vmul.f32 %v182, %v214
  %v317 = vmul.f32 %v183, %v215
  %v318 = vmul.f32 %v184, %v214
  %v319 = vmul.f32 %v185, %v215
  %v320 = vmul.f32 %v186, %v214
  %v321 = vmul.f32 %v187, %v215
  %v322 = vmul.f32 %v188, %v214
  %v323 = vmul.f32 %v189, %v215
  %v324 = vmul.f32 %v190, %v214
  %v325 = vmul.f32 %v191, %v215
  %v326 = vmul.f32 %v192, %v214
  %v327 = vmul.f32 %v193, %v215
  %v328 = vmul.f32 %v194, %v214
  %v329 = vmul.f32 %v195, %v215
  %v330 = vmul.f32 %v196, %v214
  %v331 = vmul.f32 %v197, %v215
  %v332 = vmul.f32 %v198, %v214
  %v333 = vmul.f32 %v199, %v215
  %v334 = vmul.f32 %v200, %v214
  %v335 = vmul.f32 %v201, %v215
  %v336 = vmul.f32 %v202, %v214
  %v337 = vmul.f32 %v203, %v215
  %v338 = vmul.f32 %v204, %v214
  %v339 = vmul.f32 %v205, %v215
  %v340 = vmul.f32 %v206, %v214
  %v341 = vmul.f32 %v207, %v215
  %v342 = vmul.f32 %v208, %v214
  %v343 = vmul.f32 %v209, %v215
  %v344 = vmul.f32 %v210, %v214
  %v345 = vmul.f32 %v211, %v215
  %v346 = vld [vmem:[%s2] sm:$0x3]
  %v348 = vperm.slane %v346, 0
  %v349 = vperm.slane %v346, 1
  %v352 = vadd.f32 %v218, %v348
  %v353 = vadd.f32 %v219, %v349
  %v354 = vadd.f32 %v220, %v348
  %v355 = vadd.f32 %v221, %v349
  %v356 = vadd.f32 %v222, %v348
  %v357 = vadd.f32 %v223, %v349
  %v358 = vadd.f32 %v224, %v348
  %v359 = vadd.f32 %v225, %v349
  %v360 = vadd.f32 %v226, %v348
  %v361 = vadd.f32 %v227, %v349
  %v362 = vadd.f32 %v228, %v348
  %v363 = vadd.f32 %v229, %v349
  %v364 = vadd.f32 %v230, %v348
  %v365 = vadd.f32 %v231, %v349
  %v366 = vadd.f32 %v232, %v348
  %v367 = vadd.f32 %v233, %v349
  %v368 = vadd.f32 %v234, %v348
  %v369 = vadd.f32 %v235, %v349
  %v370 = vadd.f32 %v236, %v348
  %v371 = vadd.f32 %v237, %v349
  %v372 = vadd.f32 %v238, %v348
  %v373 = vadd.f32 %v239, %v349
  %v374 = vadd.f32 %v240, %v348
  %v375 = vadd.f32 %v241, %v349
  %v376 = vadd.f32 %v242, %v348
  %v377 = vadd.f32 %v243, %v349
  %v378 = vadd.f32 %v244, %v348
  %v379 = vadd.f32 %v245, %v349
  %v380 = vadd.f32 %v246, %v348
  %v381 = vadd.f32 %v247, %v349
  %v382 = vadd.f32 %v248, %v348
  %v383 = vadd.f32 %v249, %v349
  %v384 = vadd.f32 %v250, %v348
  %v385 = vadd.f32 %v251, %v349
  %v386 = vadd.f32 %v252, %v348
  %v387 = vadd.f32 %v253, %v349
  %v388 = vadd.f32 %v254, %v348
  %v389 = vadd.f32 %v255, %v349
  %v390 = vadd.f32 %v256, %v348
  %v391 = vadd.f32 %v257, %v349
  %v392 = vadd.f32 %v258, %v348
  %v393 = vadd.f32 %v259, %v349
  %v394 = vadd.f32 %v260, %v348
  %v395 = vadd.f32 %v261, %v349
  %v396 = vadd.f32 %v262, %v348
  %v397 = vadd.f32 %v263, %v349
  %v398 = vadd.f32 %v264, %v348
  %v399 = vadd.f32 %v265, %v349
  %v400 = vadd.f32 %v266, %v348
  %v401 = vadd.f32 %v267, %v349
  %v402 = vadd.f32 %v268, %v348
  %v403 = vadd.f32 %v269, %v349
  %v404 = vadd.f32 %v270, %v348
  %v405 = vadd.f32 %v271, %v349
  %v406 = vadd.f32 %v272, %v348
  %v407 = vadd.f32 %v273, %v349
  %v408 = vadd.f32 %v274, %v348
  %v409 = vadd.f32 %v275, %v349
  %v410 = vadd.f32 %v276, %v348
  %v411 = vadd.f32 %v277, %v349
  %v412 = vadd.f32 %v278, %v348
  %v413 = vadd.f32 %v279, %v349
  %v414 = vadd.f32 %v280, %v348
  %v415 = vadd.f32 %v281, %v349
  %v416 = vadd.f32 %v282, %v348
  %v417 = vadd.f32 %v283, %v349
  %v418 = vadd.f32 %v284, %v348
  %v419 = vadd.f32 %v285, %v349
  %v420 = vadd.f32 %v286, %v348
  %v421 = vadd.f32 %v287, %v349
  %v422 = vadd.f32 %v288, %v348
  %v423 = vadd.f32 %v289, %v349
  %v424 = vadd.f32 %v290, %v348
  %v425 = vadd.f32 %v291, %v349
  %v426 = vadd.f32 %v292, %v348
  %v427 = vadd.f32 %v293, %v349
  %v428 = vadd.f32 %v294, %v348
  %v429 = vadd.f32 %v295, %v349
  %v430 = vadd.f32 %v296, %v348
  %v431 = vadd.f32 %v297, %v349
  %v432 = vadd.f32 %v298, %v348
  %v433 = vadd.f32 %v299, %v349
  %v434 = vadd.f32 %v300, %v348
  %v435 = vadd.f32 %v301, %v349
  %v436 = vadd.f32 %v302, %v348
  %v437 = vadd.f32 %v303, %v349
  %v438 = vadd.f32 %v304, %v348
  %v439 = vadd.f32 %v305, %v349
  %v440 = vadd.f32 %v306, %v348
  %v441 = vadd.f32 %v307, %v349
  %v442 = vadd.f32 %v308, %v348
  %v443 = vadd.f32 %v309, %v349
  %v444 = vadd.f32 %v310, %v348
  %v445 = vadd.f32 %v311, %v349
  %v446 = vadd.f32 %v312, %v348
  %v447 = vadd.f32 %v313, %v349
  %v448 = vadd.f32 %v314, %v348
  %v449 = vadd.f32 %v315, %v349
  %v450 = vadd.f32 %v316, %v348
  %v451 = vadd.f32 %v317, %v349
  %v452 = vadd.f32 %v318, %v348
  %v453 = vadd.f32 %v319, %v349
  %v454 = vadd.f32 %v320, %v348
  %v455 = vadd.f32 %v321, %v349
  %v456 = vadd.f32 %v322, %v348
  %v457 = vadd.f32 %v323, %v349
  %v458 = vadd.f32 %v324, %v348
  %v459 = vadd.f32 %v325, %v349
  %v460 = vadd.f32 %v326, %v348
  %v461 = vadd.f32 %v327, %v349
  %v462 = vadd.f32 %v328, %v348
  %v463 = vadd.f32 %v329, %v349
  %v464 = vadd.f32 %v330, %v348
  %v465 = vadd.f32 %v331, %v349
  %v466 = vadd.f32 %v332, %v348
  %v467 = vadd.f32 %v333, %v349
  %v468 = vadd.f32 %v334, %v348
  %v469 = vadd.f32 %v335, %v349
  %v470 = vadd.f32 %v336, %v348
  %v471 = vadd.f32 %v337, %v349
  %v472 = vadd.f32 %v338, %v348
  %v473 = vadd.f32 %v339, %v349
  %v474 = vadd.f32 %v340, %v348
  %v475 = vadd.f32 %v341, %v349
  %v476 = vadd.f32 %v342, %v348
  %v477 = vadd.f32 %v343, %v349
  %v478 = vadd.f32 %v344, %v348
  %v479 = vadd.f32 %v345, %v349
  %vm480 = vcmp.gt.f32.partialorder %v352, 0.0
  %vm481 = vcmp.gt.f32.partialorder %v353, 0.0
  %vm482 = vcmp.gt.f32.partialorder %v354, 0.0
  %vm483 = vcmp.gt.f32.partialorder %v355, 0.0
  %vm484 = vcmp.gt.f32.partialorder %v356, 0.0
  %vm485 = vcmp.gt.f32.partialorder %v357, 0.0
  %vm486 = vcmp.gt.f32.partialorder %v358, 0.0
  %vm487 = vcmp.gt.f32.partialorder %v359, 0.0
  %vm488 = vcmp.gt.f32.partialorder %v360, 0.0
  %vm489 = vcmp.gt.f32.partialorder %v361, 0.0
  %vm490 = vcmp.gt.f32.partialorder %v362, 0.0
  %vm491 = vcmp.gt.f32.partialorder %v363, 0.0
  %vm492 = vcmp.gt.f32.partialorder %v364, 0.0
  %vm493 = vcmp.gt.f32.partialorder %v365, 0.0
  %vm494 = vcmp.gt.f32.partialorder %v366, 0.0
  %vm495 = vcmp.gt.f32.partialorder %v367, 0.0
  %vm496 = vcmp.gt.f32.partialorder %v368, 0.0
  %vm497 = vcmp.gt.f32.partialorder %v369, 0.0
  %vm498 = vcmp.gt.f32.partialorder %v370, 0.0
  %vm499 = vcmp.gt.f32.partialorder %v371, 0.0
  %vm500 = vcmp.gt.f32.partialorder %v372, 0.0
  %vm501 = vcmp.gt.f32.partialorder %v373, 0.0
  %vm502 = vcmp.gt.f32.partialorder %v374, 0.0
  %vm503 = vcmp.gt.f32.partialorder %v375, 0.0
  %vm504 = vcmp.gt.f32.partialorder %v376, 0.0
  %vm505 = vcmp.gt.f32.partialorder %v377, 0.0
  %vm506 = vcmp.gt.f32.partialorder %v378, 0.0
  %vm507 = vcmp.gt.f32.partialorder %v379, 0.0
  %vm508 = vcmp.gt.f32.partialorder %v380, 0.0
  %vm509 = vcmp.gt.f32.partialorder %v381, 0.0
  %vm510 = vcmp.gt.f32.partialorder %v382, 0.0
  %vm511 = vcmp.gt.f32.partialorder %v383, 0.0
  %vm512 = vcmp.gt.f32.partialorder %v384, 0.0
  %vm513 = vcmp.gt.f32.partialorder %v385, 0.0
  %vm514 = vcmp.gt.f32.partialorder %v386, 0.0
  %vm515 = vcmp.gt.f32.partialorder %v387, 0.0
  %vm516 = vcmp.gt.f32.partialorder %v388, 0.0
  %vm517 = vcmp.gt.f32.partialorder %v389, 0.0
  %vm518 = vcmp.gt.f32.partialorder %v390, 0.0
  %vm519 = vcmp.gt.f32.partialorder %v391, 0.0
  %vm520 = vcmp.gt.f32.partialorder %v392, 0.0
  %vm521 = vcmp.gt.f32.partialorder %v393, 0.0
  %vm522 = vcmp.gt.f32.partialorder %v394, 0.0
  %vm523 = vcmp.gt.f32.partialorder %v395, 0.0
  %vm524 = vcmp.gt.f32.partialorder %v396, 0.0
  %vm525 = vcmp.gt.f32.partialorder %v397, 0.0
  %vm526 = vcmp.gt.f32.partialorder %v398, 0.0
  %vm527 = vcmp.gt.f32.partialorder %v399, 0.0
  %vm528 = vcmp.gt.f32.partialorder %v400, 0.0
  %vm529 = vcmp.gt.f32.partialorder %v401, 0.0
  %vm530 = vcmp.gt.f32.partialorder %v402, 0.0
  %vm531 = vcmp.gt.f32.partialorder %v403, 0.0
  %vm532 = vcmp.gt.f32.partialorder %v404, 0.0
  %vm533 = vcmp.gt.f32.partialorder %v405, 0.0
  %vm534 = vcmp.gt.f32.partialorder %v406, 0.0
  %vm535 = vcmp.gt.f32.partialorder %v407, 0.0
  %vm536 = vcmp.gt.f32.partialorder %v408, 0.0
  %vm537 = vcmp.gt.f32.partialorder %v409, 0.0
  %vm538 = vcmp.gt.f32.partialorder %v410, 0.0
  %vm539 = vcmp.gt.f32.partialorder %v411, 0.0
  %vm540 = vcmp.gt.f32.partialorder %v412, 0.0
  %vm541 = vcmp.gt.f32.partialorder %v413, 0.0
  %vm542 = vcmp.gt.f32.partialorder %v414, 0.0
  %vm543 = vcmp.gt.f32.partialorder %v415, 0.0
  %vm544 = vcmp.gt.f32.partialorder %v416, 0.0
  %vm545 = vcmp.gt.f32.partialorder %v417, 0.0
  %vm546 = vcmp.gt.f32.partialorder %v418, 0.0
  %vm547 = vcmp.gt.f32.partialorder %v419, 0.0
  %vm548 = vcmp.gt.f32.partialorder %v420, 0.0
  %vm549 = vcmp.gt.f32.partialorder %v421, 0.0
  %vm550 = vcmp.gt.f32.partialorder %v422, 0.0
  %vm551 = vcmp.gt.f32.partialorder %v423, 0.0
  %vm552 = vcmp.gt.f32.partialorder %v424, 0.0
  %vm553 = vcmp.gt.f32.partialorder %v425, 0.0
  %vm554 = vcmp.gt.f32.partialorder %v426, 0.0
  %vm555 = vcmp.gt.f32.partialorder %v427, 0.0
  %vm556 = vcmp.gt.f32.partialorder %v428, 0.0
  %vm557 = vcmp.gt.f32.partialorder %v429, 0.0
  %vm558 = vcmp.gt.f32.partialorder %v430, 0.0
  %vm559 = vcmp.gt.f32.partialorder %v431, 0.0
  %vm560 = vcmp.gt.f32.partialorder %v432, 0.0
  %vm561 = vcmp.gt.f32.partialorder %v433, 0.0
  %vm562 = vcmp.gt.f32.partialorder %v434, 0.0
  %vm563 = vcmp.gt.f32.partialorder %v435, 0.0
  %vm564 = vcmp.gt.f32.partialorder %v436, 0.0
  %vm565 = vcmp.gt.f32.partialorder %v437, 0.0
  %vm566 = vcmp.gt.f32.partialorder %v438, 0.0
  %vm567 = vcmp.gt.f32.partialorder %v439, 0.0
  %vm568 = vcmp.gt.f32.partialorder %v440, 0.0
  %vm569 = vcmp.gt.f32.partialorder %v441, 0.0
  %vm570 = vcmp.gt.f32.partialorder %v442, 0.0
  %vm571 = vcmp.gt.f32.partialorder %v443, 0.0
  %vm572 = vcmp.gt.f32.partialorder %v444, 0.0
  %vm573 = vcmp.gt.f32.partialorder %v445, 0.0
  %vm574 = vcmp.gt.f32.partialorder %v446, 0.0
  %vm575 = vcmp.gt.f32.partialorder %v447, 0.0
  %vm576 = vcmp.gt.f32.partialorder %v448, 0.0
  %vm577 = vcmp.gt.f32.partialorder %v449, 0.0
  %vm578 = vcmp.gt.f32.partialorder %v450, 0.0
  %vm579 = vcmp.gt.f32.partialorder %v451, 0.0
  %vm580 = vcmp.gt.f32.partialorder %v452, 0.0
  %vm581 = vcmp.gt.f32.partialorder %v453, 0.0
  %vm582 = vcmp.gt.f32.partialorder %v454, 0.0
  %vm583 = vcmp.gt.f32.partialorder %v455, 0.0
  %vm584 = vcmp.gt.f32.partialorder %v456, 0.0
  %vm585 = vcmp.gt.f32.partialorder %v457, 0.0
  %vm586 = vcmp.gt.f32.partialorder %v458, 0.0
  %vm587 = vcmp.gt.f32.partialorder %v459, 0.0
  %vm588 = vcmp.gt.f32.partialorder %v460, 0.0
  %vm589 = vcmp.gt.f32.partialorder %v461, 0.0
  %vm590 = vcmp.gt.f32.partialorder %v462, 0.0
  %vm591 = vcmp.gt.f32.partialorder %v463, 0.0
  %vm592 = vcmp.gt.f32.partialorder %v464, 0.0
  %vm593 = vcmp.gt.f32.partialorder %v465, 0.0
  %vm594 = vcmp.gt.f32.partialorder %v466, 0.0
  %vm595 = vcmp.gt.f32.partialorder %v467, 0.0
  %vm596 = vcmp.gt.f32.partialorder %v468, 0.0
  %vm597 = vcmp.gt.f32.partialorder %v469, 0.0
  %vm598 = vcmp.gt.f32.partialorder %v470, 0.0
  %vm599 = vcmp.gt.f32.partialorder %v471, 0.0
  %vm600 = vcmp.gt.f32.partialorder %v472, 0.0
  %vm601 = vcmp.gt.f32.partialorder %v473, 0.0
  %vm602 = vcmp.gt.f32.partialorder %v474, 0.0
  %vm603 = vcmp.gt.f32.partialorder %v475, 0.0
  %vm604 = vcmp.gt.f32.partialorder %v476, 0.0
  %vm605 = vcmp.gt.f32.partialorder %v477, 0.0
  %vm606 = vcmp.gt.f32.partialorder %v478, 0.0
  %vm607 = vcmp.gt.f32.partialorder %v479, 0.0
  %v608 = vmul.f32 %v352, 0.01
  %v609 = vmul.f32 %v353, 0.01
  %v610 = vmul.f32 %v354, 0.01
  %v611 = vmul.f32 %v355, 0.01
  %v612 = vmul.f32 %v356, 0.01
  %v613 = vmul.f32 %v357, 0.01
  %v614 = vmul.f32 %v358, 0.01
  %v615 = vmul.f32 %v359, 0.01
  %v616 = vmul.f32 %v360, 0.01
  %v617 = vmul.f32 %v361, 0.01
  %v618 = vmul.f32 %v362, 0.01
  %v619 = vmul.f32 %v363, 0.01
  %v620 = vmul.f32 %v364, 0.01
  %v621 = vmul.f32 %v365, 0.01
  %v622 = vmul.f32 %v366, 0.01
  %v623 = vmul.f32 %v367, 0.01
  %v624 = vmul.f32 %v368, 0.01
  %v625 = vmul.f32 %v369, 0.01
  %v626 = vmul.f32 %v370, 0.01
  %v627 = vmul.f32 %v371, 0.01
  %v628 = vmul.f32 %v372, 0.01
  %v629 = vmul.f32 %v373, 0.01
  %v630 = vmul.f32 %v374, 0.01
  %v631 = vmul.f32 %v375, 0.01
  %v632 = vmul.f32 %v376, 0.01
  %v633 = vmul.f32 %v377, 0.01
  %v634 = vmul.f32 %v378, 0.01
  %v635 = vmul.f32 %v379, 0.01
  %v636 = vmul.f32 %v380, 0.01
  %v637 = vmul.f32 %v381, 0.01
  %v638 = vmul.f32 %v382, 0.01
  %v639 = vmul.f32 %v383, 0.01
  %v640 = vmul.f32 %v384, 0.01
  %v641 = vmul.f32 %v385, 0.01
  %v642 = vmul.f32 %v386, 0.01
  %v643 = vmul.f32 %v387, 0.01
  %v644 = vmul.f32 %v388, 0.01
  %v645 = vmul.f32 %v389, 0.01
  %v646 = vmul.f32 %v390, 0.01
  %v647 = vmul.f32 %v391, 0.01
  %v648 = vmul.f32 %v392, 0.01
  %v649 = vmul.f32 %v393, 0.01
  %v650 = vmul.f32 %v394, 0.01
  %v651 = vmul.f32 %v395, 0.01
  %v652 = vmul.f32 %v396, 0.01
  %v653 = vmul.f32 %v397, 0.01
  %v654 = vmul.f32 %v398, 0.01
  %v655 = vmul.f32 %v399, 0.01
  %v656 = vmul.f32 %v400, 0.01
  %v657 = vmul.f32 %v401, 0.01
  %v658 = vmul.f32 %v402, 0.01
  %v659 = vmul.f32 %v403, 0.01
  %v660 = vmul.f32 %v404, 0.01
  %v661 = vmul.f32 %v405, 0.01
  %v662 = vmul.f32 %v406, 0.01
  %v663 = vmul.f32 %v407, 0.01
  %v664 = vmul.f32 %v408, 0.01
  %v665 = vmul.f32 %v409, 0.01
  %v666 = vmul.f32 %v410, 0.01
  %v667 = vmul.f32 %v411, 0.01
  %v668 = vmul.f32 %v412, 0.01
  %v669 = vmul.f32 %v413, 0.01
  %v670 = vmul.f32 %v414, 0.01
  %v671 = vmul.f32 %v415, 0.01
  %v672 = vmul.f32 %v416, 0.01
  %v673 = vmul.f32 %v417, 0.01
  %v674 = vmul.f32 %v418, 0.01
  %v675 = vmul.f32 %v419, 0.01
  %v676 = vmul.f32 %v420, 0.01
  %v677 = vmul.f32 %v421, 0.01
  %v678 = vmul.f32 %v422, 0.01
  %v679 = vmul.f32 %v423, 0.01
  %v680 = vmul.f32 %v424, 0.01
  %v681 = vmul.f32 %v425, 0.01
  %v682 = vmul.f32 %v426, 0.01
  %v683 = vmul.f32 %v427, 0.01
  %v684 = vmul.f32 %v428, 0.01
  %v685 = vmul.f32 %v429, 0.01
  %v686 = vmul.f32 %v430, 0.01
  %v687 = vmul.f32 %v431, 0.01
  %v688 = vmul.f32 %v432, 0.01
  %v689 = vmul.f32 %v433, 0.01
  %v690 = vmul.f32 %v434, 0.01
  %v691 = vmul.f32 %v435, 0.01
  %v692 = vmul.f32 %v436, 0.01
  %v693 = vmul.f32 %v437, 0.01
  %v694 = vmul.f32 %v438, 0.01
  %v695 = vmul.f32 %v439, 0.01
  %v696 = vmul.f32 %v440, 0.01
  %v697 = vmul.f32 %v441, 0.01
  %v698 = vmul.f32 %v442, 0.01
  %v699 = vmul.f32 %v443, 0.01
  %v700 = vmul.f32 %v444, 0.01
  %v701 = vmul.f32 %v445, 0.01
  %v702 = vmul.f32 %v446, 0.01
  %v703 = vmul.f32 %v447, 0.01
  %v704 = vmul.f32 %v448, 0.01
  %v705 = vmul.f32 %v449, 0.01
  %v706 = vmul.f32 %v450, 0.01
  %v707 = vmul.f32 %v451, 0.01
  %v708 = vmul.f32 %v452, 0.01
  %v709 = vmul.f32 %v453, 0.01
  %v710 = vmul.f32 %v454, 0.01
  %v711 = vmul.f32 %v455, 0.01
  %v712 = vmul.f32 %v456, 0.01
  %v713 = vmul.f32 %v457, 0.01
  %v714 = vmul.f32 %v458, 0.01
  %v715 = vmul.f32 %v459, 0.01
  %v716 = vmul.f32 %v460, 0.01
  %v717 = vmul.f32 %v461, 0.01
  %v718 = vmul.f32 %v462, 0.01
  %v719 = vmul.f32 %v463, 0.01
  %v720 = vmul.f32 %v464, 0.01
  %v721 = vmul.f32 %v465, 0.01
  %v722 = vmul.f32 %v466, 0.01
  %v723 = vmul.f32 %v467, 0.01
  %v724 = vmul.f32 %v468, 0.01
  %v725 = vmul.f32 %v469, 0.01
  %v726 = vmul.f32 %v470, 0.01
  %v727 = vmul.f32 %v471, 0.01
  %v728 = vmul.f32 %v472, 0.01
  %v729 = vmul.f32 %v473, 0.01
  %v730 = vmul.f32 %v474, 0.01
  %v731 = vmul.f32 %v475, 0.01
  %v732 = vmul.f32 %v476, 0.01
  %v733 = vmul.f32 %v477, 0.01
  %v734 = vmul.f32 %v478, 0.01
  %v735 = vmul.f32 %v479, 0.01
  %v736 = vsel %vm480, %v352, %v608
  %v737 = vsel %vm481, %v353, %v609
  %v738 = vsel %vm482, %v354, %v610
  %v739 = vsel %vm483, %v355, %v611
  %v740 = vsel %vm484, %v356, %v612
  %v741 = vsel %vm485, %v357, %v613
  %v742 = vsel %vm486, %v358, %v614
  %v743 = vsel %vm487, %v359, %v615
  %v744 = vsel %vm488, %v360, %v616
  %v745 = vsel %vm489, %v361, %v617
  %v746 = vsel %vm490, %v362, %v618
  %v747 = vsel %vm491, %v363, %v619
  %v748 = vsel %vm492, %v364, %v620
  %v749 = vsel %vm493, %v365, %v621
  %v750 = vsel %vm494, %v366, %v622
  %v751 = vsel %vm495, %v367, %v623
  %v752 = vsel %vm496, %v368, %v624
  %v753 = vsel %vm497, %v369, %v625
  %v754 = vsel %vm498, %v370, %v626
  %v755 = vsel %vm499, %v371, %v627
  %v756 = vsel %vm500, %v372, %v628
  %v757 = vsel %vm501, %v373, %v629
  %v758 = vsel %vm502, %v374, %v630
  %v759 = vsel %vm503, %v375, %v631
  %v760 = vsel %vm504, %v376, %v632
  %v761 = vsel %vm505, %v377, %v633
  %v762 = vsel %vm506, %v378, %v634
  %v763 = vsel %vm507, %v379, %v635
  %v764 = vsel %vm508, %v380, %v636
  %v765 = vsel %vm509, %v381, %v637
  %v766 = vsel %vm510, %v382, %v638
  %v767 = vsel %vm511, %v383, %v639
  %v768 = vsel %vm512, %v384, %v640
  %v769 = vsel %vm513, %v385, %v641
  %v770 = vsel %vm514, %v386, %v642
  %v771 = vsel %vm515, %v387, %v643
  %v772 = vsel %vm516, %v388, %v644
  %v773 = vsel %vm517, %v389, %v645
  %v774 = vsel %vm518, %v390, %v646
  %v775 = vsel %vm519, %v391, %v647
  %v776 = vsel %vm520, %v392, %v648
  %v777 = vsel %vm521, %v393, %v649
  %v778 = vsel %vm522, %v394, %v650
  %v779 = vsel %vm523, %v395, %v651
  %v780 = vsel %vm524, %v396, %v652
  %v781 = vsel %vm525, %v397, %v653
  %v782 = vsel %vm526, %v398, %v654
  %v783 = vsel %vm527, %v399, %v655
  %v784 = vsel %vm528, %v400, %v656
  %v785 = vsel %vm529, %v401, %v657
  %v786 = vsel %vm530, %v402, %v658
  %v787 = vsel %vm531, %v403, %v659
  %v788 = vsel %vm532, %v404, %v660
  %v789 = vsel %vm533, %v405, %v661
  %v790 = vsel %vm534, %v406, %v662
  %v791 = vsel %vm535, %v407, %v663
  %v792 = vsel %vm536, %v408, %v664
  %v793 = vsel %vm537, %v409, %v665
  %v794 = vsel %vm538, %v410, %v666
  %v795 = vsel %vm539, %v411, %v667
  %v796 = vsel %vm540, %v412, %v668
  %v797 = vsel %vm541, %v413, %v669
  %v798 = vsel %vm542, %v414, %v670
  %v799 = vsel %vm543, %v415, %v671
  %v800 = vsel %vm544, %v416, %v672
  %v801 = vsel %vm545, %v417, %v673
  %v802 = vsel %vm546, %v418, %v674
  %v803 = vsel %vm547, %v419, %v675
  %v804 = vsel %vm548, %v420, %v676
  %v805 = vsel %vm549, %v421, %v677
  %v806 = vsel %vm550, %v422, %v678
  %v807 = vsel %vm551, %v423, %v679
  %v808 = vsel %vm552, %v424, %v680
  %v809 = vsel %vm553, %v425, %v681
  %v810 = vsel %vm554, %v426, %v682
  %v811 = vsel %vm555, %v427, %v683
  %v812 = vsel %vm556, %v428, %v684
  %v813 = vsel %vm557, %v429, %v685
  %v814 = vsel %vm558, %v430, %v686
  %v815 = vsel %vm559, %v431, %v687
  %v816 = vsel %vm560, %v432, %v688
  %v817 = vsel %vm561, %v433, %v689
  %v818 = vsel %vm562, %v434, %v690
  %v819 = vsel %vm563, %v435, %v691
  %v820 = vsel %vm564, %v436, %v692
  %v821 = vsel %vm565, %v437, %v693
  %v822 = vsel %vm566, %v438, %v694
  %v823 = vsel %vm567, %v439, %v695
  %v824 = vsel %vm568, %v440, %v696
  %v825 = vsel %vm569, %v441, %v697
  %v826 = vsel %vm570, %v442, %v698
  %v827 = vsel %vm571, %v443, %v699
  %v828 = vsel %vm572, %v444, %v700
  %v829 = vsel %vm573, %v445, %v701
  %v830 = vsel %vm574, %v446, %v702
  %v831 = vsel %vm575, %v447, %v703
  %v832 = vsel %vm576, %v448, %v704
  %v833 = vsel %vm577, %v449, %v705
  %v834 = vsel %vm578, %v450, %v706
  %v835 = vsel %vm579, %v451, %v707
  %v836 = vsel %vm580, %v452, %v708
  %v837 = vsel %vm581, %v453, %v709
  %v838 = vsel %vm582, %v454, %v710
  %v839 = vsel %vm583, %v455, %v711
  %v840 = vsel %vm584, %v456, %v712
  %v841 = vsel %vm585, %v457, %v713
  %v842 = vsel %vm586, %v458, %v714
  %v843 = vsel %vm587, %v459, %v715
  %v844 = vsel %vm588, %v460, %v716
  %v845 = vsel %vm589, %v461, %v717
  %v846 = vsel %vm590, %v462, %v718
  %v847 = vsel %vm591, %v463, %v719
  %v848 = vsel %vm592, %v464, %v720
  %v849 = vsel %vm593, %v465, %v721
  %v850 = vsel %vm594, %v466, %v722
  %v851 = vsel %vm595, %v467, %v723
  %v852 = vsel %vm596, %v468, %v724
  %v853 = vsel %vm597, %v469, %v725
  %v854 = vsel %vm598, %v470, %v726
  %v855 = vsel %vm599, %v471, %v727
  %v856 = vsel %vm600, %v472, %v728
  %v857 = vsel %vm601, %v473, %v729
  %v858 = vsel %vm602, %v474, %v730
  %v859 = vsel %vm603, %v475, %v731
  %v860 = vsel %vm604, %v476, %v732
  %v861 = vsel %vm605, %v477, %v733
  %v862 = vsel %vm606, %v478, %v734
  %v863 = vsel %vm607, %v479, %v735
  %v864 = vpack.c.bf16 %v738, %v736
  %v865 = vpack.c.bf16 %v739, %v737
  %v866 = vpack.c.bf16 %v742, %v740
  %v867 = vpack.c.bf16 %v743, %v741
  %v868 = vpack.c.bf16 %v746, %v744
  %v869 = vpack.c.bf16 %v747, %v745
  %v870 = vpack.c.bf16 %v750, %v748
  %v871 = vpack.c.bf16 %v751, %v749
  %v872 = vpack.c.bf16 %v754, %v752
  %v873 = vpack.c.bf16 %v755, %v753
  %v874 = vpack.c.bf16 %v758, %v756
  %v875 = vpack.c.bf16 %v759, %v757
  %v876 = vpack.c.bf16 %v762, %v760
  %v877 = vpack.c.bf16 %v763, %v761
  %v878 = vpack.c.bf16 %v766, %v764
  %v879 = vpack.c.bf16 %v767, %v765
  %v880 = vpack.c.bf16 %v770, %v768
  %v881 = vpack.c.bf16 %v771, %v769
  %v882 = vpack.c.bf16 %v774, %v772
  %v883 = vpack.c.bf16 %v775, %v773
  %v884 = vpack.c.bf16 %v778, %v776
  %v885 = vpack.c.bf16 %v779, %v777
  %v886 = vpack.c.bf16 %v782, %v780
  %v887 = vpack.c.bf16 %v783, %v781
  %v888 = vpack.c.bf16 %v786, %v784
  %v889 = vpack.c.bf16 %v787, %v785
  %v890 = vpack.c.bf16 %v790, %v788
  %v891 = vpack.c.bf16 %v791, %v789
  %v892 = vpack.c.bf16 %v794, %v792
  %v893 = vpack.c.bf16 %v795, %v793
  %v894 = vpack.c.bf16 %v798, %v796
  %v895 = vpack.c.bf16 %v799, %v797
  %v896 = vpack.c.bf16 %v802, %v800
  %v897 = vpack.c.bf16 %v803, %v801
  %v898 = vpack.c.bf16 %v806, %v804
  %v899 = vpack.c.bf16 %v807, %v805
  %v900 = vpack.c.bf16 %v810, %v808
  %v901 = vpack.c.bf16 %v811, %v809
  %v902 = vpack.c.bf16 %v814, %v812
  %v903 = vpack.c.bf16 %v815, %v813
  %v904 = vpack.c.bf16 %v818, %v816
  %v905 = vpack.c.bf16 %v819, %v817
  %v906 = vpack.c.bf16 %v822, %v820
  %v907 = vpack.c.bf16 %v823, %v821
  %v908 = vpack.c.bf16 %v826, %v824
  %v909 = vpack.c.bf16 %v827, %v825
  %v910 = vpack.c.bf16 %v830, %v828
  %v911 = vpack.c.bf16 %v831, %v829
  %v912 = vpack.c.bf16 %v834, %v832
  %v913 = vpack.c.bf16 %v835, %v833
  %v914 = vpack.c.bf16 %v838, %v836
  %v915 = vpack.c.bf16 %v839, %v837
  %v916 = vpack.c.bf16 %v842, %v840
  %v917 = vpack.c.bf16 %v843, %v841
  %v918 = vpack.c.bf16 %v846, %v844
  %v919 = vpack.c.bf16 %v847, %v845
  %v920 = vpack.c.bf16 %v850, %v848
  %v921 = vpack.c.bf16 %v851, %v849
  %v922 = vpack.c.bf16 %v854, %v852
  %v923 = vpack.c.bf16 %v855, %v853
  %v924 = vpack.c.bf16 %v858, %v856
  %v925 = vpack.c.bf16 %v859, %v857
  %v926 = vpack.c.bf16 %v862, %v860
  %v927 = vpack.c.bf16 %v863, %v861
  %v928 = vld [vmem:[%s3] sm:$0xf]
  %v929 = vld [vmem:[%s3 + $0x4] sm:$0xf]
  %v930 = vld [vmem:[%s3 + $0x8] sm:$0xf]
  %v931 = vld [vmem:[%s3 + $0xc] sm:$0xf]
  %v932 = vld [vmem:[%s3 + $0x10] sm:$0xf]
  %v933 = vld [vmem:[%s3 + $0x14] sm:$0xf]
  %v934 = vld [vmem:[%s3 + $0x18] sm:$0xf]
  %v935 = vld [vmem:[%s3 + $0x1c] sm:$0xf]
  %v936 = vld [vmem:[%s3 + $0x20] sm:$0xf]
  %v937 = vld [vmem:[%s3 + $0x24] sm:$0xf]
  %v938 = vld [vmem:[%s3 + $0x28] sm:$0xf]
  %v939 = vld [vmem:[%s3 + $0x2c] sm:$0xf]
  %v940 = vld [vmem:[%s3 + $0x30] sm:$0xf]
  %v941 = vld [vmem:[%s3 + $0x34] sm:$0xf]
  %v942 = vld [vmem:[%s3 + $0x38] sm:$0xf]
  %v943 = vld [vmem:[%s3 + $0x3c] sm:$0xf]
  %v944 = vld [vmem:[%s3 + $0x40] sm:$0xf]
  %v945 = vld [vmem:[%s3 + $0x44] sm:$0xf]
  %v946 = vld [vmem:[%s3 + $0x48] sm:$0xf]
  %v947 = vld [vmem:[%s3 + $0x4c] sm:$0xf]
  %v948 = vld [vmem:[%s3 + $0x50] sm:$0xf]
  %v949 = vld [vmem:[%s3 + $0x54] sm:$0xf]
  %v950 = vld [vmem:[%s3 + $0x58] sm:$0xf]
  %v951 = vld [vmem:[%s3 + $0x5c] sm:$0xf]
  %v952 = vld [vmem:[%s3 + $0x60] sm:$0xf]
  %v953 = vld [vmem:[%s3 + $0x64] sm:$0xf]
  %v954 = vld [vmem:[%s3 + $0x68] sm:$0xf]
  %v955 = vld [vmem:[%s3 + $0x6c] sm:$0xf]
  %v956 = vld [vmem:[%s3 + $0x70] sm:$0xf]
  %v957 = vld [vmem:[%s3 + $0x74] sm:$0xf]
  %v958 = vld [vmem:[%s3 + $0x78] sm:$0xf]
  %v959 = vld [vmem:[%s3 + $0x7c] sm:$0xf]
  %v960 = vld [vmem:[%s4] sm:$0x1]
  %v962 = vperm.slane %v960, 0
  %v996 = vunpack.c.l.b16 %v928
  %v997 = vunpack.c.l.b16 %v929
  %v998 = vunpack.c.l.b16 %v930
  %v999 = vunpack.c.l.b16 %v931
  %v1000 = vunpack.c.l.b16 %v932
  %v1001 = vunpack.c.l.b16 %v933
  %v1002 = vunpack.c.l.b16 %v934
  %v1003 = vunpack.c.l.b16 %v935
  %v1004 = vunpack.c.l.b16 %v936
  %v1005 = vunpack.c.l.b16 %v937
  %v1006 = vunpack.c.l.b16 %v938
  %v1007 = vunpack.c.l.b16 %v939
  %v1008 = vunpack.c.l.b16 %v940
  %v1009 = vunpack.c.l.b16 %v941
  %v1010 = vunpack.c.l.b16 %v942
  %v1011 = vunpack.c.l.b16 %v943
  %v1012 = vunpack.c.l.b16 %v944
  %v1013 = vunpack.c.l.b16 %v945
  %v1014 = vunpack.c.l.b16 %v946
  %v1015 = vunpack.c.l.b16 %v947
  %v1016 = vunpack.c.l.b16 %v948
  %v1017 = vunpack.c.l.b16 %v949
  %v1018 = vunpack.c.l.b16 %v950
  %v1019 = vunpack.c.l.b16 %v951
  %v1020 = vunpack.c.l.b16 %v952
  %v1021 = vunpack.c.l.b16 %v953
  %v1022 = vunpack.c.l.b16 %v954
  %v1023 = vunpack.c.l.b16 %v955
  %v1024 = vunpack.c.l.b16 %v956
  %v1025 = vunpack.c.l.b16 %v957
  %v1026 = vunpack.c.l.b16 %v958
  %v1027 = vunpack.c.l.b16 %v959
  %v1028 = vpack.c.b16 %v997, %v996
  %v1029 = vpack.c.b16 %v999, %v998
  %v1030 = vpack.c.b16 %v1001, %v1000
  %v1031 = vpack.c.b16 %v1003, %v1002
  %v1032 = vpack.c.b16 %v1005, %v1004
  %v1033 = vpack.c.b16 %v1007, %v1006
  %v1034 = vpack.c.b16 %v1009, %v1008
  %v1035 = vpack.c.b16 %v1011, %v1010
  %v1036 = vpack.c.b16 %v1013, %v1012
  %v1037 = vpack.c.b16 %v1015, %v1014
  %v1038 = vpack.c.b16 %v1017, %v1016
  %v1039 = vpack.c.b16 %v1019, %v1018
  %v1040 = vpack.c.b16 %v1021, %v1020
  %v1041 = vpack.c.b16 %v1023, %v1022
  %v1042 = vpack.c.b16 %v1025, %v1024
  %v1043 = vpack.c.b16 %v1027, %v1026
  %1060 = vmatpush.bf16.msra.mxu0 %v1035
  %1061 = vmatpush.bf16.msra.mxu0 %v1034
  %1062 = vmatpush.bf16.msra.mxu0 %v1033
  %1063 = vmatpush.bf16.msra.mxu0 %v1032
  %1064 = vmatpush.bf16.msra.mxu0 %v1031
  %1065 = vmatpush.bf16.msra.mxu0 %v1030
  %1066 = vmatpush.bf16.msra.mxu0 %v1029
  %1067 = vmatpush.bf16.msra.mxu0 %v1028
  %1068 = vmatmul.bf16.gmra.mxu0 %v864
  %v1069 = vpop.f32.mrf.mxu0
  %v1070 = vadd.f32 %v962, %v1069
  %v1071 = vpop.f32.mrf.mxu0
  %v1072 = vadd.f32 %v962, %v1071
  %1073 = vmatmul.bf16.gmra.mxu0 %v866
  %v1074 = vpop.f32.mrf.mxu0
  %v1075 = vadd.f32 %v962, %v1074
  %v1076 = vpop.f32.mrf.mxu0
  %v1077 = vadd.f32 %v962, %v1076
  %1078 = vmatmul.bf16.gmra.mxu0 %v868
  %v1079 = vpop.f32.mrf.mxu0
  %v1080 = vadd.f32 %v962, %v1079
  %v1081 = vpop.f32.mrf.mxu0
  %v1082 = vadd.f32 %v962, %v1081
  %1083 = vmatmul.bf16.gmra.mxu0 %v870
  %v1084 = vpop.f32.mrf.mxu0
  %v1085 = vadd.f32 %v962, %v1084
  %v1086 = vpop.f32.mrf.mxu0
  %v1087 = vadd.f32 %v962, %v1086
  %1088 = vmatmul.bf16.gmra.mxu0 %v872
  %v1089 = vpop.f32.mrf.mxu0
  %v1090 = vadd.f32 %v962, %v1089
  %v1091 = vpop.f32.mrf.mxu0
  %v1092 = vadd.f32 %v962, %v1091
  %1093 = vmatmul.bf16.gmra.mxu0 %v874
  %v1094 = vpop.f32.mrf.mxu0
  %v1095 = vadd.f32 %v962, %v1094
  %v1096 = vpop.f32.mrf.mxu0
  %v1097 = vadd.f32 %v962, %v1096
  %1098 = vmatmul.bf16.gmra.mxu0 %v876
  %v1099 = vpop.f32.mrf.mxu0
  %v1100 = vadd.f32 %v962, %v1099
  %v1101 = vpop.f32.mrf.mxu0
  %v1102 = vadd.f32 %v962, %v1101
  %1103 = vmatmul.bf16.gmra.mxu0 %v878
  %v1104 = vpop.f32.mrf.mxu0
  %v1105 = vadd.f32 %v962, %v1104
  %v1106 = vpop.f32.mrf.mxu0
  %v1107 = vadd.f32 %v962, %v1106
  %1108 = vmatmul.bf16.gmra.mxu0 %v880
  %v1109 = vpop.f32.mrf.mxu0
  %v1110 = vadd.f32 %v962, %v1109
  %v1111 = vpop.f32.mrf.mxu0
  %v1112 = vadd.f32 %v962, %v1111
  %1113 = vmatmul.bf16.gmra.mxu0 %v882
  %v1114 = vpop.f32.mrf.mxu0
  %v1115 = vadd.f32 %v962, %v1114
  %v1116 = vpop.f32.mrf.mxu0
  %v1117 = vadd.f32 %v962, %v1116
  %1118 = vmatmul.bf16.gmra.mxu0 %v884
  %v1119 = vpop.f32.mrf.mxu0
  %v1120 = vadd.f32 %v962, %v1119
  %v1121 = vpop.f32.mrf.mxu0
  %v1122 = vadd.f32 %v962, %v1121
  %1123 = vmatmul.bf16.gmra.mxu0 %v886
  %v1124 = vpop.f32.mrf.mxu0
  %v1125 = vadd.f32 %v962, %v1124
  %v1126 = vpop.f32.mrf.mxu0
  %v1127 = vadd.f32 %v962, %v1126
  %1128 = vmatmul.bf16.gmra.mxu0 %v888
  %v1129 = vpop.f32.mrf.mxu0
  %v1130 = vadd.f32 %v962, %v1129
  %v1131 = vpop.f32.mrf.mxu0
  %v1132 = vadd.f32 %v962, %v1131
  %1133 = vmatmul.bf16.gmra.mxu0 %v890
  %v1134 = vpop.f32.mrf.mxu0
  %v1135 = vadd.f32 %v962, %v1134
  %v1136 = vpop.f32.mrf.mxu0
  %v1137 = vadd.f32 %v962, %v1136
  %1138 = vmatmul.bf16.gmra.mxu0 %v892
  %v1139 = vpop.f32.mrf.mxu0
  %v1140 = vadd.f32 %v962, %v1139
  %v1141 = vpop.f32.mrf.mxu0
  %v1142 = vadd.f32 %v962, %v1141
  %1143 = vmatmul.bf16.gmra.mxu0 %v894
  %v1144 = vpop.f32.mrf.mxu0
  %v1145 = vadd.f32 %v962, %v1144
  %v1146 = vpop.f32.mrf.mxu0
  %v1147 = vadd.f32 %v962, %v1146
  %1148 = vmatmul.bf16.gmra.mxu0 %v896
  %v1149 = vpop.f32.mrf.mxu0
  %v1150 = vadd.f32 %v962, %v1149
  %v1151 = vpop.f32.mrf.mxu0
  %v1152 = vadd.f32 %v962, %v1151
  %1153 = vmatmul.bf16.gmra.mxu0 %v898
  %v1154 = vpop.f32.mrf.mxu0
  %v1155 = vadd.f32 %v962, %v1154
  %v1156 = vpop.f32.mrf.mxu0
  %v1157 = vadd.f32 %v962, %v1156
  %1158 = vmatmul.bf16.gmra.mxu0 %v900
  %v1159 = vpop.f32.mrf.mxu0
  %v1160 = vadd.f32 %v962, %v1159
  %v1161 = vpop.f32.mrf.mxu0
  %v1162 = vadd.f32 %v962, %v1161
  %1163 = vmatmul.bf16.gmra.mxu0 %v902
  %v1164 = vpop.f32.mrf.mxu0
  %v1165 = vadd.f32 %v962, %v1164
  %v1166 = vpop.f32.mrf.mxu0
  %v1167 = vadd.f32 %v962, %v1166
  %1168 = vmatmul.bf16.gmra.mxu0 %v904
  %v1169 = vpop.f32.mrf.mxu0
  %v1170 = vadd.f32 %v962, %v1169
  %v1171 = vpop.f32.mrf.mxu0
  %v1172 = vadd.f32 %v962, %v1171
  %1173 = vmatmul.bf16.gmra.mxu0 %v906
  %v1174 = vpop.f32.mrf.mxu0
  %v1175 = vadd.f32 %v962, %v1174
  %v1176 = vpop.f32.mrf.mxu0
  %v1177 = vadd.f32 %v962, %v1176
  %1178 = vmatmul.bf16.gmra.mxu0 %v908
  %v1179 = vpop.f32.mrf.mxu0
  %v1180 = vadd.f32 %v962, %v1179
  %v1181 = vpop.f32.mrf.mxu0
  %v1182 = vadd.f32 %v962, %v1181
  %1183 = vmatmul.bf16.gmra.mxu0 %v910
  %v1184 = vpop.f32.mrf.mxu0
  %v1185 = vadd.f32 %v962, %v1184
  %v1186 = vpop.f32.mrf.mxu0
  %v1187 = vadd.f32 %v962, %v1186
  %1188 = vmatmul.bf16.gmra.mxu0 %v912
  %v1189 = vpop.f32.mrf.mxu0
  %v1190 = vadd.f32 %v962, %v1189
  %v1191 = vpop.f32.mrf.mxu0
  %v1192 = vadd.f32 %v962, %v1191
  %1193 = vmatmul.bf16.gmra.mxu0 %v914
  %v1194 = vpop.f32.mrf.mxu0
  %v1195 = vadd.f32 %v962, %v1194
  %v1196 = vpop.f32.mrf.mxu0
  %v1197 = vadd.f32 %v962, %v1196
  %1198 = vmatmul.bf16.gmra.mxu0 %v916
  %v1199 = vpop.f32.mrf.mxu0
  %v1200 = vadd.f32 %v962, %v1199
  %v1201 = vpop.f32.mrf.mxu0
  %v1202 = vadd.f32 %v962, %v1201
  %1203 = vmatmul.bf16.gmra.mxu0 %v918
  %v1204 = vpop.f32.mrf.mxu0
  %v1205 = vadd.f32 %v962, %v1204
  %v1206 = vpop.f32.mrf.mxu0
  %v1207 = vadd.f32 %v962, %v1206
  %1208 = vmatmul.bf16.gmra.mxu0 %v920
  %v1209 = vpop.f32.mrf.mxu0
  %v1210 = vadd.f32 %v962, %v1209
  %v1211 = vpop.f32.mrf.mxu0
  %v1212 = vadd.f32 %v962, %v1211
  %1213 = vmatmul.bf16.gmra.mxu0 %v922
  %v1214 = vpop.f32.mrf.mxu0
  %v1215 = vadd.f32 %v962, %v1214
  %v1216 = vpop.f32.mrf.mxu0
  %v1217 = vadd.f32 %v962, %v1216
  %1218 = vmatmul.bf16.gmra.mxu0 %v924
  %v1219 = vpop.f32.mrf.mxu0
  %v1220 = vadd.f32 %v962, %v1219
  %v1221 = vpop.f32.mrf.mxu0
  %v1222 = vadd.f32 %v962, %v1221
  %1223 = vmatmul.bf16.gmra.mxu0 %v926
  %v1224 = vpop.f32.mrf.mxu0
  %v1225 = vadd.f32 %v962, %v1224
  %v1226 = vpop.f32.mrf.mxu0
  %v1227 = vadd.f32 %v962, %v1226
  %1228 = vdwg.mxu0
  %1229 = vmatpush.bf16.msra.mxu0 %v1043
  %1230 = vmatpush.bf16.msra.mxu0 %v1042
  %1231 = vmatpush.bf16.msra.mxu0 %v1041
  %1232 = vmatpush.bf16.msra.mxu0 %v1040
  %1233 = vmatpush.bf16.msra.mxu0 %v1039
  %1234 = vmatpush.bf16.msra.mxu0 %v1038
  %1235 = vmatpush.bf16.msra.mxu0 %v1037
  %1236 = vmatpush.bf16.msra.mxu0 %v1036
  %1237 = vmatmul.bf16.gmra.mxu0 %v865
  %v1238 = vpop.f32.mrf.mxu0
  %v1239 = vadd.f32 %v1070, %v1238
  %v1240 = vpop.f32.mrf.mxu0
  %v1241 = vadd.f32 %v1072, %v1240
  %1242 = vmatmul.bf16.gmra.mxu0 %v867
  %v1243 = vpop.f32.mrf.mxu0
  %v1244 = vadd.f32 %v1075, %v1243
  %v1245 = vpop.f32.mrf.mxu0
  %v1246 = vadd.f32 %v1077, %v1245
  %1247 = vmatmul.bf16.gmra.mxu0 %v869
  %v1248 = vpop.f32.mrf.mxu0
  %v1249 = vadd.f32 %v1080, %v1248
  %v1250 = vpop.f32.mrf.mxu0
  %v1251 = vadd.f32 %v1082, %v1250
  %1252 = vmatmul.bf16.gmra.mxu0 %v871
  %v1253 = vpop.f32.mrf.mxu0
  %v1254 = vadd.f32 %v1085, %v1253
  %v1255 = vpop.f32.mrf.mxu0
  %v1256 = vadd.f32 %v1087, %v1255
  %1257 = vmatmul.bf16.gmra.mxu0 %v873
  %v1258 = vpop.f32.mrf.mxu0
  %v1259 = vadd.f32 %v1090, %v1258
  %v1260 = vpop.f32.mrf.mxu0
  %v1261 = vadd.f32 %v1092, %v1260
  %1262 = vmatmul.bf16.gmra.mxu0 %v875
  %v1263 = vpop.f32.mrf.mxu0
  %v1264 = vadd.f32 %v1095, %v1263
  %v1265 = vpop.f32.mrf.mxu0
  %v1266 = vadd.f32 %v1097, %v1265
  %1267 = vmatmul.bf16.gmra.mxu0 %v877
  %v1268 = vpop.f32.mrf.mxu0
  %v1269 = vadd.f32 %v1100, %v1268
  %v1270 = vpop.f32.mrf.mxu0
  %v1271 = vadd.f32 %v1102, %v1270
  %1272 = vmatmul.bf16.gmra.mxu0 %v879
  %v1273 = vpop.f32.mrf.mxu0
  %v1274 = vadd.f32 %v1105, %v1273
  %v1275 = vpop.f32.mrf.mxu0
  %v1276 = vadd.f32 %v1107, %v1275
  %1277 = vmatmul.bf16.gmra.mxu0 %v881
  %v1278 = vpop.f32.mrf.mxu0
  %v1279 = vadd.f32 %v1110, %v1278
  %v1280 = vpop.f32.mrf.mxu0
  %v1281 = vadd.f32 %v1112, %v1280
  %1282 = vmatmul.bf16.gmra.mxu0 %v883
  %v1283 = vpop.f32.mrf.mxu0
  %v1284 = vadd.f32 %v1115, %v1283
  %v1285 = vpop.f32.mrf.mxu0
  %v1286 = vadd.f32 %v1117, %v1285
  %1287 = vmatmul.bf16.gmra.mxu0 %v885
  %v1288 = vpop.f32.mrf.mxu0
  %v1289 = vadd.f32 %v1120, %v1288
  %v1290 = vpop.f32.mrf.mxu0
  %v1291 = vadd.f32 %v1122, %v1290
  %1292 = vmatmul.bf16.gmra.mxu0 %v887
  %v1293 = vpop.f32.mrf.mxu0
  %v1294 = vadd.f32 %v1125, %v1293
  %v1295 = vpop.f32.mrf.mxu0
  %v1296 = vadd.f32 %v1127, %v1295
  %1297 = vmatmul.bf16.gmra.mxu0 %v889
  %v1298 = vpop.f32.mrf.mxu0
  %v1299 = vadd.f32 %v1130, %v1298
  %v1300 = vpop.f32.mrf.mxu0
  %v1301 = vadd.f32 %v1132, %v1300
  %1302 = vmatmul.bf16.gmra.mxu0 %v891
  %v1303 = vpop.f32.mrf.mxu0
  %v1304 = vadd.f32 %v1135, %v1303
  %v1305 = vpop.f32.mrf.mxu0
  %v1306 = vadd.f32 %v1137, %v1305
  %1307 = vmatmul.bf16.gmra.mxu0 %v893
  %v1308 = vpop.f32.mrf.mxu0
  %v1309 = vadd.f32 %v1140, %v1308
  %v1310 = vpop.f32.mrf.mxu0
  %v1311 = vadd.f32 %v1142, %v1310
  %1312 = vmatmul.bf16.gmra.mxu0 %v895
  %v1313 = vpop.f32.mrf.mxu0
  %v1314 = vadd.f32 %v1145, %v1313
  %v1315 = vpop.f32.mrf.mxu0
  %v1316 = vadd.f32 %v1147, %v1315
  %1317 = vmatmul.bf16.gmra.mxu0 %v897
  %v1318 = vpop.f32.mrf.mxu0
  %v1319 = vadd.f32 %v1150, %v1318
  %v1320 = vpop.f32.mrf.mxu0
  %v1321 = vadd.f32 %v1152, %v1320
  %1322 = vmatmul.bf16.gmra.mxu0 %v899
  %v1323 = vpop.f32.mrf.mxu0
  %v1324 = vadd.f32 %v1155, %v1323
  %v1325 = vpop.f32.mrf.mxu0
  %v1326 = vadd.f32 %v1157, %v1325
  %1327 = vmatmul.bf16.gmra.mxu0 %v901
  %v1328 = vpop.f32.mrf.mxu0
  %v1329 = vadd.f32 %v1160, %v1328
  %v1330 = vpop.f32.mrf.mxu0
  %v1331 = vadd.f32 %v1162, %v1330
  %1332 = vmatmul.bf16.gmra.mxu0 %v903
  %v1333 = vpop.f32.mrf.mxu0
  %v1334 = vadd.f32 %v1165, %v1333
  %v1335 = vpop.f32.mrf.mxu0
  %v1336 = vadd.f32 %v1167, %v1335
  %1337 = vmatmul.bf16.gmra.mxu0 %v905
  %v1338 = vpop.f32.mrf.mxu0
  %v1339 = vadd.f32 %v1170, %v1338
  %v1340 = vpop.f32.mrf.mxu0
  %v1341 = vadd.f32 %v1172, %v1340
  %1342 = vmatmul.bf16.gmra.mxu0 %v907
  %v1343 = vpop.f32.mrf.mxu0
  %v1344 = vadd.f32 %v1175, %v1343
  %v1345 = vpop.f32.mrf.mxu0
  %v1346 = vadd.f32 %v1177, %v1345
  %1347 = vmatmul.bf16.gmra.mxu0 %v909
  %v1348 = vpop.f32.mrf.mxu0
  %v1349 = vadd.f32 %v1180, %v1348
  %v1350 = vpop.f32.mrf.mxu0
  %v1351 = vadd.f32 %v1182, %v1350
  %1352 = vmatmul.bf16.gmra.mxu0 %v911
  %v1353 = vpop.f32.mrf.mxu0
  %v1354 = vadd.f32 %v1185, %v1353
  %v1355 = vpop.f32.mrf.mxu0
  %v1356 = vadd.f32 %v1187, %v1355
  %1357 = vmatmul.bf16.gmra.mxu0 %v913
  %v1358 = vpop.f32.mrf.mxu0
  %v1359 = vadd.f32 %v1190, %v1358
  %v1360 = vpop.f32.mrf.mxu0
  %v1361 = vadd.f32 %v1192, %v1360
  %1362 = vmatmul.bf16.gmra.mxu0 %v915
  %v1363 = vpop.f32.mrf.mxu0
  %v1364 = vadd.f32 %v1195, %v1363
  %v1365 = vpop.f32.mrf.mxu0
  %v1366 = vadd.f32 %v1197, %v1365
  %1367 = vmatmul.bf16.gmra.mxu0 %v917
  %v1368 = vpop.f32.mrf.mxu0
  %v1369 = vadd.f32 %v1200, %v1368
  %v1370 = vpop.f32.mrf.mxu0
  %v1371 = vadd.f32 %v1202, %v1370
  %1372 = vmatmul.bf16.gmra.mxu0 %v919
  %v1373 = vpop.f32.mrf.mxu0
  %v1374 = vadd.f32 %v1205, %v1373
  %v1375 = vpop.f32.mrf.mxu0
  %v1376 = vadd.f32 %v1207, %v1375
  %1377 = vmatmul.bf16.gmra.mxu0 %v921
  %v1378 = vpop.f32.mrf.mxu0
  %v1379 = vadd.f32 %v1210, %v1378
  %v1380 = vpop.f32.mrf.mxu0
  %v1381 = vadd.f32 %v1212, %v1380
  %1382 = vmatmul.bf16.gmra.mxu0 %v923
  %v1383 = vpop.f32.mrf.mxu0
  %v1384 = vadd.f32 %v1215, %v1383
  %v1385 = vpop.f32.mrf.mxu0
  %v1386 = vadd.f32 %v1217, %v1385
  %1387 = vmatmul.bf16.gmra.mxu0 %v925
  %v1388 = vpop.f32.mrf.mxu0
  %v1389 = vadd.f32 %v1220, %v1388
  %v1390 = vpop.f32.mrf.mxu0
  %v1391 = vadd.f32 %v1222, %v1390
  %1392 = vmatmul.bf16.gmra.mxu0 %v927
  %v1393 = vpop.f32.mrf.mxu0
  %v1394 = vadd.f32 %v1225, %v1393
  %v1395 = vpop.f32.mrf.mxu0
  %v1396 = vadd.f32 %v1227, %v1395
  %1397 = vdwg.mxu0
  %v1398 = vpack.c.bf16 %v1239, %v1239
  %v1399 = vpack.c.bf16 %v1241, %v1241
  %v1400 = vpack.c.bf16 %v1244, %v1244
  %v1401 = vpack.c.bf16 %v1246, %v1246
  %v1402 = vpack.c.bf16 %v1249, %v1249
  %v1403 = vpack.c.bf16 %v1251, %v1251
  %v1404 = vpack.c.bf16 %v1254, %v1254
  %v1405 = vpack.c.bf16 %v1256, %v1256
  %v1406 = vpack.c.bf16 %v1259, %v1259
  %v1407 = vpack.c.bf16 %v1261, %v1261
  %v1408 = vpack.c.bf16 %v1264, %v1264
  %v1409 = vpack.c.bf16 %v1266, %v1266
  %v1410 = vpack.c.bf16 %v1269, %v1269
  %v1411 = vpack.c.bf16 %v1271, %v1271
  %v1412 = vpack.c.bf16 %v1274, %v1274
  %v1413 = vpack.c.bf16 %v1276, %v1276
  %v1414 = vpack.c.bf16 %v1279, %v1279
  %v1415 = vpack.c.bf16 %v1281, %v1281
  %v1416 = vpack.c.bf16 %v1284, %v1284
  %v1417 = vpack.c.bf16 %v1286, %v1286
  %v1418 = vpack.c.bf16 %v1289, %v1289
  %v1419 = vpack.c.bf16 %v1291, %v1291
  %v1420 = vpack.c.bf16 %v1294, %v1294
  %v1421 = vpack.c.bf16 %v1296, %v1296
  %v1422 = vpack.c.bf16 %v1299, %v1299
  %v1423 = vpack.c.bf16 %v1301, %v1301
  %v1424 = vpack.c.bf16 %v1304, %v1304
  %v1425 = vpack.c.bf16 %v1306, %v1306
  %v1426 = vpack.c.bf16 %v1309, %v1309
  %v1427 = vpack.c.bf16 %v1311, %v1311
  %v1428 = vpack.c.bf16 %v1314, %v1314
  %v1429 = vpack.c.bf16 %v1316, %v1316
  %v1430 = vpack.c.bf16 %v1319, %v1319
  %v1431 = vpack.c.bf16 %v1321, %v1321
  %v1432 = vpack.c.bf16 %v1324, %v1324
  %v1433 = vpack.c.bf16 %v1326, %v1326
  %v1434 = vpack.c.bf16 %v1329, %v1329
  %v1435 = vpack.c.bf16 %v1331, %v1331
  %v1436 = vpack.c.bf16 %v1334, %v1334
  %v1437 = vpack.c.bf16 %v1336, %v1336
  %v1438 = vpack.c.bf16 %v1339, %v1339
  %v1439 = vpack.c.bf16 %v1341, %v1341
  %v1440 = vpack.c.bf16 %v1344, %v1344
  %v1441 = vpack.c.bf16 %v1346, %v1346
  %v1442 = vpack.c.bf16 %v1349, %v1349
  %v1443 = vpack.c.bf16 %v1351, %v1351
  %v1444 = vpack.c.bf16 %v1354, %v1354
  %v1445 = vpack.c.bf16 %v1356, %v1356
  %v1446 = vpack.c.bf16 %v1359, %v1359
  %v1447 = vpack.c.bf16 %v1361, %v1361
  %v1448 = vpack.c.bf16 %v1364, %v1364
  %v1449 = vpack.c.bf16 %v1366, %v1366
  %v1450 = vpack.c.bf16 %v1369, %v1369
  %v1451 = vpack.c.bf16 %v1371, %v1371
  %v1452 = vpack.c.bf16 %v1374, %v1374
  %v1453 = vpack.c.bf16 %v1376, %v1376
  %v1454 = vpack.c.bf16 %v1379, %v1379
  %v1455 = vpack.c.bf16 %v1381, %v1381
  %v1456 = vpack.c.bf16 %v1384, %v1384
  %v1457 = vpack.c.bf16 %v1386, %v1386
  %v1458 = vpack.c.bf16 %v1389, %v1389
  %v1459 = vpack.c.bf16 %v1391, %v1391
  %v1460 = vpack.c.bf16 %v1394, %v1394
  %v1461 = vpack.c.bf16 %v1396, %v1396
  %1462 = vst [vmem:[%s5] sm:$0xf] %v1398
  %1463 = vst [vmem:[%s5 + $0x4] sm:$0xf] %v1399
  %1464 = vst [vmem:[%s5 + $0x8] sm:$0xf] %v1400
  %1465 = vst [vmem:[%s5 + $0xc] sm:$0xf] %v1401
  %1466 = vst [vmem:[%s5 + $0x10] sm:$0xf] %v1402
  %1467 = vst [vmem:[%s5 + $0x14] sm:$0xf] %v1403
  %1468 = vst [vmem:[%s5 + $0x18] sm:$0xf] %v1404
  %1469 = vst [vmem:[%s5 + $0x1c] sm:$0xf] %v1405
  %1470 = vst [vmem:[%s5 + $0x20] sm:$0xf] %v1406
  %1471 = vst [vmem:[%s5 + $0x24] sm:$0xf] %v1407
  %1472 = vst [vmem:[%s5 + $0x28] sm:$0xf] %v1408
  %1473 = vst [vmem:[%s5 + $0x2c] sm:$0xf] %v1409
  %1474 = vst [vmem:[%s5 + $0x30] sm:$0xf] %v1410
  %1475 = vst [vmem:[%s5 + $0x34] sm:$0xf] %v1411
  %1476 = vst [vmem:[%s5 + $0x38] sm:$0xf] %v1412
  %1477 = vst [vmem:[%s5 + $0x3c] sm:$0xf] %v1413
  %1478 = vst [vmem:[%s5 + $0x40] sm:$0xf] %v1414
  %1479 = vst [vmem:[%s5 + $0x44] sm:$0xf] %v1415
  %1480 = vst [vmem:[%s5 + $0x48] sm:$0xf] %v1416
  %1481 = vst [vmem:[%s5 + $0x4c] sm:$0xf] %v1417
  %1482 = vst [vmem:[%s5 + $0x50] sm:$0xf] %v1418
  %1483 = vst [vmem:[%s5 + $0x54] sm:$0xf] %v1419
  %1484 = vst [vmem:[%s5 + $0x58] sm:$0xf] %v1420
  %1485 = vst [vmem:[%s5 + $0x5c] sm:$0xf] %v1421
  %1486 = vst [vmem:[%s5 + $0x60] sm:$0xf] %v1422
  %1487 = vst [vmem:[%s5 + $0x64] sm:$0xf] %v1423
  %1488 = vst [vmem:[%s5 + $0x68] sm:$0xf] %v1424
  %1489 = vst [vmem:[%s5 + $0x6c] sm:$0xf] %v1425
  %1490 = vst [vmem:[%s5 + $0x70] sm:$0xf] %v1426
  %1491 = vst [vmem:[%s5 + $0x74] sm:$0xf] %v1427
  %1492 = vst [vmem:[%s5 + $0x78] sm:$0xf] %v1428
  %1493 = vst [vmem:[%s5 + $0x7c] sm:$0xf] %v1429
  %1494 = vst [vmem:[%s5 + $0x80] sm:$0xf] %v1430
  %1495 = vst [vmem:[%s5 + $0x84] sm:$0xf] %v1431
  %1496 = vst [vmem:[%s5 + $0x88] sm:$0xf] %v1432
  %1497 = vst [vmem:[%s5 + $0x8c] sm:$0xf] %v1433
  %1498 = vst [vmem:[%s5 + $0x90] sm:$0xf] %v1434
  %1499 = vst [vmem:[%s5 + $0x94] sm:$0xf] %v1435
  %1500 = vst [vmem:[%s5 + $0x98] sm:$0xf] %v1436
  %1501 = vst [vmem:[%s5 + $0x9c] sm:$0xf] %v1437
  %1502 = vst [vmem:[%s5 + $0xa0] sm:$0xf] %v1438
  %1503 = vst [vmem:[%s5 + $0xa4] sm:$0xf] %v1439
  %1504 = vst [vmem:[%s5 + $0xa8] sm:$0xf] %v1440
  %1505 = vst [vmem:[%s5 + $0xac] sm:$0xf] %v1441
  %1506 = vst [vmem:[%s5 + $0xb0] sm:$0xf] %v1442
  %1507 = vst [vmem:[%s5 + $0xb4] sm:$0xf] %v1443
  %1508 = vst [vmem:[%s5 + $0xb8] sm:$0xf] %v1444
  %1509 = vst [vmem:[%s5 + $0xbc] sm:$0xf] %v1445
  %1510 = vst [vmem:[%s5 + $0xc0] sm:$0xf] %v1446
  %1511 = vst [vmem:[%s5 + $0xc4] sm:$0xf] %v1447
  %1512 = vst [vmem:[%s5 + $0xc8] sm:$0xf] %v1448
  %1513 = vst [vmem:[%s5 + $0xcc] sm:$0xf] %v1449
  %1514 = vst [vmem:[%s5 + $0xd0] sm:$0xf] %v1450
  %1515 = vst [vmem:[%s5 + $0xd4] sm:$0xf] %v1451
  %1516 = vst [vmem:[%s5 + $0xd8] sm:$0xf] %v1452
  %1517 = vst [vmem:[%s5 + $0xdc] sm:$0xf] %v1453
  %1518 = vst [vmem:[%s5 + $0xe0] sm:$0xf] %v1454
  %1519 = vst [vmem:[%s5 + $0xe4] sm:$0xf] %v1455
  %1520 = vst [vmem:[%s5 + $0xe8] sm:$0xf] %v1456
  %1521 = vst [vmem:[%s5 + $0xec] sm:$0xf] %v1457
  %1522 = vst [vmem:[%s5 + $0xf0] sm:$0xf] %v1458
  %1523 = vst [vmem:[%s5 + $0xf4] sm:$0xf] %v1459
  %1524 = vst [vmem:[%s5 + $0xf8] sm:$0xf] %v1460
  %1525 = vst [vmem:[%s5 + $0xfc] sm:$0xf] %v1461
  // Predicated region
  $region22: #{encoder_forward.27} parent=0 // pred_check
    _
  $region23: #{encoder_forward.27} parent=0 // pred_check_branch
    %1527 = sbr.rel (0) target = $region25
  $region24: #{encoder_forward.27} parent=0 // pred_region
    _
  $region25: #{encoder_forward.27} parent=0 // pred_fallthru
    _
  // Predicated region
  $region26: #{encoder_forward.27} parent=0 // pred_check
    _
  $region27: #{encoder_forward.27} parent=0 // pred_check_branch
    %1529 = sbr.rel (0) target = $region29
  $region28: #{encoder_forward.27} parent=0 // pred_region
    _
  $region29: #{encoder_forward.27} parent=0 // pred_fallthru
    _

// kernel: encoder_forward.28
$region0: #{encoder_forward.28}
  #allocation0 [shape = 'u32[]', space=smem, size = 0x4, offset = 0x4, fixed_abs, tag = 'smem constant byte address 0x4 - core index']
  #allocation1 [shape = 'u32[72,128]{1,0:T(1,128)}', space=vmem, size = 0x9000, scoped, tag = 'internal scratch']
  %s0 = inlined_call_operand.vmem [shape: bf16[128,128], index: 0, kind: input, shape index: {}]
  %s1 = inlined_call_operand.vmem [shape: f32[1,128], index: 1, kind: input, shape index: {}]
  %s2 = inlined_call_operand.vmem [shape: f32[1,128], index: 2, kind: input, shape index: {}]
  %s3 = inlined_call_operand.vmem [shape: bf16[128,128], index: 3, kind: input, shape index: {}]
  %s4 = inlined_call_operand.vmem [shape: f32[1,128], index: 4, kind: input, shape index: {}]
  %s5 = inlined_call_operand.vmem [shape: bf16[128,128], index: 5, kind: output, shape index: {}]
  %s6 = sld [smem:[#allocation0]]
  $region30: #{encoder_forward.28} parent=0
    _
  %s8 = ssub.s32 1, %s6
  %s9 = scalar_select 0, %s8, %s6
  // Predicated region
  $region2: #{encoder_forward.28} parent=0 // pred_check
    _
  $region3: #{encoder_forward.28} parent=0 // pred_check_branch
    %11 = sbr.rel (0) target = $region5
  $region4: #{encoder_forward.28} parent=0 // pred_region
    _
  $region5: #{encoder_forward.28} parent=0 // pred_fallthru
    _
  // Predicated region
  $region6: #{encoder_forward.28} parent=0 // pred_check
    _
  $region7: #{encoder_forward.28} parent=0 // pred_check_branch
    %13 = sbr.rel (0) target = $region9
  $region8: #{encoder_forward.28} parent=0 // pred_region
    _
  $region9: #{encoder_forward.28} parent=0 // pred_fallthru
    _
  // Predicated region
  $region10: #{encoder_forward.28} parent=0 // pred_check
    _
  $region11: #{encoder_forward.28} parent=0 // pred_check_branch
    %15 = sbr.rel (0) target = $region13
  $region12: #{encoder_forward.28} parent=0 // pred_region
    _
  $region13: #{encoder_forward.28} parent=0 // pred_fallthru
    _
  // Predicated region
  $region14: #{encoder_forward.28} parent=0 // pred_check
    _
  $region15: #{encoder_forward.28} parent=0 // pred_check_branch
    %17 = sbr.rel (0) target = $region17
  $region16: #{encoder_forward.28} parent=0 // pred_region
    _
  $region17: #{encoder_forward.28} parent=0 // pred_fallthru
    _
  // Predicated region
  $region18: #{encoder_forward.28} parent=0 // pred_check
    _
  $region19: #{encoder_forward.28} parent=0 // pred_check_branch
    %19 = sbr.rel (0) target = $region21
  $region20: #{encoder_forward.28} parent=0 // pred_region
    _
  $region21: #{encoder_forward.28} parent=0 // pred_fallthru
    _
  %v20 = vld [vmem:[%s0] sm:$0xf]
  %v21 = vld [vmem:[%s0 + $0x4] sm:$0xf]
  %v22 = vld [vmem:[%s0 + $0x8] sm:$0xf]
  %v23 = vld [vmem:[%s0 + $0xc] sm:$0xf]
  %v24 = vld [vmem:[%s0 + $0x10] sm:$0xf]
  %v25 = vld [vmem:[%s0 + $0x14] sm:$0xf]
  %v26 = vld [vmem:[%s0 + $0x18] sm:$0xf]
  %v27 = vld [vmem:[%s0 + $0x1c] sm:$0xf]
  %v28 = vld [vmem:[%s0 + $0x20] sm:$0xf]
  %v29 = vld [vmem:[%s0 + $0x24] sm:$0xf]
  %v30 = vld [vmem:[%s0 + $0x28] sm:$0xf]
  %v31 = vld [vmem:[%s0 + $0x2c] sm:$0xf]
  %v32 = vld [vmem:[%s0 + $0x30] sm:$0xf]
  %v33 = vld [vmem:[%s0 + $0x34] sm:$0xf]
  %v34 = vld [vmem:[%s0 + $0x38] sm:$0xf]
  %v35 = vld [vmem:[%s0 + $0x3c] sm:$0xf]
  %v36 = vunpack.c.l.bf16 %v20
  %v37 = vunpack.c.l.bf16 %v21
  %v38 = vunpack.c.l.bf16 %v22
  %v39 = vunpack.c.l.bf16 %v23
  %v40 = vunpack.c.l.bf16 %v24
  %v41 = vunpack.c.l.bf16 %v25
  %v42 = vunpack.c.l.bf16 %v26
  %v43 = vunpack.c.l.bf16 %v27
  %v44 = vunpack.c.l.bf16 %v28
  %v45 = vunpack.c.l.bf16 %v29
  %v46 = vunpack.c.l.bf16 %v30
  %v47 = vunpack.c.l.bf16 %v31
  %v48 = vunpack.c.l.bf16 %v32
  %v49 = vunpack.c.l.bf16 %v33
  %v50 = vunpack.c.l.bf16 %v34
  %v51 = vunpack.c.l.bf16 %v35
  %v52 = vld [vmem:[%s1] sm:$0x1]
  %v54 = vperm.slane %v52, 0
  %v56 = vmul.f32 %v36, %v54
  %v57 = vmul.f32 %v37, %v54
  %v58 = vmul.f32 %v38, %v54
  %v59 = vmul.f32 %v39, %v54
  %v60 = vmul.f32 %v40, %v54
  %v61 = vmul.f32 %v41, %v54
  %v62 = vmul.f32 %v42, %v54
  %v63 = vmul.f32 %v43, %v54
  %v64 = vmul.f32 %v44, %v54
  %v65 = vmul.f32 %v45, %v54
  %v66 = vmul.f32 %v46, %v54
  %v67 = vmul.f32 %v47, %v54
  %v68 = vmul.f32 %v48, %v54
  %v69 = vmul.f32 %v49, %v54
  %v70 = vmul.f32 %v50, %v54
  %v71 = vmul.f32 %v51, %v54
  %v72 = vld [vmem:[%s2] sm:$0x1]
  %v74 = vperm.slane %v72, 0
  %v76 = vadd.f32 %v56, %v74
  %v77 = vadd.f32 %v57, %v74
  %v78 = vadd.f32 %v58, %v74
  %v79 = vadd.f32 %v59, %v74
  %v80 = vadd.f32 %v60, %v74
  %v81 = vadd.f32 %v61, %v74
  %v82 = vadd.f32 %v62, %v74
  %v83 = vadd.f32 %v63, %v74
  %v84 = vadd.f32 %v64, %v74
  %v85 = vadd.f32 %v65, %v74
  %v86 = vadd.f32 %v66, %v74
  %v87 = vadd.f32 %v67, %v74
  %v88 = vadd.f32 %v68, %v74
  %v89 = vadd.f32 %v69, %v74
  %v90 = vadd.f32 %v70, %v74
  %v91 = vadd.f32 %v71, %v74
  %vm92 = vcmp.gt.f32.partialorder %v76, 0.0
  %vm93 = vcmp.gt.f32.partialorder %v77, 0.0
  %vm94 = vcmp.gt.f32.partialorder %v78, 0.0
  %vm95 = vcmp.gt.f32.partialorder %v79, 0.0
  %vm96 = vcmp.gt.f32.partialorder %v80, 0.0
  %vm97 = vcmp.gt.f32.partialorder %v81, 0.0
  %vm98 = vcmp.gt.f32.partialorder %v82, 0.0
  %vm99 = vcmp.gt.f32.partialorder %v83, 0.0
  %vm100 = vcmp.gt.f32.partialorder %v84, 0.0
  %vm101 = vcmp.gt.f32.partialorder %v85, 0.0
  %vm102 = vcmp.gt.f32.partialorder %v86, 0.0
  %vm103 = vcmp.gt.f32.partialorder %v87, 0.0
  %vm104 = vcmp.gt.f32.partialorder %v88, 0.0
  %vm105 = vcmp.gt.f32.partialorder %v89, 0.0
  %vm106 = vcmp.gt.f32.partialorder %v90, 0.0
  %vm107 = vcmp.gt.f32.partialorder %v91, 0.0
  %v108 = vmul.f32 %v76, 0.01
  %v109 = vmul.f32 %v77, 0.01
  %v110 = vmul.f32 %v78, 0.01
  %v111 = vmul.f32 %v79, 0.01
  %v112 = vmul.f32 %v80, 0.01
  %v113 = vmul.f32 %v81, 0.01
  %v114 = vmul.f32 %v82, 0.01
  %v115 = vmul.f32 %v83, 0.01
  %v116 = vmul.f32 %v84, 0.01
  %v117 = vmul.f32 %v85, 0.01
  %v118 = vmul.f32 %v86, 0.01
  %v119 = vmul.f32 %v87, 0.01
  %v120 = vmul.f32 %v88, 0.01
  %v121 = vmul.f32 %v89, 0.01
  %v122 = vmul.f32 %v90, 0.01
  %v123 = vmul.f32 %v91, 0.01
  %v124 = vsel %vm92, %v76, %v108
  %v125 = vsel %vm93, %v77, %v109
  %v126 = vsel %vm94, %v78, %v110
  %v127 = vsel %vm95, %v79, %v111
  %v128 = vsel %vm96, %v80, %v112
  %v129 = vsel %vm97, %v81, %v113
  %v130 = vsel %vm98, %v82, %v114
  %v131 = vsel %vm99, %v83, %v115
  %v132 = vsel %vm100, %v84, %v116
  %v133 = vsel %vm101, %v85, %v117
  %v134 = vsel %vm102, %v86, %v118
  %v135 = vsel %vm103, %v87, %v119
  %v136 = vsel %vm104, %v88, %v120
  %v137 = vsel %vm105, %v89, %v121
  %v138 = vsel %vm106, %v90, %v122
  %v139 = vsel %vm107, %v91, %v123
  %v140 = vpack.c.bf16 %v125, %v124
  %v141 = vpack.c.bf16 %v127, %v126
  %v142 = vpack.c.bf16 %v129, %v128
  %v143 = vpack.c.bf16 %v131, %v130
  %v144 = vpack.c.bf16 %v133, %v132
  %v145 = vpack.c.bf16 %v135, %v134
  %v146 = vpack.c.bf16 %v137, %v136
  %v147 = vpack.c.bf16 %v139, %v138
  %v148 = vld [vmem:[%s3] sm:$0xf]
  %v149 = vld [vmem:[%s3 + $0x4] sm:$0xf]
  %v150 = vld [vmem:[%s3 + $0x8] sm:$0xf]
  %v151 = vld [vmem:[%s3 + $0xc] sm:$0xf]
  %v152 = vld [vmem:[%s3 + $0x10] sm:$0xf]
  %v153 = vld [vmem:[%s3 + $0x14] sm:$0xf]
  %v154 = vld [vmem:[%s3 + $0x18] sm:$0xf]
  %v155 = vld [vmem:[%s3 + $0x1c] sm:$0xf]
  %v156 = vld [vmem:[%s3 + $0x20] sm:$0xf]
  %v157 = vld [vmem:[%s3 + $0x24] sm:$0xf]
  %v158 = vld [vmem:[%s3 + $0x28] sm:$0xf]
  %v159 = vld [vmem:[%s3 + $0x2c] sm:$0xf]
  %v160 = vld [vmem:[%s3 + $0x30] sm:$0xf]
  %v161 = vld [vmem:[%s3 + $0x34] sm:$0xf]
  %v162 = vld [vmem:[%s3 + $0x38] sm:$0xf]
  %v163 = vld [vmem:[%s3 + $0x3c] sm:$0xf]
  %v164 = vld [vmem:[%s4] sm:$0x1]
  %v166 = vperm.slane %v164, 0
  %v184 = vunpack.c.l.b16 %v148
  %v185 = vunpack.c.l.b16 %v149
  %v186 = vunpack.c.l.b16 %v150
  %v187 = vunpack.c.l.b16 %v151
  %v188 = vunpack.c.l.b16 %v152
  %v189 = vunpack.c.l.b16 %v153
  %v190 = vunpack.c.l.b16 %v154
  %v191 = vunpack.c.l.b16 %v155
  %v192 = vunpack.c.l.b16 %v156
  %v193 = vunpack.c.l.b16 %v157
  %v194 = vunpack.c.l.b16 %v158
  %v195 = vunpack.c.l.b16 %v159
  %v196 = vunpack.c.l.b16 %v160
  %v197 = vunpack.c.l.b16 %v161
  %v198 = vunpack.c.l.b16 %v162
  %v199 = vunpack.c.l.b16 %v163
  %v200 = vpack.c.b16 %v185, %v184
  %v201 = vpack.c.b16 %v187, %v186
  %v202 = vpack.c.b16 %v189, %v188
  %v203 = vpack.c.b16 %v191, %v190
  %v204 = vpack.c.b16 %v193, %v192
  %v205 = vpack.c.b16 %v195, %v194
  %v206 = vpack.c.b16 %v197, %v196
  %v207 = vpack.c.b16 %v199, %v198
  %216 = vmatpush.bf16.msra.mxu0 %v207
  %217 = vmatpush.bf16.msra.mxu0 %v206
  %218 = vmatpush.bf16.msra.mxu0 %v205
  %219 = vmatpush.bf16.msra.mxu0 %v204
  %220 = vmatpush.bf16.msra.mxu0 %v203
  %221 = vmatpush.bf16.msra.mxu0 %v202
  %222 = vmatpush.bf16.msra.mxu0 %v201
  %223 = vmatpush.bf16.msra.mxu0 %v200
  %224 = vmatmul.bf16.gmra.mxu0 %v140
  %v225 = vpop.f32.mrf.mxu0
  %v226 = vadd.f32 %v166, %v225
  %v227 = vpop.f32.mrf.mxu0
  %v228 = vadd.f32 %v166, %v227
  %229 = vmatmul.bf16.gmra.mxu0 %v141
  %v230 = vpop.f32.mrf.mxu0
  %v231 = vadd.f32 %v166, %v230
  %v232 = vpop.f32.mrf.mxu0
  %v233 = vadd.f32 %v166, %v232
  %234 = vmatmul.bf16.gmra.mxu0 %v142
  %v235 = vpop.f32.mrf.mxu0
  %v236 = vadd.f32 %v166, %v235
  %v237 = vpop.f32.mrf.mxu0
  %v238 = vadd.f32 %v166, %v237
  %239 = vmatmul.bf16.gmra.mxu0 %v143
  %v240 = vpop.f32.mrf.mxu0
  %v241 = vadd.f32 %v166, %v240
  %v242 = vpop.f32.mrf.mxu0
  %v243 = vadd.f32 %v166, %v242
  %244 = vmatmul.bf16.gmra.mxu0 %v144
  %v245 = vpop.f32.mrf.mxu0
  %v246 = vadd.f32 %v166, %v245
  %v247 = vpop.f32.mrf.mxu0
  %v248 = vadd.f32 %v166, %v247
  %249 = vmatmul.bf16.gmra.mxu0 %v145
  %v250 = vpop.f32.mrf.mxu0
  %v251 = vadd.f32 %v166, %v250
  %v252 = vpop.f32.mrf.mxu0
  %v253 = vadd.f32 %v166, %v252
  %254 = vmatmul.bf16.gmra.mxu0 %v146
  %v255 = vpop.f32.mrf.mxu0
  %v256 = vadd.f32 %v166, %v255
  %v257 = vpop.f32.mrf.mxu0
  %v258 = vadd.f32 %v166, %v257
  %259 = vmatmul.bf16.gmra.mxu0 %v147
  %v260 = vpop.f32.mrf.mxu0
  %v261 = vadd.f32 %v166, %v260
  %v262 = vpop.f32.mrf.mxu0
  %v263 = vadd.f32 %v166, %v262
  %264 = vdwg.mxu0
  %v265 = vpack.c.bf16 %v226, %v226
  %v266 = vpack.c.bf16 %v228, %v228
  %v267 = vpack.c.bf16 %v231, %v231
  %v268 = vpack.c.bf16 %v233, %v233
  %v269 = vpack.c.bf16 %v236, %v236
  %v270 = vpack.c.bf16 %v238, %v238
  %v271 = vpack.c.bf16 %v241, %v241
  %v272 = vpack.c.bf16 %v243, %v243
  %v273 = vpack.c.bf16 %v246, %v246
  %v274 = vpack.c.bf16 %v248, %v248
  %v275 = vpack.c.bf16 %v251, %v251
  %v276 = vpack.c.bf16 %v253, %v253
  %v277 = vpack.c.bf16 %v256, %v256
  %v278 = vpack.c.bf16 %v258, %v258
  %v279 = vpack.c.bf16 %v261, %v261
  %v280 = vpack.c.bf16 %v263, %v263
  %281 = vst [vmem:[%s5] sm:$0xf] %v265
  %282 = vst [vmem:[%s5 + $0x4] sm:$0xf] %v266
  %283 = vst [vmem:[%s5 + $0x8] sm:$0xf] %v267
  %284 = vst [vmem:[%s5 + $0xc] sm:$0xf] %v268
  %285 = vst [vmem:[%s5 + $0x10] sm:$0xf] %v269
  %286 = vst [vmem:[%s5 + $0x14] sm:$0xf] %v270
  %287 = vst [vmem:[%s5 + $0x18] sm:$0xf] %v271
  %288 = vst [vmem:[%s5 + $0x1c] sm:$0xf] %v272
  %289 = vst [vmem:[%s5 + $0x20] sm:$0xf] %v273
  %290 = vst [vmem:[%s5 + $0x24] sm:$0xf] %v274
  %291 = vst [vmem:[%s5 + $0x28] sm:$0xf] %v275
  %292 = vst [vmem:[%s5 + $0x2c] sm:$0xf] %v276
  %293 = vst [vmem:[%s5 + $0x30] sm:$0xf] %v277
  %294 = vst [vmem:[%s5 + $0x34] sm:$0xf] %v278
  %295 = vst [vmem:[%s5 + $0x38] sm:$0xf] %v279
  %296 = vst [vmem:[%s5 + $0x3c] sm:$0xf] %v280
  // Predicated region
  $region22: #{encoder_forward.28} parent=0 // pred_check
    _
  $region23: #{encoder_forward.28} parent=0 // pred_check_branch
    %298 = sbr.rel (0) target = $region25
  $region24: #{encoder_forward.28} parent=0 // pred_region
    _
  $region25: #{encoder_forward.28} parent=0 // pred_fallthru
    _
  // Predicated region
  $region26: #{encoder_forward.28} parent=0 // pred_check
    _
  $region27: #{encoder_forward.28} parent=0 // pred_check_branch
    %300 = sbr.rel (0) target = $region29
  $region28: #{encoder_forward.28} parent=0 // pred_region
    _
  $region29: #{encoder_forward.28} parent=0 // pred_fallthru
    _

// kernel: encoder_forward.29
$region0: #{encoder_forward.29}
  #allocation0 [shape = 'u32[]', space=smem, size = 0x4, offset = 0x4, fixed_abs, tag = 'smem constant byte address 0x4 - core index']
  #allocation1 [shape = 'u32[72,128]{1,0:T(1,128)}', space=vmem, size = 0x9000, scoped, tag = 'internal scratch']
  %s0 = inlined_call_operand.vmem [shape: bf16[128,256], index: 0, kind: input, shape index: {}]
  %s1 = inlined_call_operand.vmem [shape: f32[1,256], index: 1, kind: input, shape index: {}]
  %s2 = inlined_call_operand.vmem [shape: f32[1,256], index: 2, kind: input, shape index: {}]
  %s3 = inlined_call_operand.vmem [shape: bf16[256,128], index: 3, kind: input, shape index: {}]
  %s4 = inlined_call_operand.vmem [shape: f32[1,128], index: 4, kind: input, shape index: {}]
  %s5 = inlined_call_operand.vmem [shape: bf16[128,128], index: 5, kind: output, shape index: {}]
  %s6 = sld [smem:[#allocation0]]
  $region30: #{encoder_forward.29} parent=0
    _
  %s8 = ssub.s32 1, %s6
  %s9 = scalar_select 0, %s8, %s6
  // Predicated region
  $region2: #{encoder_forward.29} parent=0 // pred_check
    _
  $region3: #{encoder_forward.29} parent=0 // pred_check_branch
    %11 = sbr.rel (0) target = $region5
  $region4: #{encoder_forward.29} parent=0 // pred_region
    _
  $region5: #{encoder_forward.29} parent=0 // pred_fallthru
    _
  // Predicated region
  $region6: #{encoder_forward.29} parent=0 // pred_check
    _
  $region7: #{encoder_forward.29} parent=0 // pred_check_branch
    %13 = sbr.rel (0) target = $region9
  $region8: #{encoder_forward.29} parent=0 // pred_region
    _
  $region9: #{encoder_forward.29} parent=0 // pred_fallthru
    _
  // Predicated region
  $region10: #{encoder_forward.29} parent=0 // pred_check
    _
  $region11: #{encoder_forward.29} parent=0 // pred_check_branch
    %15 = sbr.rel (0) target = $region13
  $region12: #{encoder_forward.29} parent=0 // pred_region
    _
  $region13: #{encoder_forward.29} parent=0 // pred_fallthru
    _
  // Predicated region
  $region14: #{encoder_forward.29} parent=0 // pred_check
    _
  $region15: #{encoder_forward.29} parent=0 // pred_check_branch
    %17 = sbr.rel (0) target = $region17
  $region16: #{encoder_forward.29} parent=0 // pred_region
    _
  $region17: #{encoder_forward.29} parent=0 // pred_fallthru
    _
  // Predicated region
  $region18: #{encoder_forward.29} parent=0 // pred_check
    _
  $region19: #{encoder_forward.29} parent=0 // pred_check_branch
    %19 = sbr.rel (0) target = $region21
  $region20: #{encoder_forward.29} parent=0 // pred_region
    _
  $region21: #{encoder_forward.29} parent=0 // pred_fallthru
    _
  %v20 = vld [vmem:[%s0] sm:$0xff]
  %v21 = vld [vmem:[%s0 + $0x8] sm:$0xff]
  %v22 = vld [vmem:[%s0 + $0x10] sm:$0xff]
  %v23 = vld [vmem:[%s0 + $0x18] sm:$0xff]
  %v24 = vld [vmem:[%s0 + $0x20] sm:$0xff]
  %v25 = vld [vmem:[%s0 + $0x28] sm:$0xff]
  %v26 = vld [vmem:[%s0 + $0x30] sm:$0xff]
  %v27 = vld [vmem:[%s0 + $0x38] sm:$0xff]
  %v28 = vld [vmem:[%s0 + $0x40] sm:$0xff]
  %v29 = vld [vmem:[%s0 + $0x48] sm:$0xff]
  %v30 = vld [vmem:[%s0 + $0x50] sm:$0xff]
  %v31 = vld [vmem:[%s0 + $0x58] sm:$0xff]
  %v32 = vld [vmem:[%s0 + $0x60] sm:$0xff]
  %v33 = vld [vmem:[%s0 + $0x68] sm:$0xff]
  %v34 = vld [vmem:[%s0 + $0x70] sm:$0xff]
  %v35 = vld [vmem:[%s0 + $0x78] sm:$0xff]
  %v36 = vunpack.c.l.bf16 %v20
  %v37 = vunpack.c.h.bf16 %v20
  %v38 = vunpack.c.l.bf16 %v21
  %v39 = vunpack.c.h.bf16 %v21
  %v40 = vunpack.c.l.bf16 %v22
  %v41 = vunpack.c.h.bf16 %v22
  %v42 = vunpack.c.l.bf16 %v23
  %v43 = vunpack.c.h.bf16 %v23
  %v44 = vunpack.c.l.bf16 %v24
  %v45 = vunpack.c.h.bf16 %v24
  %v46 = vunpack.c.l.bf16 %v25
  %v47 = vunpack.c.h.bf16 %v25
  %v48 = vunpack.c.l.bf16 %v26
  %v49 = vunpack.c.h.bf16 %v26
  %v50 = vunpack.c.l.bf16 %v27
  %v51 = vunpack.c.h.bf16 %v27
  %v52 = vunpack.c.l.bf16 %v28
  %v53 = vunpack.c.h.bf16 %v28
  %v54 = vunpack.c.l.bf16 %v29
  %v55 = vunpack.c.h.bf16 %v29
  %v56 = vunpack.c.l.bf16 %v30
  %v57 = vunpack.c.h.bf16 %v30
  %v58 = vunpack.c.l.bf16 %v31
  %v59 = vunpack.c.h.bf16 %v31
  %v60 = vunpack.c.l.bf16 %v32
  %v61 = vunpack.c.h.bf16 %v32
  %v62 = vunpack.c.l.bf16 %v33
  %v63 = vunpack.c.h.bf16 %v33
  %v64 = vunpack.c.l.bf16 %v34
  %v65 = vunpack.c.h.bf16 %v34
  %v66 = vunpack.c.l.bf16 %v35
  %v67 = vunpack.c.h.bf16 %v35
  %v68 = vld [vmem:[%s1] sm:$0x3]
  %v70 = vperm.slane %v68, 0
  %v71 = vperm.slane %v68, 1
  %v74 = vmul.f32 %v36, %v70
  %v75 = vmul.f32 %v37, %v71
  %v76 = vmul.f32 %v38, %v70
  %v77 = vmul.f32 %v39, %v71
  %v78 = vmul.f32 %v40, %v70
  %v79 = vmul.f32 %v41, %v71
  %v80 = vmul.f32 %v42, %v70
  %v81 = vmul.f32 %v43, %v71
  %v82 = vmul.f32 %v44, %v70
  %v83 = vmul.f32 %v45, %v71
  %v84 = vmul.f32 %v46, %v70
  %v85 = vmul.f32 %v47, %v71
  %v86 = vmul.f32 %v48, %v70
  %v87 = vmul.f32 %v49, %v71
  %v88 = vmul.f32 %v50, %v70
  %v89 = vmul.f32 %v51, %v71
  %v90 = vmul.f32 %v52, %v70
  %v91 = vmul.f32 %v53, %v71
  %v92 = vmul.f32 %v54, %v70
  %v93 = vmul.f32 %v55, %v71
  %v94 = vmul.f32 %v56, %v70
  %v95 = vmul.f32 %v57, %v71
  %v96 = vmul.f32 %v58, %v70
  %v97 = vmul.f32 %v59, %v71
  %v98 = vmul.f32 %v60, %v70
  %v99 = vmul.f32 %v61, %v71
  %v100 = vmul.f32 %v62, %v70
  %v101 = vmul.f32 %v63, %v71
  %v102 = vmul.f32 %v64, %v70
  %v103 = vmul.f32 %v65, %v71
  %v104 = vmul.f32 %v66, %v70
  %v105 = vmul.f32 %v67, %v71
  %v106 = vld [vmem:[%s2] sm:$0x3]
  %v108 = vperm.slane %v106, 0
  %v109 = vperm.slane %v106, 1
  %v112 = vadd.f32 %v74, %v108
  %v113 = vadd.f32 %v75, %v109
  %v114 = vadd.f32 %v76, %v108
  %v115 = vadd.f32 %v77, %v109
  %v116 = vadd.f32 %v78, %v108
  %v117 = vadd.f32 %v79, %v109
  %v118 = vadd.f32 %v80, %v108
  %v119 = vadd.f32 %v81, %v109
  %v120 = vadd.f32 %v82, %v108
  %v121 = vadd.f32 %v83, %v109
  %v122 = vadd.f32 %v84, %v108
  %v123 = vadd.f32 %v85, %v109
  %v124 = vadd.f32 %v86, %v108
  %v125 = vadd.f32 %v87, %v109
  %v126 = vadd.f32 %v88, %v108
  %v127 = vadd.f32 %v89, %v109
  %v128 = vadd.f32 %v90, %v108
  %v129 = vadd.f32 %v91, %v109
  %v130 = vadd.f32 %v92, %v108
  %v131 = vadd.f32 %v93, %v109
  %v132 = vadd.f32 %v94, %v108
  %v133 = vadd.f32 %v95, %v109
  %v134 = vadd.f32 %v96, %v108
  %v135 = vadd.f32 %v97, %v109
  %v136 = vadd.f32 %v98, %v108
  %v137 = vadd.f32 %v99, %v109
  %v138 = vadd.f32 %v100, %v108
  %v139 = vadd.f32 %v101, %v109
  %v140 = vadd.f32 %v102, %v108
  %v141 = vadd.f32 %v103, %v109
  %v142 = vadd.f32 %v104, %v108
  %v143 = vadd.f32 %v105, %v109
  %vm144 = vcmp.gt.f32.partialorder %v112, 0.0
  %vm145 = vcmp.gt.f32.partialorder %v113, 0.0
  %vm146 = vcmp.gt.f32.partialorder %v114, 0.0
  %vm147 = vcmp.gt.f32.partialorder %v115, 0.0
  %vm148 = vcmp.gt.f32.partialorder %v116, 0.0
  %vm149 = vcmp.gt.f32.partialorder %v117, 0.0
  %vm150 = vcmp.gt.f32.partialorder %v118, 0.0
  %vm151 = vcmp.gt.f32.partialorder %v119, 0.0
  %vm152 = vcmp.gt.f32.partialorder %v120, 0.0
  %vm153 = vcmp.gt.f32.partialorder %v121, 0.0
  %vm154 = vcmp.gt.f32.partialorder %v122, 0.0
  %vm155 = vcmp.gt.f32.partialorder %v123, 0.0
  %vm156 = vcmp.gt.f32.partialorder %v124, 0.0
  %vm157 = vcmp.gt.f32.partialorder %v125, 0.0
  %vm158 = vcmp.gt.f32.partialorder %v126, 0.0
  %vm159 = vcmp.gt.f32.partialorder %v127, 0.0
  %vm160 = vcmp.gt.f32.partialorder %v128, 0.0
  %vm161 = vcmp.gt.f32.partialorder %v129, 0.0
  %vm162 = vcmp.gt.f32.partialorder %v130, 0.0
  %vm163 = vcmp.gt.f32.partialorder %v131, 0.0
  %vm164 = vcmp.gt.f32.partialorder %v132, 0.0
  %vm165 = vcmp.gt.f32.partialorder %v133, 0.0
  %vm166 = vcmp.gt.f32.partialorder %v134, 0.0
  %vm167 = vcmp.gt.f32.partialorder %v135, 0.0
  %vm168 = vcmp.gt.f32.partialorder %v136, 0.0
  %vm169 = vcmp.gt.f32.partialorder %v137, 0.0
  %vm170 = vcmp.gt.f32.partialorder %v138, 0.0
  %vm171 = vcmp.gt.f32.partialorder %v139, 0.0
  %vm172 = vcmp.gt.f32.partialorder %v140, 0.0
  %vm173 = vcmp.gt.f32.partialorder %v141, 0.0
  %vm174 = vcmp.gt.f32.partialorder %v142, 0.0
  %vm175 = vcmp.gt.f32.partialorder %v143, 0.0
  %v176 = vmul.f32 %v112, 0.01
  %v177 = vmul.f32 %v113, 0.01
  %v178 = vmul.f32 %v114, 0.01
  %v179 = vmul.f32 %v115, 0.01
  %v180 = vmul.f32 %v116, 0.01
  %v181 = vmul.f32 %v117, 0.01
  %v182 = vmul.f32 %v118, 0.01
  %v183 = vmul.f32 %v119, 0.01
  %v184 = vmul.f32 %v120, 0.01
  %v185 = vmul.f32 %v121, 0.01
  %v186 = vmul.f32 %v122, 0.01
  %v187 = vmul.f32 %v123, 0.01
  %v188 = vmul.f32 %v124, 0.01
  %v189 = vmul.f32 %v125, 0.01
  %v190 = vmul.f32 %v126, 0.01
  %v191 = vmul.f32 %v127, 0.01
  %v192 = vmul.f32 %v128, 0.01
  %v193 = vmul.f32 %v129, 0.01
  %v194 = vmul.f32 %v130, 0.01
  %v195 = vmul.f32 %v131, 0.01
  %v196 = vmul.f32 %v132, 0.01
  %v197 = vmul.f32 %v133, 0.01
  %v198 = vmul.f32 %v134, 0.01
  %v199 = vmul.f32 %v135, 0.01
  %v200 = vmul.f32 %v136, 0.01
  %v201 = vmul.f32 %v137, 0.01
  %v202 = vmul.f32 %v138, 0.01
  %v203 = vmul.f32 %v139, 0.01
  %v204 = vmul.f32 %v140, 0.01
  %v205 = vmul.f32 %v141, 0.01
  %v206 = vmul.f32 %v142, 0.01
  %v207 = vmul.f32 %v143, 0.01
  %v208 = vsel %vm144, %v112, %v176
  %v209 = vsel %vm145, %v113, %v177
  %v210 = vsel %vm146, %v114, %v178
  %v211 = vsel %vm147, %v115, %v179
  %v212 = vsel %vm148, %v116, %v180
  %v213 = vsel %vm149, %v117, %v181
  %v214 = vsel %vm150, %v118, %v182
  %v215 = vsel %vm151, %v119, %v183
  %v216 = vsel %vm152, %v120, %v184
  %v217 = vsel %vm153, %v121, %v185
  %v218 = vsel %vm154, %v122, %v186
  %v219 = vsel %vm155, %v123, %v187
  %v220 = vsel %vm156, %v124, %v188
  %v221 = vsel %vm157, %v125, %v189
  %v222 = vsel %vm158, %v126, %v190
  %v223 = vsel %vm159, %v127, %v191
  %v224 = vsel %vm160, %v128, %v192
  %v225 = vsel %vm161, %v129, %v193
  %v226 = vsel %vm162, %v130, %v194
  %v227 = vsel %vm163, %v131, %v195
  %v228 = vsel %vm164, %v132, %v196
  %v229 = vsel %vm165, %v133, %v197
  %v230 = vsel %vm166, %v134, %v198
  %v231 = vsel %vm167, %v135, %v199
  %v232 = vsel %vm168, %v136, %v200
  %v233 = vsel %vm169, %v137, %v201
  %v234 = vsel %vm170, %v138, %v202
  %v235 = vsel %vm171, %v139, %v203
  %v236 = vsel %vm172, %v140, %v204
  %v237 = vsel %vm173, %v141, %v205
  %v238 = vsel %vm174, %v142, %v206
  %v239 = vsel %vm175, %v143, %v207
  %v240 = vpack.c.bf16 %v210, %v208
  %v241 = vpack.c.bf16 %v211, %v209
  %v242 = vpack.c.bf16 %v214, %v212
  %v243 = vpack.c.bf16 %v215, %v213
  %v244 = vpack.c.bf16 %v218, %v216
  %v245 = vpack.c.bf16 %v219, %v217
  %v246 = vpack.c.bf16 %v222, %v220
  %v247 = vpack.c.bf16 %v223, %v221
  %v248 = vpack.c.bf16 %v226, %v224
  %v249 = vpack.c.bf16 %v227, %v225
  %v250 = vpack.c.bf16 %v230, %v228
  %v251 = vpack.c.bf16 %v231, %v229
  %v252 = vpack.c.bf16 %v234, %v232
  %v253 = vpack.c.bf16 %v235, %v233
  %v254 = vpack.c.bf16 %v238, %v236
  %v255 = vpack.c.bf16 %v239, %v237
  %v256 = vld [vmem:[%s3] sm:$0xf]
  %v257 = vld [vmem:[%s3 + $0x4] sm:$0xf]
  %v258 = vld [vmem:[%s3 + $0x8] sm:$0xf]
  %v259 = vld [vmem:[%s3 + $0xc] sm:$0xf]
  %v260 = vld [vmem:[%s3 + $0x10] sm:$0xf]
  %v261 = vld [vmem:[%s3 + $0x14] sm:$0xf]
  %v262 = vld [vmem:[%s3 + $0x18] sm:$0xf]
  %v263 = vld [vmem:[%s3 + $0x1c] sm:$0xf]
  %v264 = vld [vmem:[%s3 + $0x20] sm:$0xf]
  %v265 = vld [vmem:[%s3 + $0x24] sm:$0xf]
  %v266 = vld [vmem:[%s3 + $0x28] sm:$0xf]
  %v267 = vld [vmem:[%s3 + $0x2c] sm:$0xf]
  %v268 = vld [vmem:[%s3 + $0x30] sm:$0xf]
  %v269 = vld [vmem:[%s3 + $0x34] sm:$0xf]
  %v270 = vld [vmem:[%s3 + $0x38] sm:$0xf]
  %v271 = vld [vmem:[%s3 + $0x3c] sm:$0xf]
  %v272 = vld [vmem:[%s3 + $0x40] sm:$0xf]
  %v273 = vld [vmem:[%s3 + $0x44] sm:$0xf]
  %v274 = vld [vmem:[%s3 + $0x48] sm:$0xf]
  %v275 = vld [vmem:[%s3 + $0x4c] sm:$0xf]
  %v276 = vld [vmem:[%s3 + $0x50] sm:$0xf]
  %v277 = vld [vmem:[%s3 + $0x54] sm:$0xf]
  %v278 = vld [vmem:[%s3 + $0x58] sm:$0xf]
  %v279 = vld [vmem:[%s3 + $0x5c] sm:$0xf]
  %v280 = vld [vmem:[%s3 + $0x60] sm:$0xf]
  %v281 = vld [vmem:[%s3 + $0x64] sm:$0xf]
  %v282 = vld [vmem:[%s3 + $0x68] sm:$0xf]
  %v283 = vld [vmem:[%s3 + $0x6c] sm:$0xf]
  %v284 = vld [vmem:[%s3 + $0x70] sm:$0xf]
  %v285 = vld [vmem:[%s3 + $0x74] sm:$0xf]
  %v286 = vld [vmem:[%s3 + $0x78] sm:$0xf]
  %v287 = vld [vmem:[%s3 + $0x7c] sm:$0xf]
  %v288 = vld [vmem:[%s4] sm:$0x1]
  %v290 = vperm.slane %v288, 0
  %v324 = vunpack.c.l.b16 %v256
  %v325 = vunpack.c.l.b16 %v257
  %v326 = vunpack.c.l.b16 %v258
  %v327 = vunpack.c.l.b16 %v259
  %v328 = vunpack.c.l.b16 %v260
  %v329 = vunpack.c.l.b16 %v261
  %v330 = vunpack.c.l.b16 %v262
  %v331 = vunpack.c.l.b16 %v263
  %v332 = vunpack.c.l.b16 %v264
  %v333 = vunpack.c.l.b16 %v265
  %v334 = vunpack.c.l.b16 %v266
  %v335 = vunpack.c.l.b16 %v267
  %v336 = vunpack.c.l.b16 %v268
  %v337 = vunpack.c.l.b16 %v269
  %v338 = vunpack.c.l.b16 %v270
  %v339 = vunpack.c.l.b16 %v271
  %v340 = vunpack.c.l.b16 %v272
  %v341 = vunpack.c.l.b16 %v273
  %v342 = vunpack.c.l.b16 %v274
  %v343 = vunpack.c.l.b16 %v275
  %v344 = vunpack.c.l.b16 %v276
  %v345 = vunpack.c.l.b16 %v277
  %v346 = vunpack.c.l.b16 %v278
  %v347 = vunpack.c.l.b16 %v279
  %v348 = vunpack.c.l.b16 %v280
  %v349 = vunpack.c.l.b16 %v281
  %v350 = vunpack.c.l.b16 %v282
  %v351 = vunpack.c.l.b16 %v283
  %v352 = vunpack.c.l.b16 %v284
  %v353 = vunpack.c.l.b16 %v285
  %v354 = vunpack.c.l.b16 %v286
  %v355 = vunpack.c.l.b16 %v287
  %v356 = vpack.c.b16 %v325, %v324
  %v357 = vpack.c.b16 %v327, %v326
  %v358 = vpack.c.b16 %v329, %v328
  %v359 = vpack.c.b16 %v331, %v330
  %v360 = vpack.c.b16 %v333, %v332
  %v361 = vpack.c.b16 %v335, %v334
  %v362 = vpack.c.b16 %v337, %v336
  %v363 = vpack.c.b16 %v339, %v338
  %v364 = vpack.c.b16 %v341, %v340
  %v365 = vpack.c.b16 %v343, %v342
  %v366 = vpack.c.b16 %v345, %v344
  %v367 = vpack.c.b16 %v347, %v346
  %v368 = vpack.c.b16 %v349, %v348
  %v369 = vpack.c.b16 %v351, %v350
  %v370 = vpack.c.b16 %v353, %v352
  %v371 = vpack.c.b16 %v355, %v354
  %388 = vmatpush.bf16.msra.mxu0 %v363
  %389 = vmatpush.bf16.msra.mxu0 %v362
  %390 = vmatpush.bf16.msra.mxu0 %v361
  %391 = vmatpush.bf16.msra.mxu0 %v360
  %392 = vmatpush.bf16.msra.mxu0 %v359
  %393 = vmatpush.bf16.msra.mxu0 %v358
  %394 = vmatpush.bf16.msra.mxu0 %v357
  %395 = vmatpush.bf16.msra.mxu0 %v356
  %396 = vmatmul.bf16.gmra.mxu0 %v240
  %v397 = vpop.f32.mrf.mxu0
  %v398 = vadd.f32 %v290, %v397
  %v399 = vpop.f32.mrf.mxu0
  %v400 = vadd.f32 %v290, %v399
  %401 = vmatmul.bf16.gmra.mxu0 %v242
  %v402 = vpop.f32.mrf.mxu0
  %v403 = vadd.f32 %v290, %v402
  %v404 = vpop.f32.mrf.mxu0
  %v405 = vadd.f32 %v290, %v404
  %406 = vmatmul.bf16.gmra.mxu0 %v244
  %v407 = vpop.f32.mrf.mxu0
  %v408 = vadd.f32 %v290, %v407
  %v409 = vpop.f32.mrf.mxu0
  %v410 = vadd.f32 %v290, %v409
  %411 = vmatmul.bf16.gmra.mxu0 %v246
  %v412 = vpop.f32.mrf.mxu0
  %v413 = vadd.f32 %v290, %v412
  %v414 = vpop.f32.mrf.mxu0
  %v415 = vadd.f32 %v290, %v414
  %416 = vmatmul.bf16.gmra.mxu0 %v248
  %v417 = vpop.f32.mrf.mxu0
  %v418 = vadd.f32 %v290, %v417
  %v419 = vpop.f32.mrf.mxu0
  %v420 = vadd.f32 %v290, %v419
  %421 = vmatmul.bf16.gmra.mxu0 %v250
  %v422 = vpop.f32.mrf.mxu0
  %v423 = vadd.f32 %v290, %v422
  %v424 = vpop.f32.mrf.mxu0
  %v425 = vadd.f32 %v290, %v424
  %426 = vmatmul.bf16.gmra.mxu0 %v252
  %v427 = vpop.f32.mrf.mxu0
  %v428 = vadd.f32 %v290, %v427
  %v429 = vpop.f32.mrf.mxu0
  %v430 = vadd.f32 %v290, %v429
  %431 = vmatmul.bf16.gmra.mxu0 %v254
  %v432 = vpop.f32.mrf.mxu0
  %v433 = vadd.f32 %v290, %v432
  %v434 = vpop.f32.mrf.mxu0
  %v435 = vadd.f32 %v290, %v434
  %436 = vdwg.mxu0
  %437 = vmatpush.bf16.msra.mxu0 %v371
  %438 = vmatpush.bf16.msra.mxu0 %v370
  %439 = vmatpush.bf16.msra.mxu0 %v369
  %440 = vmatpush.bf16.msra.mxu0 %v368
  %441 = vmatpush.bf16.msra.mxu0 %v367
  %442 = vmatpush.bf16.msra.mxu0 %v366
  %443 = vmatpush.bf16.msra.mxu0 %v365
  %444 = vmatpush.bf16.msra.mxu0 %v364
  %445 = vmatmul.bf16.gmra.mxu0 %v241
  %v446 = vpop.f32.mrf.mxu0
  %v447 = vadd.f32 %v398, %v446
  %v448 = vpop.f32.mrf.mxu0
  %v449 = vadd.f32 %v400, %v448
  %450 = vmatmul.bf16.gmra.mxu0 %v243
  %v451 = vpop.f32.mrf.mxu0
  %v452 = vadd.f32 %v403, %v451
  %v453 = vpop.f32.mrf.mxu0
  %v454 = vadd.f32 %v405, %v453
  %455 = vmatmul.bf16.gmra.mxu0 %v245
  %v456 = vpop.f32.mrf.mxu0
  %v457 = vadd.f32 %v408, %v456
  %v458 = vpop.f32.mrf.mxu0
  %v459 = vadd.f32 %v410, %v458
  %460 = vmatmul.bf16.gmra.mxu0 %v247
  %v461 = vpop.f32.mrf.mxu0
  %v462 = vadd.f32 %v413, %v461
  %v463 = vpop.f32.mrf.mxu0
  %v464 = vadd.f32 %v415, %v463
  %465 = vmatmul.bf16.gmra.mxu0 %v249
  %v466 = vpop.f32.mrf.mxu0
  %v467 = vadd.f32 %v418, %v466
  %v468 = vpop.f32.mrf.mxu0
  %v469 = vadd.f32 %v420, %v468
  %470 = vmatmul.bf16.gmra.mxu0 %v251
  %v471 = vpop.f32.mrf.mxu0
  %v472 = vadd.f32 %v423, %v471
  %v473 = vpop.f32.mrf.mxu0
  %v474 = vadd.f32 %v425, %v473
  %475 = vmatmul.bf16.gmra.mxu0 %v253
  %v476 = vpop.f32.mrf.mxu0
  %v477 = vadd.f32 %v428, %v476
  %v478 = vpop.f32.mrf.mxu0
  %v479 = vadd.f32 %v430, %v478
  %480 = vmatmul.bf16.gmra.mxu0 %v255
  %v481 = vpop.f32.mrf.mxu0
  %v482 = vadd.f32 %v433, %v481
  %v483 = vpop.f32.mrf.mxu0
  %v484 = vadd.f32 %v435, %v483
  %485 = vdwg.mxu0
  %v486 = vpack.c.bf16 %v447, %v447
  %v487 = vpack.c.bf16 %v449, %v449
  %v488 = vpack.c.bf16 %v452, %v452
  %v489 = vpack.c.bf16 %v454, %v454
  %v490 = vpack.c.bf16 %v457, %v457
  %v491 = vpack.c.bf16 %v459, %v459
  %v492 = vpack.c.bf16 %v462, %v462
  %v493 = vpack.c.bf16 %v464, %v464
  %v494 = vpack.c.bf16 %v467, %v467
  %v495 = vpack.c.bf16 %v469, %v469
  %v496 = vpack.c.bf16 %v472, %v472
  %v497 = vpack.c.bf16 %v474, %v474
  %v498 = vpack.c.bf16 %v477, %v477
  %v499 = vpack.c.bf16 %v479, %v479
  %v500 = vpack.c.bf16 %v482, %v482
  %v501 = vpack.c.bf16 %v484, %v484
  %502 = vst [vmem:[%s5] sm:$0xf] %v486
  %503 = vst [vmem:[%s5 + $0x4] sm:$0xf] %v487
  %504 = vst [vmem:[%s5 + $0x8] sm:$0xf] %v488
  %505 = vst [vmem:[%s5 + $0xc] sm:$0xf] %v489
  %506 = vst [vmem:[%s5 + $0x10] sm:$0xf] %v490
  %507 = vst [vmem:[%s5 + $0x14] sm:$0xf] %v491
  %508 = vst [vmem:[%s5 + $0x18] sm:$0xf] %v492
  %509 = vst [vmem:[%s5 + $0x1c] sm:$0xf] %v493
  %510 = vst [vmem:[%s5 + $0x20] sm:$0xf] %v494
  %511 = vst [vmem:[%s5 + $0x24] sm:$0xf] %v495
  %512 = vst [vmem:[%s5 + $0x28] sm:$0xf] %v496
  %513 = vst [vmem:[%s5 + $0x2c] sm:$0xf] %v497
  %514 = vst [vmem:[%s5 + $0x30] sm:$0xf] %v498
  %515 = vst [vmem:[%s5 + $0x34] sm:$0xf] %v499
  %516 = vst [vmem:[%s5 + $0x38] sm:$0xf] %v500
  %517 = vst [vmem:[%s5 + $0x3c] sm:$0xf] %v501
  // Predicated region
  $region22: #{encoder_forward.29} parent=0 // pred_check
    _
  $region23: #{encoder_forward.29} parent=0 // pred_check_branch
    %519 = sbr.rel (0) target = $region25
  $region24: #{encoder_forward.29} parent=0 // pred_region
    _
  $region25: #{encoder_forward.29} parent=0 // pred_fallthru
    _
  // Predicated region
  $region26: #{encoder_forward.29} parent=0 // pred_check
    _
  $region27: #{encoder_forward.29} parent=0 // pred_check_branch
    %521 = sbr.rel (0) target = $region29
  $region28: #{encoder_forward.29} parent=0 // pred_region
    _
  $region29: #{encoder_forward.29} parent=0 // pred_fallthru
    _

// kernel: encoder_forward.31
$region0: #{encoder_forward.31}
  #allocation0 [shape = 'u32[]', space=smem, size = 0x4, offset = 0x4, fixed_abs, tag = 'smem constant byte address 0x4 - core index']
  #allocation1 [shape = 'u32[72,128]{1,0:T(1,128)}', space=vmem, size = 0x9000, scoped, tag = 'internal scratch']
  %s0 = inlined_call_operand.vmem [shape: bf16[128,256], index: 0, kind: input, shape index: {}]
  %s1 = inlined_call_operand.vmem [shape: f32[1,256], index: 1, kind: input, shape index: {}]
  %s2 = inlined_call_operand.vmem [shape: f32[1,256], index: 2, kind: input, shape index: {}]
  %s3 = inlined_call_operand.vmem [shape: bf16[256,128], index: 3, kind: input, shape index: {}]
  %s4 = inlined_call_operand.vmem [shape: f32[1,128], index: 4, kind: input, shape index: {}]
  %s5 = inlined_call_operand.vmem [shape: bf16[128,128], index: 5, kind: input, shape index: {}]
  %s6 = inlined_call_operand.vmem [shape: bf16[128,128], index: 6, kind: output, shape index: {}]
  %s7 = sld [smem:[#allocation0]]
  $region34: #{encoder_forward.31} parent=0
    _
  %s9 = ssub.s32 1, %s7
  %s10 = scalar_select 0, %s9, %s7
  // Predicated region
  $region2: #{encoder_forward.31} parent=0 // pred_check
    _
  $region3: #{encoder_forward.31} parent=0 // pred_check_branch
    %12 = sbr.rel (0) target = $region5
  $region4: #{encoder_forward.31} parent=0 // pred_region
    _
  $region5: #{encoder_forward.31} parent=0 // pred_fallthru
    _
  // Predicated region
  $region6: #{encoder_forward.31} parent=0 // pred_check
    _
  $region7: #{encoder_forward.31} parent=0 // pred_check_branch
    %14 = sbr.rel (0) target = $region9
  $region8: #{encoder_forward.31} parent=0 // pred_region
    _
  $region9: #{encoder_forward.31} parent=0 // pred_fallthru
    _
  // Predicated region
  $region10: #{encoder_forward.31} parent=0 // pred_check
    _
  $region11: #{encoder_forward.31} parent=0 // pred_check_branch
    %16 = sbr.rel (0) target = $region13
  $region12: #{encoder_forward.31} parent=0 // pred_region
    _
  $region13: #{encoder_forward.31} parent=0 // pred_fallthru
    _
  // Predicated region
  $region14: #{encoder_forward.31} parent=0 // pred_check
    _
  $region15: #{encoder_forward.31} parent=0 // pred_check_branch
    %18 = sbr.rel (0) target = $region17
  $region16: #{encoder_forward.31} parent=0 // pred_region
    _
  $region17: #{encoder_forward.31} parent=0 // pred_fallthru
    _
  // Predicated region
  $region18: #{encoder_forward.31} parent=0 // pred_check
    _
  $region19: #{encoder_forward.31} parent=0 // pred_check_branch
    %20 = sbr.rel (0) target = $region21
  $region20: #{encoder_forward.31} parent=0 // pred_region
    _
  $region21: #{encoder_forward.31} parent=0 // pred_fallthru
    _
  // Predicated region
  $region22: #{encoder_forward.31} parent=0 // pred_check
    _
  $region23: #{encoder_forward.31} parent=0 // pred_check_branch
    %22 = sbr.rel (0) target = $region25
  $region24: #{encoder_forward.31} parent=0 // pred_region
    _
  $region25: #{encoder_forward.31} parent=0 // pred_fallthru
    _
  %v23 = vld [vmem:[%s0] sm:$0xff]
  %v24 = vld [vmem:[%s0 + $0x8] sm:$0xff]
  %v25 = vld [vmem:[%s0 + $0x10] sm:$0xff]
  %v26 = vld [vmem:[%s0 + $0x18] sm:$0xff]
  %v27 = vld [vmem:[%s0 + $0x20] sm:$0xff]
  %v28 = vld [vmem:[%s0 + $0x28] sm:$0xff]
  %v29 = vld [vmem:[%s0 + $0x30] sm:$0xff]
  %v30 = vld [vmem:[%s0 + $0x38] sm:$0xff]
  %v31 = vld [vmem:[%s0 + $0x40] sm:$0xff]
  %v32 = vld [vmem:[%s0 + $0x48] sm:$0xff]
  %v33 = vld [vmem:[%s0 + $0x50] sm:$0xff]
  %v34 = vld [vmem:[%s0 + $0x58] sm:$0xff]
  %v35 = vld [vmem:[%s0 + $0x60] sm:$0xff]
  %v36 = vld [vmem:[%s0 + $0x68] sm:$0xff]
  %v37 = vld [vmem:[%s0 + $0x70] sm:$0xff]
  %v38 = vld [vmem:[%s0 + $0x78] sm:$0xff]
  %v39 = vunpack.c.l.bf16 %v23
  %v40 = vunpack.c.h.bf16 %v23
  %v41 = vunpack.c.l.bf16 %v24
  %v42 = vunpack.c.h.bf16 %v24
  %v43 = vunpack.c.l.bf16 %v25
  %v44 = vunpack.c.h.bf16 %v25
  %v45 = vunpack.c.l.bf16 %v26
  %v46 = vunpack.c.h.bf16 %v26
  %v47 = vunpack.c.l.bf16 %v27
  %v48 = vunpack.c.h.bf16 %v27
  %v49 = vunpack.c.l.bf16 %v28
  %v50 = vunpack.c.h.bf16 %v28
  %v51 = vunpack.c.l.bf16 %v29
  %v52 = vunpack.c.h.bf16 %v29
  %v53 = vunpack.c.l.bf16 %v30
  %v54 = vunpack.c.h.bf16 %v30
  %v55 = vunpack.c.l.bf16 %v31
  %v56 = vunpack.c.h.bf16 %v31
  %v57 = vunpack.c.l.bf16 %v32
  %v58 = vunpack.c.h.bf16 %v32
  %v59 = vunpack.c.l.bf16 %v33
  %v60 = vunpack.c.h.bf16 %v33
  %v61 = vunpack.c.l.bf16 %v34
  %v62 = vunpack.c.h.bf16 %v34
  %v63 = vunpack.c.l.bf16 %v35
  %v64 = vunpack.c.h.bf16 %v35
  %v65 = vunpack.c.l.bf16 %v36
  %v66 = vunpack.c.h.bf16 %v36
  %v67 = vunpack.c.l.bf16 %v37
  %v68 = vunpack.c.h.bf16 %v37
  %v69 = vunpack.c.l.bf16 %v38
  %v70 = vunpack.c.h.bf16 %v38
  %v71 = vld [vmem:[%s1] sm:$0x3]
  %v73 = vperm.slane %v71, 0
  %v74 = vperm.slane %v71, 1
  %v77 = vmul.f32 %v39, %v73
  %v78 = vmul.f32 %v40, %v74
  %v79 = vmul.f32 %v41, %v73
  %v80 = vmul.f32 %v42, %v74
  %v81 = vmul.f32 %v43, %v73
  %v82 = vmul.f32 %v44, %v74
  %v83 = vmul.f32 %v45, %v73
  %v84 = vmul.f32 %v46, %v74
  %v85 = vmul.f32 %v47, %v73
  %v86 = vmul.f32 %v48, %v74
  %v87 = vmul.f32 %v49, %v73
  %v88 = vmul.f32 %v50, %v74
  %v89 = vmul.f32 %v51, %v73
  %v90 = vmul.f32 %v52, %v74
  %v91 = vmul.f32 %v53, %v73
  %v92 = vmul.f32 %v54, %v74
  %v93 = vmul.f32 %v55, %v73
  %v94 = vmul.f32 %v56, %v74
  %v95 = vmul.f32 %v57, %v73
  %v96 = vmul.f32 %v58, %v74
  %v97 = vmul.f32 %v59, %v73
  %v98 = vmul.f32 %v60, %v74
  %v99 = vmul.f32 %v61, %v73
  %v100 = vmul.f32 %v62, %v74
  %v101 = vmul.f32 %v63, %v73
  %v102 = vmul.f32 %v64, %v74
  %v103 = vmul.f32 %v65, %v73
  %v104 = vmul.f32 %v66, %v74
  %v105 = vmul.f32 %v67, %v73
  %v106 = vmul.f32 %v68, %v74
  %v107 = vmul.f32 %v69, %v73
  %v108 = vmul.f32 %v70, %v74
  %v109 = vld [vmem:[%s2] sm:$0x3]
  %v111 = vperm.slane %v109, 0
  %v112 = vperm.slane %v109, 1
  %v115 = vadd.f32 %v77, %v111
  %v116 = vadd.f32 %v78, %v112
  %v117 = vadd.f32 %v79, %v111
  %v118 = vadd.f32 %v80, %v112
  %v119 = vadd.f32 %v81, %v111
  %v120 = vadd.f32 %v82, %v112
  %v121 = vadd.f32 %v83, %v111
  %v122 = vadd.f32 %v84, %v112
  %v123 = vadd.f32 %v85, %v111
  %v124 = vadd.f32 %v86, %v112
  %v125 = vadd.f32 %v87, %v111
  %v126 = vadd.f32 %v88, %v112
  %v127 = vadd.f32 %v89, %v111
  %v128 = vadd.f32 %v90, %v112
  %v129 = vadd.f32 %v91, %v111
  %v130 = vadd.f32 %v92, %v112
  %v131 = vadd.f32 %v93, %v111
  %v132 = vadd.f32 %v94, %v112
  %v133 = vadd.f32 %v95, %v111
  %v134 = vadd.f32 %v96, %v112
  %v135 = vadd.f32 %v97, %v111
  %v136 = vadd.f32 %v98, %v112
  %v137 = vadd.f32 %v99, %v111
  %v138 = vadd.f32 %v100, %v112
  %v139 = vadd.f32 %v101, %v111
  %v140 = vadd.f32 %v102, %v112
  %v141 = vadd.f32 %v103, %v111
  %v142 = vadd.f32 %v104, %v112
  %v143 = vadd.f32 %v105, %v111
  %v144 = vadd.f32 %v106, %v112
  %v145 = vadd.f32 %v107, %v111
  %v146 = vadd.f32 %v108, %v112
  %vm147 = vcmp.gt.f32.partialorder %v115, 0.0
  %vm148 = vcmp.gt.f32.partialorder %v116, 0.0
  %vm149 = vcmp.gt.f32.partialorder %v117, 0.0
  %vm150 = vcmp.gt.f32.partialorder %v118, 0.0
  %vm151 = vcmp.gt.f32.partialorder %v119, 0.0
  %vm152 = vcmp.gt.f32.partialorder %v120, 0.0
  %vm153 = vcmp.gt.f32.partialorder %v121, 0.0
  %vm154 = vcmp.gt.f32.partialorder %v122, 0.0
  %vm155 = vcmp.gt.f32.partialorder %v123, 0.0
  %vm156 = vcmp.gt.f32.partialorder %v124, 0.0
  %vm157 = vcmp.gt.f32.partialorder %v125, 0.0
  %vm158 = vcmp.gt.f32.partialorder %v126, 0.0
  %vm159 = vcmp.gt.f32.partialorder %v127, 0.0
  %vm160 = vcmp.gt.f32.partialorder %v128, 0.0
  %vm161 = vcmp.gt.f32.partialorder %v129, 0.0
  %vm162 = vcmp.gt.f32.partialorder %v130, 0.0
  %vm163 = vcmp.gt.f32.partialorder %v131, 0.0
  %vm164 = vcmp.gt.f32.partialorder %v132, 0.0
  %vm165 = vcmp.gt.f32.partialorder %v133, 0.0
  %vm166 = vcmp.gt.f32.partialorder %v134, 0.0
  %vm167 = vcmp.gt.f32.partialorder %v135, 0.0
  %vm168 = vcmp.gt.f32.partialorder %v136, 0.0
  %vm169 = vcmp.gt.f32.partialorder %v137, 0.0
  %vm170 = vcmp.gt.f32.partialorder %v138, 0.0
  %vm171 = vcmp.gt.f32.partialorder %v139, 0.0
  %vm172 = vcmp.gt.f32.partialorder %v140, 0.0
  %vm173 = vcmp.gt.f32.partialorder %v141, 0.0
  %vm174 = vcmp.gt.f32.partialorder %v142, 0.0
  %vm175 = vcmp.gt.f32.partialorder %v143, 0.0
  %vm176 = vcmp.gt.f32.partialorder %v144, 0.0
  %vm177 = vcmp.gt.f32.partialorder %v145, 0.0
  %vm178 = vcmp.gt.f32.partialorder %v146, 0.0
  %v179 = vmul.f32 %v115, 0.01
  %v180 = vmul.f32 %v116, 0.01
  %v181 = vmul.f32 %v117, 0.01
  %v182 = vmul.f32 %v118, 0.01
  %v183 = vmul.f32 %v119, 0.01
  %v184 = vmul.f32 %v120, 0.01
  %v185 = vmul.f32 %v121, 0.01
  %v186 = vmul.f32 %v122, 0.01
  %v187 = vmul.f32 %v123, 0.01
  %v188 = vmul.f32 %v124, 0.01
  %v189 = vmul.f32 %v125, 0.01
  %v190 = vmul.f32 %v126, 0.01
  %v191 = vmul.f32 %v127, 0.01
  %v192 = vmul.f32 %v128, 0.01
  %v193 = vmul.f32 %v129, 0.01
  %v194 = vmul.f32 %v130, 0.01
  %v195 = vmul.f32 %v131, 0.01
  %v196 = vmul.f32 %v132, 0.01
  %v197 = vmul.f32 %v133, 0.01
  %v198 = vmul.f32 %v134, 0.01
  %v199 = vmul.f32 %v135, 0.01
  %v200 = vmul.f32 %v136, 0.01
  %v201 = vmul.f32 %v137, 0.01
  %v202 = vmul.f32 %v138, 0.01
  %v203 = vmul.f32 %v139, 0.01
  %v204 = vmul.f32 %v140, 0.01
  %v205 = vmul.f32 %v141, 0.01
  %v206 = vmul.f32 %v142, 0.01
  %v207 = vmul.f32 %v143, 0.01
  %v208 = vmul.f32 %v144, 0.01
  %v209 = vmul.f32 %v145, 0.01
  %v210 = vmul.f32 %v146, 0.01
  %v211 = vsel %vm147, %v115, %v179
  %v212 = vsel %vm148, %v116, %v180
  %v213 = vsel %vm149, %v117, %v181
  %v214 = vsel %vm150, %v118, %v182
  %v215 = vsel %vm151, %v119, %v183
  %v216 = vsel %vm152, %v120, %v184
  %v217 = vsel %vm153, %v121, %v185
  %v218 = vsel %vm154, %v122, %v186
  %v219 = vsel %vm155, %v123, %v187
  %v220 = vsel %vm156, %v124, %v188
  %v221 = vsel %vm157, %v125, %v189
  %v222 = vsel %vm158, %v126, %v190
  %v223 = vsel %vm159, %v127, %v191
  %v224 = vsel %vm160, %v128, %v192
  %v225 = vsel %vm161, %v129, %v193
  %v226 = vsel %vm162, %v130, %v194
  %v227 = vsel %vm163, %v131, %v195
  %v228 = vsel %vm164, %v132, %v196
  %v229 = vsel %vm165, %v133, %v197
  %v230 = vsel %vm166, %v134, %v198
  %v231 = vsel %vm167, %v135, %v199
  %v232 = vsel %vm168, %v136, %v200
  %v233 = vsel %vm169, %v137, %v201
  %v234 = vsel %vm170, %v138, %v202
  %v235 = vsel %vm171, %v139, %v203
  %v236 = vsel %vm172, %v140, %v204
  %v237 = vsel %vm173, %v141, %v205
  %v238 = vsel %vm174, %v142, %v206
  %v239 = vsel %vm175, %v143, %v207
  %v240 = vsel %vm176, %v144, %v208
  %v241 = vsel %vm177, %v145, %v209
  %v242 = vsel %vm178, %v146, %v210
  %v243 = vpack.c.bf16 %v213, %v211
  %v244 = vpack.c.bf16 %v214, %v212
  %v245 = vpack.c.bf16 %v217, %v215
  %v246 = vpack.c.bf16 %v218, %v216
  %v247 = vpack.c.bf16 %v221, %v219
  %v248 = vpack.c.bf16 %v222, %v220
  %v249 = vpack.c.bf16 %v225, %v223
  %v250 = vpack.c.bf16 %v226, %v224
  %v251 = vpack.c.bf16 %v229, %v227
  %v252 = vpack.c.bf16 %v230, %v228
  %v253 = vpack.c.bf16 %v233, %v231
  %v254 = vpack.c.bf16 %v234, %v232
  %v255 = vpack.c.bf16 %v237, %v235
  %v256 = vpack.c.bf16 %v238, %v236
  %v257 = vpack.c.bf16 %v241, %v239
  %v258 = vpack.c.bf16 %v242, %v240
  %v259 = vld [vmem:[%s3] sm:$0xf]
  %v260 = vld [vmem:[%s3 + $0x4] sm:$0xf]
  %v261 = vld [vmem:[%s3 + $0x8] sm:$0xf]
  %v262 = vld [vmem:[%s3 + $0xc] sm:$0xf]
  %v263 = vld [vmem:[%s3 + $0x10] sm:$0xf]
  %v264 = vld [vmem:[%s3 + $0x14] sm:$0xf]
  %v265 = vld [vmem:[%s3 + $0x18] sm:$0xf]
  %v266 = vld [vmem:[%s3 + $0x1c] sm:$0xf]
  %v267 = vld [vmem:[%s3 + $0x20] sm:$0xf]
  %v268 = vld [vmem:[%s3 + $0x24] sm:$0xf]
  %v269 = vld [vmem:[%s3 + $0x28] sm:$0xf]
  %v270 = vld [vmem:[%s3 + $0x2c] sm:$0xf]
  %v271 = vld [vmem:[%s3 + $0x30] sm:$0xf]
  %v272 = vld [vmem:[%s3 + $0x34] sm:$0xf]
  %v273 = vld [vmem:[%s3 + $0x38] sm:$0xf]
  %v274 = vld [vmem:[%s3 + $0x3c] sm:$0xf]
  %v275 = vld [vmem:[%s3 + $0x40] sm:$0xf]
  %v276 = vld [vmem:[%s3 + $0x44] sm:$0xf]
  %v277 = vld [vmem:[%s3 + $0x48] sm:$0xf]
  %v278 = vld [vmem:[%s3 + $0x4c] sm:$0xf]
  %v279 = vld [vmem:[%s3 + $0x50] sm:$0xf]
  %v280 = vld [vmem:[%s3 + $0x54] sm:$0xf]
  %v281 = vld [vmem:[%s3 + $0x58] sm:$0xf]
  %v282 = vld [vmem:[%s3 + $0x5c] sm:$0xf]
  %v283 = vld [vmem:[%s3 + $0x60] sm:$0xf]
  %v284 = vld [vmem:[%s3 + $0x64] sm:$0xf]
  %v285 = vld [vmem:[%s3 + $0x68] sm:$0xf]
  %v286 = vld [vmem:[%s3 + $0x6c] sm:$0xf]
  %v287 = vld [vmem:[%s3 + $0x70] sm:$0xf]
  %v288 = vld [vmem:[%s3 + $0x74] sm:$0xf]
  %v289 = vld [vmem:[%s3 + $0x78] sm:$0xf]
  %v290 = vld [vmem:[%s3 + $0x7c] sm:$0xf]
  %v291 = vld [vmem:[%s4] sm:$0x1]
  %v293 = vperm.slane %v291, 0
  %v327 = vunpack.c.l.b16 %v259
  %v328 = vunpack.c.l.b16 %v260
  %v329 = vunpack.c.l.b16 %v261
  %v330 = vunpack.c.l.b16 %v262
  %v331 = vunpack.c.l.b16 %v263
  %v332 = vunpack.c.l.b16 %v264
  %v333 = vunpack.c.l.b16 %v265
  %v334 = vunpack.c.l.b16 %v266
  %v335 = vunpack.c.l.b16 %v267
  %v336 = vunpack.c.l.b16 %v268
  %v337 = vunpack.c.l.b16 %v269
  %v338 = vunpack.c.l.b16 %v270
  %v339 = vunpack.c.l.b16 %v271
  %v340 = vunpack.c.l.b16 %v272
  %v341 = vunpack.c.l.b16 %v273
  %v342 = vunpack.c.l.b16 %v274
  %v343 = vunpack.c.l.b16 %v275
  %v344 = vunpack.c.l.b16 %v276
  %v345 = vunpack.c.l.b16 %v277
  %v346 = vunpack.c.l.b16 %v278
  %v347 = vunpack.c.l.b16 %v279
  %v348 = vunpack.c.l.b16 %v280
  %v349 = vunpack.c.l.b16 %v281
  %v350 = vunpack.c.l.b16 %v282
  %v351 = vunpack.c.l.b16 %v283
  %v352 = vunpack.c.l.b16 %v284
  %v353 = vunpack.c.l.b16 %v285
  %v354 = vunpack.c.l.b16 %v286
  %v355 = vunpack.c.l.b16 %v287
  %v356 = vunpack.c.l.b16 %v288
  %v357 = vunpack.c.l.b16 %v289
  %v358 = vunpack.c.l.b16 %v290
  %v359 = vpack.c.b16 %v328, %v327
  %v360 = vpack.c.b16 %v330, %v329
  %v361 = vpack.c.b16 %v332, %v331
  %v362 = vpack.c.b16 %v334, %v333
  %v363 = vpack.c.b16 %v336, %v335
  %v364 = vpack.c.b16 %v338, %v337
  %v365 = vpack.c.b16 %v340, %v339
  %v366 = vpack.c.b16 %v342, %v341
  %v367 = vpack.c.b16 %v344, %v343
  %v368 = vpack.c.b16 %v346, %v345
  %v369 = vpack.c.b16 %v348, %v347
  %v370 = vpack.c.b16 %v350, %v349
  %v371 = vpack.c.b16 %v352, %v351
  %v372 = vpack.c.b16 %v354, %v353
  %v373 = vpack.c.b16 %v356, %v355
  %v374 = vpack.c.b16 %v358, %v357
  %391 = vmatpush.bf16.msra.mxu0 %v366
  %392 = vmatpush.bf16.msra.mxu0 %v365
  %393 = vmatpush.bf16.msra.mxu0 %v364
  %394 = vmatpush.bf16.msra.mxu0 %v363
  %395 = vmatpush.bf16.msra.mxu0 %v362
  %396 = vmatpush.bf16.msra.mxu0 %v361
  %397 = vmatpush.bf16.msra.mxu0 %v360
  %398 = vmatpush.bf16.msra.mxu0 %v359
  %399 = vmatmul.bf16.gmra.mxu0 %v243
  %v400 = vpop.f32.mrf.mxu0
  %v401 = vadd.f32 %v293, %v400
  %v402 = vpop.f32.mrf.mxu0
  %v403 = vadd.f32 %v293, %v402
  %404 = vmatmul.bf16.gmra.mxu0 %v245
  %v405 = vpop.f32.mrf.mxu0
  %v406 = vadd.f32 %v293, %v405
  %v407 = vpop.f32.mrf.mxu0
  %v408 = vadd.f32 %v293, %v407
  %409 = vmatmul.bf16.gmra.mxu0 %v247
  %v410 = vpop.f32.mrf.mxu0
  %v411 = vadd.f32 %v293, %v410
  %v412 = vpop.f32.mrf.mxu0
  %v413 = vadd.f32 %v293, %v412
  %414 = vmatmul.bf16.gmra.mxu0 %v249
  %v415 = vpop.f32.mrf.mxu0
  %v416 = vadd.f32 %v293, %v415
  %v417 = vpop.f32.mrf.mxu0
  %v418 = vadd.f32 %v293, %v417
  %419 = vmatmul.bf16.gmra.mxu0 %v251
  %v420 = vpop.f32.mrf.mxu0
  %v421 = vadd.f32 %v293, %v420
  %v422 = vpop.f32.mrf.mxu0
  %v423 = vadd.f32 %v293, %v422
  %424 = vmatmul.bf16.gmra.mxu0 %v253
  %v425 = vpop.f32.mrf.mxu0
  %v426 = vadd.f32 %v293, %v425
  %v427 = vpop.f32.mrf.mxu0
  %v428 = vadd.f32 %v293, %v427
  %429 = vmatmul.bf16.gmra.mxu0 %v255
  %v430 = vpop.f32.mrf.mxu0
  %v431 = vadd.f32 %v293, %v430
  %v432 = vpop.f32.mrf.mxu0
  %v433 = vadd.f32 %v293, %v432
  %434 = vmatmul.bf16.gmra.mxu0 %v257
  %v435 = vpop.f32.mrf.mxu0
  %v436 = vadd.f32 %v293, %v435
  %v437 = vpop.f32.mrf.mxu0
  %v438 = vadd.f32 %v293, %v437
  %439 = vdwg.mxu0
  %440 = vmatpush.bf16.msra.mxu0 %v374
  %441 = vmatpush.bf16.msra.mxu0 %v373
  %442 = vmatpush.bf16.msra.mxu0 %v372
  %443 = vmatpush.bf16.msra.mxu0 %v371
  %444 = vmatpush.bf16.msra.mxu0 %v370
  %445 = vmatpush.bf16.msra.mxu0 %v369
  %446 = vmatpush.bf16.msra.mxu0 %v368
  %447 = vmatpush.bf16.msra.mxu0 %v367
  %448 = vmatmul.bf16.gmra.mxu0 %v244
  %v449 = vpop.f32.mrf.mxu0
  %v450 = vadd.f32 %v401, %v449
  %v451 = vpop.f32.mrf.mxu0
  %v452 = vadd.f32 %v403, %v451
  %453 = vmatmul.bf16.gmra.mxu0 %v246
  %v454 = vpop.f32.mrf.mxu0
  %v455 = vadd.f32 %v406, %v454
  %v456 = vpop.f32.mrf.mxu0
  %v457 = vadd.f32 %v408, %v456
  %458 = vmatmul.bf16.gmra.mxu0 %v248
  %v459 = vpop.f32.mrf.mxu0
  %v460 = vadd.f32 %v411, %v459
  %v461 = vpop.f32.mrf.mxu0
  %v462 = vadd.f32 %v413, %v461
  %463 = vmatmul.bf16.gmra.mxu0 %v250
  %v464 = vpop.f32.mrf.mxu0
  %v465 = vadd.f32 %v416, %v464
  %v466 = vpop.f32.mrf.mxu0
  %v467 = vadd.f32 %v418, %v466
  %468 = vmatmul.bf16.gmra.mxu0 %v252
  %v469 = vpop.f32.mrf.mxu0
  %v470 = vadd.f32 %v421, %v469
  %v471 = vpop.f32.mrf.mxu0
  %v472 = vadd.f32 %v423, %v471
  %473 = vmatmul.bf16.gmra.mxu0 %v254
  %v474 = vpop.f32.mrf.mxu0
  %v475 = vadd.f32 %v426, %v474
  %v476 = vpop.f32.mrf.mxu0
  %v477 = vadd.f32 %v428, %v476
  %478 = vmatmul.bf16.gmra.mxu0 %v256
  %v479 = vpop.f32.mrf.mxu0
  %v480 = vadd.f32 %v431, %v479
  %v481 = vpop.f32.mrf.mxu0
  %v482 = vadd.f32 %v433, %v481
  %483 = vmatmul.bf16.gmra.mxu0 %v258
  %v484 = vpop.f32.mrf.mxu0
  %v485 = vadd.f32 %v436, %v484
  %v486 = vpop.f32.mrf.mxu0
  %v487 = vadd.f32 %v438, %v486
  %488 = vdwg.mxu0
  %v489 = vld [vmem:[%s5] sm:$0xf]
  %v490 = vld [vmem:[%s5 + $0x4] sm:$0xf]
  %v491 = vld [vmem:[%s5 + $0x8] sm:$0xf]
  %v492 = vld [vmem:[%s5 + $0xc] sm:$0xf]
  %v493 = vld [vmem:[%s5 + $0x10] sm:$0xf]
  %v494 = vld [vmem:[%s5 + $0x14] sm:$0xf]
  %v495 = vld [vmem:[%s5 + $0x18] sm:$0xf]
  %v496 = vld [vmem:[%s5 + $0x1c] sm:$0xf]
  %v497 = vld [vmem:[%s5 + $0x20] sm:$0xf]
  %v498 = vld [vmem:[%s5 + $0x24] sm:$0xf]
  %v499 = vld [vmem:[%s5 + $0x28] sm:$0xf]
  %v500 = vld [vmem:[%s5 + $0x2c] sm:$0xf]
  %v501 = vld [vmem:[%s5 + $0x30] sm:$0xf]
  %v502 = vld [vmem:[%s5 + $0x34] sm:$0xf]
  %v503 = vld [vmem:[%s5 + $0x38] sm:$0xf]
  %v504 = vld [vmem:[%s5 + $0x3c] sm:$0xf]
  %v505 = vunpack.c.l.bf16 %v489
  %v506 = vunpack.c.l.bf16 %v490
  %v507 = vunpack.c.l.bf16 %v491
  %v508 = vunpack.c.l.bf16 %v492
  %v509 = vunpack.c.l.bf16 %v493
  %v510 = vunpack.c.l.bf16 %v494
  %v511 = vunpack.c.l.bf16 %v495
  %v512 = vunpack.c.l.bf16 %v496
  %v513 = vunpack.c.l.bf16 %v497
  %v514 = vunpack.c.l.bf16 %v498
  %v515 = vunpack.c.l.bf16 %v499
  %v516 = vunpack.c.l.bf16 %v500
  %v517 = vunpack.c.l.bf16 %v501
  %v518 = vunpack.c.l.bf16 %v502
  %v519 = vunpack.c.l.bf16 %v503
  %v520 = vunpack.c.l.bf16 %v504
  %v521 = vadd.f32 %v450, %v505
  %v522 = vadd.f32 %v452, %v506
  %v523 = vadd.f32 %v455, %v507
  %v524 = vadd.f32 %v457, %v508
  %v525 = vadd.f32 %v460, %v509
  %v526 = vadd.f32 %v462, %v510
  %v527 = vadd.f32 %v465, %v511
  %v528 = vadd.f32 %v467, %v512
  %v529 = vadd.f32 %v470, %v513
  %v530 = vadd.f32 %v472, %v514
  %v531 = vadd.f32 %v475, %v515
  %v532 = vadd.f32 %v477, %v516
  %v533 = vadd.f32 %v480, %v517
  %v534 = vadd.f32 %v482, %v518
  %v535 = vadd.f32 %v485, %v519
  %v536 = vadd.f32 %v487, %v520
  %v537 = vpack.c.bf16 %v521, %v521
  %v538 = vpack.c.bf16 %v522, %v522
  %v539 = vpack.c.bf16 %v523, %v523
  %v540 = vpack.c.bf16 %v524, %v524
  %v541 = vpack.c.bf16 %v525, %v525
  %v542 = vpack.c.bf16 %v526, %v526
  %v543 = vpack.c.bf16 %v527, %v527
  %v544 = vpack.c.bf16 %v528, %v528
  %v545 = vpack.c.bf16 %v529, %v529
  %v546 = vpack.c.bf16 %v530, %v530
  %v547 = vpack.c.bf16 %v531, %v531
  %v548 = vpack.c.bf16 %v532, %v532
  %v549 = vpack.c.bf16 %v533, %v533
  %v550 = vpack.c.bf16 %v534, %v534
  %v551 = vpack.c.bf16 %v535, %v535
  %v552 = vpack.c.bf16 %v536, %v536
  %553 = vst [vmem:[%s6] sm:$0xf] %v537
  %554 = vst [vmem:[%s6 + $0x4] sm:$0xf] %v538
  %555 = vst [vmem:[%s6 + $0x8] sm:$0xf] %v539
  %556 = vst [vmem:[%s6 + $0xc] sm:$0xf] %v540
  %557 = vst [vmem:[%s6 + $0x10] sm:$0xf] %v541
  %558 = vst [vmem:[%s6 + $0x14] sm:$0xf] %v542
  %559 = vst [vmem:[%s6 + $0x18] sm:$0xf] %v543
  %560 = vst [vmem:[%s6 + $0x1c] sm:$0xf] %v544
  %561 = vst [vmem:[%s6 + $0x20] sm:$0xf] %v545
  %562 = vst [vmem:[%s6 + $0x24] sm:$0xf] %v546
  %563 = vst [vmem:[%s6 + $0x28] sm:$0xf] %v547
  %564 = vst [vmem:[%s6 + $0x2c] sm:$0xf] %v548
  %565 = vst [vmem:[%s6 + $0x30] sm:$0xf] %v549
  %566 = vst [vmem:[%s6 + $0x34] sm:$0xf] %v550
  %567 = vst [vmem:[%s6 + $0x38] sm:$0xf] %v551
  %568 = vst [vmem:[%s6 + $0x3c] sm:$0xf] %v552
  // Predicated region
  $region26: #{encoder_forward.31} parent=0 // pred_check
    _
  $region27: #{encoder_forward.31} parent=0 // pred_check_branch
    %570 = sbr.rel (0) target = $region29
  $region28: #{encoder_forward.31} parent=0 // pred_region
    _
  $region29: #{encoder_forward.31} parent=0 // pred_fallthru
    _
  // Predicated region
  $region30: #{encoder_forward.31} parent=0 // pred_check
    _
  $region31: #{encoder_forward.31} parent=0 // pred_check_branch
    %572 = sbr.rel (0) target = $region33
  $region32: #{encoder_forward.31} parent=0 // pred_region
    _
  $region33: #{encoder_forward.31} parent=0 // pred_fallthru
    _

// kernel: encoder_forward.32
$region0: #{encoder_forward.32}
  #allocation0 [shape = 'u32[]', space=smem, size = 0x4, offset = 0x4, fixed_abs, tag = 'smem constant byte address 0x4 - core index']
  #allocation1 [shape = 'u32[72,128]{1,0:T(1,128)}', space=vmem, size = 0x9000, scoped, tag = 'internal scratch']
  %s0 = inlined_call_operand.vmem [shape: bf16[32,256], index: 0, kind: input, shape index: {}]
  %s1 = inlined_call_operand.vmem [shape: f32[1,256], index: 1, kind: input, shape index: {}]
  %s2 = inlined_call_operand.vmem [shape: f32[1,256], index: 2, kind: input, shape index: {}]
  %s3 = inlined_call_operand.vmem [shape: bf16[256,128], index: 3, kind: input, shape index: {}]
  %s4 = inlined_call_operand.vmem [shape: f32[1,128], index: 4, kind: input, shape index: {}]
  %s5 = inlined_call_operand.vmem [shape: bf16[32,128], index: 5, kind: output, shape index: {}]
  %s6 = sld [smem:[#allocation0]]
  $region30: #{encoder_forward.32} parent=0
    _
  %s8 = ssub.s32 1, %s6
  %s9 = scalar_select 0, %s8, %s6
  // Predicated region
  $region2: #{encoder_forward.32} parent=0 // pred_check
    _
  $region3: #{encoder_forward.32} parent=0 // pred_check_branch
    %11 = sbr.rel (0) target = $region5
  $region4: #{encoder_forward.32} parent=0 // pred_region
    _
  $region5: #{encoder_forward.32} parent=0 // pred_fallthru
    _
  // Predicated region
  $region6: #{encoder_forward.32} parent=0 // pred_check
    _
  $region7: #{encoder_forward.32} parent=0 // pred_check_branch
    %13 = sbr.rel (0) target = $region9
  $region8: #{encoder_forward.32} parent=0 // pred_region
    _
  $region9: #{encoder_forward.32} parent=0 // pred_fallthru
    _
  // Predicated region
  $region10: #{encoder_forward.32} parent=0 // pred_check
    _
  $region11: #{encoder_forward.32} parent=0 // pred_check_branch
    %15 = sbr.rel (0) target = $region13
  $region12: #{encoder_forward.32} parent=0 // pred_region
    _
  $region13: #{encoder_forward.32} parent=0 // pred_fallthru
    _
  // Predicated region
  $region14: #{encoder_forward.32} parent=0 // pred_check
    _
  $region15: #{encoder_forward.32} parent=0 // pred_check_branch
    %17 = sbr.rel (0) target = $region17
  $region16: #{encoder_forward.32} parent=0 // pred_region
    _
  $region17: #{encoder_forward.32} parent=0 // pred_fallthru
    _
  // Predicated region
  $region18: #{encoder_forward.32} parent=0 // pred_check
    _
  $region19: #{encoder_forward.32} parent=0 // pred_check_branch
    %19 = sbr.rel (0) target = $region21
  $region20: #{encoder_forward.32} parent=0 // pred_region
    _
  $region21: #{encoder_forward.32} parent=0 // pred_fallthru
    _
  %v20 = vld [vmem:[%s0] sm:$0xff]
  %v21 = vld [vmem:[%s0 + $0x8] sm:$0xff]
  %v22 = vld [vmem:[%s0 + $0x10] sm:$0xff]
  %v23 = vld [vmem:[%s0 + $0x18] sm:$0xff]
  %v24 = vunpack.c.l.bf16 %v20
  %v25 = vunpack.c.h.bf16 %v20
  %v26 = vunpack.c.l.bf16 %v21
  %v27 = vunpack.c.h.bf16 %v21
  %v28 = vunpack.c.l.bf16 %v22
  %v29 = vunpack.c.h.bf16 %v22
  %v30 = vunpack.c.l.bf16 %v23
  %v31 = vunpack.c.h.bf16 %v23
  %v32 = vld [vmem:[%s1] sm:$0x3]
  %v34 = vperm.slane %v32, 0
  %v35 = vperm.slane %v32, 1
  %v38 = vmul.f32 %v24, %v34
  %v39 = vmul.f32 %v25, %v35
  %v40 = vmul.f32 %v26, %v34
  %v41 = vmul.f32 %v27, %v35
  %v42 = vmul.f32 %v28, %v34
  %v43 = vmul.f32 %v29, %v35
  %v44 = vmul.f32 %v30, %v34
  %v45 = vmul.f32 %v31, %v35
  %v46 = vld [vmem:[%s2] sm:$0x3]
  %v48 = vperm.slane %v46, 0
  %v49 = vperm.slane %v46, 1
  %v52 = vadd.f32 %v38, %v48
  %v53 = vadd.f32 %v39, %v49
  %v54 = vadd.f32 %v40, %v48
  %v55 = vadd.f32 %v41, %v49
  %v56 = vadd.f32 %v42, %v48
  %v57 = vadd.f32 %v43, %v49
  %v58 = vadd.f32 %v44, %v48
  %v59 = vadd.f32 %v45, %v49
  %vm60 = vcmp.gt.f32.partialorder %v52, 0.0
  %vm61 = vcmp.gt.f32.partialorder %v53, 0.0
  %vm62 = vcmp.gt.f32.partialorder %v54, 0.0
  %vm63 = vcmp.gt.f32.partialorder %v55, 0.0
  %vm64 = vcmp.gt.f32.partialorder %v56, 0.0
  %vm65 = vcmp.gt.f32.partialorder %v57, 0.0
  %vm66 = vcmp.gt.f32.partialorder %v58, 0.0
  %vm67 = vcmp.gt.f32.partialorder %v59, 0.0
  %v68 = vmul.f32 %v52, 0.01
  %v69 = vmul.f32 %v53, 0.01
  %v70 = vmul.f32 %v54, 0.01
  %v71 = vmul.f32 %v55, 0.01
  %v72 = vmul.f32 %v56, 0.01
  %v73 = vmul.f32 %v57, 0.01
  %v74 = vmul.f32 %v58, 0.01
  %v75 = vmul.f32 %v59, 0.01
  %v76 = vsel %vm60, %v52, %v68
  %v77 = vsel %vm61, %v53, %v69
  %v78 = vsel %vm62, %v54, %v70
  %v79 = vsel %vm63, %v55, %v71
  %v80 = vsel %vm64, %v56, %v72
  %v81 = vsel %vm65, %v57, %v73
  %v82 = vsel %vm66, %v58, %v74
  %v83 = vsel %vm67, %v59, %v75
  %v84 = vpack.c.bf16 %v78, %v76
  %v85 = vpack.c.bf16 %v79, %v77
  %v86 = vpack.c.bf16 %v82, %v80
  %v87 = vpack.c.bf16 %v83, %v81
  %v88 = vld [vmem:[%s3] sm:$0xf]
  %v89 = vld [vmem:[%s3 + $0x4] sm:$0xf]
  %v90 = vld [vmem:[%s3 + $0x8] sm:$0xf]
  %v91 = vld [vmem:[%s3 + $0xc] sm:$0xf]
  %v92 = vld [vmem:[%s3 + $0x10] sm:$0xf]
  %v93 = vld [vmem:[%s3 + $0x14] sm:$0xf]
  %v94 = vld [vmem:[%s3 + $0x18] sm:$0xf]
  %v95 = vld [vmem:[%s3 + $0x1c] sm:$0xf]
  %v96 = vld [vmem:[%s3 + $0x20] sm:$0xf]
  %v97 = vld [vmem:[%s3 + $0x24] sm:$0xf]
  %v98 = vld [vmem:[%s3 + $0x28] sm:$0xf]
  %v99 = vld [vmem:[%s3 + $0x2c] sm:$0xf]
  %v100 = vld [vmem:[%s3 + $0x30] sm:$0xf]
  %v101 = vld [vmem:[%s3 + $0x34] sm:$0xf]
  %v102 = vld [vmem:[%s3 + $0x38] sm:$0xf]
  %v103 = vld [vmem:[%s3 + $0x3c] sm:$0xf]
  %v104 = vld [vmem:[%s3 + $0x40] sm:$0xf]
  %v105 = vld [vmem:[%s3 + $0x44] sm:$0xf]
  %v106 = vld [vmem:[%s3 + $0x48] sm:$0xf]
  %v107 = vld [vmem:[%s3 + $0x4c] sm:$0xf]
  %v108 = vld [vmem:[%s3 + $0x50] sm:$0xf]
  %v109 = vld [vmem:[%s3 + $0x54] sm:$0xf]
  %v110 = vld [vmem:[%s3 + $0x58] sm:$0xf]
  %v111 = vld [vmem:[%s3 + $0x5c] sm:$0xf]
  %v112 = vld [vmem:[%s3 + $0x60] sm:$0xf]
  %v113 = vld [vmem:[%s3 + $0x64] sm:$0xf]
  %v114 = vld [vmem:[%s3 + $0x68] sm:$0xf]
  %v115 = vld [vmem:[%s3 + $0x6c] sm:$0xf]
  %v116 = vld [vmem:[%s3 + $0x70] sm:$0xf]
  %v117 = vld [vmem:[%s3 + $0x74] sm:$0xf]
  %v118 = vld [vmem:[%s3 + $0x78] sm:$0xf]
  %v119 = vld [vmem:[%s3 + $0x7c] sm:$0xf]
  %v120 = vld [vmem:[%s4] sm:$0x1]
  %v122 = vperm.slane %v120, 0
  %v156 = vunpack.c.l.b16 %v88
  %v157 = vunpack.c.l.b16 %v89
  %v158 = vunpack.c.l.b16 %v90
  %v159 = vunpack.c.l.b16 %v91
  %v160 = vunpack.c.l.b16 %v92
  %v161 = vunpack.c.l.b16 %v93
  %v162 = vunpack.c.l.b16 %v94
  %v163 = vunpack.c.l.b16 %v95
  %v164 = vunpack.c.l.b16 %v96
  %v165 = vunpack.c.l.b16 %v97
  %v166 = vunpack.c.l.b16 %v98
  %v167 = vunpack.c.l.b16 %v99
  %v168 = vunpack.c.l.b16 %v100
  %v169 = vunpack.c.l.b16 %v101
  %v170 = vunpack.c.l.b16 %v102
  %v171 = vunpack.c.l.b16 %v103
  %v172 = vunpack.c.l.b16 %v104
  %v173 = vunpack.c.l.b16 %v105
  %v174 = vunpack.c.l.b16 %v106
  %v175 = vunpack.c.l.b16 %v107
  %v176 = vunpack.c.l.b16 %v108
  %v177 = vunpack.c.l.b16 %v109
  %v178 = vunpack.c.l.b16 %v110
  %v179 = vunpack.c.l.b16 %v111
  %v180 = vunpack.c.l.b16 %v112
  %v181 = vunpack.c.l.b16 %v113
  %v182 = vunpack.c.l.b16 %v114
  %v183 = vunpack.c.l.b16 %v115
  %v184 = vunpack.c.l.b16 %v116
  %v185 = vunpack.c.l.b16 %v117
  %v186 = vunpack.c.l.b16 %v118
  %v187 = vunpack.c.l.b16 %v119
  %v188 = vpack.c.b16 %v157, %v156
  %v189 = vpack.c.b16 %v159, %v158
  %v190 = vpack.c.b16 %v161, %v160
  %v191 = vpack.c.b16 %v163, %v162
  %v192 = vpack.c.b16 %v165, %v164
  %v193 = vpack.c.b16 %v167, %v166
  %v194 = vpack.c.b16 %v169, %v168
  %v195 = vpack.c.b16 %v171, %v170
  %v196 = vpack.c.b16 %v173, %v172
  %v197 = vpack.c.b16 %v175, %v174
  %v198 = vpack.c.b16 %v177, %v176
  %v199 = vpack.c.b16 %v179, %v178
  %v200 = vpack.c.b16 %v181, %v180
  %v201 = vpack.c.b16 %v183, %v182
  %v202 = vpack.c.b16 %v185, %v184
  %v203 = vpack.c.b16 %v187, %v186
  %220 = vmatpush.bf16.msra.mxu0 %v195
  %221 = vmatpush.bf16.msra.mxu0 %v194
  %222 = vmatpush.bf16.msra.mxu0 %v193
  %223 = vmatpush.bf16.msra.mxu0 %v192
  %224 = vmatpush.bf16.msra.mxu0 %v191
  %225 = vmatpush.bf16.msra.mxu0 %v190
  %226 = vmatpush.bf16.msra.mxu0 %v189
  %227 = vmatpush.bf16.msra.mxu0 %v188
  %228 = vmatmul.bf16.gmra.mxu0 %v84
  %v229 = vpop.f32.mrf.mxu0
  %v230 = vadd.f32 %v122, %v229
  %v231 = vpop.f32.mrf.mxu0
  %v232 = vadd.f32 %v122, %v231
  %233 = vmatmul.bf16.gmra.mxu0 %v86
  %v234 = vpop.f32.mrf.mxu0
  %v235 = vadd.f32 %v122, %v234
  %v236 = vpop.f32.mrf.mxu0
  %v237 = vadd.f32 %v122, %v236
  %238 = vdwg.mxu0
  %239 = vmatpush.bf16.msra.mxu0 %v203
  %240 = vmatpush.bf16.msra.mxu0 %v202
  %241 = vmatpush.bf16.msra.mxu0 %v201
  %242 = vmatpush.bf16.msra.mxu0 %v200
  %243 = vmatpush.bf16.msra.mxu0 %v199
  %244 = vmatpush.bf16.msra.mxu0 %v198
  %245 = vmatpush.bf16.msra.mxu0 %v197
  %246 = vmatpush.bf16.msra.mxu0 %v196
  %247 = vmatmul.bf16.gmra.mxu0 %v85
  %v248 = vpop.f32.mrf.mxu0
  %v249 = vadd.f32 %v230, %v248
  %v250 = vpop.f32.mrf.mxu0
  %v251 = vadd.f32 %v232, %v250
  %252 = vmatmul.bf16.gmra.mxu0 %v87
  %v253 = vpop.f32.mrf.mxu0
  %v254 = vadd.f32 %v235, %v253
  %v255 = vpop.f32.mrf.mxu0
  %v256 = vadd.f32 %v237, %v255
  %257 = vdwg.mxu0
  %v258 = vpack.c.bf16 %v249, %v249
  %v259 = vpack.c.bf16 %v251, %v251
  %v260 = vpack.c.bf16 %v254, %v254
  %v261 = vpack.c.bf16 %v256, %v256
  %262 = vst [vmem:[%s5] sm:$0xf] %v258
  %263 = vst [vmem:[%s5 + $0x4] sm:$0xf] %v259
  %264 = vst [vmem:[%s5 + $0x8] sm:$0xf] %v260
  %265 = vst [vmem:[%s5 + $0xc] sm:$0xf] %v261
  // Predicated region
  $region22: #{encoder_forward.32} parent=0 // pred_check
    _
  $region23: #{encoder_forward.32} parent=0 // pred_check_branch
    %267 = sbr.rel (0) target = $region25
  $region24: #{encoder_forward.32} parent=0 // pred_region
    _
  $region25: #{encoder_forward.32} parent=0 // pred_fallthru
    _
  // Predicated region
  $region26: #{encoder_forward.32} parent=0 // pred_check
    _
  $region27: #{encoder_forward.32} parent=0 // pred_check_branch
    %269 = sbr.rel (0) target = $region29
  $region28: #{encoder_forward.32} parent=0 // pred_region
    _
  $region29: #{encoder_forward.32} parent=0 // pred_fallthru
    _

// kernel: encoder_forward.33
$region0: #{encoder_forward.33}
  #allocation0 [shape = 'u32[]', space=smem, size = 0x4, offset = 0x4, fixed_abs, tag = 'smem constant byte address 0x4 - core index']
  #allocation1 [shape = 'u32[72,128]{1,0:T(1,128)}', space=vmem, size = 0x9000, scoped, tag = 'internal scratch']
  %s0 = inlined_call_operand.vmem [shape: bf16[32,384], index: 0, kind: input, shape index: {}]
  %s1 = inlined_call_operand.vmem [shape: f32[1,384], index: 1, kind: input, shape index: {}]
  %s2 = inlined_call_operand.vmem [shape: f32[1,384], index: 2, kind: input, shape index: {}]
  %s3 = inlined_call_operand.vmem [shape: bf16[384,128], index: 3, kind: input, shape index: {}]
  %s4 = inlined_call_operand.vmem [shape: f32[1,128], index: 4, kind: input, shape index: {}]
  %s5 = inlined_call_operand.vmem [shape: bf16[32,128], index: 5, kind: output, shape index: {}]
  %s6 = sld [smem:[#allocation0]]
  $region30: #{encoder_forward.33} parent=0
    _
  %s8 = ssub.s32 1, %s6
  %s9 = scalar_select 0, %s8, %s6
  // Predicated region
  $region2: #{encoder_forward.33} parent=0 // pred_check
    _
  $region3: #{encoder_forward.33} parent=0 // pred_check_branch
    %11 = sbr.rel (0) target = $region5
  $region4: #{encoder_forward.33} parent=0 // pred_region
    _
  $region5: #{encoder_forward.33} parent=0 // pred_fallthru
    _
  // Predicated region
  $region6: #{encoder_forward.33} parent=0 // pred_check
    _
  $region7: #{encoder_forward.33} parent=0 // pred_check_branch
    %13 = sbr.rel (0) target = $region9
  $region8: #{encoder_forward.33} parent=0 // pred_region
    _
  $region9: #{encoder_forward.33} parent=0 // pred_fallthru
    _
  // Predicated region
  $region10: #{encoder_forward.33} parent=0 // pred_check
    _
  $region11: #{encoder_forward.33} parent=0 // pred_check_branch
    %15 = sbr.rel (0) target = $region13
  $region12: #{encoder_forward.33} parent=0 // pred_region
    _
  $region13: #{encoder_forward.33} parent=0 // pred_fallthru
    _
  // Predicated region
  $region14: #{encoder_forward.33} parent=0 // pred_check
    _
  $region15: #{encoder_forward.33} parent=0 // pred_check_branch
    %17 = sbr.rel (0) target = $region17
  $region16: #{encoder_forward.33} parent=0 // pred_region
    _
  $region17: #{encoder_forward.33} parent=0 // pred_fallthru
    _
  // Predicated region
  $region18: #{encoder_forward.33} parent=0 // pred_check
    _
  $region19: #{encoder_forward.33} parent=0 // pred_check_branch
    %19 = sbr.rel (0) target = $region21
  $region20: #{encoder_forward.33} parent=0 // pred_region
    _
  $region21: #{encoder_forward.33} parent=0 // pred_fallthru
    _
  %v20 = vld [vmem:[%s0] sm:$0xff]
  %v21 = vld [vmem:[%s0 + $0x8] sm:$0xf]
  %v22 = vld [vmem:[%s0 + $0xc] sm:$0xff]
  %v23 = vld [vmem:[%s0 + $0x14] sm:$0xf]
  %v24 = vld [vmem:[%s0 + $0x18] sm:$0xff]
  %v25 = vld [vmem:[%s0 + $0x20] sm:$0xf]
  %v26 = vld [vmem:[%s0 + $0x24] sm:$0xff]
  %v27 = vld [vmem:[%s0 + $0x2c] sm:$0xf]
  %v28 = vunpack.c.l.bf16 %v20
  %v29 = vunpack.c.h.bf16 %v20
  %v30 = vunpack.c.l.bf16 %v21
  %v31 = vunpack.c.l.bf16 %v22
  %v32 = vunpack.c.h.bf16 %v22
  %v33 = vunpack.c.l.bf16 %v23
  %v34 = vunpack.c.l.bf16 %v24
  %v35 = vunpack.c.h.bf16 %v24
  %v36 = vunpack.c.l.bf16 %v25
  %v37 = vunpack.c.l.bf16 %v26
  %v38 = vunpack.c.h.bf16 %v26
  %v39 = vunpack.c.l.bf16 %v27
  %v40 = vld [vmem:[%s1] sm:$0x7]
  %v42 = vperm.slane %v40, 0
  %v43 = vperm.slane %v40, 1
  %v44 = vperm.slane %v40, 2
  %v48 = vmul.f32 %v28, %v42
  %v49 = vmul.f32 %v29, %v43
  %v50 = vmul.f32 %v30, %v44
  %v51 = vmul.f32 %v31, %v42
  %v52 = vmul.f32 %v32, %v43
  %v53 = vmul.f32 %v33, %v44
  %v54 = vmul.f32 %v34, %v42
  %v55 = vmul.f32 %v35, %v43
  %v56 = vmul.f32 %v36, %v44
  %v57 = vmul.f32 %v37, %v42
  %v58 = vmul.f32 %v38, %v43
  %v59 = vmul.f32 %v39, %v44
  %v60 = vld [vmem:[%s2] sm:$0x7]
  %v62 = vperm.slane %v60, 0
  %v63 = vperm.slane %v60, 1
  %v64 = vperm.slane %v60, 2
  %v68 = vadd.f32 %v48, %v62
  %v69 = vadd.f32 %v49, %v63
  %v70 = vadd.f32 %v50, %v64
  %v71 = vadd.f32 %v51, %v62
  %v72 = vadd.f32 %v52, %v63
  %v73 = vadd.f32 %v53, %v64
  %v74 = vadd.f32 %v54, %v62
  %v75 = vadd.f32 %v55, %v63
  %v76 = vadd.f32 %v56, %v64
  %v77 = vadd.f32 %v57, %v62
  %v78 = vadd.f32 %v58, %v63
  %v79 = vadd.f32 %v59, %v64
  %vm80 = vcmp.gt.f32.partialorder %v68, 0.0
  %vm81 = vcmp.gt.f32.partialorder %v69, 0.0
  %vm82 = vcmp.gt.f32.partialorder %v70, 0.0
  %vm83 = vcmp.gt.f32.partialorder %v71, 0.0
  %vm84 = vcmp.gt.f32.partialorder %v72, 0.0
  %vm85 = vcmp.gt.f32.partialorder %v73, 0.0
  %vm86 = vcmp.gt.f32.partialorder %v74, 0.0
  %vm87 = vcmp.gt.f32.partialorder %v75, 0.0
  %vm88 = vcmp.gt.f32.partialorder %v76, 0.0
  %vm89 = vcmp.gt.f32.partialorder %v77, 0.0
  %vm90 = vcmp.gt.f32.partialorder %v78, 0.0
  %vm91 = vcmp.gt.f32.partialorder %v79, 0.0
  %v92 = vmul.f32 %v68, 0.01
  %v93 = vmul.f32 %v69, 0.01
  %v94 = vmul.f32 %v70, 0.01
  %v95 = vmul.f32 %v71, 0.01
  %v96 = vmul.f32 %v72, 0.01
  %v97 = vmul.f32 %v73, 0.01
  %v98 = vmul.f32 %v74, 0.01
  %v99 = vmul.f32 %v75, 0.01
  %v100 = vmul.f32 %v76, 0.01
  %v101 = vmul.f32 %v77, 0.01
  %v102 = vmul.f32 %v78, 0.01
  %v103 = vmul.f32 %v79, 0.01
  %v104 = vsel %vm80, %v68, %v92
  %v105 = vsel %vm81, %v69, %v93
  %v106 = vsel %vm82, %v70, %v94
  %v107 = vsel %vm83, %v71, %v95
  %v108 = vsel %vm84, %v72, %v96
  %v109 = vsel %vm85, %v73, %v97
  %v110 = vsel %vm86, %v74, %v98
  %v111 = vsel %vm87, %v75, %v99
  %v112 = vsel %vm88, %v76, %v100
  %v113 = vsel %vm89, %v77, %v101
  %v114 = vsel %vm90, %v78, %v102
  %v115 = vsel %vm91, %v79, %v103
  %v116 = vpack.c.bf16 %v107, %v104
  %v117 = vpack.c.bf16 %v108, %v105
  %v118 = vpack.c.bf16 %v109, %v106
  %v119 = vpack.c.bf16 %v113, %v110
  %v120 = vpack.c.bf16 %v114, %v111
  %v121 = vpack.c.bf16 %v115, %v112
  %v122 = vld [vmem:[%s3] sm:$0xf]
  %v123 = vld [vmem:[%s3 + $0x4] sm:$0xf]
  %v124 = vld [vmem:[%s3 + $0x8] sm:$0xf]
  %v125 = vld [vmem:[%s3 + $0xc] sm:$0xf]
  %v126 = vld [vmem:[%s3 + $0x10] sm:$0xf]
  %v127 = vld [vmem:[%s3 + $0x14] sm:$0xf]
  %v128 = vld [vmem:[%s3 + $0x18] sm:$0xf]
  %v129 = vld [vmem:[%s3 + $0x1c] sm:$0xf]
  %v130 = vld [vmem:[%s3 + $0x20] sm:$0xf]
  %v131 = vld [vmem:[%s3 + $0x24] sm:$0xf]
  %v132 = vld [vmem:[%s3 + $0x28] sm:$0xf]
  %v133 = vld [vmem:[%s3 + $0x2c] sm:$0xf]
  %v134 = vld [vmem:[%s3 + $0x30] sm:$0xf]
  %v135 = vld [vmem:[%s3 + $0x34] sm:$0xf]
  %v136 = vld [vmem:[%s3 + $0x38] sm:$0xf]
  %v137 = vld [vmem:[%s3 + $0x3c] sm:$0xf]
  %v138 = vld [vmem:[%s3 + $0x40] sm:$0xf]
  %v139 = vld [vmem:[%s3 + $0x44] sm:$0xf]
  %v140 = vld [vmem:[%s3 + $0x48] sm:$0xf]
  %v141 = vld [vmem:[%s3 + $0x4c] sm:$0xf]
  %v142 = vld [vmem:[%s3 + $0x50] sm:$0xf]
  %v143 = vld [vmem:[%s3 + $0x54] sm:$0xf]
  %v144 = vld [vmem:[%s3 + $0x58] sm:$0xf]
  %v145 = vld [vmem:[%s3 + $0x5c] sm:$0xf]
  %v146 = vld [vmem:[%s3 + $0x60] sm:$0xf]
  %v147 = vld [vmem:[%s3 + $0x64] sm:$0xf]
  %v148 = vld [vmem:[%s3 + $0x68] sm:$0xf]
  %v149 = vld [vmem:[%s3 + $0x6c] sm:$0xf]
  %v150 = vld [vmem:[%s3 + $0x70] sm:$0xf]
  %v151 = vld [vmem:[%s3 + $0x74] sm:$0xf]
  %v152 = vld [vmem:[%s3 + $0x78] sm:$0xf]
  %v153 = vld [vmem:[%s3 + $0x7c] sm:$0xf]
  %v154 = vld [vmem:[%s3 + $0x80] sm:$0xf]
  %v155 = vld [vmem:[%s3 + $0x84] sm:$0xf]
  %v156 = vld [vmem:[%s3 + $0x88] sm:$0xf]
  %v157 = vld [vmem:[%s3 + $0x8c] sm:$0xf]
  %v158 = vld [vmem:[%s3 + $0x90] sm:$0xf]
  %v159 = vld [vmem:[%s3 + $0x94] sm:$0xf]
  %v160 = vld [vmem:[%s3 + $0x98] sm:$0xf]
  %v161 = vld [vmem:[%s3 + $0x9c] sm:$0xf]
  %v162 = vld [vmem:[%s3 + $0xa0] sm:$0xf]
  %v163 = vld [vmem:[%s3 + $0xa4] sm:$0xf]
  %v164 = vld [vmem:[%s3 + $0xa8] sm:$0xf]
  %v165 = vld [vmem:[%s3 + $0xac] sm:$0xf]
  %v166 = vld [vmem:[%s3 + $0xb0] sm:$0xf]
  %v167 = vld [vmem:[%s3 + $0xb4] sm:$0xf]
  %v168 = vld [vmem:[%s3 + $0xb8] sm:$0xf]
  %v169 = vld [vmem:[%s3 + $0xbc] sm:$0xf]
  %v170 = vld [vmem:[%s4] sm:$0x1]
  %v172 = vperm.slane %v170, 0
  %v222 = vunpack.c.l.b16 %v122
  %v223 = vunpack.c.l.b16 %v123
  %v224 = vunpack.c.l.b16 %v124
  %v225 = vunpack.c.l.b16 %v125
  %v226 = vunpack.c.l.b16 %v126
  %v227 = vunpack.c.l.b16 %v127
  %v228 = vunpack.c.l.b16 %v128
  %v229 = vunpack.c.l.b16 %v129
  %v230 = vunpack.c.l.b16 %v130
  %v231 = vunpack.c.l.b16 %v131
  %v232 = vunpack.c.l.b16 %v132
  %v233 = vunpack.c.l.b16 %v133
  %v234 = vunpack.c.l.b16 %v134
  %v235 = vunpack.c.l.b16 %v135
  %v236 = vunpack.c.l.b16 %v136
  %v237 = vunpack.c.l.b16 %v137
  %v238 = vunpack.c.l.b16 %v138
  %v239 = vunpack.c.l.b16 %v139
  %v240 = vunpack.c.l.b16 %v140
  %v241 = vunpack.c.l.b16 %v141
  %v242 = vunpack.c.l.b16 %v142
  %v243 = vunpack.c.l.b16 %v143
  %v244 = vunpack.c.l.b16 %v144
  %v245 = vunpack.c.l.b16 %v145
  %v246 = vunpack.c.l.b16 %v146
  %v247 = vunpack.c.l.b16 %v147
  %v248 = vunpack.c.l.b16 %v148
  %v249 = vunpack.c.l.b16 %v149
  %v250 = vunpack.c.l.b16 %v150
  %v251 = vunpack.c.l.b16 %v151
  %v252 = vunpack.c.l.b16 %v152
  %v253 = vunpack.c.l.b16 %v153
  %v254 = vunpack.c.l.b16 %v154
  %v255 = vunpack.c.l.b16 %v155
  %v256 = vunpack.c.l.b16 %v156
  %v257 = vunpack.c.l.b16 %v157
  %v258 = vunpack.c.l.b16 %v158
  %v259 = vunpack.c.l.b16 %v159
  %v260 = vunpack.c.l.b16 %v160
  %v261 = vunpack.c.l.b16 %v161
  %v262 = vunpack.c.l.b16 %v162
  %v263 = vunpack.c.l.b16 %v163
  %v264 = vunpack.c.l.b16 %v164
  %v265 = vunpack.c.l.b16 %v165
  %v266 = vunpack.c.l.b16 %v166
  %v267 = vunpack.c.l.b16 %v167
  %v268 = vunpack.c.l.b16 %v168
  %v269 = vunpack.c.l.b16 %v169
  %v270 = vpack.c.b16 %v223, %v222
  %v271 = vpack.c.b16 %v225, %v224
  %v272 = vpack.c.b16 %v227, %v226
  %v273 = vpack.c.b16 %v229, %v228
  %v274 = vpack.c.b16 %v231, %v230
  %v275 = vpack.c.b16 %v233, %v232
  %v276 = vpack.c.b16 %v235, %v234
  %v277 = vpack.c.b16 %v237, %v236
  %v278 = vpack.c.b16 %v239, %v238
  %v279 = vpack.c.b16 %v241, %v240
  %v280 = vpack.c.b16 %v243, %v242
  %v281 = vpack.c.b16 %v245, %v244
  %v282 = vpack.c.b16 %v247, %v246
  %v283 = vpack.c.b16 %v249, %v248
  %v284 = vpack.c.b16 %v251, %v250
  %v285 = vpack.c.b16 %v253, %v252
  %v286 = vpack.c.b16 %v255, %v254
  %v287 = vpack.c.b16 %v257, %v256
  %v288 = vpack.c.b16 %v259, %v258
  %v289 = vpack.c.b16 %v261, %v260
  %v290 = vpack.c.b16 %v263, %v262
  %v291 = vpack.c.b16 %v265, %v264
  %v292 = vpack.c.b16 %v267, %v266
  %v293 = vpack.c.b16 %v269, %v268
  %318 = vmatpush.bf16.msra.mxu0 %v277
  %319 = vmatpush.bf16.msra.mxu0 %v276
  %320 = vmatpush.bf16.msra.mxu0 %v275
  %321 = vmatpush.bf16.msra.mxu0 %v274
  %322 = vmatpush.bf16.msra.mxu0 %v273
  %323 = vmatpush.bf16.msra.mxu0 %v272
  %324 = vmatpush.bf16.msra.mxu0 %v271
  %325 = vmatpush.bf16.msra.mxu0 %v270
  %326 = vmatmul.bf16.gmra.mxu0 %v116
  %v327 = vpop.f32.mrf.mxu0
  %v328 = vadd.f32 %v172, %v327
  %v329 = vpop.f32.mrf.mxu0
  %v330 = vadd.f32 %v172, %v329
  %331 = vmatmul.bf16.gmra.mxu0 %v119
  %v332 = vpop.f32.mrf.mxu0
  %v333 = vadd.f32 %v172, %v332
  %v334 = vpop.f32.mrf.mxu0
  %v335 = vadd.f32 %v172, %v334
  %336 = vdwg.mxu0
  %337 = vmatpush.bf16.msra.mxu0 %v285
  %338 = vmatpush.bf16.msra.mxu0 %v284
  %339 = vmatpush.bf16.msra.mxu0 %v283
  %340 = vmatpush.bf16.msra.mxu0 %v282
  %341 = vmatpush.bf16.msra.mxu0 %v281
  %342 = vmatpush.bf16.msra.mxu0 %v280
  %343 = vmatpush.bf16.msra.mxu0 %v279
  %344 = vmatpush.bf16.msra.mxu0 %v278
  %345 = vmatmul.bf16.gmra.mxu0 %v117
  %v346 = vpop.f32.mrf.mxu0
  %v347 = vadd.f32 %v328, %v346
  %v348 = vpop.f32.mrf.mxu0
  %v349 = vadd.f32 %v330, %v348
  %350 = vmatmul.bf16.gmra.mxu0 %v120
  %v351 = vpop.f32.mrf.mxu0
  %v352 = vadd.f32 %v333, %v351
  %v353 = vpop.f32.mrf.mxu0
  %v354 = vadd.f32 %v335, %v353
  %355 = vdwg.mxu0
  %356 = vmatpush.bf16.msra.mxu0 %v293
  %357 = vmatpush.bf16.msra.mxu0 %v292
  %358 = vmatpush.bf16.msra.mxu0 %v291
  %359 = vmatpush.bf16.msra.mxu0 %v290
  %360 = vmatpush.bf16.msra.mxu0 %v289
  %361 = vmatpush.bf16.msra.mxu0 %v288
  %362 = vmatpush.bf16.msra.mxu0 %v287
  %363 = vmatpush.bf16.msra.mxu0 %v286
  %364 = vmatmul.bf16.gmra.mxu0 %v118
  %v365 = vpop.f32.mrf.mxu0
  %v366 = vadd.f32 %v347, %v365
  %v367 = vpop.f32.mrf.mxu0
  %v368 = vadd.f32 %v349, %v367
  %369 = vmatmul.bf16.gmra.mxu0 %v121
  %v370 = vpop.f32.mrf.mxu0
  %v371 = vadd.f32 %v352, %v370
  %v372 = vpop.f32.mrf.mxu0
  %v373 = vadd.f32 %v354, %v372
  %374 = vdwg.mxu0
  %v375 = vpack.c.bf16 %v366, %v366
  %v376 = vpack.c.bf16 %v368, %v368
  %v377 = vpack.c.bf16 %v371, %v371
  %v378 = vpack.c.bf16 %v373, %v373
  %379 = vst [vmem:[%s5] sm:$0xf] %v375
  %380 = vst [vmem:[%s5 + $0x4] sm:$0xf] %v376
  %381 = vst [vmem:[%s5 + $0x8] sm:$0xf] %v377
  %382 = vst [vmem:[%s5 + $0xc] sm:$0xf] %v378
  // Predicated region
  $region22: #{encoder_forward.33} parent=0 // pred_check
    _
  $region23: #{encoder_forward.33} parent=0 // pred_check_branch
    %384 = sbr.rel (0) target = $region25
  $region24: #{encoder_forward.33} parent=0 // pred_region
    _
  $region25: #{encoder_forward.33} parent=0 // pred_fallthru
    _
  // Predicated region
  $region26: #{encoder_forward.33} parent=0 // pred_check
    _
  $region27: #{encoder_forward.33} parent=0 // pred_check_branch
    %386 = sbr.rel (0) target = $region29
  $region28: #{encoder_forward.33} parent=0 // pred_region
    _
  $region29: #{encoder_forward.33} parent=0 // pred_fallthru
    _

// kernel: encoder_forward.35
$region0: #{encoder_forward.35}
  #allocation0 [shape = 'u32[]', space=smem, size = 0x4, offset = 0x4, fixed_abs, tag = 'smem constant byte address 0x4 - core index']
  #allocation1 [shape = 'u32[72,128]{1,0:T(1,128)}', space=vmem, size = 0x9000, scoped, tag = 'internal scratch']
  %s0 = inlined_call_operand.vmem [shape: bf16[32,384], index: 0, kind: input, shape index: {}]
  %s1 = inlined_call_operand.vmem [shape: f32[1,384], index: 1, kind: input, shape index: {}]
  %s2 = inlined_call_operand.vmem [shape: f32[1,384], index: 2, kind: input, shape index: {}]
  %s3 = inlined_call_operand.vmem [shape: bf16[384,128], index: 3, kind: input, shape index: {}]
  %s4 = inlined_call_operand.vmem [shape: f32[1,128], index: 4, kind: input, shape index: {}]
  %s5 = inlined_call_operand.vmem [shape: bf16[32,128], index: 5, kind: input, shape index: {}]
  %s6 = inlined_call_operand.vmem [shape: bf16[32,128], index: 6, kind: output, shape index: {}]
  %s7 = sld [smem:[#allocation0]]
  $region34: #{encoder_forward.35} parent=0
    _
  %s9 = ssub.s32 1, %s7
  %s10 = scalar_select 0, %s9, %s7
  // Predicated region
  $region2: #{encoder_forward.35} parent=0 // pred_check
    _
  $region3: #{encoder_forward.35} parent=0 // pred_check_branch
    %12 = sbr.rel (0) target = $region5
  $region4: #{encoder_forward.35} parent=0 // pred_region
    _
  $region5: #{encoder_forward.35} parent=0 // pred_fallthru
    _
  // Predicated region
  $region6: #{encoder_forward.35} parent=0 // pred_check
    _
  $region7: #{encoder_forward.35} parent=0 // pred_check_branch
    %14 = sbr.rel (0) target = $region9
  $region8: #{encoder_forward.35} parent=0 // pred_region
    _
  $region9: #{encoder_forward.35} parent=0 // pred_fallthru
    _
  // Predicated region
  $region10: #{encoder_forward.35} parent=0 // pred_check
    _
  $region11: #{encoder_forward.35} parent=0 // pred_check_branch
    %16 = sbr.rel (0) target = $region13
  $region12: #{encoder_forward.35} parent=0 // pred_region
    _
  $region13: #{encoder_forward.35} parent=0 // pred_fallthru
    _
  // Predicated region
  $region14: #{encoder_forward.35} parent=0 // pred_check
    _
  $region15: #{encoder_forward.35} parent=0 // pred_check_branch
    %18 = sbr.rel (0) target = $region17
  $region16: #{encoder_forward.35} parent=0 // pred_region
    _
  $region17: #{encoder_forward.35} parent=0 // pred_fallthru
    _
  // Predicated region
  $region18: #{encoder_forward.35} parent=0 // pred_check
    _
  $region19: #{encoder_forward.35} parent=0 // pred_check_branch
    %20 = sbr.rel (0) target = $region21
  $region20: #{encoder_forward.35} parent=0 // pred_region
    _
  $region21: #{encoder_forward.35} parent=0 // pred_fallthru
    _
  // Predicated region
  $region22: #{encoder_forward.35} parent=0 // pred_check
    _
  $region23: #{encoder_forward.35} parent=0 // pred_check_branch
    %22 = sbr.rel (0) target = $region25
  $region24: #{encoder_forward.35} parent=0 // pred_region
    _
  $region25: #{encoder_forward.35} parent=0 // pred_fallthru
    _
  %v23 = vld [vmem:[%s0] sm:$0xff]
  %v24 = vld [vmem:[%s0 + $0x8] sm:$0xf]
  %v25 = vld [vmem:[%s0 + $0xc] sm:$0xff]
  %v26 = vld [vmem:[%s0 + $0x14] sm:$0xf]
  %v27 = vld [vmem:[%s0 + $0x18] sm:$0xff]
  %v28 = vld [vmem:[%s0 + $0x20] sm:$0xf]
  %v29 = vld [vmem:[%s0 + $0x24] sm:$0xff]
  %v30 = vld [vmem:[%s0 + $0x2c] sm:$0xf]
  %v31 = vunpack.c.l.bf16 %v23
  %v32 = vunpack.c.h.bf16 %v23
  %v33 = vunpack.c.l.bf16 %v24
  %v34 = vunpack.c.l.bf16 %v25
  %v35 = vunpack.c.h.bf16 %v25
  %v36 = vunpack.c.l.bf16 %v26
  %v37 = vunpack.c.l.bf16 %v27
  %v38 = vunpack.c.h.bf16 %v27
  %v39 = vunpack.c.l.bf16 %v28
  %v40 = vunpack.c.l.bf16 %v29
  %v41 = vunpack.c.h.bf16 %v29
  %v42 = vunpack.c.l.bf16 %v30
  %v43 = vld [vmem:[%s1] sm:$0x7]
  %v45 = vperm.slane %v43, 0
  %v46 = vperm.slane %v43, 1
  %v47 = vperm.slane %v43, 2
  %v51 = vmul.f32 %v31, %v45
  %v52 = vmul.f32 %v32, %v46
  %v53 = vmul.f32 %v33, %v47
  %v54 = vmul.f32 %v34, %v45
  %v55 = vmul.f32 %v35, %v46
  %v56 = vmul.f32 %v36, %v47
  %v57 = vmul.f32 %v37, %v45
  %v58 = vmul.f32 %v38, %v46
  %v59 = vmul.f32 %v39, %v47
  %v60 = vmul.f32 %v40, %v45
  %v61 = vmul.f32 %v41, %v46
  %v62 = vmul.f32 %v42, %v47
  %v63 = vld [vmem:[%s2] sm:$0x7]
  %v65 = vperm.slane %v63, 0
  %v66 = vperm.slane %v63, 1
  %v67 = vperm.slane %v63, 2
  %v71 = vadd.f32 %v51, %v65
  %v72 = vadd.f32 %v52, %v66
  %v73 = vadd.f32 %v53, %v67
  %v74 = vadd.f32 %v54, %v65
  %v75 = vadd.f32 %v55, %v66
  %v76 = vadd.f32 %v56, %v67
  %v77 = vadd.f32 %v57, %v65
  %v78 = vadd.f32 %v58, %v66
  %v79 = vadd.f32 %v59, %v67
  %v80 = vadd.f32 %v60, %v65
  %v81 = vadd.f32 %v61, %v66
  %v82 = vadd.f32 %v62, %v67
  %vm83 = vcmp.gt.f32.partialorder %v71, 0.0
  %vm84 = vcmp.gt.f32.partialorder %v72, 0.0
  %vm85 = vcmp.gt.f32.partialorder %v73, 0.0
  %vm86 = vcmp.gt.f32.partialorder %v74, 0.0
  %vm87 = vcmp.gt.f32.partialorder %v75, 0.0
  %vm88 = vcmp.gt.f32.partialorder %v76, 0.0
  %vm89 = vcmp.gt.f32.partialorder %v77, 0.0
  %vm90 = vcmp.gt.f32.partialorder %v78, 0.0
  %vm91 = vcmp.gt.f32.partialorder %v79, 0.0
  %vm92 = vcmp.gt.f32.partialorder %v80, 0.0
  %vm93 = vcmp.gt.f32.partialorder %v81, 0.0
  %vm94 = vcmp.gt.f32.partialorder %v82, 0.0
  %v95 = vmul.f32 %v71, 0.01
  %v96 = vmul.f32 %v72, 0.01
  %v97 = vmul.f32 %v73, 0.01
  %v98 = vmul.f32 %v74, 0.01
  %v99 = vmul.f32 %v75, 0.01
  %v100 = vmul.f32 %v76, 0.01
  %v101 = vmul.f32 %v77, 0.01
  %v102 = vmul.f32 %v78, 0.01
  %v103 = vmul.f32 %v79, 0.01
  %v104 = vmul.f32 %v80, 0.01
  %v105 = vmul.f32 %v81, 0.01
  %v106 = vmul.f32 %v82, 0.01
  %v107 = vsel %vm83, %v71, %v95
  %v108 = vsel %vm84, %v72, %v96
  %v109 = vsel %vm85, %v73, %v97
  %v110 = vsel %vm86, %v74, %v98
  %v111 = vsel %vm87, %v75, %v99
  %v112 = vsel %vm88, %v76, %v100
  %v113 = vsel %vm89, %v77, %v101
  %v114 = vsel %vm90, %v78, %v102
  %v115 = vsel %vm91, %v79, %v103
  %v116 = vsel %vm92, %v80, %v104
  %v117 = vsel %vm93, %v81, %v105
  %v118 = vsel %vm94, %v82, %v106
  %v119 = vpack.c.bf16 %v110, %v107
  %v120 = vpack.c.bf16 %v111, %v108
  %v121 = vpack.c.bf16 %v112, %v109
  %v122 = vpack.c.bf16 %v116, %v113
  %v123 = vpack.c.bf16 %v117, %v114
  %v124 = vpack.c.bf16 %v118, %v115
  %v125 = vld [vmem:[%s3] sm:$0xf]
  %v126 = vld [vmem:[%s3 + $0x4] sm:$0xf]
  %v127 = vld [vmem:[%s3 + $0x8] sm:$0xf]
  %v128 = vld [vmem:[%s3 + $0xc] sm:$0xf]
  %v129 = vld [vmem:[%s3 + $0x10] sm:$0xf]
  %v130 = vld [vmem:[%s3 + $0x14] sm:$0xf]
  %v131 = vld [vmem:[%s3 + $0x18] sm:$0xf]
  %v132 = vld [vmem:[%s3 + $0x1c] sm:$0xf]
  %v133 = vld [vmem:[%s3 + $0x20] sm:$0xf]
  %v134 = vld [vmem:[%s3 + $0x24] sm:$0xf]
  %v135 = vld [vmem:[%s3 + $0x28] sm:$0xf]
  %v136 = vld [vmem:[%s3 + $0x2c] sm:$0xf]
  %v137 = vld [vmem:[%s3 + $0x30] sm:$0xf]
  %v138 = vld [vmem:[%s3 + $0x34] sm:$0xf]
  %v139 = vld [vmem:[%s3 + $0x38] sm:$0xf]
  %v140 = vld [vmem:[%s3 + $0x3c] sm:$0xf]
  %v141 = vld [vmem:[%s3 + $0x40] sm:$0xf]
  %v142 = vld [vmem:[%s3 + $0x44] sm:$0xf]
  %v143 = vld [vmem:[%s3 + $0x48] sm:$0xf]
  %v144 = vld [vmem:[%s3 + $0x4c] sm:$0xf]
  %v145 = vld [vmem:[%s3 + $0x50] sm:$0xf]
  %v146 = vld [vmem:[%s3 + $0x54] sm:$0xf]
  %v147 = vld [vmem:[%s3 + $0x58] sm:$0xf]
  %v148 = vld [vmem:[%s3 + $0x5c] sm:$0xf]
  %v149 = vld [vmem:[%s3 + $0x60] sm:$0xf]
  %v150 = vld [vmem:[%s3 + $0x64] sm:$0xf]
  %v151 = vld [vmem:[%s3 + $0x68] sm:$0xf]
  %v152 = vld [vmem:[%s3 + $0x6c] sm:$0xf]
  %v153 = vld [vmem:[%s3 + $0x70] sm:$0xf]
  %v154 = vld [vmem:[%s3 + $0x74] sm:$0xf]
  %v155 = vld [vmem:[%s3 + $0x78] sm:$0xf]
  %v156 = vld [vmem:[%s3 + $0x7c] sm:$0xf]
  %v157 = vld [vmem:[%s3 + $0x80] sm:$0xf]
  %v158 = vld [vmem:[%s3 + $0x84] sm:$0xf]
  %v159 = vld [vmem:[%s3 + $0x88] sm:$0xf]
  %v160 = vld [vmem:[%s3 + $0x8c] sm:$0xf]
  %v161 = vld [vmem:[%s3 + $0x90] sm:$0xf]
  %v162 = vld [vmem:[%s3 + $0x94] sm:$0xf]
  %v163 = vld [vmem:[%s3 + $0x98] sm:$0xf]
  %v164 = vld [vmem:[%s3 + $0x9c] sm:$0xf]
  %v165 = vld [vmem:[%s3 + $0xa0] sm:$0xf]
  %v166 = vld [vmem:[%s3 + $0xa4] sm:$0xf]
  %v167 = vld [vmem:[%s3 + $0xa8] sm:$0xf]
  %v168 = vld [vmem:[%s3 + $0xac] sm:$0xf]
  %v169 = vld [vmem:[%s3 + $0xb0] sm:$0xf]
  %v170 = vld [vmem:[%s3 + $0xb4] sm:$0xf]
  %v171 = vld [vmem:[%s3 + $0xb8] sm:$0xf]
  %v172 = vld [vmem:[%s3 + $0xbc] sm:$0xf]
  %v173 = vld [vmem:[%s4] sm:$0x1]
  %v175 = vperm.slane %v173, 0
  %v225 = vunpack.c.l.b16 %v125
  %v226 = vunpack.c.l.b16 %v126
  %v227 = vunpack.c.l.b16 %v127
  %v228 = vunpack.c.l.b16 %v128
  %v229 = vunpack.c.l.b16 %v129
  %v230 = vunpack.c.l.b16 %v130
  %v231 = vunpack.c.l.b16 %v131
  %v232 = vunpack.c.l.b16 %v132
  %v233 = vunpack.c.l.b16 %v133
  %v234 = vunpack.c.l.b16 %v134
  %v235 = vunpack.c.l.b16 %v135
  %v236 = vunpack.c.l.b16 %v136
  %v237 = vunpack.c.l.b16 %v137
  %v238 = vunpack.c.l.b16 %v138
  %v239 = vunpack.c.l.b16 %v139
  %v240 = vunpack.c.l.b16 %v140
  %v241 = vunpack.c.l.b16 %v141
  %v242 = vunpack.c.l.b16 %v142
  %v243 = vunpack.c.l.b16 %v143
  %v244 = vunpack.c.l.b16 %v144
  %v245 = vunpack.c.l.b16 %v145
  %v246 = vunpack.c.l.b16 %v146
  %v247 = vunpack.c.l.b16 %v147
  %v248 = vunpack.c.l.b16 %v148
  %v249 = vunpack.c.l.b16 %v149
  %v250 = vunpack.c.l.b16 %v150
  %v251 = vunpack.c.l.b16 %v151
  %v252 = vunpack.c.l.b16 %v152
  %v253 = vunpack.c.l.b16 %v153
  %v254 = vunpack.c.l.b16 %v154
  %v255 = vunpack.c.l.b16 %v155
  %v256 = vunpack.c.l.b16 %v156
  %v257 = vunpack.c.l.b16 %v157
  %v258 = vunpack.c.l.b16 %v158
  %v259 = vunpack.c.l.b16 %v159
  %v260 = vunpack.c.l.b16 %v160
  %v261 = vunpack.c.l.b16 %v161
  %v262 = vunpack.c.l.b16 %v162
  %v263 = vunpack.c.l.b16 %v163
  %v264 = vunpack.c.l.b16 %v164
  %v265 = vunpack.c.l.b16 %v165
  %v266 = vunpack.c.l.b16 %v166
  %v267 = vunpack.c.l.b16 %v167
  %v268 = vunpack.c.l.b16 %v168
  %v269 = vunpack.c.l.b16 %v169
  %v270 = vunpack.c.l.b16 %v170
  %v271 = vunpack.c.l.b16 %v171
  %v272 = vunpack.c.l.b16 %v172
  %v273 = vpack.c.b16 %v226, %v225
  %v274 = vpack.c.b16 %v228, %v227
  %v275 = vpack.c.b16 %v230, %v229
  %v276 = vpack.c.b16 %v232, %v231
  %v277 = vpack.c.b16 %v234, %v233
  %v278 = vpack.c.b16 %v236, %v235
  %v279 = vpack.c.b16 %v238, %v237
  %v280 = vpack.c.b16 %v240, %v239
  %v281 = vpack.c.b16 %v242, %v241
  %v282 = vpack.c.b16 %v244, %v243
  %v283 = vpack.c.b16 %v246, %v245
  %v284 = vpack.c.b16 %v248, %v247
  %v285 = vpack.c.b16 %v250, %v249
  %v286 = vpack.c.b16 %v252, %v251
  %v287 = vpack.c.b16 %v254, %v253
  %v288 = vpack.c.b16 %v256, %v255
  %v289 = vpack.c.b16 %v258, %v257
  %v290 = vpack.c.b16 %v260, %v259
  %v291 = vpack.c.b16 %v262, %v261
  %v292 = vpack.c.b16 %v264, %v263
  %v293 = vpack.c.b16 %v266, %v265
  %v294 = vpack.c.b16 %v268, %v267
  %v295 = vpack.c.b16 %v270, %v269
  %v296 = vpack.c.b16 %v272, %v271
  %321 = vmatpush.bf16.msra.mxu0 %v280
  %322 = vmatpush.bf16.msra.mxu0 %v279
  %323 = vmatpush.bf16.msra.mxu0 %v278
  %324 = vmatpush.bf16.msra.mxu0 %v277
  %325 = vmatpush.bf16.msra.mxu0 %v276
  %326 = vmatpush.bf16.msra.mxu0 %v275
  %327 = vmatpush.bf16.msra.mxu0 %v274
  %328 = vmatpush.bf16.msra.mxu0 %v273
  %329 = vmatmul.bf16.gmra.mxu0 %v119
  %v330 = vpop.f32.mrf.mxu0
  %v331 = vadd.f32 %v175, %v330
  %v332 = vpop.f32.mrf.mxu0
  %v333 = vadd.f32 %v175, %v332
  %334 = vmatmul.bf16.gmra.mxu0 %v122
  %v335 = vpop.f32.mrf.mxu0
  %v336 = vadd.f32 %v175, %v335
  %v337 = vpop.f32.mrf.mxu0
  %v338 = vadd.f32 %v175, %v337
  %339 = vdwg.mxu0
  %340 = vmatpush.bf16.msra.mxu0 %v288
  %341 = vmatpush.bf16.msra.mxu0 %v287
  %342 = vmatpush.bf16.msra.mxu0 %v286
  %343 = vmatpush.bf16.msra.mxu0 %v285
  %344 = vmatpush.bf16.msra.mxu0 %v284
  %345 = vmatpush.bf16.msra.mxu0 %v283
  %346 = vmatpush.bf16.msra.mxu0 %v282
  %347 = vmatpush.bf16.msra.mxu0 %v281
  %348 = vmatmul.bf16.gmra.mxu0 %v120
  %v349 = vpop.f32.mrf.mxu0
  %v350 = vadd.f32 %v331, %v349
  %v351 = vpop.f32.mrf.mxu0
  %v352 = vadd.f32 %v333, %v351
  %353 = vmatmul.bf16.gmra.mxu0 %v123
  %v354 = vpop.f32.mrf.mxu0
  %v355 = vadd.f32 %v336, %v354
  %v356 = vpop.f32.mrf.mxu0
  %v357 = vadd.f32 %v338, %v356
  %358 = vdwg.mxu0
  %359 = vmatpush.bf16.msra.mxu0 %v296
  %360 = vmatpush.bf16.msra.mxu0 %v295
  %361 = vmatpush.bf16.msra.mxu0 %v294
  %362 = vmatpush.bf16.msra.mxu0 %v293
  %363 = vmatpush.bf16.msra.mxu0 %v292
  %364 = vmatpush.bf16.msra.mxu0 %v291
  %365 = vmatpush.bf16.msra.mxu0 %v290
  %366 = vmatpush.bf16.msra.mxu0 %v289
  %367 = vmatmul.bf16.gmra.mxu0 %v121
  %v368 = vpop.f32.mrf.mxu0
  %v369 = vadd.f32 %v350, %v368
  %v370 = vpop.f32.mrf.mxu0
  %v371 = vadd.f32 %v352, %v370
  %372 = vmatmul.bf16.gmra.mxu0 %v124
  %v373 = vpop.f32.mrf.mxu0
  %v374 = vadd.f32 %v355, %v373
  %v375 = vpop.f32.mrf.mxu0
  %v376 = vadd.f32 %v357, %v375
  %377 = vdwg.mxu0
  %v378 = vld [vmem:[%s5] sm:$0xf]
  %v379 = vld [vmem:[%s5 + $0x4] sm:$0xf]
  %v380 = vld [vmem:[%s5 + $0x8] sm:$0xf]
  %v381 = vld [vmem:[%s5 + $0xc] sm:$0xf]
  %v382 = vunpack.c.l.bf16 %v378
  %v383 = vunpack.c.l.bf16 %v379
  %v384 = vunpack.c.l.bf16 %v380
  %v385 = vunpack.c.l.bf16 %v381
  %v386 = vadd.f32 %v369, %v382
  %v387 = vadd.f32 %v371, %v383
  %v388 = vadd.f32 %v374, %v384
  %v389 = vadd.f32 %v376, %v385
  %v390 = vpack.c.bf16 %v386, %v386
  %v391 = vpack.c.bf16 %v387, %v387
  %v392 = vpack.c.bf16 %v388, %v388
  %v393 = vpack.c.bf16 %v389, %v389
  %394 = vst [vmem:[%s6] sm:$0xf] %v390
  %395 = vst [vmem:[%s6 + $0x4] sm:$0xf] %v391
  %396 = vst [vmem:[%s6 + $0x8] sm:$0xf] %v392
  %397 = vst [vmem:[%s6 + $0xc] sm:$0xf] %v393
  // Predicated region
  $region26: #{encoder_forward.35} parent=0 // pred_check
    _
  $region27: #{encoder_forward.35} parent=0 // pred_check_branch
    %399 = sbr.rel (0) target = $region29
  $region28: #{encoder_forward.35} parent=0 // pred_region
    _
  $region29: #{encoder_forward.35} parent=0 // pred_fallthru
    _
  // Predicated region
  $region30: #{encoder_forward.35} parent=0 // pred_check
    _
  $region31: #{encoder_forward.35} parent=0 // pred_check_branch
    %401 = sbr.rel (0) target = $region33
  $region32: #{encoder_forward.35} parent=0 // pred_region
    _
  $region33: #{encoder_forward.35} parent=0 // pred_fallthru
    _

// kernel: encoder_forward.36
$region0: #{encoder_forward.36}
  #allocation0 [shape = 'u32[]', space=smem, size = 0x4, offset = 0x4, fixed_abs, tag = 'smem constant byte address 0x4 - core index']
  #allocation1 [shape = 'u32[72,128]{1,0:T(1,128)}', space=vmem, size = 0x9000, scoped, tag = 'internal scratch']
  %s0 = inlined_call_operand.vmem [shape: bf16[8,384], index: 0, kind: input, shape index: {}]
  %s1 = inlined_call_operand.vmem [shape: f32[1,384], index: 1, kind: input, shape index: {}]
  %s2 = inlined_call_operand.vmem [shape: f32[1,384], index: 2, kind: input, shape index: {}]
  %s3 = inlined_call_operand.vmem [shape: bf16[384,128], index: 3, kind: input, shape index: {}]
  %s4 = inlined_call_operand.vmem [shape: f32[1,128], index: 4, kind: input, shape index: {}]
  %s5 = inlined_call_operand.vmem [shape: bf16[8,128], index: 5, kind: output, shape index: {}]
  %s6 = sld [smem:[#allocation0]]
  $region30: #{encoder_forward.36} parent=0
    _
  %s8 = ssub.s32 1, %s6
  %s9 = scalar_select 0, %s8, %s6
  // Predicated region
  $region2: #{encoder_forward.36} parent=0 // pred_check
    _
  $region3: #{encoder_forward.36} parent=0 // pred_check_branch
    %11 = sbr.rel (0) target = $region5
  $region4: #{encoder_forward.36} parent=0 // pred_region
    _
  $region5: #{encoder_forward.36} parent=0 // pred_fallthru
    _
  // Predicated region
  $region6: #{encoder_forward.36} parent=0 // pred_check
    _
  $region7: #{encoder_forward.36} parent=0 // pred_check_branch
    %13 = sbr.rel (0) target = $region9
  $region8: #{encoder_forward.36} parent=0 // pred_region
    _
  $region9: #{encoder_forward.36} parent=0 // pred_fallthru
    _
  // Predicated region
  $region10: #{encoder_forward.36} parent=0 // pred_check
    _
  $region11: #{encoder_forward.36} parent=0 // pred_check_branch
    %15 = sbr.rel (0) target = $region13
  $region12: #{encoder_forward.36} parent=0 // pred_region
    _
  $region13: #{encoder_forward.36} parent=0 // pred_fallthru
    _
  // Predicated region
  $region14: #{encoder_forward.36} parent=0 // pred_check
    _
  $region15: #{encoder_forward.36} parent=0 // pred_check_branch
    %17 = sbr.rel (0) target = $region17
  $region16: #{encoder_forward.36} parent=0 // pred_region
    _
  $region17: #{encoder_forward.36} parent=0 // pred_fallthru
    _
  // Predicated region
  $region18: #{encoder_forward.36} parent=0 // pred_check
    _
  $region19: #{encoder_forward.36} parent=0 // pred_check_branch
    %19 = sbr.rel (0) target = $region21
  $region20: #{encoder_forward.36} parent=0 // pred_region
    _
  $region21: #{encoder_forward.36} parent=0 // pred_fallthru
    _
  %v20 = vld [vmem:[%s0] sm:$0xff]
  %v21 = vld [vmem:[%s0 + $0x8] sm:$0xf]
  %v22 = vunpack.c.l.bf16 %v20
  %v23 = vunpack.c.h.bf16 %v20
  %v24 = vunpack.c.l.bf16 %v21
  %v25 = vld [vmem:[%s1] sm:$0x7]
  %v27 = vperm.slane %v25, 0
  %v28 = vperm.slane %v25, 1
  %v29 = vperm.slane %v25, 2
  %v33 = vmul.f32 %v22, %v27
  %v34 = vmul.f32 %v23, %v28
  %v35 = vmul.f32 %v24, %v29
  %v36 = vld [vmem:[%s2] sm:$0x7]
  %v38 = vperm.slane %v36, 0
  %v39 = vperm.slane %v36, 1
  %v40 = vperm.slane %v36, 2
  %v44 = vadd.f32 %v33, %v38
  %v45 = vadd.f32 %v34, %v39
  %v46 = vadd.f32 %v35, %v40
  %vm47 = vcmp.gt.f32.partialorder %v44, 0.0
  %vm48 = vcmp.gt.f32.partialorder %v45, 0.0
  %vm49 = vcmp.gt.f32.partialorder %v46, 0.0
  %v50 = vmul.f32 %v44, 0.01
  %v51 = vmul.f32 %v45, 0.01
  %v52 = vmul.f32 %v46, 0.01
  %v53 = vsel %vm47, %v44, %v50
  %v54 = vsel %vm48, %v45, %v51
  %v55 = vsel %vm49, %v46, %v52
  %v56 = vpack.c.bf16 %v53, %v53
  %v57 = vpack.c.bf16 %v54, %v54
  %v58 = vpack.c.bf16 %v55, %v55
  %v59 = vld [vmem:[%s3] sm:$0xf]
  %v60 = vld [vmem:[%s3 + $0x4] sm:$0xf]
  %v61 = vld [vmem:[%s3 + $0x8] sm:$0xf]
  %v62 = vld [vmem:[%s3 + $0xc] sm:$0xf]
  %v63 = vld [vmem:[%s3 + $0x10] sm:$0xf]
  %v64 = vld [vmem:[%s3 + $0x14] sm:$0xf]
  %v65 = vld [vmem:[%s3 + $0x18] sm:$0xf]
  %v66 = vld [vmem:[%s3 + $0x1c] sm:$0xf]
  %v67 = vld [vmem:[%s3 + $0x20] sm:$0xf]
  %v68 = vld [vmem:[%s3 + $0x24] sm:$0xf]
  %v69 = vld [vmem:[%s3 + $0x28] sm:$0xf]
  %v70 = vld [vmem:[%s3 + $0x2c] sm:$0xf]
  %v71 = vld [vmem:[%s3 + $0x30] sm:$0xf]
  %v72 = vld [vmem:[%s3 + $0x34] sm:$0xf]
  %v73 = vld [vmem:[%s3 + $0x38] sm:$0xf]
  %v74 = vld [vmem:[%s3 + $0x3c] sm:$0xf]
  %v75 = vld [vmem:[%s3 + $0x40] sm:$0xf]
  %v76 = vld [vmem:[%s3 + $0x44] sm:$0xf]
  %v77 = vld [vmem:[%s3 + $0x48] sm:$0xf]
  %v78 = vld [vmem:[%s3 + $0x4c] sm:$0xf]
  %v79 = vld [vmem:[%s3 + $0x50] sm:$0xf]
  %v80 = vld [vmem:[%s3 + $0x54] sm:$0xf]
  %v81 = vld [vmem:[%s3 + $0x58] sm:$0xf]
  %v82 = vld [vmem:[%s3 + $0x5c] sm:$0xf]
  %v83 = vld [vmem:[%s3 + $0x60] sm:$0xf]
  %v84 = vld [vmem:[%s3 + $0x64] sm:$0xf]
  %v85 = vld [vmem:[%s3 + $0x68] sm:$0xf]
  %v86 = vld [vmem:[%s3 + $0x6c] sm:$0xf]
  %v87 = vld [vmem:[%s3 + $0x70] sm:$0xf]
  %v88 = vld [vmem:[%s3 + $0x74] sm:$0xf]
  %v89 = vld [vmem:[%s3 + $0x78] sm:$0xf]
  %v90 = vld [vmem:[%s3 + $0x7c] sm:$0xf]
  %v91 = vld [vmem:[%s3 + $0x80] sm:$0xf]
  %v92 = vld [vmem:[%s3 + $0x84] sm:$0xf]
  %v93 = vld [vmem:[%s3 + $0x88] sm:$0xf]
  %v94 = vld [vmem:[%s3 + $0x8c] sm:$0xf]
  %v95 = vld [vmem:[%s3 + $0x90] sm:$0xf]
  %v96 = vld [vmem:[%s3 + $0x94] sm:$0xf]
  %v97 = vld [vmem:[%s3 + $0x98] sm:$0xf]
  %v98 = vld [vmem:[%s3 + $0x9c] sm:$0xf]
  %v99 = vld [vmem:[%s3 + $0xa0] sm:$0xf]
  %v100 = vld [vmem:[%s3 + $0xa4] sm:$0xf]
  %v101 = vld [vmem:[%s3 + $0xa8] sm:$0xf]
  %v102 = vld [vmem:[%s3 + $0xac] sm:$0xf]
  %v103 = vld [vmem:[%s3 + $0xb0] sm:$0xf]
  %v104 = vld [vmem:[%s3 + $0xb4] sm:$0xf]
  %v105 = vld [vmem:[%s3 + $0xb8] sm:$0xf]
  %v106 = vld [vmem:[%s3 + $0xbc] sm:$0xf]
  %v107 = vld [vmem:[%s4] sm:$0x1]
  %v109 = vperm.slane %v107, 0
  %v159 = vunpack.c.l.b16 %v59
  %v160 = vunpack.c.l.b16 %v60
  %v161 = vunpack.c.l.b16 %v61
  %v162 = vunpack.c.l.b16 %v62
  %v163 = vunpack.c.l.b16 %v63
  %v164 = vunpack.c.l.b16 %v64
  %v165 = vunpack.c.l.b16 %v65
  %v166 = vunpack.c.l.b16 %v66
  %v167 = vunpack.c.l.b16 %v67
  %v168 = vunpack.c.l.b16 %v68
  %v169 = vunpack.c.l.b16 %v69
  %v170 = vunpack.c.l.b16 %v70
  %v171 = vunpack.c.l.b16 %v71
  %v172 = vunpack.c.l.b16 %v72
  %v173 = vunpack.c.l.b16 %v73
  %v174 = vunpack.c.l.b16 %v74
  %v175 = vunpack.c.l.b16 %v75
  %v176 = vunpack.c.l.b16 %v76
  %v177 = vunpack.c.l.b16 %v77
  %v178 = vunpack.c.l.b16 %v78
  %v179 = vunpack.c.l.b16 %v79
  %v180 = vunpack.c.l.b16 %v80
  %v181 = vunpack.c.l.b16 %v81
  %v182 = vunpack.c.l.b16 %v82
  %v183 = vunpack.c.l.b16 %v83
  %v184 = vunpack.c.l.b16 %v84
  %v185 = vunpack.c.l.b16 %v85
  %v186 = vunpack.c.l.b16 %v86
  %v187 = vunpack.c.l.b16 %v87
  %v188 = vunpack.c.l.b16 %v88
  %v189 = vunpack.c.l.b16 %v89
  %v190 = vunpack.c.l.b16 %v90
  %v191 = vunpack.c.l.b16 %v91
  %v192 = vunpack.c.l.b16 %v92
  %v193 = vunpack.c.l.b16 %v93
  %v194 = vunpack.c.l.b16 %v94
  %v195 = vunpack.c.l.b16 %v95
  %v196 = vunpack.c.l.b16 %v96
  %v197 = vunpack.c.l.b16 %v97
  %v198 = vunpack.c.l.b16 %v98
  %v199 = vunpack.c.l.b16 %v99
  %v200 = vunpack.c.l.b16 %v100
  %v201 = vunpack.c.l.b16 %v101
  %v202 = vunpack.c.l.b16 %v102
  %v203 = vunpack.c.l.b16 %v103
  %v204 = vunpack.c.l.b16 %v104
  %v205 = vunpack.c.l.b16 %v105
  %v206 = vunpack.c.l.b16 %v106
  %v207 = vpack.c.b16 %v160, %v159
  %v208 = vpack.c.b16 %v162, %v161
  %v209 = vpack.c.b16 %v164, %v163
  %v210 = vpack.c.b16 %v166, %v165
  %v211 = vpack.c.b16 %v168, %v167
  %v212 = vpack.c.b16 %v170, %v169
  %v213 = vpack.c.b16 %v172, %v171
  %v214 = vpack.c.b16 %v174, %v173
  %v215 = vpack.c.b16 %v176, %v175
  %v216 = vpack.c.b16 %v178, %v177
  %v217 = vpack.c.b16 %v180, %v179
  %v218 = vpack.c.b16 %v182, %v181
  %v219 = vpack.c.b16 %v184, %v183
  %v220 = vpack.c.b16 %v186, %v185
  %v221 = vpack.c.b16 %v188, %v187
  %v222 = vpack.c.b16 %v190, %v189
  %v223 = vpack.c.b16 %v192, %v191
  %v224 = vpack.c.b16 %v194, %v193
  %v225 = vpack.c.b16 %v196, %v195
  %v226 = vpack.c.b16 %v198, %v197
  %v227 = vpack.c.b16 %v200, %v199
  %v228 = vpack.c.b16 %v202, %v201
  %v229 = vpack.c.b16 %v204, %v203
  %v230 = vpack.c.b16 %v206, %v205
  %255 = vmatpush.bf16.msra.mxu0 %v214
  %256 = vmatpush.bf16.msra.mxu0 %v213
  %257 = vmatpush.bf16.msra.mxu0 %v212
  %258 = vmatpush.bf16.msra.mxu0 %v211
  %259 = vmatpush.bf16.msra.mxu0 %v210
  %260 = vmatpush.bf16.msra.mxu0 %v209
  %261 = vmatpush.bf16.msra.mxu0 %v208
  %262 = vmatpush.bf16.msra.mxu0 %v207
  %263 = vmatmul.bf16.gmra.mxu0 %v56
  %v264 = vpop.f32.mrf.mxu0
  %v265 = vadd.f32 %v109, %v264
  %v266 = vpop.f32.mrf.mxu0
  %267 = vdwg.mxu0
  %268 = vmatpush.bf16.msra.mxu0 %v222
  %269 = vmatpush.bf16.msra.mxu0 %v221
  %270 = vmatpush.bf16.msra.mxu0 %v220
  %271 = vmatpush.bf16.msra.mxu0 %v219
  %272 = vmatpush.bf16.msra.mxu0 %v218
  %273 = vmatpush.bf16.msra.mxu0 %v217
  %274 = vmatpush.bf16.msra.mxu0 %v216
  %275 = vmatpush.bf16.msra.mxu0 %v215
  %276 = vmatmul.bf16.gmra.mxu0 %v57
  %v277 = vpop.f32.mrf.mxu0
  %v278 = vadd.f32 %v265, %v277
  %v279 = vpop.f32.mrf.mxu0
  %280 = vdwg.mxu0
  %281 = vmatpush.bf16.msra.mxu0 %v230
  %282 = vmatpush.bf16.msra.mxu0 %v229
  %283 = vmatpush.bf16.msra.mxu0 %v228
  %284 = vmatpush.bf16.msra.mxu0 %v227
  %285 = vmatpush.bf16.msra.mxu0 %v226
  %286 = vmatpush.bf16.msra.mxu0 %v225
  %287 = vmatpush.bf16.msra.mxu0 %v224
  %288 = vmatpush.bf16.msra.mxu0 %v223
  %289 = vmatmul.bf16.gmra.mxu0 %v58
  %v290 = vpop.f32.mrf.mxu0
  %v291 = vadd.f32 %v278, %v290
  %v292 = vpop.f32.mrf.mxu0
  %293 = vdwg.mxu0
  %v294 = vpack.c.bf16 %v291, %v291
  %295 = vst [vmem:[%s5] sm:$0xf] %v294
  // Predicated region
  $region22: #{encoder_forward.36} parent=0 // pred_check
    _
  $region23: #{encoder_forward.36} parent=0 // pred_check_branch
    %297 = sbr.rel (0) target = $region25
  $region24: #{encoder_forward.36} parent=0 // pred_region
    _
  $region25: #{encoder_forward.36} parent=0 // pred_fallthru
    _
  // Predicated region
  $region26: #{encoder_forward.36} parent=0 // pred_check
    _
  $region27: #{encoder_forward.36} parent=0 // pred_check_branch
    %299 = sbr.rel (0) target = $region29
  $region28: #{encoder_forward.36} parent=0 // pred_region
    _
  $region29: #{encoder_forward.36} parent=0 // pred_fallthru
    _

// kernel: encoder_forward.39
$region0: #{encoder_forward.39}
  #allocation0 [shape = 'u32[]', space=smem, size = 0x4, offset = 0x4, fixed_abs, tag = 'smem constant byte address 0x4 - core index']
  #allocation1 [shape = 'u32[72,128]{1,0:T(1,128)}', space=vmem, size = 0x9000, scoped, tag = 'internal scratch']
  %s0 = inlined_call_operand.vmem [shape: bf16[8,640], index: 0, kind: input, shape index: {}]
  %s1 = inlined_call_operand.vmem [shape: f32[1,640], index: 1, kind: input, shape index: {}]
  %s2 = inlined_call_operand.vmem [shape: f32[1,640], index: 2, kind: input, shape index: {}]
  %s3 = inlined_call_operand.vmem [shape: bf16[640,128], index: 3, kind: input, shape index: {}]
  %s4 = inlined_call_operand.vmem [shape: f32[1,128], index: 4, kind: input, shape index: {}]
  %s5 = inlined_call_operand.vmem [shape: bf16[8,128], index: 5, kind: input, shape index: {}]
  %s6 = inlined_call_operand.vmem [shape: bf16[8,128], index: 6, kind: output, shape index: {}]
  %s7 = sld [smem:[#allocation0]]
  $region34: #{encoder_forward.39} parent=0
    _
  %s9 = ssub.s32 1, %s7
  %s10 = scalar_select 0, %s9, %s7
  // Predicated region
  $region2: #{encoder_forward.39} parent=0 // pred_check
    _
  $region3: #{encoder_forward.39} parent=0 // pred_check_branch
    %12 = sbr.rel (0) target = $region5
  $region4: #{encoder_forward.39} parent=0 // pred_region
    _
  $region5: #{encoder_forward.39} parent=0 // pred_fallthru
    _
  // Predicated region
  $region6: #{encoder_forward.39} parent=0 // pred_check
    _
  $region7: #{encoder_forward.39} parent=0 // pred_check_branch
    %14 = sbr.rel (0) target = $region9
  $region8: #{encoder_forward.39} parent=0 // pred_region
    _
  $region9: #{encoder_forward.39} parent=0 // pred_fallthru
    _
  // Predicated region
  $region10: #{encoder_forward.39} parent=0 // pred_check
    _
  $region11: #{encoder_forward.39} parent=0 // pred_check_branch
    %16 = sbr.rel (0) target = $region13
  $region12: #{encoder_forward.39} parent=0 // pred_region
    _
  $region13: #{encoder_forward.39} parent=0 // pred_fallthru
    _
  // Predicated region
  $region14: #{encoder_forward.39} parent=0 // pred_check
    _
  $region15: #{encoder_forward.39} parent=0 // pred_check_branch
    %18 = sbr.rel (0) target = $region17
  $region16: #{encoder_forward.39} parent=0 // pred_region
    _
  $region17: #{encoder_forward.39} parent=0 // pred_fallthru
    _
  // Predicated region
  $region18: #{encoder_forward.39} parent=0 // pred_check
    _
  $region19: #{encoder_forward.39} parent=0 // pred_check_branch
    %20 = sbr.rel (0) target = $region21
  $region20: #{encoder_forward.39} parent=0 // pred_region
    _
  $region21: #{encoder_forward.39} parent=0 // pred_fallthru
    _
  // Predicated region
  $region22: #{encoder_forward.39} parent=0 // pred_check
    _
  $region23: #{encoder_forward.39} parent=0 // pred_check_branch
    %22 = sbr.rel (0) target = $region25
  $region24: #{encoder_forward.39} parent=0 // pred_region
    _
  $region25: #{encoder_forward.39} parent=0 // pred_fallthru
    _
  %v23 = vld [vmem:[%s0] sm:$0xff]
  %v24 = vld [vmem:[%s0 + $0x8] sm:$0xff]
  %v25 = vld [vmem:[%s0 + $0x10] sm:$0xf]
  %v26 = vunpack.c.l.bf16 %v23
  %v27 = vunpack.c.h.bf16 %v23
  %v28 = vunpack.c.l.bf16 %v24
  %v29 = vunpack.c.h.bf16 %v24
  %v30 = vunpack.c.l.bf16 %v25
  %v31 = vld [vmem:[%s1] sm:$0x1f]
  %v33 = vperm.slane %v31, 0
  %v34 = vperm.slane %v31, 1
  %v35 = vperm.slane %v31, 2
  %v36 = vperm.slane %v31, 3
  %v37 = vperm.slane %v31, 4
  %v43 = vmul.f32 %v26, %v33
  %v44 = vmul.f32 %v27, %v34
  %v45 = vmul.f32 %v28, %v35
  %v46 = vmul.f32 %v29, %v36
  %v47 = vmul.f32 %v30, %v37
  %v48 = vld [vmem:[%s2] sm:$0x1f]
  %v50 = vperm.slane %v48, 0
  %v51 = vperm.slane %v48, 1
  %v52 = vperm.slane %v48, 2
  %v53 = vperm.slane %v48, 3
  %v54 = vperm.slane %v48, 4
  %v60 = vadd.f32 %v43, %v50
  %v61 = vadd.f32 %v44, %v51
  %v62 = vadd.f32 %v45, %v52
  %v63 = vadd.f32 %v46, %v53
  %v64 = vadd.f32 %v47, %v54
  %vm65 = vcmp.gt.f32.partialorder %v60, 0.0
  %vm66 = vcmp.gt.f32.partialorder %v61, 0.0
  %vm67 = vcmp.gt.f32.partialorder %v62, 0.0
  %vm68 = vcmp.gt.f32.partialorder %v63, 0.0
  %vm69 = vcmp.gt.f32.partialorder %v64, 0.0
  %v70 = vmul.f32 %v60, 0.01
  %v71 = vmul.f32 %v61, 0.01
  %v72 = vmul.f32 %v62, 0.01
  %v73 = vmul.f32 %v63, 0.01
  %v74 = vmul.f32 %v64, 0.01
  %v75 = vsel %vm65, %v60, %v70
  %v76 = vsel %vm66, %v61, %v71
  %v77 = vsel %vm67, %v62, %v72
  %v78 = vsel %vm68, %v63, %v73
  %v79 = vsel %vm69, %v64, %v74
  %v80 = vpack.c.bf16 %v75, %v75
  %v81 = vpack.c.bf16 %v76, %v76
  %v82 = vpack.c.bf16 %v77, %v77
  %v83 = vpack.c.bf16 %v78, %v78
  %v84 = vpack.c.bf16 %v79, %v79
  %v85 = vld [vmem:[%s3] sm:$0xf]
  %v86 = vld [vmem:[%s3 + $0x4] sm:$0xf]
  %v87 = vld [vmem:[%s3 + $0x8] sm:$0xf]
  %v88 = vld [vmem:[%s3 + $0xc] sm:$0xf]
  %v89 = vld [vmem:[%s3 + $0x10] sm:$0xf]
  %v90 = vld [vmem:[%s3 + $0x14] sm:$0xf]
  %v91 = vld [vmem:[%s3 + $0x18] sm:$0xf]
  %v92 = vld [vmem:[%s3 + $0x1c] sm:$0xf]
  %v93 = vld [vmem:[%s3 + $0x20] sm:$0xf]
  %v94 = vld [vmem:[%s3 + $0x24] sm:$0xf]
  %v95 = vld [vmem:[%s3 + $0x28] sm:$0xf]
  %v96 = vld [vmem:[%s3 + $0x2c] sm:$0xf]
  %v97 = vld [vmem:[%s3 + $0x30] sm:$0xf]
  %v98 = vld [vmem:[%s3 + $0x34] sm:$0xf]
  %v99 = vld [vmem:[%s3 + $0x38] sm:$0xf]
  %v100 = vld [vmem:[%s3 + $0x3c] sm:$0xf]
  %v101 = vld [vmem:[%s3 + $0x40] sm:$0xf]
  %v102 = vld [vmem:[%s3 + $0x44] sm:$0xf]
  %v103 = vld [vmem:[%s3 + $0x48] sm:$0xf]
  %v104 = vld [vmem:[%s3 + $0x4c] sm:$0xf]
  %v105 = vld [vmem:[%s3 + $0x50] sm:$0xf]
  %v106 = vld [vmem:[%s3 + $0x54] sm:$0xf]
  %v107 = vld [vmem:[%s3 + $0x58] sm:$0xf]
  %v108 = vld [vmem:[%s3 + $0x5c] sm:$0xf]
  %v109 = vld [vmem:[%s3 + $0x60] sm:$0xf]
  %v110 = vld [vmem:[%s3 + $0x64] sm:$0xf]
  %v111 = vld [vmem:[%s3 + $0x68] sm:$0xf]
  %v112 = vld [vmem:[%s3 + $0x6c] sm:$0xf]
  %v113 = vld [vmem:[%s3 + $0x70] sm:$0xf]
  %v114 = vld [vmem:[%s3 + $0x74] sm:$0xf]
  %v115 = vld [vmem:[%s3 + $0x78] sm:$0xf]
  %v116 = vld [vmem:[%s3 + $0x7c] sm:$0xf]
  %v117 = vld [vmem:[%s3 + $0x80] sm:$0xf]
  %v118 = vld [vmem:[%s3 + $0x84] sm:$0xf]
  %v119 = vld [vmem:[%s3 + $0x88] sm:$0xf]
  %v120 = vld [vmem:[%s3 + $0x8c] sm:$0xf]
  %v121 = vld [vmem:[%s3 + $0x90] sm:$0xf]
  %v122 = vld [vmem:[%s3 + $0x94] sm:$0xf]
  %v123 = vld [vmem:[%s3 + $0x98] sm:$0xf]
  %v124 = vld [vmem:[%s3 + $0x9c] sm:$0xf]
  %v125 = vld [vmem:[%s3 + $0xa0] sm:$0xf]
  %v126 = vld [vmem:[%s3 + $0xa4] sm:$0xf]
  %v127 = vld [vmem:[%s3 + $0xa8] sm:$0xf]
  %v128 = vld [vmem:[%s3 + $0xac] sm:$0xf]
  %v129 = vld [vmem:[%s3 + $0xb0] sm:$0xf]
  %v130 = vld [vmem:[%s3 + $0xb4] sm:$0xf]
  %v131 = vld [vmem:[%s3 + $0xb8] sm:$0xf]
  %v132 = vld [vmem:[%s3 + $0xbc] sm:$0xf]
  %v133 = vld [vmem:[%s3 + $0xc0] sm:$0xf]
  %v134 = vld [vmem:[%s3 + $0xc4] sm:$0xf]
  %v135 = vld [vmem:[%s3 + $0xc8] sm:$0xf]
  %v136 = vld [vmem:[%s3 + $0xcc] sm:$0xf]
  %v137 = vld [vmem:[%s3 + $0xd0] sm:$0xf]
  %v138 = vld [vmem:[%s3 + $0xd4] sm:$0xf]
  %v139 = vld [vmem:[%s3 + $0xd8] sm:$0xf]
  %v140 = vld [vmem:[%s3 + $0xdc] sm:$0xf]
  %v141 = vld [vmem:[%s3 + $0xe0] sm:$0xf]
  %v142 = vld [vmem:[%s3 + $0xe4] sm:$0xf]
  %v143 = vld [vmem:[%s3 + $0xe8] sm:$0xf]
  %v144 = vld [vmem:[%s3 + $0xec] sm:$0xf]
  %v145 = vld [vmem:[%s3 + $0xf0] sm:$0xf]
  %v146 = vld [vmem:[%s3 + $0xf4] sm:$0xf]
  %v147 = vld [vmem:[%s3 + $0xf8] sm:$0xf]
  %v148 = vld [vmem:[%s3 + $0xfc] sm:$0xf]
  %v149 = vld [vmem:[%s3 + $0x100] sm:$0xf]
  %v150 = vld [vmem:[%s3 + $0x104] sm:$0xf]
  %v151 = vld [vmem:[%s3 + $0x108] sm:$0xf]
  %v152 = vld [vmem:[%s3 + $0x10c] sm:$0xf]
  %v153 = vld [vmem:[%s3 + $0x110] sm:$0xf]
  %v154 = vld [vmem:[%s3 + $0x114] sm:$0xf]
  %v155 = vld [vmem:[%s3 + $0x118] sm:$0xf]
  %v156 = vld [vmem:[%s3 + $0x11c] sm:$0xf]
  %v157 = vld [vmem:[%s3 + $0x120] sm:$0xf]
  %v158 = vld [vmem:[%s3 + $0x124] sm:$0xf]
  %v159 = vld [vmem:[%s3 + $0x128] sm:$0xf]
  %v160 = vld [vmem:[%s3 + $0x12c] sm:$0xf]
  %v161 = vld [vmem:[%s3 + $0x130] sm:$0xf]
  %v162 = vld [vmem:[%s3 + $0x134] sm:$0xf]
  %v163 = vld [vmem:[%s3 + $0x138] sm:$0xf]
  %v164 = vld [vmem:[%s3 + $0x13c] sm:$0xf]
  %v165 = vld [vmem:[%s4] sm:$0x1]
  %v167 = vperm.slane %v165, 0
  %v249 = vunpack.c.l.b16 %v85
  %v250 = vunpack.c.l.b16 %v86
  %v251 = vunpack.c.l.b16 %v87
  %v252 = vunpack.c.l.b16 %v88
  %v253 = vunpack.c.l.b16 %v89
  %v254 = vunpack.c.l.b16 %v90
  %v255 = vunpack.c.l.b16 %v91
  %v256 = vunpack.c.l.b16 %v92
  %v257 = vunpack.c.l.b16 %v93
  %v258 = vunpack.c.l.b16 %v94
  %v259 = vunpack.c.l.b16 %v95
  %v260 = vunpack.c.l.b16 %v96
  %v261 = vunpack.c.l.b16 %v97
  %v262 = vunpack.c.l.b16 %v98
  %v263 = vunpack.c.l.b16 %v99
  %v264 = vunpack.c.l.b16 %v100
  %v265 = vunpack.c.l.b16 %v101
  %v266 = vunpack.c.l.b16 %v102
  %v267 = vunpack.c.l.b16 %v103
  %v268 = vunpack.c.l.b16 %v104
  %v269 = vunpack.c.l.b16 %v105
  %v270 = vunpack.c.l.b16 %v106
  %v271 = vunpack.c.l.b16 %v107
  %v272 = vunpack.c.l.b16 %v108
  %v273 = vunpack.c.l.b16 %v109
  %v274 = vunpack.c.l.b16 %v110
  %v275 = vunpack.c.l.b16 %v111
  %v276 = vunpack.c.l.b16 %v112
  %v277 = vunpack.c.l.b16 %v113
  %v278 = vunpack.c.l.b16 %v114
  %v279 = vunpack.c.l.b16 %v115
  %v280 = vunpack.c.l.b16 %v116
  %v281 = vunpack.c.l.b16 %v117
  %v282 = vunpack.c.l.b16 %v118
  %v283 = vunpack.c.l.b16 %v119
  %v284 = vunpack.c.l.b16 %v120
  %v285 = vunpack.c.l.b16 %v121
  %v286 = vunpack.c.l.b16 %v122
  %v287 = vunpack.c.l.b16 %v123
  %v288 = vunpack.c.l.b16 %v124
  %v289 = vunpack.c.l.b16 %v125
  %v290 = vunpack.c.l.b16 %v126
  %v291 = vunpack.c.l.b16 %v127
  %v292 = vunpack.c.l.b16 %v128
  %v293 = vunpack.c.l.b16 %v129
  %v294 = vunpack.c.l.b16 %v130
  %v295 = vunpack.c.l.b16 %v131
  %v296 = vunpack.c.l.b16 %v132
  %v297 = vunpack.c.l.b16 %v133
  %v298 = vunpack.c.l.b16 %v134
  %v299 = vunpack.c.l.b16 %v135
  %v300 = vunpack.c.l.b16 %v136
  %v301 = vunpack.c.l.b16 %v137
  %v302 = vunpack.c.l.b16 %v138
  %v303 = vunpack.c.l.b16 %v139
  %v304 = vunpack.c.l.b16 %v140
  %v305 = vunpack.c.l.b16 %v141
  %v306 = vunpack.c.l.b16 %v142
  %v307 = vunpack.c.l.b16 %v143
  %v308 = vunpack.c.l.b16 %v144
  %v309 = vunpack.c.l.b16 %v145
  %v310 = vunpack.c.l.b16 %v146
  %v311 = vunpack.c.l.b16 %v147
  %v312 = vunpack.c.l.b16 %v148
  %v313 = vunpack.c.l.b16 %v149
  %v314 = vunpack.c.l.b16 %v150
  %v315 = vunpack.c.l.b16 %v151
  %v316 = vunpack.c.l.b16 %v152
  %v317 = vunpack.c.l.b16 %v153
  %v318 = vunpack.c.l.b16 %v154
  %v319 = vunpack.c.l.b16 %v155
  %v320 = vunpack.c.l.b16 %v156
  %v321 = vunpack.c.l.b16 %v157
  %v322 = vunpack.c.l.b16 %v158
  %v323 = vunpack.c.l.b16 %v159
  %v324 = vunpack.c.l.b16 %v160
  %v325 = vunpack.c.l.b16 %v161
  %v326 = vunpack.c.l.b16 %v162
  %v327 = vunpack.c.l.b16 %v163
  %v328 = vunpack.c.l.b16 %v164
  %v329 = vpack.c.b16 %v250, %v249
  %v330 = vpack.c.b16 %v252, %v251
  %v331 = vpack.c.b16 %v254, %v253
  %v332 = vpack.c.b16 %v256, %v255
  %v333 = vpack.c.b16 %v258, %v257
  %v334 = vpack.c.b16 %v260, %v259
  %v335 = vpack.c.b16 %v262, %v261
  %v336 = vpack.c.b16 %v264, %v263
  %v337 = vpack.c.b16 %v266, %v265
  %v338 = vpack.c.b16 %v268, %v267
  %v339 = vpack.c.b16 %v270, %v269
  %v340 = vpack.c.b16 %v272, %v271
  %v341 = vpack.c.b16 %v274, %v273
  %v342 = vpack.c.b16 %v276, %v275
  %v343 = vpack.c.b16 %v278, %v277
  %v344 = vpack.c.b16 %v280, %v279
  %v345 = vpack.c.b16 %v282, %v281
  %v346 = vpack.c.b16 %v284, %v283
  %v347 = vpack.c.b16 %v286, %v285
  %v348 = vpack.c.b16 %v288, %v287
  %v349 = vpack.c.b16 %v290, %v289
  %v350 = vpack.c.b16 %v292, %v291
  %v351 = vpack.c.b16 %v294, %v293
  %v352 = vpack.c.b16 %v296, %v295
  %v353 = vpack.c.b16 %v298, %v297
  %v354 = vpack.c.b16 %v300, %v299
  %v355 = vpack.c.b16 %v302, %v301
  %v356 = vpack.c.b16 %v304, %v303
  %v357 = vpack.c.b16 %v306, %v305
  %v358 = vpack.c.b16 %v308, %v307
  %v359 = vpack.c.b16 %v310, %v309
  %v360 = vpack.c.b16 %v312, %v311
  %v361 = vpack.c.b16 %v314, %v313
  %v362 = vpack.c.b16 %v316, %v315
  %v363 = vpack.c.b16 %v318, %v317
  %v364 = vpack.c.b16 %v320, %v319
  %v365 = vpack.c.b16 %v322, %v321
  %v366 = vpack.c.b16 %v324, %v323
  %v367 = vpack.c.b16 %v326, %v325
  %v368 = vpack.c.b16 %v328, %v327
  %409 = vmatpush.bf16.msra.mxu0 %v336
  %410 = vmatpush.bf16.msra.mxu0 %v335
  %411 = vmatpush.bf16.msra.mxu0 %v334
  %412 = vmatpush.bf16.msra.mxu0 %v333
  %413 = vmatpush.bf16.msra.mxu0 %v332
  %414 = vmatpush.bf16.msra.mxu0 %v331
  %415 = vmatpush.bf16.msra.mxu0 %v330
  %416 = vmatpush.bf16.msra.mxu0 %v329
  %417 = vmatmul.bf16.gmra.mxu0 %v80
  %v418 = vpop.f32.mrf.mxu0
  %v419 = vadd.f32 %v167, %v418
  %v420 = vpop.f32.mrf.mxu0
  %421 = vdwg.mxu0
  %422 = vmatpush.bf16.msra.mxu0 %v344
  %423 = vmatpush.bf16.msra.mxu0 %v343
  %424 = vmatpush.bf16.msra.mxu0 %v342
  %425 = vmatpush.bf16.msra.mxu0 %v341
  %426 = vmatpush.bf16.msra.mxu0 %v340
  %427 = vmatpush.bf16.msra.mxu0 %v339
  %428 = vmatpush.bf16.msra.mxu0 %v338
  %429 = vmatpush.bf16.msra.mxu0 %v337
  %430 = vmatmul.bf16.gmra.mxu0 %v81
  %v431 = vpop.f32.mrf.mxu0
  %v432 = vadd.f32 %v419, %v431
  %v433 = vpop.f32.mrf.mxu0
  %434 = vdwg.mxu0
  %435 = vmatpush.bf16.msra.mxu0 %v352
  %436 = vmatpush.bf16.msra.mxu0 %v351
  %437 = vmatpush.bf16.msra.mxu0 %v350
  %438 = vmatpush.bf16.msra.mxu0 %v349
  %439 = vmatpush.bf16.msra.mxu0 %v348
  %440 = vmatpush.bf16.msra.mxu0 %v347
  %441 = vmatpush.bf16.msra.mxu0 %v346
  %442 = vmatpush.bf16.msra.mxu0 %v345
  %443 = vmatmul.bf16.gmra.mxu0 %v82
  %v444 = vpop.f32.mrf.mxu0
  %v445 = vadd.f32 %v432, %v444
  %v446 = vpop.f32.mrf.mxu0
  %447 = vdwg.mxu0
  %448 = vmatpush.bf16.msra.mxu0 %v360
  %449 = vmatpush.bf16.msra.mxu0 %v359
  %450 = vmatpush.bf16.msra.mxu0 %v358
  %451 = vmatpush.bf16.msra.mxu0 %v357
  %452 = vmatpush.bf16.msra.mxu0 %v356
  %453 = vmatpush.bf16.msra.mxu0 %v355
  %454 = vmatpush.bf16.msra.mxu0 %v354
  %455 = vmatpush.bf16.msra.mxu0 %v353
  %456 = vmatmul.bf16.gmra.mxu0 %v83
  %v457 = vpop.f32.mrf.mxu0
  %v458 = vadd.f32 %v445, %v457
  %v459 = vpop.f32.mrf.mxu0
  %460 = vdwg.mxu0
  %461 = vmatpush.bf16.msra.mxu0 %v368
  %462 = vmatpush.bf16.msra.mxu0 %v367
  %463 = vmatpush.bf16.msra.mxu0 %v366
  %464 = vmatpush.bf16.msra.mxu0 %v365
  %465 = vmatpush.bf16.msra.mxu0 %v364
  %466 = vmatpush.bf16.msra.mxu0 %v363
  %467 = vmatpush.bf16.msra.mxu0 %v362
  %468 = vmatpush.bf16.msra.mxu0 %v361
  %469 = vmatmul.bf16.gmra.mxu0 %v84
  %v470 = vpop.f32.mrf.mxu0
  %v471 = vadd.f32 %v458, %v470
  %v472 = vpop.f32.mrf.mxu0
  %473 = vdwg.mxu0
  %v474 = vld [vmem:[%s5] sm:$0xf]
  %v475 = vunpack.c.l.bf16 %v474
  %v476 = vadd.f32 %v471, %v475
  %v477 = vpack.c.bf16 %v476, %v476
  %478 = vst [vmem:[%s6] sm:$0xf] %v477
  // Predicated region
  $region26: #{encoder_forward.39} parent=0 // pred_check
    _
  $region27: #{encoder_forward.39} parent=0 // pred_check_branch
    %480 = sbr.rel (0) target = $region29
  $region28: #{encoder_forward.39} parent=0 // pred_region
    _
  $region29: #{encoder_forward.39} parent=0 // pred_fallthru
    _
  // Predicated region
  $region30: #{encoder_forward.39} parent=0 // pred_check
    _
  $region31: #{encoder_forward.39} parent=0 // pred_check_branch
    %482 = sbr.rel (0) target = $region33
  $region32: #{encoder_forward.39} parent=0 // pred_region
    _
  $region33: #{encoder_forward.39} parent=0 // pred_fallthru
    _

// kernel: encoder_forward.37
$region0: #{encoder_forward.37}
  #allocation0 [shape = 'u32[]', space=smem, size = 0x4, offset = 0x4, fixed_abs, tag = 'smem constant byte address 0x4 - core index']
  #allocation1 [shape = 'u32[72,128]{1,0:T(1,128)}', space=vmem, size = 0x9000, scoped, tag = 'internal scratch']
  %s0 = inlined_call_operand.vmem [shape: bf16[8,640], index: 0, kind: input, shape index: {}]
  %s1 = inlined_call_operand.vmem [shape: f32[1,640], index: 1, kind: input, shape index: {}]
  %s2 = inlined_call_operand.vmem [shape: f32[1,640], index: 2, kind: input, shape index: {}]
  %s3 = inlined_call_operand.vmem [shape: bf16[640,128], index: 3, kind: input, shape index: {}]
  %s4 = inlined_call_operand.vmem [shape: f32[1,128], index: 4, kind: input, shape index: {}]
  %s5 = inlined_call_operand.vmem [shape: bf16[8,128], index: 5, kind: output, shape index: {}]
  %s6 = sld [smem:[#allocation0]]
  $region30: #{encoder_forward.37} parent=0
    _
  %s8 = ssub.s32 1, %s6
  %s9 = scalar_select 0, %s8, %s6
  // Predicated region
  $region2: #{encoder_forward.37} parent=0 // pred_check
    _
  $region3: #{encoder_forward.37} parent=0 // pred_check_branch
    %11 = sbr.rel (0) target = $region5
  $region4: #{encoder_forward.37} parent=0 // pred_region
    _
  $region5: #{encoder_forward.37} parent=0 // pred_fallthru
    _
  // Predicated region
  $region6: #{encoder_forward.37} parent=0 // pred_check
    _
  $region7: #{encoder_forward.37} parent=0 // pred_check_branch
    %13 = sbr.rel (0) target = $region9
  $region8: #{encoder_forward.37} parent=0 // pred_region
    _
  $region9: #{encoder_forward.37} parent=0 // pred_fallthru
    _
  // Predicated region
  $region10: #{encoder_forward.37} parent=0 // pred_check
    _
  $region11: #{encoder_forward.37} parent=0 // pred_check_branch
    %15 = sbr.rel (0) target = $region13
  $region12: #{encoder_forward.37} parent=0 // pred_region
    _
  $region13: #{encoder_forward.37} parent=0 // pred_fallthru
    _
  // Predicated region
  $region14: #{encoder_forward.37} parent=0 // pred_check
    _
  $region15: #{encoder_forward.37} parent=0 // pred_check_branch
    %17 = sbr.rel (0) target = $region17
  $region16: #{encoder_forward.37} parent=0 // pred_region
    _
  $region17: #{encoder_forward.37} parent=0 // pred_fallthru
    _
  // Predicated region
  $region18: #{encoder_forward.37} parent=0 // pred_check
    _
  $region19: #{encoder_forward.37} parent=0 // pred_check_branch
    %19 = sbr.rel (0) target = $region21
  $region20: #{encoder_forward.37} parent=0 // pred_region
    _
  $region21: #{encoder_forward.37} parent=0 // pred_fallthru
    _
  %v20 = vld [vmem:[%s0] sm:$0xff]
  %v21 = vld [vmem:[%s0 + $0x8] sm:$0xff]
  %v22 = vld [vmem:[%s0 + $0x10] sm:$0xf]
  %v23 = vunpack.c.l.bf16 %v20
  %v24 = vunpack.c.h.bf16 %v20
  %v25 = vunpack.c.l.bf16 %v21
  %v26 = vunpack.c.h.bf16 %v21
  %v27 = vunpack.c.l.bf16 %v22
  %v28 = vld [vmem:[%s1] sm:$0x1f]
  %v30 = vperm.slane %v28, 0
  %v31 = vperm.slane %v28, 1
  %v32 = vperm.slane %v28, 2
  %v33 = vperm.slane %v28, 3
  %v34 = vperm.slane %v28, 4
  %v40 = vmul.f32 %v23, %v30
  %v41 = vmul.f32 %v24, %v31
  %v42 = vmul.f32 %v25, %v32
  %v43 = vmul.f32 %v26, %v33
  %v44 = vmul.f32 %v27, %v34
  %v45 = vld [vmem:[%s2] sm:$0x1f]
  %v47 = vperm.slane %v45, 0
  %v48 = vperm.slane %v45, 1
  %v49 = vperm.slane %v45, 2
  %v50 = vperm.slane %v45, 3
  %v51 = vperm.slane %v45, 4
  %v57 = vadd.f32 %v40, %v47
  %v58 = vadd.f32 %v41, %v48
  %v59 = vadd.f32 %v42, %v49
  %v60 = vadd.f32 %v43, %v50
  %v61 = vadd.f32 %v44, %v51
  %vm62 = vcmp.gt.f32.partialorder %v57, 0.0
  %vm63 = vcmp.gt.f32.partialorder %v58, 0.0
  %vm64 = vcmp.gt.f32.partialorder %v59, 0.0
  %vm65 = vcmp.gt.f32.partialorder %v60, 0.0
  %vm66 = vcmp.gt.f32.partialorder %v61, 0.0
  %v67 = vmul.f32 %v57, 0.01
  %v68 = vmul.f32 %v58, 0.01
  %v69 = vmul.f32 %v59, 0.01
  %v70 = vmul.f32 %v60, 0.01
  %v71 = vmul.f32 %v61, 0.01
  %v72 = vsel %vm62, %v57, %v67
  %v73 = vsel %vm63, %v58, %v68
  %v74 = vsel %vm64, %v59, %v69
  %v75 = vsel %vm65, %v60, %v70
  %v76 = vsel %vm66, %v61, %v71
  %v77 = vpack.c.bf16 %v72, %v72
  %v78 = vpack.c.bf16 %v73, %v73
  %v79 = vpack.c.bf16 %v74, %v74
  %v80 = vpack.c.bf16 %v75, %v75
  %v81 = vpack.c.bf16 %v76, %v76
  %v82 = vld [vmem:[%s3] sm:$0xf]
  %v83 = vld [vmem:[%s3 + $0x4] sm:$0xf]
  %v84 = vld [vmem:[%s3 + $0x8] sm:$0xf]
  %v85 = vld [vmem:[%s3 + $0xc] sm:$0xf]
  %v86 = vld [vmem:[%s3 + $0x10] sm:$0xf]
  %v87 = vld [vmem:[%s3 + $0x14] sm:$0xf]
  %v88 = vld [vmem:[%s3 + $0x18] sm:$0xf]
  %v89 = vld [vmem:[%s3 + $0x1c] sm:$0xf]
  %v90 = vld [vmem:[%s3 + $0x20] sm:$0xf]
  %v91 = vld [vmem:[%s3 + $0x24] sm:$0xf]
  %v92 = vld [vmem:[%s3 + $0x28] sm:$0xf]
  %v93 = vld [vmem:[%s3 + $0x2c] sm:$0xf]
  %v94 = vld [vmem:[%s3 + $0x30] sm:$0xf]
  %v95 = vld [vmem:[%s3 + $0x34] sm:$0xf]
  %v96 = vld [vmem:[%s3 + $0x38] sm:$0xf]
  %v97 = vld [vmem:[%s3 + $0x3c] sm:$0xf]
  %v98 = vld [vmem:[%s3 + $0x40] sm:$0xf]
  %v99 = vld [vmem:[%s3 + $0x44] sm:$0xf]
  %v100 = vld [vmem:[%s3 + $0x48] sm:$0xf]
  %v101 = vld [vmem:[%s3 + $0x4c] sm:$0xf]
  %v102 = vld [vmem:[%s3 + $0x50] sm:$0xf]
  %v103 = vld [vmem:[%s3 + $0x54] sm:$0xf]
  %v104 = vld [vmem:[%s3 + $0x58] sm:$0xf]
  %v105 = vld [vmem:[%s3 + $0x5c] sm:$0xf]
  %v106 = vld [vmem:[%s3 + $0x60] sm:$0xf]
  %v107 = vld [vmem:[%s3 + $0x64] sm:$0xf]
  %v108 = vld [vmem:[%s3 + $0x68] sm:$0xf]
  %v109 = vld [vmem:[%s3 + $0x6c] sm:$0xf]
  %v110 = vld [vmem:[%s3 + $0x70] sm:$0xf]
  %v111 = vld [vmem:[%s3 + $0x74] sm:$0xf]
  %v112 = vld [vmem:[%s3 + $0x78] sm:$0xf]
  %v113 = vld [vmem:[%s3 + $0x7c] sm:$0xf]
  %v114 = vld [vmem:[%s3 + $0x80] sm:$0xf]
  %v115 = vld [vmem:[%s3 + $0x84] sm:$0xf]
  %v116 = vld [vmem:[%s3 + $0x88] sm:$0xf]
  %v117 = vld [vmem:[%s3 + $0x8c] sm:$0xf]
  %v118 = vld [vmem:[%s3 + $0x90] sm:$0xf]
  %v119 = vld [vmem:[%s3 + $0x94] sm:$0xf]
  %v120 = vld [vmem:[%s3 + $0x98] sm:$0xf]
  %v121 = vld [vmem:[%s3 + $0x9c] sm:$0xf]
  %v122 = vld [vmem:[%s3 + $0xa0] sm:$0xf]
  %v123 = vld [vmem:[%s3 + $0xa4] sm:$0xf]
  %v124 = vld [vmem:[%s3 + $0xa8] sm:$0xf]
  %v125 = vld [vmem:[%s3 + $0xac] sm:$0xf]
  %v126 = vld [vmem:[%s3 + $0xb0] sm:$0xf]
  %v127 = vld [vmem:[%s3 + $0xb4] sm:$0xf]
  %v128 = vld [vmem:[%s3 + $0xb8] sm:$0xf]
  %v129 = vld [vmem:[%s3 + $0xbc] sm:$0xf]
  %v130 = vld [vmem:[%s3 + $0xc0] sm:$0xf]
  %v131 = vld [vmem:[%s3 + $0xc4] sm:$0xf]
  %v132 = vld [vmem:[%s3 + $0xc8] sm:$0xf]
  %v133 = vld [vmem:[%s3 + $0xcc] sm:$0xf]
  %v134 = vld [vmem:[%s3 + $0xd0] sm:$0xf]
  %v135 = vld [vmem:[%s3 + $0xd4] sm:$0xf]
  %v136 = vld [vmem:[%s3 + $0xd8] sm:$0xf]
  %v137 = vld [vmem:[%s3 + $0xdc] sm:$0xf]
  %v138 = vld [vmem:[%s3 + $0xe0] sm:$0xf]
  %v139 = vld [vmem:[%s3 + $0xe4] sm:$0xf]
  %v140 = vld [vmem:[%s3 + $0xe8] sm:$0xf]
  %v141 = vld [vmem:[%s3 + $0xec] sm:$0xf]
  %v142 = vld [vmem:[%s3 + $0xf0] sm:$0xf]
  %v143 = vld [vmem:[%s3 + $0xf4] sm:$0xf]
  %v144 = vld [vmem:[%s3 + $0xf8] sm:$0xf]
  %v145 = vld [vmem:[%s3 + $0xfc] sm:$0xf]
  %v146 = vld [vmem:[%s3 + $0x100] sm:$0xf]
  %v147 = vld [vmem:[%s3 + $0x104] sm:$0xf]
  %v148 = vld [vmem:[%s3 + $0x108] sm:$0xf]
  %v149 = vld [vmem:[%s3 + $0x10c] sm:$0xf]
  %v150 = vld [vmem:[%s3 + $0x110] sm:$0xf]
  %v151 = vld [vmem:[%s3 + $0x114] sm:$0xf]
  %v152 = vld [vmem:[%s3 + $0x118] sm:$0xf]
  %v153 = vld [vmem:[%s3 + $0x11c] sm:$0xf]
  %v154 = vld [vmem:[%s3 + $0x120] sm:$0xf]
  %v155 = vld [vmem:[%s3 + $0x124] sm:$0xf]
  %v156 = vld [vmem:[%s3 + $0x128] sm:$0xf]
  %v157 = vld [vmem:[%s3 + $0x12c] sm:$0xf]
  %v158 = vld [vmem:[%s3 + $0x130] sm:$0xf]
  %v159 = vld [vmem:[%s3 + $0x134] sm:$0xf]
  %v160 = vld [vmem:[%s3 + $0x138] sm:$0xf]
  %v161 = vld [vmem:[%s3 + $0x13c] sm:$0xf]
  %v162 = vld [vmem:[%s4] sm:$0x1]
  %v164 = vperm.slane %v162, 0
  %v246 = vunpack.c.l.b16 %v82
  %v247 = vunpack.c.l.b16 %v83
  %v248 = vunpack.c.l.b16 %v84
  %v249 = vunpack.c.l.b16 %v85
  %v250 = vunpack.c.l.b16 %v86
  %v251 = vunpack.c.l.b16 %v87
  %v252 = vunpack.c.l.b16 %v88
  %v253 = vunpack.c.l.b16 %v89
  %v254 = vunpack.c.l.b16 %v90
  %v255 = vunpack.c.l.b16 %v91
  %v256 = vunpack.c.l.b16 %v92
  %v257 = vunpack.c.l.b16 %v93
  %v258 = vunpack.c.l.b16 %v94
  %v259 = vunpack.c.l.b16 %v95
  %v260 = vunpack.c.l.b16 %v96
  %v261 = vunpack.c.l.b16 %v97
  %v262 = vunpack.c.l.b16 %v98
  %v263 = vunpack.c.l.b16 %v99
  %v264 = vunpack.c.l.b16 %v100
  %v265 = vunpack.c.l.b16 %v101
  %v266 = vunpack.c.l.b16 %v102
  %v267 = vunpack.c.l.b16 %v103
  %v268 = vunpack.c.l.b16 %v104
  %v269 = vunpack.c.l.b16 %v105
  %v270 = vunpack.c.l.b16 %v106
  %v271 = vunpack.c.l.b16 %v107
  %v272 = vunpack.c.l.b16 %v108
  %v273 = vunpack.c.l.b16 %v109
  %v274 = vunpack.c.l.b16 %v110
  %v275 = vunpack.c.l.b16 %v111
  %v276 = vunpack.c.l.b16 %v112
  %v277 = vunpack.c.l.b16 %v113
  %v278 = vunpack.c.l.b16 %v114
  %v279 = vunpack.c.l.b16 %v115
  %v280 = vunpack.c.l.b16 %v116
  %v281 = vunpack.c.l.b16 %v117
  %v282 = vunpack.c.l.b16 %v118
  %v283 = vunpack.c.l.b16 %v119
  %v284 = vunpack.c.l.b16 %v120
  %v285 = vunpack.c.l.b16 %v121
  %v286 = vunpack.c.l.b16 %v122
  %v287 = vunpack.c.l.b16 %v123
  %v288 = vunpack.c.l.b16 %v124
  %v289 = vunpack.c.l.b16 %v125
  %v290 = vunpack.c.l.b16 %v126
  %v291 = vunpack.c.l.b16 %v127
  %v292 = vunpack.c.l.b16 %v128
  %v293 = vunpack.c.l.b16 %v129
  %v294 = vunpack.c.l.b16 %v130
  %v295 = vunpack.c.l.b16 %v131
  %v296 = vunpack.c.l.b16 %v132
  %v297 = vunpack.c.l.b16 %v133
  %v298 = vunpack.c.l.b16 %v134
  %v299 = vunpack.c.l.b16 %v135
  %v300 = vunpack.c.l.b16 %v136
  %v301 = vunpack.c.l.b16 %v137
  %v302 = vunpack.c.l.b16 %v138
  %v303 = vunpack.c.l.b16 %v139
  %v304 = vunpack.c.l.b16 %v140
  %v305 = vunpack.c.l.b16 %v141
  %v306 = vunpack.c.l.b16 %v142
  %v307 = vunpack.c.l.b16 %v143
  %v308 = vunpack.c.l.b16 %v144
  %v309 = vunpack.c.l.b16 %v145
  %v310 = vunpack.c.l.b16 %v146
  %v311 = vunpack.c.l.b16 %v147
  %v312 = vunpack.c.l.b16 %v148
  %v313 = vunpack.c.l.b16 %v149
  %v314 = vunpack.c.l.b16 %v150
  %v315 = vunpack.c.l.b16 %v151
  %v316 = vunpack.c.l.b16 %v152
  %v317 = vunpack.c.l.b16 %v153
  %v318 = vunpack.c.l.b16 %v154
  %v319 = vunpack.c.l.b16 %v155
  %v320 = vunpack.c.l.b16 %v156
  %v321 = vunpack.c.l.b16 %v157
  %v322 = vunpack.c.l.b16 %v158
  %v323 = vunpack.c.l.b16 %v159
  %v324 = vunpack.c.l.b16 %v160
  %v325 = vunpack.c.l.b16 %v161
  %v326 = vpack.c.b16 %v247, %v246
  %v327 = vpack.c.b16 %v249, %v248
  %v328 = vpack.c.b16 %v251, %v250
  %v329 = vpack.c.b16 %v253, %v252
  %v330 = vpack.c.b16 %v255, %v254
  %v331 = vpack.c.b16 %v257, %v256
  %v332 = vpack.c.b16 %v259, %v258
  %v333 = vpack.c.b16 %v261, %v260
  %v334 = vpack.c.b16 %v263, %v262
  %v335 = vpack.c.b16 %v265, %v264
  %v336 = vpack.c.b16 %v267, %v266
  %v337 = vpack.c.b16 %v269, %v268
  %v338 = vpack.c.b16 %v271, %v270
  %v339 = vpack.c.b16 %v273, %v272
  %v340 = vpack.c.b16 %v275, %v274
  %v341 = vpack.c.b16 %v277, %v276
  %v342 = vpack.c.b16 %v279, %v278
  %v343 = vpack.c.b16 %v281, %v280
  %v344 = vpack.c.b16 %v283, %v282
  %v345 = vpack.c.b16 %v285, %v284
  %v346 = vpack.c.b16 %v287, %v286
  %v347 = vpack.c.b16 %v289, %v288
  %v348 = vpack.c.b16 %v291, %v290
  %v349 = vpack.c.b16 %v293, %v292
  %v350 = vpack.c.b16 %v295, %v294
  %v351 = vpack.c.b16 %v297, %v296
  %v352 = vpack.c.b16 %v299, %v298
  %v353 = vpack.c.b16 %v301, %v300
  %v354 = vpack.c.b16 %v303, %v302
  %v355 = vpack.c.b16 %v305, %v304
  %v356 = vpack.c.b16 %v307, %v306
  %v357 = vpack.c.b16 %v309, %v308
  %v358 = vpack.c.b16 %v311, %v310
  %v359 = vpack.c.b16 %v313, %v312
  %v360 = vpack.c.b16 %v315, %v314
  %v361 = vpack.c.b16 %v317, %v316
  %v362 = vpack.c.b16 %v319, %v318
  %v363 = vpack.c.b16 %v321, %v320
  %v364 = vpack.c.b16 %v323, %v322
  %v365 = vpack.c.b16 %v325, %v324
  %406 = vmatpush.bf16.msra.mxu0 %v333
  %407 = vmatpush.bf16.msra.mxu0 %v332
  %408 = vmatpush.bf16.msra.mxu0 %v331
  %409 = vmatpush.bf16.msra.mxu0 %v330
  %410 = vmatpush.bf16.msra.mxu0 %v329
  %411 = vmatpush.bf16.msra.mxu0 %v328
  %412 = vmatpush.bf16.msra.mxu0 %v327
  %413 = vmatpush.bf16.msra.mxu0 %v326
  %414 = vmatmul.bf16.gmra.mxu0 %v77
  %v415 = vpop.f32.mrf.mxu0
  %v416 = vadd.f32 %v164, %v415
  %v417 = vpop.f32.mrf.mxu0
  %418 = vdwg.mxu0
  %419 = vmatpush.bf16.msra.mxu0 %v341
  %420 = vmatpush.bf16.msra.mxu0 %v340
  %421 = vmatpush.bf16.msra.mxu0 %v339
  %422 = vmatpush.bf16.msra.mxu0 %v338
  %423 = vmatpush.bf16.msra.mxu0 %v337
  %424 = vmatpush.bf16.msra.mxu0 %v336
  %425 = vmatpush.bf16.msra.mxu0 %v335
  %426 = vmatpush.bf16.msra.mxu0 %v334
  %427 = vmatmul.bf16.gmra.mxu0 %v78
  %v428 = vpop.f32.mrf.mxu0
  %v429 = vadd.f32 %v416, %v428
  %v430 = vpop.f32.mrf.mxu0
  %431 = vdwg.mxu0
  %432 = vmatpush.bf16.msra.mxu0 %v349
  %433 = vmatpush.bf16.msra.mxu0 %v348
  %434 = vmatpush.bf16.msra.mxu0 %v347
  %435 = vmatpush.bf16.msra.mxu0 %v346
  %436 = vmatpush.bf16.msra.mxu0 %v345
  %437 = vmatpush.bf16.msra.mxu0 %v344
  %438 = vmatpush.bf16.msra.mxu0 %v343
  %439 = vmatpush.bf16.msra.mxu0 %v342
  %440 = vmatmul.bf16.gmra.mxu0 %v79
  %v441 = vpop.f32.mrf.mxu0
  %v442 = vadd.f32 %v429, %v441
  %v443 = vpop.f32.mrf.mxu0
  %444 = vdwg.mxu0
  %445 = vmatpush.bf16.msra.mxu0 %v357
  %446 = vmatpush.bf16.msra.mxu0 %v356
  %447 = vmatpush.bf16.msra.mxu0 %v355
  %448 = vmatpush.bf16.msra.mxu0 %v354
  %449 = vmatpush.bf16.msra.mxu0 %v353
  %450 = vmatpush.bf16.msra.mxu0 %v352
  %451 = vmatpush.bf16.msra.mxu0 %v351
  %452 = vmatpush.bf16.msra.mxu0 %v350
  %453 = vmatmul.bf16.gmra.mxu0 %v80
  %v454 = vpop.f32.mrf.mxu0
  %v455 = vadd.f32 %v442, %v454
  %v456 = vpop.f32.mrf.mxu0
  %457 = vdwg.mxu0
  %458 = vmatpush.bf16.msra.mxu0 %v365
  %459 = vmatpush.bf16.msra.mxu0 %v364
  %460 = vmatpush.bf16.msra.mxu0 %v363
  %461 = vmatpush.bf16.msra.mxu0 %v362
  %462 = vmatpush.bf16.msra.mxu0 %v361
  %463 = vmatpush.bf16.msra.mxu0 %v360
  %464 = vmatpush.bf16.msra.mxu0 %v359
  %465 = vmatpush.bf16.msra.mxu0 %v358
  %466 = vmatmul.bf16.gmra.mxu0 %v81
  %v467 = vpop.f32.mrf.mxu0
  %v468 = vadd.f32 %v455, %v467
  %v469 = vpop.f32.mrf.mxu0
  %470 = vdwg.mxu0
  %v471 = vpack.c.bf16 %v468, %v468
  %472 = vst [vmem:[%s5] sm:$0xf] %v471
  // Predicated region
  $region22: #{encoder_forward.37} parent=0 // pred_check
    _
  $region23: #{encoder_forward.37} parent=0 // pred_check_branch
    %474 = sbr.rel (0) target = $region25
  $region24: #{encoder_forward.37} parent=0 // pred_region
    _
  $region25: #{encoder_forward.37} parent=0 // pred_fallthru
    _
  // Predicated region
  $region26: #{encoder_forward.37} parent=0 // pred_check
    _
  $region27: #{encoder_forward.37} parent=0 // pred_check_branch
    %476 = sbr.rel (0) target = $region29
  $region28: #{encoder_forward.37} parent=0 // pred_region
    _
  $region29: #{encoder_forward.37} parent=0 // pred_fallthru
    _

// kernel: encoder_forward.40
$region0: #{encoder_forward.40}
  #allocation0 [shape = 'u32[]', space=smem, size = 0x4, offset = 0x4, fixed_abs, tag = 'smem constant byte address 0x4 - core index']
  #allocation1 [shape = 'u32[72,128]{1,0:T(1,128)}', space=vmem, size = 0x9000, scoped, tag = 'internal scratch']
  %s0 = inlined_call_operand.vmem [shape: bf16[32,640], index: 0, kind: input, shape index: {}]
  %s1 = inlined_call_operand.vmem [shape: f32[1,640], index: 1, kind: input, shape index: {}]
  %s2 = inlined_call_operand.vmem [shape: f32[1,640], index: 2, kind: input, shape index: {}]
  %s3 = inlined_call_operand.vmem [shape: bf16[640,128], index: 3, kind: input, shape index: {}]
  %s4 = inlined_call_operand.vmem [shape: f32[1,128], index: 4, kind: input, shape index: {}]
  %s5 = inlined_call_operand.vmem [shape: bf16[32,128], index: 5, kind: output, shape index: {}]
  %s6 = sld [smem:[#allocation0]]
  $region30: #{encoder_forward.40} parent=0
    _
  %s8 = ssub.s32 1, %s6
  %s9 = scalar_select 0, %s8, %s6
  // Predicated region
  $region2: #{encoder_forward.40} parent=0 // pred_check
    _
  $region3: #{encoder_forward.40} parent=0 // pred_check_branch
    %11 = sbr.rel (0) target = $region5
  $region4: #{encoder_forward.40} parent=0 // pred_region
    _
  $region5: #{encoder_forward.40} parent=0 // pred_fallthru
    _
  // Predicated region
  $region6: #{encoder_forward.40} parent=0 // pred_check
    _
  $region7: #{encoder_forward.40} parent=0 // pred_check_branch
    %13 = sbr.rel (0) target = $region9
  $region8: #{encoder_forward.40} parent=0 // pred_region
    _
  $region9: #{encoder_forward.40} parent=0 // pred_fallthru
    _
  // Predicated region
  $region10: #{encoder_forward.40} parent=0 // pred_check
    _
  $region11: #{encoder_forward.40} parent=0 // pred_check_branch
    %15 = sbr.rel (0) target = $region13
  $region12: #{encoder_forward.40} parent=0 // pred_region
    _
  $region13: #{encoder_forward.40} parent=0 // pred_fallthru
    _
  // Predicated region
  $region14: #{encoder_forward.40} parent=0 // pred_check
    _
  $region15: #{encoder_forward.40} parent=0 // pred_check_branch
    %17 = sbr.rel (0) target = $region17
  $region16: #{encoder_forward.40} parent=0 // pred_region
    _
  $region17: #{encoder_forward.40} parent=0 // pred_fallthru
    _
  // Predicated region
  $region18: #{encoder_forward.40} parent=0 // pred_check
    _
  $region19: #{encoder_forward.40} parent=0 // pred_check_branch
    %19 = sbr.rel (0) target = $region21
  $region20: #{encoder_forward.40} parent=0 // pred_region
    _
  $region21: #{encoder_forward.40} parent=0 // pred_fallthru
    _
  %v20 = vld [vmem:[%s0] sm:$0xff]
  %v21 = vld [vmem:[%s0 + $0x8] sm:$0xff]
  %v22 = vld [vmem:[%s0 + $0x10] sm:$0xf]
  %v23 = vld [vmem:[%s0 + $0x14] sm:$0xff]
  %v24 = vld [vmem:[%s0 + $0x1c] sm:$0xff]
  %v25 = vld [vmem:[%s0 + $0x24] sm:$0xf]
  %v26 = vld [vmem:[%s0 + $0x28] sm:$0xff]
  %v27 = vld [vmem:[%s0 + $0x30] sm:$0xff]
  %v28 = vld [vmem:[%s0 + $0x38] sm:$0xf]
  %v29 = vld [vmem:[%s0 + $0x3c] sm:$0xff]
  %v30 = vld [vmem:[%s0 + $0x44] sm:$0xff]
  %v31 = vld [vmem:[%s0 + $0x4c] sm:$0xf]
  %v32 = vunpack.c.l.bf16 %v20
  %v33 = vunpack.c.h.bf16 %v20
  %v34 = vunpack.c.l.bf16 %v21
  %v35 = vunpack.c.h.bf16 %v21
  %v36 = vunpack.c.l.bf16 %v22
  %v37 = vunpack.c.l.bf16 %v23
  %v38 = vunpack.c.h.bf16 %v23
  %v39 = vunpack.c.l.bf16 %v24
  %v40 = vunpack.c.h.bf16 %v24
  %v41 = vunpack.c.l.bf16 %v25
  %v42 = vunpack.c.l.bf16 %v26
  %v43 = vunpack.c.h.bf16 %v26
  %v44 = vunpack.c.l.bf16 %v27
  %v45 = vunpack.c.h.bf16 %v27
  %v46 = vunpack.c.l.bf16 %v28
  %v47 = vunpack.c.l.bf16 %v29
  %v48 = vunpack.c.h.bf16 %v29
  %v49 = vunpack.c.l.bf16 %v30
  %v50 = vunpack.c.h.bf16 %v30
  %v51 = vunpack.c.l.bf16 %v31
  %v52 = vld [vmem:[%s1] sm:$0x1f]
  %v54 = vperm.slane %v52, 0
  %v55 = vperm.slane %v52, 1
  %v56 = vperm.slane %v52, 2
  %v57 = vperm.slane %v52, 3
  %v58 = vperm.slane %v52, 4
  %v64 = vmul.f32 %v32, %v54
  %v65 = vmul.f32 %v33, %v55
  %v66 = vmul.f32 %v34, %v56
  %v67 = vmul.f32 %v35, %v57
  %v68 = vmul.f32 %v36, %v58
  %v69 = vmul.f32 %v37, %v54
  %v70 = vmul.f32 %v38, %v55
  %v71 = vmul.f32 %v39, %v56
  %v72 = vmul.f32 %v40, %v57
  %v73 = vmul.f32 %v41, %v58
  %v74 = vmul.f32 %v42, %v54
  %v75 = vmul.f32 %v43, %v55
  %v76 = vmul.f32 %v44, %v56
  %v77 = vmul.f32 %v45, %v57
  %v78 = vmul.f32 %v46, %v58
  %v79 = vmul.f32 %v47, %v54
  %v80 = vmul.f32 %v48, %v55
  %v81 = vmul.f32 %v49, %v56
  %v82 = vmul.f32 %v50, %v57
  %v83 = vmul.f32 %v51, %v58
  %v84 = vld [vmem:[%s2] sm:$0x1f]
  %v86 = vperm.slane %v84, 0
  %v87 = vperm.slane %v84, 1
  %v88 = vperm.slane %v84, 2
  %v89 = vperm.slane %v84, 3
  %v90 = vperm.slane %v84, 4
  %v96 = vadd.f32 %v64, %v86
  %v97 = vadd.f32 %v65, %v87
  %v98 = vadd.f32 %v66, %v88
  %v99 = vadd.f32 %v67, %v89
  %v100 = vadd.f32 %v68, %v90
  %v101 = vadd.f32 %v69, %v86
  %v102 = vadd.f32 %v70, %v87
  %v103 = vadd.f32 %v71, %v88
  %v104 = vadd.f32 %v72, %v89
  %v105 = vadd.f32 %v73, %v90
  %v106 = vadd.f32 %v74, %v86
  %v107 = vadd.f32 %v75, %v87
  %v108 = vadd.f32 %v76, %v88
  %v109 = vadd.f32 %v77, %v89
  %v110 = vadd.f32 %v78, %v90
  %v111 = vadd.f32 %v79, %v86
  %v112 = vadd.f32 %v80, %v87
  %v113 = vadd.f32 %v81, %v88
  %v114 = vadd.f32 %v82, %v89
  %v115 = vadd.f32 %v83, %v90
  %vm116 = vcmp.gt.f32.partialorder %v96, 0.0
  %vm117 = vcmp.gt.f32.partialorder %v97, 0.0
  %vm118 = vcmp.gt.f32.partialorder %v98, 0.0
  %vm119 = vcmp.gt.f32.partialorder %v99, 0.0
  %vm120 = vcmp.gt.f32.partialorder %v100, 0.0
  %vm121 = vcmp.gt.f32.partialorder %v101, 0.0
  %vm122 = vcmp.gt.f32.partialorder %v102, 0.0
  %vm123 = vcmp.gt.f32.partialorder %v103, 0.0
  %vm124 = vcmp.gt.f32.partialorder %v104, 0.0
  %vm125 = vcmp.gt.f32.partialorder %v105, 0.0
  %vm126 = vcmp.gt.f32.partialorder %v106, 0.0
  %vm127 = vcmp.gt.f32.partialorder %v107, 0.0
  %vm128 = vcmp.gt.f32.partialorder %v108, 0.0
  %vm129 = vcmp.gt.f32.partialorder %v109, 0.0
  %vm130 = vcmp.gt.f32.partialorder %v110, 0.0
  %vm131 = vcmp.gt.f32.partialorder %v111, 0.0
  %vm132 = vcmp.gt.f32.partialorder %v112, 0.0
  %vm133 = vcmp.gt.f32.partialorder %v113, 0.0
  %vm134 = vcmp.gt.f32.partialorder %v114, 0.0
  %vm135 = vcmp.gt.f32.partialorder %v115, 0.0
  %v136 = vmul.f32 %v96, 0.01
  %v137 = vmul.f32 %v97, 0.01
  %v138 = vmul.f32 %v98, 0.01
  %v139 = vmul.f32 %v99, 0.01
  %v140 = vmul.f32 %v100, 0.01
  %v141 = vmul.f32 %v101, 0.01
  %v142 = vmul.f32 %v102, 0.01
  %v143 = vmul.f32 %v103, 0.01
  %v144 = vmul.f32 %v104, 0.01
  %v145 = vmul.f32 %v105, 0.01
  %v146 = vmul.f32 %v106, 0.01
  %v147 = vmul.f32 %v107, 0.01
  %v148 = vmul.f32 %v108, 0.01
  %v149 = vmul.f32 %v109, 0.01
  %v150 = vmul.f32 %v110, 0.01
  %v151 = vmul.f32 %v111, 0.01
  %v152 = vmul.f32 %v112, 0.01
  %v153 = vmul.f32 %v113, 0.01
  %v154 = vmul.f32 %v114, 0.01
  %v155 = vmul.f32 %v115, 0.01
  %v156 = vsel %vm116, %v96, %v136
  %v157 = vsel %vm117, %v97, %v137
  %v158 = vsel %vm118, %v98, %v138
  %v159 = vsel %vm119, %v99, %v139
  %v160 = vsel %vm120, %v100, %v140
  %v161 = vsel %vm121, %v101, %v141
  %v162 = vsel %vm122, %v102, %v142
  %v163 = vsel %vm123, %v103, %v143
  %v164 = vsel %vm124, %v104, %v144
  %v165 = vsel %vm125, %v105, %v145
  %v166 = vsel %vm126, %v106, %v146
  %v167 = vsel %vm127, %v107, %v147
  %v168 = vsel %vm128, %v108, %v148
  %v169 = vsel %vm129, %v109, %v149
  %v170 = vsel %vm130, %v110, %v150
  %v171 = vsel %vm131, %v111, %v151
  %v172 = vsel %vm132, %v112, %v152
  %v173 = vsel %vm133, %v113, %v153
  %v174 = vsel %vm134, %v114, %v154
  %v175 = vsel %vm135, %v115, %v155
  %v176 = vpack.c.bf16 %v161, %v156
  %v177 = vpack.c.bf16 %v162, %v157
  %v178 = vpack.c.bf16 %v163, %v158
  %v179 = vpack.c.bf16 %v164, %v159
  %v180 = vpack.c.bf16 %v165, %v160
  %v181 = vpack.c.bf16 %v171, %v166
  %v182 = vpack.c.bf16 %v172, %v167
  %v183 = vpack.c.bf16 %v173, %v168
  %v184 = vpack.c.bf16 %v174, %v169
  %v185 = vpack.c.bf16 %v175, %v170
  %v186 = vld [vmem:[%s3] sm:$0xf]
  %v187 = vld [vmem:[%s3 + $0x4] sm:$0xf]
  %v188 = vld [vmem:[%s3 + $0x8] sm:$0xf]
  %v189 = vld [vmem:[%s3 + $0xc] sm:$0xf]
  %v190 = vld [vmem:[%s3 + $0x10] sm:$0xf]
  %v191 = vld [vmem:[%s3 + $0x14] sm:$0xf]
  %v192 = vld [vmem:[%s3 + $0x18] sm:$0xf]
  %v193 = vld [vmem:[%s3 + $0x1c] sm:$0xf]
  %v194 = vld [vmem:[%s3 + $0x20] sm:$0xf]
  %v195 = vld [vmem:[%s3 + $0x24] sm:$0xf]
  %v196 = vld [vmem:[%s3 + $0x28] sm:$0xf]
  %v197 = vld [vmem:[%s3 + $0x2c] sm:$0xf]
  %v198 = vld [vmem:[%s3 + $0x30] sm:$0xf]
  %v199 = vld [vmem:[%s3 + $0x34] sm:$0xf]
  %v200 = vld [vmem:[%s3 + $0x38] sm:$0xf]
  %v201 = vld [vmem:[%s3 + $0x3c] sm:$0xf]
  %v202 = vld [vmem:[%s3 + $0x40] sm:$0xf]
  %v203 = vld [vmem:[%s3 + $0x44] sm:$0xf]
  %v204 = vld [vmem:[%s3 + $0x48] sm:$0xf]
  %v205 = vld [vmem:[%s3 + $0x4c] sm:$0xf]
  %v206 = vld [vmem:[%s3 + $0x50] sm:$0xf]
  %v207 = vld [vmem:[%s3 + $0x54] sm:$0xf]
  %v208 = vld [vmem:[%s3 + $0x58] sm:$0xf]
  %v209 = vld [vmem:[%s3 + $0x5c] sm:$0xf]
  %v210 = vld [vmem:[%s3 + $0x60] sm:$0xf]
  %v211 = vld [vmem:[%s3 + $0x64] sm:$0xf]
  %v212 = vld [vmem:[%s3 + $0x68] sm:$0xf]
  %v213 = vld [vmem:[%s3 + $0x6c] sm:$0xf]
  %v214 = vld [vmem:[%s3 + $0x70] sm:$0xf]
  %v215 = vld [vmem:[%s3 + $0x74] sm:$0xf]
  %v216 = vld [vmem:[%s3 + $0x78] sm:$0xf]
  %v217 = vld [vmem:[%s3 + $0x7c] sm:$0xf]
  %v218 = vld [vmem:[%s3 + $0x80] sm:$0xf]
  %v219 = vld [vmem:[%s3 + $0x84] sm:$0xf]
  %v220 = vld [vmem:[%s3 + $0x88] sm:$0xf]
  %v221 = vld [vmem:[%s3 + $0x8c] sm:$0xf]
  %v222 = vld [vmem:[%s3 + $0x90] sm:$0xf]
  %v223 = vld [vmem:[%s3 + $0x94] sm:$0xf]
  %v224 = vld [vmem:[%s3 + $0x98] sm:$0xf]
  %v225 = vld [vmem:[%s3 + $0x9c] sm:$0xf]
  %v226 = vld [vmem:[%s3 + $0xa0] sm:$0xf]
  %v227 = vld [vmem:[%s3 + $0xa4] sm:$0xf]
  %v228 = vld [vmem:[%s3 + $0xa8] sm:$0xf]
  %v229 = vld [vmem:[%s3 + $0xac] sm:$0xf]
  %v230 = vld [vmem:[%s3 + $0xb0] sm:$0xf]
  %v231 = vld [vmem:[%s3 + $0xb4] sm:$0xf]
  %v232 = vld [vmem:[%s3 + $0xb8] sm:$0xf]
  %v233 = vld [vmem:[%s3 + $0xbc] sm:$0xf]
  %v234 = vld [vmem:[%s3 + $0xc0] sm:$0xf]
  %v235 = vld [vmem:[%s3 + $0xc4] sm:$0xf]
  %v236 = vld [vmem:[%s3 + $0xc8] sm:$0xf]
  %v237 = vld [vmem:[%s3 + $0xcc] sm:$0xf]
  %v238 = vld [vmem:[%s3 + $0xd0] sm:$0xf]
  %v239 = vld [vmem:[%s3 + $0xd4] sm:$0xf]
  %v240 = vld [vmem:[%s3 + $0xd8] sm:$0xf]
  %v241 = vld [vmem:[%s3 + $0xdc] sm:$0xf]
  %v242 = vld [vmem:[%s3 + $0xe0] sm:$0xf]
  %v243 = vld [vmem:[%s3 + $0xe4] sm:$0xf]
  %v244 = vld [vmem:[%s3 + $0xe8] sm:$0xf]
  %v245 = vld [vmem:[%s3 + $0xec] sm:$0xf]
  %v246 = vld [vmem:[%s3 + $0xf0] sm:$0xf]
  %v247 = vld [vmem:[%s3 + $0xf4] sm:$0xf]
  %v248 = vld [vmem:[%s3 + $0xf8] sm:$0xf]
  %v249 = vld [vmem:[%s3 + $0xfc] sm:$0xf]
  %v250 = vld [vmem:[%s3 + $0x100] sm:$0xf]
  %v251 = vld [vmem:[%s3 + $0x104] sm:$0xf]
  %v252 = vld [vmem:[%s3 + $0x108] sm:$0xf]
  %v253 = vld [vmem:[%s3 + $0x10c] sm:$0xf]
  %v254 = vld [vmem:[%s3 + $0x110] sm:$0xf]
  %v255 = vld [vmem:[%s3 + $0x114] sm:$0xf]
  %v256 = vld [vmem:[%s3 + $0x118] sm:$0xf]
  %v257 = vld [vmem:[%s3 + $0x11c] sm:$0xf]
  %v258 = vld [vmem:[%s3 + $0x120] sm:$0xf]
  %v259 = vld [vmem:[%s3 + $0x124] sm:$0xf]
  %v260 = vld [vmem:[%s3 + $0x128] sm:$0xf]
  %v261 = vld [vmem:[%s3 + $0x12c] sm:$0xf]
  %v262 = vld [vmem:[%s3 + $0x130] sm:$0xf]
  %v263 = vld [vmem:[%s3 + $0x134] sm:$0xf]
  %v264 = vld [vmem:[%s3 + $0x138] sm:$0xf]
  %v265 = vld [vmem:[%s3 + $0x13c] sm:$0xf]
  %v266 = vld [vmem:[%s4] sm:$0x1]
  %v268 = vperm.slane %v266, 0
  %v350 = vunpack.c.l.b16 %v186
  %v351 = vunpack.c.l.b16 %v187
  %v352 = vunpack.c.l.b16 %v188
  %v353 = vunpack.c.l.b16 %v189
  %v354 = vunpack.c.l.b16 %v190
  %v355 = vunpack.c.l.b16 %v191
  %v356 = vunpack.c.l.b16 %v192
  %v357 = vunpack.c.l.b16 %v193
  %v358 = vunpack.c.l.b16 %v194
  %v359 = vunpack.c.l.b16 %v195
  %v360 = vunpack.c.l.b16 %v196
  %v361 = vunpack.c.l.b16 %v197
  %v362 = vunpack.c.l.b16 %v198
  %v363 = vunpack.c.l.b16 %v199
  %v364 = vunpack.c.l.b16 %v200
  %v365 = vunpack.c.l.b16 %v201
  %v366 = vunpack.c.l.b16 %v202
  %v367 = vunpack.c.l.b16 %v203
  %v368 = vunpack.c.l.b16 %v204
  %v369 = vunpack.c.l.b16 %v205
  %v370 = vunpack.c.l.b16 %v206
  %v371 = vunpack.c.l.b16 %v207
  %v372 = vunpack.c.l.b16 %v208
  %v373 = vunpack.c.l.b16 %v209
  %v374 = vunpack.c.l.b16 %v210
  %v375 = vunpack.c.l.b16 %v211
  %v376 = vunpack.c.l.b16 %v212
  %v377 = vunpack.c.l.b16 %v213
  %v378 = vunpack.c.l.b16 %v214
  %v379 = vunpack.c.l.b16 %v215
  %v380 = vunpack.c.l.b16 %v216
  %v381 = vunpack.c.l.b16 %v217
  %v382 = vunpack.c.l.b16 %v218
  %v383 = vunpack.c.l.b16 %v219
  %v384 = vunpack.c.l.b16 %v220
  %v385 = vunpack.c.l.b16 %v221
  %v386 = vunpack.c.l.b16 %v222
  %v387 = vunpack.c.l.b16 %v223
  %v388 = vunpack.c.l.b16 %v224
  %v389 = vunpack.c.l.b16 %v225
  %v390 = vunpack.c.l.b16 %v226
  %v391 = vunpack.c.l.b16 %v227
  %v392 = vunpack.c.l.b16 %v228
  %v393 = vunpack.c.l.b16 %v229
  %v394 = vunpack.c.l.b16 %v230
  %v395 = vunpack.c.l.b16 %v231
  %v396 = vunpack.c.l.b16 %v232
  %v397 = vunpack.c.l.b16 %v233
  %v398 = vunpack.c.l.b16 %v234
  %v399 = vunpack.c.l.b16 %v235
  %v400 = vunpack.c.l.b16 %v236
  %v401 = vunpack.c.l.b16 %v237
  %v402 = vunpack.c.l.b16 %v238
  %v403 = vunpack.c.l.b16 %v239
  %v404 = vunpack.c.l.b16 %v240
  %v405 = vunpack.c.l.b16 %v241
  %v406 = vunpack.c.l.b16 %v242
  %v407 = vunpack.c.l.b16 %v243
  %v408 = vunpack.c.l.b16 %v244
  %v409 = vunpack.c.l.b16 %v245
  %v410 = vunpack.c.l.b16 %v246
  %v411 = vunpack.c.l.b16 %v247
  %v412 = vunpack.c.l.b16 %v248
  %v413 = vunpack.c.l.b16 %v249
  %v414 = vunpack.c.l.b16 %v250
  %v415 = vunpack.c.l.b16 %v251
  %v416 = vunpack.c.l.b16 %v252
  %v417 = vunpack.c.l.b16 %v253
  %v418 = vunpack.c.l.b16 %v254
  %v419 = vunpack.c.l.b16 %v255
  %v420 = vunpack.c.l.b16 %v256
  %v421 = vunpack.c.l.b16 %v257
  %v422 = vunpack.c.l.b16 %v258
  %v423 = vunpack.c.l.b16 %v259
  %v424 = vunpack.c.l.b16 %v260
  %v425 = vunpack.c.l.b16 %v261
  %v426 = vunpack.c.l.b16 %v262
  %v427 = vunpack.c.l.b16 %v263
  %v428 = vunpack.c.l.b16 %v264
  %v429 = vunpack.c.l.b16 %v265
  %v430 = vpack.c.b16 %v351, %v350
  %v431 = vpack.c.b16 %v353, %v352
  %v432 = vpack.c.b16 %v355, %v354
  %v433 = vpack.c.b16 %v357, %v356
  %v434 = vpack.c.b16 %v359, %v358
  %v435 = vpack.c.b16 %v361, %v360
  %v436 = vpack.c.b16 %v363, %v362
  %v437 = vpack.c.b16 %v365, %v364
  %v438 = vpack.c.b16 %v367, %v366
  %v439 = vpack.c.b16 %v369, %v368
  %v440 = vpack.c.b16 %v371, %v370
  %v441 = vpack.c.b16 %v373, %v372
  %v442 = vpack.c.b16 %v375, %v374
  %v443 = vpack.c.b16 %v377, %v376
  %v444 = vpack.c.b16 %v379, %v378
  %v445 = vpack.c.b16 %v381, %v380
  %v446 = vpack.c.b16 %v383, %v382
  %v447 = vpack.c.b16 %v385, %v384
  %v448 = vpack.c.b16 %v387, %v386
  %v449 = vpack.c.b16 %v389, %v388
  %v450 = vpack.c.b16 %v391, %v390
  %v451 = vpack.c.b16 %v393, %v392
  %v452 = vpack.c.b16 %v395, %v394
  %v453 = vpack.c.b16 %v397, %v396
  %v454 = vpack.c.b16 %v399, %v398
  %v455 = vpack.c.b16 %v401, %v400
  %v456 = vpack.c.b16 %v403, %v402
  %v457 = vpack.c.b16 %v405, %v404
  %v458 = vpack.c.b16 %v407, %v406
  %v459 = vpack.c.b16 %v409, %v408
  %v460 = vpack.c.b16 %v411, %v410
  %v461 = vpack.c.b16 %v413, %v412
  %v462 = vpack.c.b16 %v415, %v414
  %v463 = vpack.c.b16 %v417, %v416
  %v464 = vpack.c.b16 %v419, %v418
  %v465 = vpack.c.b16 %v421, %v420
  %v466 = vpack.c.b16 %v423, %v422
  %v467 = vpack.c.b16 %v425, %v424
  %v468 = vpack.c.b16 %v427, %v426
  %v469 = vpack.c.b16 %v429, %v428
  %510 = vmatpush.bf16.msra.mxu0 %v437
  %511 = vmatpush.bf16.msra.mxu0 %v436
  %512 = vmatpush.bf16.msra.mxu0 %v435
  %513 = vmatpush.bf16.msra.mxu0 %v434
  %514 = vmatpush.bf16.msra.mxu0 %v433
  %515 = vmatpush.bf16.msra.mxu0 %v432
  %516 = vmatpush.bf16.msra.mxu0 %v431
  %517 = vmatpush.bf16.msra.mxu0 %v430
  %518 = vmatmul.bf16.gmra.mxu0 %v176
  %v519 = vpop.f32.mrf.mxu0
  %v520 = vadd.f32 %v268, %v519
  %v521 = vpop.f32.mrf.mxu0
  %v522 = vadd.f32 %v268, %v521
  %523 = vmatmul.bf16.gmra.mxu0 %v181
  %v524 = vpop.f32.mrf.mxu0
  %v525 = vadd.f32 %v268, %v524
  %v526 = vpop.f32.mrf.mxu0
  %v527 = vadd.f32 %v268, %v526
  %528 = vdwg.mxu0
  %529 = vmatpush.bf16.msra.mxu0 %v445
  %530 = vmatpush.bf16.msra.mxu0 %v444
  %531 = vmatpush.bf16.msra.mxu0 %v443
  %532 = vmatpush.bf16.msra.mxu0 %v442
  %533 = vmatpush.bf16.msra.mxu0 %v441
  %534 = vmatpush.bf16.msra.mxu0 %v440
  %535 = vmatpush.bf16.msra.mxu0 %v439
  %536 = vmatpush.bf16.msra.mxu0 %v438
  %537 = vmatmul.bf16.gmra.mxu0 %v177
  %v538 = vpop.f32.mrf.mxu0
  %v539 = vadd.f32 %v520, %v538
  %v540 = vpop.f32.mrf.mxu0
  %v541 = vadd.f32 %v522, %v540
  %542 = vmatmul.bf16.gmra.mxu0 %v182
  %v543 = vpop.f32.mrf.mxu0
  %v544 = vadd.f32 %v525, %v543
  %v545 = vpop.f32.mrf.mxu0
  %v546 = vadd.f32 %v527, %v545
  %547 = vdwg.mxu0
  %548 = vmatpush.bf16.msra.mxu0 %v453
  %549 = vmatpush.bf16.msra.mxu0 %v452
  %550 = vmatpush.bf16.msra.mxu0 %v451
  %551 = vmatpush.bf16.msra.mxu0 %v450
  %552 = vmatpush.bf16.msra.mxu0 %v449
  %553 = vmatpush.bf16.msra.mxu0 %v448
  %554 = vmatpush.bf16.msra.mxu0 %v447
  %555 = vmatpush.bf16.msra.mxu0 %v446
  %556 = vmatmul.bf16.gmra.mxu0 %v178
  %v557 = vpop.f32.mrf.mxu0
  %v558 = vadd.f32 %v539, %v557
  %v559 = vpop.f32.mrf.mxu0
  %v560 = vadd.f32 %v541, %v559
  %561 = vmatmul.bf16.gmra.mxu0 %v183
  %v562 = vpop.f32.mrf.mxu0
  %v563 = vadd.f32 %v544, %v562
  %v564 = vpop.f32.mrf.mxu0
  %v565 = vadd.f32 %v546, %v564
  %566 = vdwg.mxu0
  %567 = vmatpush.bf16.msra.mxu0 %v461
  %568 = vmatpush.bf16.msra.mxu0 %v460
  %569 = vmatpush.bf16.msra.mxu0 %v459
  %570 = vmatpush.bf16.msra.mxu0 %v458
  %571 = vmatpush.bf16.msra.mxu0 %v457
  %572 = vmatpush.bf16.msra.mxu0 %v456
  %573 = vmatpush.bf16.msra.mxu0 %v455
  %574 = vmatpush.bf16.msra.mxu0 %v454
  %575 = vmatmul.bf16.gmra.mxu0 %v179
  %v576 = vpop.f32.mrf.mxu0
  %v577 = vadd.f32 %v558, %v576
  %v578 = vpop.f32.mrf.mxu0
  %v579 = vadd.f32 %v560, %v578
  %580 = vmatmul.bf16.gmra.mxu0 %v184
  %v581 = vpop.f32.mrf.mxu0
  %v582 = vadd.f32 %v563, %v581
  %v583 = vpop.f32.mrf.mxu0
  %v584 = vadd.f32 %v565, %v583
  %585 = vdwg.mxu0
  %586 = vmatpush.bf16.msra.mxu0 %v469
  %587 = vmatpush.bf16.msra.mxu0 %v468
  %588 = vmatpush.bf16.msra.mxu0 %v467
  %589 = vmatpush.bf16.msra.mxu0 %v466
  %590 = vmatpush.bf16.msra.mxu0 %v465
  %591 = vmatpush.bf16.msra.mxu0 %v464
  %592 = vmatpush.bf16.msra.mxu0 %v463
  %593 = vmatpush.bf16.msra.mxu0 %v462
  %594 = vmatmul.bf16.gmra.mxu0 %v180
  %v595 = vpop.f32.mrf.mxu0
  %v596 = vadd.f32 %v577, %v595
  %v597 = vpop.f32.mrf.mxu0
  %v598 = vadd.f32 %v579, %v597
  %599 = vmatmul.bf16.gmra.mxu0 %v185
  %v600 = vpop.f32.mrf.mxu0
  %v601 = vadd.f32 %v582, %v600
  %v602 = vpop.f32.mrf.mxu0
  %v603 = vadd.f32 %v584, %v602
  %604 = vdwg.mxu0
  %v605 = vpack.c.bf16 %v596, %v596
  %v606 = vpack.c.bf16 %v598, %v598
  %v607 = vpack.c.bf16 %v601, %v601
  %v608 = vpack.c.bf16 %v603, %v603
  %609 = vst [vmem:[%s5] sm:$0xf] %v605
  %610 = vst [vmem:[%s5 + $0x4] sm:$0xf] %v606
  %611 = vst [vmem:[%s5 + $0x8] sm:$0xf] %v607
  %612 = vst [vmem:[%s5 + $0xc] sm:$0xf] %v608
  // Predicated region
  $region22: #{encoder_forward.40} parent=0 // pred_check
    _
  $region23: #{encoder_forward.40} parent=0 // pred_check_branch
    %614 = sbr.rel (0) target = $region25
  $region24: #{encoder_forward.40} parent=0 // pred_region
    _
  $region25: #{encoder_forward.40} parent=0 // pred_fallthru
    _
  // Predicated region
  $region26: #{encoder_forward.40} parent=0 // pred_check
    _
  $region27: #{encoder_forward.40} parent=0 // pred_check_branch
    %616 = sbr.rel (0) target = $region29
  $region28: #{encoder_forward.40} parent=0 // pred_region
    _
  $region29: #{encoder_forward.40} parent=0 // pred_fallthru
    _

// kernel: encoder_forward.44
$region0: #{encoder_forward.44}
  #allocation0 [shape = 'u32[]', space=smem, size = 0x4, offset = 0x4, fixed_abs, tag = 'smem constant byte address 0x4 - core index']
  #allocation1 [shape = 'u32[72,128]{1,0:T(1,128)}', space=vmem, size = 0x9000, scoped, tag = 'internal scratch']
  %s0 = inlined_call_operand.vmem [shape: bf16[128,384], index: 0, kind: input, shape index: {}]
  %s1 = inlined_call_operand.vmem [shape: f32[1,384], index: 1, kind: input, shape index: {}]
  %s2 = inlined_call_operand.vmem [shape: f32[1,384], index: 2, kind: input, shape index: {}]
  %s3 = inlined_call_operand.vmem [shape: bf16[384,128], index: 3, kind: input, shape index: {}]
  %s4 = inlined_call_operand.vmem [shape: f32[1,128], index: 4, kind: input, shape index: {}]
  %s5 = inlined_call_operand.vmem [shape: bf16[128,128], index: 5, kind: output, shape index: {}]
  %s6 = sld [smem:[#allocation0]]
  $region30: #{encoder_forward.44} parent=0
    _
  %s8 = ssub.s32 1, %s6
  %s9 = scalar_select 0, %s8, %s6
  // Predicated region
  $region2: #{encoder_forward.44} parent=0 // pred_check
    _
  $region3: #{encoder_forward.44} parent=0 // pred_check_branch
    %11 = sbr.rel (0) target = $region5
  $region4: #{encoder_forward.44} parent=0 // pred_region
    _
  $region5: #{encoder_forward.44} parent=0 // pred_fallthru
    _
  // Predicated region
  $region6: #{encoder_forward.44} parent=0 // pred_check
    _
  $region7: #{encoder_forward.44} parent=0 // pred_check_branch
    %13 = sbr.rel (0) target = $region9
  $region8: #{encoder_forward.44} parent=0 // pred_region
    _
  $region9: #{encoder_forward.44} parent=0 // pred_fallthru
    _
  // Predicated region
  $region10: #{encoder_forward.44} parent=0 // pred_check
    _
  $region11: #{encoder_forward.44} parent=0 // pred_check_branch
    %15 = sbr.rel (0) target = $region13
  $region12: #{encoder_forward.44} parent=0 // pred_region
    _
  $region13: #{encoder_forward.44} parent=0 // pred_fallthru
    _
  // Predicated region
  $region14: #{encoder_forward.44} parent=0 // pred_check
    _
  $region15: #{encoder_forward.44} parent=0 // pred_check_branch
    %17 = sbr.rel (0) target = $region17
  $region16: #{encoder_forward.44} parent=0 // pred_region
    _
  $region17: #{encoder_forward.44} parent=0 // pred_fallthru
    _
  // Predicated region
  $region18: #{encoder_forward.44} parent=0 // pred_check
    _
  $region19: #{encoder_forward.44} parent=0 // pred_check_branch
    %19 = sbr.rel (0) target = $region21
  $region20: #{encoder_forward.44} parent=0 // pred_region
    _
  $region21: #{encoder_forward.44} parent=0 // pred_fallthru
    _
  %v20 = vld [vmem:[%s0] sm:$0xff]
  %v21 = vld [vmem:[%s0 + $0x8] sm:$0xf]
  %v22 = vld [vmem:[%s0 + $0xc] sm:$0xff]
  %v23 = vld [vmem:[%s0 + $0x14] sm:$0xf]
  %v24 = vld [vmem:[%s0 + $0x18] sm:$0xff]
  %v25 = vld [vmem:[%s0 + $0x20] sm:$0xf]
  %v26 = vld [vmem:[%s0 + $0x24] sm:$0xff]
  %v27 = vld [vmem:[%s0 + $0x2c] sm:$0xf]
  %v28 = vld [vmem:[%s0 + $0x30] sm:$0xff]
  %v29 = vld [vmem:[%s0 + $0x38] sm:$0xf]
  %v30 = vld [vmem:[%s0 + $0x3c] sm:$0xff]
  %v31 = vld [vmem:[%s0 + $0x44] sm:$0xf]
  %v32 = vld [vmem:[%s0 + $0x48] sm:$0xff]
  %v33 = vld [vmem:[%s0 + $0x50] sm:$0xf]
  %v34 = vld [vmem:[%s0 + $0x54] sm:$0xff]
  %v35 = vld [vmem:[%s0 + $0x5c] sm:$0xf]
  %v36 = vld [vmem:[%s0 + $0x60] sm:$0xff]
  %v37 = vld [vmem:[%s0 + $0x68] sm:$0xf]
  %v38 = vld [vmem:[%s0 + $0x6c] sm:$0xff]
  %v39 = vld [vmem:[%s0 + $0x74] sm:$0xf]
  %v40 = vld [vmem:[%s0 + $0x78] sm:$0xff]
  %v41 = vld [vmem:[%s0 + $0x80] sm:$0xf]
  %v42 = vld [vmem:[%s0 + $0x84] sm:$0xff]
  %v43 = vld [vmem:[%s0 + $0x8c] sm:$0xf]
  %v44 = vld [vmem:[%s0 + $0x90] sm:$0xff]
  %v45 = vld [vmem:[%s0 + $0x98] sm:$0xf]
  %v46 = vld [vmem:[%s0 + $0x9c] sm:$0xff]
  %v47 = vld [vmem:[%s0 + $0xa4] sm:$0xf]
  %v48 = vld [vmem:[%s0 + $0xa8] sm:$0xff]
  %v49 = vld [vmem:[%s0 + $0xb0] sm:$0xf]
  %v50 = vld [vmem:[%s0 + $0xb4] sm:$0xff]
  %v51 = vld [vmem:[%s0 + $0xbc] sm:$0xf]
  %v52 = vunpack.c.l.bf16 %v20
  %v53 = vunpack.c.h.bf16 %v20
  %v54 = vunpack.c.l.bf16 %v21
  %v55 = vunpack.c.l.bf16 %v22
  %v56 = vunpack.c.h.bf16 %v22
  %v57 = vunpack.c.l.bf16 %v23
  %v58 = vunpack.c.l.bf16 %v24
  %v59 = vunpack.c.h.bf16 %v24
  %v60 = vunpack.c.l.bf16 %v25
  %v61 = vunpack.c.l.bf16 %v26
  %v62 = vunpack.c.h.bf16 %v26
  %v63 = vunpack.c.l.bf16 %v27
  %v64 = vunpack.c.l.bf16 %v28
  %v65 = vunpack.c.h.bf16 %v28
  %v66 = vunpack.c.l.bf16 %v29
  %v67 = vunpack.c.l.bf16 %v30
  %v68 = vunpack.c.h.bf16 %v30
  %v69 = vunpack.c.l.bf16 %v31
  %v70 = vunpack.c.l.bf16 %v32
  %v71 = vunpack.c.h.bf16 %v32
  %v72 = vunpack.c.l.bf16 %v33
  %v73 = vunpack.c.l.bf16 %v34
  %v74 = vunpack.c.h.bf16 %v34
  %v75 = vunpack.c.l.bf16 %v35
  %v76 = vunpack.c.l.bf16 %v36
  %v77 = vunpack.c.h.bf16 %v36
  %v78 = vunpack.c.l.bf16 %v37
  %v79 = vunpack.c.l.bf16 %v38
  %v80 = vunpack.c.h.bf16 %v38
  %v81 = vunpack.c.l.bf16 %v39
  %v82 = vunpack.c.l.bf16 %v40
  %v83 = vunpack.c.h.bf16 %v40
  %v84 = vunpack.c.l.bf16 %v41
  %v85 = vunpack.c.l.bf16 %v42
  %v86 = vunpack.c.h.bf16 %v42
  %v87 = vunpack.c.l.bf16 %v43
  %v88 = vunpack.c.l.bf16 %v44
  %v89 = vunpack.c.h.bf16 %v44
  %v90 = vunpack.c.l.bf16 %v45
  %v91 = vunpack.c.l.bf16 %v46
  %v92 = vunpack.c.h.bf16 %v46
  %v93 = vunpack.c.l.bf16 %v47
  %v94 = vunpack.c.l.bf16 %v48
  %v95 = vunpack.c.h.bf16 %v48
  %v96 = vunpack.c.l.bf16 %v49
  %v97 = vunpack.c.l.bf16 %v50
  %v98 = vunpack.c.h.bf16 %v50
  %v99 = vunpack.c.l.bf16 %v51
  %v100 = vld [vmem:[%s1] sm:$0x7]
  %v102 = vperm.slane %v100, 0
  %v103 = vperm.slane %v100, 1
  %v104 = vperm.slane %v100, 2
  %v108 = vmul.f32 %v52, %v102
  %v109 = vmul.f32 %v53, %v103
  %v110 = vmul.f32 %v54, %v104
  %v111 = vmul.f32 %v55, %v102
  %v112 = vmul.f32 %v56, %v103
  %v113 = vmul.f32 %v57, %v104
  %v114 = vmul.f32 %v58, %v102
  %v115 = vmul.f32 %v59, %v103
  %v116 = vmul.f32 %v60, %v104
  %v117 = vmul.f32 %v61, %v102
  %v118 = vmul.f32 %v62, %v103
  %v119 = vmul.f32 %v63, %v104
  %v120 = vmul.f32 %v64, %v102
  %v121 = vmul.f32 %v65, %v103
  %v122 = vmul.f32 %v66, %v104
  %v123 = vmul.f32 %v67, %v102
  %v124 = vmul.f32 %v68, %v103
  %v125 = vmul.f32 %v69, %v104
  %v126 = vmul.f32 %v70, %v102
  %v127 = vmul.f32 %v71, %v103
  %v128 = vmul.f32 %v72, %v104
  %v129 = vmul.f32 %v73, %v102
  %v130 = vmul.f32 %v74, %v103
  %v131 = vmul.f32 %v75, %v104
  %v132 = vmul.f32 %v76, %v102
  %v133 = vmul.f32 %v77, %v103
  %v134 = vmul.f32 %v78, %v104
  %v135 = vmul.f32 %v79, %v102
  %v136 = vmul.f32 %v80, %v103
  %v137 = vmul.f32 %v81, %v104
  %v138 = vmul.f32 %v82, %v102
  %v139 = vmul.f32 %v83, %v103
  %v140 = vmul.f32 %v84, %v104
  %v141 = vmul.f32 %v85, %v102
  %v142 = vmul.f32 %v86, %v103
  %v143 = vmul.f32 %v87, %v104
  %v144 = vmul.f32 %v88, %v102
  %v145 = vmul.f32 %v89, %v103
  %v146 = vmul.f32 %v90, %v104
  %v147 = vmul.f32 %v91, %v102
  %v148 = vmul.f32 %v92, %v103
  %v149 = vmul.f32 %v93, %v104
  %v150 = vmul.f32 %v94, %v102
  %v151 = vmul.f32 %v95, %v103
  %v152 = vmul.f32 %v96, %v104
  %v153 = vmul.f32 %v97, %v102
  %v154 = vmul.f32 %v98, %v103
  %v155 = vmul.f32 %v99, %v104
  %v156 = vld [vmem:[%s2] sm:$0x7]
  %v158 = vperm.slane %v156, 0
  %v159 = vperm.slane %v156, 1
  %v160 = vperm.slane %v156, 2
  %v164 = vadd.f32 %v108, %v158
  %v165 = vadd.f32 %v109, %v159
  %v166 = vadd.f32 %v110, %v160
  %v167 = vadd.f32 %v111, %v158
  %v168 = vadd.f32 %v112, %v159
  %v169 = vadd.f32 %v113, %v160
  %v170 = vadd.f32 %v114, %v158
  %v171 = vadd.f32 %v115, %v159
  %v172 = vadd.f32 %v116, %v160
  %v173 = vadd.f32 %v117, %v158
  %v174 = vadd.f32 %v118, %v159
  %v175 = vadd.f32 %v119, %v160
  %v176 = vadd.f32 %v120, %v158
  %v177 = vadd.f32 %v121, %v159
  %v178 = vadd.f32 %v122, %v160
  %v179 = vadd.f32 %v123, %v158
  %v180 = vadd.f32 %v124, %v159
  %v181 = vadd.f32 %v125, %v160
  %v182 = vadd.f32 %v126, %v158
  %v183 = vadd.f32 %v127, %v159
  %v184 = vadd.f32 %v128, %v160
  %v185 = vadd.f32 %v129, %v158
  %v186 = vadd.f32 %v130, %v159
  %v187 = vadd.f32 %v131, %v160
  %v188 = vadd.f32 %v132, %v158
  %v189 = vadd.f32 %v133, %v159
  %v190 = vadd.f32 %v134, %v160
  %v191 = vadd.f32 %v135, %v158
  %v192 = vadd.f32 %v136, %v159
  %v193 = vadd.f32 %v137, %v160
  %v194 = vadd.f32 %v138, %v158
  %v195 = vadd.f32 %v139, %v159
  %v196 = vadd.f32 %v140, %v160
  %v197 = vadd.f32 %v141, %v158
  %v198 = vadd.f32 %v142, %v159
  %v199 = vadd.f32 %v143, %v160
  %v200 = vadd.f32 %v144, %v158
  %v201 = vadd.f32 %v145, %v159
  %v202 = vadd.f32 %v146, %v160
  %v203 = vadd.f32 %v147, %v158
  %v204 = vadd.f32 %v148, %v159
  %v205 = vadd.f32 %v149, %v160
  %v206 = vadd.f32 %v150, %v158
  %v207 = vadd.f32 %v151, %v159
  %v208 = vadd.f32 %v152, %v160
  %v209 = vadd.f32 %v153, %v158
  %v210 = vadd.f32 %v154, %v159
  %v211 = vadd.f32 %v155, %v160
  %vm212 = vcmp.gt.f32.partialorder %v164, 0.0
  %vm213 = vcmp.gt.f32.partialorder %v165, 0.0
  %vm214 = vcmp.gt.f32.partialorder %v166, 0.0
  %vm215 = vcmp.gt.f32.partialorder %v167, 0.0
  %vm216 = vcmp.gt.f32.partialorder %v168, 0.0
  %vm217 = vcmp.gt.f32.partialorder %v169, 0.0
  %vm218 = vcmp.gt.f32.partialorder %v170, 0.0
  %vm219 = vcmp.gt.f32.partialorder %v171, 0.0
  %vm220 = vcmp.gt.f32.partialorder %v172, 0.0
  %vm221 = vcmp.gt.f32.partialorder %v173, 0.0
  %vm222 = vcmp.gt.f32.partialorder %v174, 0.0
  %vm223 = vcmp.gt.f32.partialorder %v175, 0.0
  %vm224 = vcmp.gt.f32.partialorder %v176, 0.0
  %vm225 = vcmp.gt.f32.partialorder %v177, 0.0
  %vm226 = vcmp.gt.f32.partialorder %v178, 0.0
  %vm227 = vcmp.gt.f32.partialorder %v179, 0.0
  %vm228 = vcmp.gt.f32.partialorder %v180, 0.0
  %vm229 = vcmp.gt.f32.partialorder %v181, 0.0
  %vm230 = vcmp.gt.f32.partialorder %v182, 0.0
  %vm231 = vcmp.gt.f32.partialorder %v183, 0.0
  %vm232 = vcmp.gt.f32.partialorder %v184, 0.0
  %vm233 = vcmp.gt.f32.partialorder %v185, 0.0
  %vm234 = vcmp.gt.f32.partialorder %v186, 0.0
  %vm235 = vcmp.gt.f32.partialorder %v187, 0.0
  %vm236 = vcmp.gt.f32.partialorder %v188, 0.0
  %vm237 = vcmp.gt.f32.partialorder %v189, 0.0
  %vm238 = vcmp.gt.f32.partialorder %v190, 0.0
  %vm239 = vcmp.gt.f32.partialorder %v191, 0.0
  %vm240 = vcmp.gt.f32.partialorder %v192, 0.0
  %vm241 = vcmp.gt.f32.partialorder %v193, 0.0
  %vm242 = vcmp.gt.f32.partialorder %v194, 0.0
  %vm243 = vcmp.gt.f32.partialorder %v195, 0.0
  %vm244 = vcmp.gt.f32.partialorder %v196, 0.0
  %vm245 = vcmp.gt.f32.partialorder %v197, 0.0
  %vm246 = vcmp.gt.f32.partialorder %v198, 0.0
  %vm247 = vcmp.gt.f32.partialorder %v199, 0.0
  %vm248 = vcmp.gt.f32.partialorder %v200, 0.0
  %vm249 = vcmp.gt.f32.partialorder %v201, 0.0
  %vm250 = vcmp.gt.f32.partialorder %v202, 0.0
  %vm251 = vcmp.gt.f32.partialorder %v203, 0.0
  %vm252 = vcmp.gt.f32.partialorder %v204, 0.0
  %vm253 = vcmp.gt.f32.partialorder %v205, 0.0
  %vm254 = vcmp.gt.f32.partialorder %v206, 0.0
  %vm255 = vcmp.gt.f32.partialorder %v207, 0.0
  %vm256 = vcmp.gt.f32.partialorder %v208, 0.0
  %vm257 = vcmp.gt.f32.partialorder %v209, 0.0
  %vm258 = vcmp.gt.f32.partialorder %v210, 0.0
  %vm259 = vcmp.gt.f32.partialorder %v211, 0.0
  %v260 = vmul.f32 %v164, 0.01
  %v261 = vmul.f32 %v165, 0.01
  %v262 = vmul.f32 %v166, 0.01
  %v263 = vmul.f32 %v167, 0.01
  %v264 = vmul.f32 %v168, 0.01
  %v265 = vmul.f32 %v169, 0.01
  %v266 = vmul.f32 %v170, 0.01
  %v267 = vmul.f32 %v171, 0.01
  %v268 = vmul.f32 %v172, 0.01
  %v269 = vmul.f32 %v173, 0.01
  %v270 = vmul.f32 %v174, 0.01
  %v271 = vmul.f32 %v175, 0.01
  %v272 = vmul.f32 %v176, 0.01
  %v273 = vmul.f32 %v177, 0.01
  %v274 = vmul.f32 %v178, 0.01
  %v275 = vmul.f32 %v179, 0.01
  %v276 = vmul.f32 %v180, 0.01
  %v277 = vmul.f32 %v181, 0.01
  %v278 = vmul.f32 %v182, 0.01
  %v279 = vmul.f32 %v183, 0.01
  %v280 = vmul.f32 %v184, 0.01
  %v281 = vmul.f32 %v185, 0.01
  %v282 = vmul.f32 %v186, 0.01
  %v283 = vmul.f32 %v187, 0.01
  %v284 = vmul.f32 %v188, 0.01
  %v285 = vmul.f32 %v189, 0.01
  %v286 = vmul.f32 %v190, 0.01
  %v287 = vmul.f32 %v191, 0.01
  %v288 = vmul.f32 %v192, 0.01
  %v289 = vmul.f32 %v193, 0.01
  %v290 = vmul.f32 %v194, 0.01
  %v291 = vmul.f32 %v195, 0.01
  %v292 = vmul.f32 %v196, 0.01
  %v293 = vmul.f32 %v197, 0.01
  %v294 = vmul.f32 %v198, 0.01
  %v295 = vmul.f32 %v199, 0.01
  %v296 = vmul.f32 %v200, 0.01
  %v297 = vmul.f32 %v201, 0.01
  %v298 = vmul.f32 %v202, 0.01
  %v299 = vmul.f32 %v203, 0.01
  %v300 = vmul.f32 %v204, 0.01
  %v301 = vmul.f32 %v205, 0.01
  %v302 = vmul.f32 %v206, 0.01
  %v303 = vmul.f32 %v207, 0.01
  %v304 = vmul.f32 %v208, 0.01
  %v305 = vmul.f32 %v209, 0.01
  %v306 = vmul.f32 %v210, 0.01
  %v307 = vmul.f32 %v211, 0.01
  %v308 = vsel %vm212, %v164, %v260
  %v309 = vsel %vm213, %v165, %v261
  %v310 = vsel %vm214, %v166, %v262
  %v311 = vsel %vm215, %v167, %v263
  %v312 = vsel %vm216, %v168, %v264
  %v313 = vsel %vm217, %v169, %v265
  %v314 = vsel %vm218, %v170, %v266
  %v315 = vsel %vm219, %v171, %v267
  %v316 = vsel %vm220, %v172, %v268
  %v317 = vsel %vm221, %v173, %v269
  %v318 = vsel %vm222, %v174, %v270
  %v319 = vsel %vm223, %v175, %v271
  %v320 = vsel %vm224, %v176, %v272
  %v321 = vsel %vm225, %v177, %v273
  %v322 = vsel %vm226, %v178, %v274
  %v323 = vsel %vm227, %v179, %v275
  %v324 = vsel %vm228, %v180, %v276
  %v325 = vsel %vm229, %v181, %v277
  %v326 = vsel %vm230, %v182, %v278
  %v327 = vsel %vm231, %v183, %v279
  %v328 = vsel %vm232, %v184, %v280
  %v329 = vsel %vm233, %v185, %v281
  %v330 = vsel %vm234, %v186, %v282
  %v331 = vsel %vm235, %v187, %v283
  %v332 = vsel %vm236, %v188, %v284
  %v333 = vsel %vm237, %v189, %v285
  %v334 = vsel %vm238, %v190, %v286
  %v335 = vsel %vm239, %v191, %v287
  %v336 = vsel %vm240, %v192, %v288
  %v337 = vsel %vm241, %v193, %v289
  %v338 = vsel %vm242, %v194, %v290
  %v339 = vsel %vm243, %v195, %v291
  %v340 = vsel %vm244, %v196, %v292
  %v341 = vsel %vm245, %v197, %v293
  %v342 = vsel %vm246, %v198, %v294
  %v343 = vsel %vm247, %v199, %v295
  %v344 = vsel %vm248, %v200, %v296
  %v345 = vsel %vm249, %v201, %v297
  %v346 = vsel %vm250, %v202, %v298
  %v347 = vsel %vm251, %v203, %v299
  %v348 = vsel %vm252, %v204, %v300
  %v349 = vsel %vm253, %v205, %v301
  %v350 = vsel %vm254, %v206, %v302
  %v351 = vsel %vm255, %v207, %v303
  %v352 = vsel %vm256, %v208, %v304
  %v353 = vsel %vm257, %v209, %v305
  %v354 = vsel %vm258, %v210, %v306
  %v355 = vsel %vm259, %v211, %v307
  %v356 = vpack.c.bf16 %v311, %v308
  %v357 = vpack.c.bf16 %v312, %v309
  %v358 = vpack.c.bf16 %v313, %v310
  %v359 = vpack.c.bf16 %v317, %v314
  %v360 = vpack.c.bf16 %v318, %v315
  %v361 = vpack.c.bf16 %v319, %v316
  %v362 = vpack.c.bf16 %v323, %v320
  %v363 = vpack.c.bf16 %v324, %v321
  %v364 = vpack.c.bf16 %v325, %v322
  %v365 = vpack.c.bf16 %v329, %v326
  %v366 = vpack.c.bf16 %v330, %v327
  %v367 = vpack.c.bf16 %v331, %v328
  %v368 = vpack.c.bf16 %v335, %v332
  %v369 = vpack.c.bf16 %v336, %v333
  %v370 = vpack.c.bf16 %v337, %v334
  %v371 = vpack.c.bf16 %v341, %v338
  %v372 = vpack.c.bf16 %v342, %v339
  %v373 = vpack.c.bf16 %v343, %v340
  %v374 = vpack.c.bf16 %v347, %v344
  %v375 = vpack.c.bf16 %v348, %v345
  %v376 = vpack.c.bf16 %v349, %v346
  %v377 = vpack.c.bf16 %v353, %v350
  %v378 = vpack.c.bf16 %v354, %v351
  %v379 = vpack.c.bf16 %v355, %v352
  %v380 = vld [vmem:[%s3] sm:$0xf]
  %v381 = vld [vmem:[%s3 + $0x4] sm:$0xf]
  %v382 = vld [vmem:[%s3 + $0x8] sm:$0xf]
  %v383 = vld [vmem:[%s3 + $0xc] sm:$0xf]
  %v384 = vld [vmem:[%s3 + $0x10] sm:$0xf]
  %v385 = vld [vmem:[%s3 + $0x14] sm:$0xf]
  %v386 = vld [vmem:[%s3 + $0x18] sm:$0xf]
  %v387 = vld [vmem:[%s3 + $0x1c] sm:$0xf]
  %v388 = vld [vmem:[%s3 + $0x20] sm:$0xf]
  %v389 = vld [vmem:[%s3 + $0x24] sm:$0xf]
  %v390 = vld [vmem:[%s3 + $0x28] sm:$0xf]
  %v391 = vld [vmem:[%s3 + $0x2c] sm:$0xf]
  %v392 = vld [vmem:[%s3 + $0x30] sm:$0xf]
  %v393 = vld [vmem:[%s3 + $0x34] sm:$0xf]
  %v394 = vld [vmem:[%s3 + $0x38] sm:$0xf]
  %v395 = vld [vmem:[%s3 + $0x3c] sm:$0xf]
  %v396 = vld [vmem:[%s3 + $0x40] sm:$0xf]
  %v397 = vld [vmem:[%s3 + $0x44] sm:$0xf]
  %v398 = vld [vmem:[%s3 + $0x48] sm:$0xf]
  %v399 = vld [vmem:[%s3 + $0x4c] sm:$0xf]
  %v400 = vld [vmem:[%s3 + $0x50] sm:$0xf]
  %v401 = vld [vmem:[%s3 + $0x54] sm:$0xf]
  %v402 = vld [vmem:[%s3 + $0x58] sm:$0xf]
  %v403 = vld [vmem:[%s3 + $0x5c] sm:$0xf]
  %v404 = vld [vmem:[%s3 + $0x60] sm:$0xf]
  %v405 = vld [vmem:[%s3 + $0x64] sm:$0xf]
  %v406 = vld [vmem:[%s3 + $0x68] sm:$0xf]
  %v407 = vld [vmem:[%s3 + $0x6c] sm:$0xf]
  %v408 = vld [vmem:[%s3 + $0x70] sm:$0xf]
  %v409 = vld [vmem:[%s3 + $0x74] sm:$0xf]
  %v410 = vld [vmem:[%s3 + $0x78] sm:$0xf]
  %v411 = vld [vmem:[%s3 + $0x7c] sm:$0xf]
  %v412 = vld [vmem:[%s3 + $0x80] sm:$0xf]
  %v413 = vld [vmem:[%s3 + $0x84] sm:$0xf]
  %v414 = vld [vmem:[%s3 + $0x88] sm:$0xf]
  %v415 = vld [vmem:[%s3 + $0x8c] sm:$0xf]
  %v416 = vld [vmem:[%s3 + $0x90] sm:$0xf]
  %v417 = vld [vmem:[%s3 + $0x94] sm:$0xf]
  %v418 = vld [vmem:[%s3 + $0x98] sm:$0xf]
  %v419 = vld [vmem:[%s3 + $0x9c] sm:$0xf]
  %v420 = vld [vmem:[%s3 + $0xa0] sm:$0xf]
  %v421 = vld [vmem:[%s3 + $0xa4] sm:$0xf]
  %v422 = vld [vmem:[%s3 + $0xa8] sm:$0xf]
  %v423 = vld [vmem:[%s3 + $0xac] sm:$0xf]
  %v424 = vld [vmem:[%s3 + $0xb0] sm:$0xf]
  %v425 = vld [vmem:[%s3 + $0xb4] sm:$0xf]
  %v426 = vld [vmem:[%s3 + $0xb8] sm:$0xf]
  %v427 = vld [vmem:[%s3 + $0xbc] sm:$0xf]
  %v428 = vld [vmem:[%s4] sm:$0x1]
  %v430 = vperm.slane %v428, 0
  %v480 = vunpack.c.l.b16 %v380
  %v481 = vunpack.c.l.b16 %v381
  %v482 = vunpack.c.l.b16 %v382
  %v483 = vunpack.c.l.b16 %v383
  %v484 = vunpack.c.l.b16 %v384
  %v485 = vunpack.c.l.b16 %v385
  %v486 = vunpack.c.l.b16 %v386
  %v487 = vunpack.c.l.b16 %v387
  %v488 = vunpack.c.l.b16 %v388
  %v489 = vunpack.c.l.b16 %v389
  %v490 = vunpack.c.l.b16 %v390
  %v491 = vunpack.c.l.b16 %v391
  %v492 = vunpack.c.l.b16 %v392
  %v493 = vunpack.c.l.b16 %v393
  %v494 = vunpack.c.l.b16 %v394
  %v495 = vunpack.c.l.b16 %v395
  %v496 = vunpack.c.l.b16 %v396
  %v497 = vunpack.c.l.b16 %v397
  %v498 = vunpack.c.l.b16 %v398
  %v499 = vunpack.c.l.b16 %v399
  %v500 = vunpack.c.l.b16 %v400
  %v501 = vunpack.c.l.b16 %v401
  %v502 = vunpack.c.l.b16 %v402
  %v503 = vunpack.c.l.b16 %v403
  %v504 = vunpack.c.l.b16 %v404
  %v505 = vunpack.c.l.b16 %v405
  %v506 = vunpack.c.l.b16 %v406
  %v507 = vunpack.c.l.b16 %v407
  %v508 = vunpack.c.l.b16 %v408
  %v509 = vunpack.c.l.b16 %v409
  %v510 = vunpack.c.l.b16 %v410
  %v511 = vunpack.c.l.b16 %v411
  %v512 = vunpack.c.l.b16 %v412
  %v513 = vunpack.c.l.b16 %v413
  %v514 = vunpack.c.l.b16 %v414
  %v515 = vunpack.c.l.b16 %v415
  %v516 = vunpack.c.l.b16 %v416
  %v517 = vunpack.c.l.b16 %v417
  %v518 = vunpack.c.l.b16 %v418
  %v519 = vunpack.c.l.b16 %v419
  %v520 = vunpack.c.l.b16 %v420
  %v521 = vunpack.c.l.b16 %v421
  %v522 = vunpack.c.l.b16 %v422
  %v523 = vunpack.c.l.b16 %v423
  %v524 = vunpack.c.l.b16 %v424
  %v525 = vunpack.c.l.b16 %v425
  %v526 = vunpack.c.l.b16 %v426
  %v527 = vunpack.c.l.b16 %v427
  %v528 = vpack.c.b16 %v481, %v480
  %v529 = vpack.c.b16 %v483, %v482
  %v530 = vpack.c.b16 %v485, %v484
  %v531 = vpack.c.b16 %v487, %v486
  %v532 = vpack.c.b16 %v489, %v488
  %v533 = vpack.c.b16 %v491, %v490
  %v534 = vpack.c.b16 %v493, %v492
  %v535 = vpack.c.b16 %v495, %v494
  %v536 = vpack.c.b16 %v497, %v496
  %v537 = vpack.c.b16 %v499, %v498
  %v538 = vpack.c.b16 %v501, %v500
  %v539 = vpack.c.b16 %v503, %v502
  %v540 = vpack.c.b16 %v505, %v504
  %v541 = vpack.c.b16 %v507, %v506
  %v542 = vpack.c.b16 %v509, %v508
  %v543 = vpack.c.b16 %v511, %v510
  %v544 = vpack.c.b16 %v513, %v512
  %v545 = vpack.c.b16 %v515, %v514
  %v546 = vpack.c.b16 %v517, %v516
  %v547 = vpack.c.b16 %v519, %v518
  %v548 = vpack.c.b16 %v521, %v520
  %v549 = vpack.c.b16 %v523, %v522
  %v550 = vpack.c.b16 %v525, %v524
  %v551 = vpack.c.b16 %v527, %v526
  %576 = vmatpush.bf16.msra.mxu0 %v535
  %577 = vmatpush.bf16.msra.mxu0 %v534
  %578 = vmatpush.bf16.msra.mxu0 %v533
  %579 = vmatpush.bf16.msra.mxu0 %v532
  %580 = vmatpush.bf16.msra.mxu0 %v531
  %581 = vmatpush.bf16.msra.mxu0 %v530
  %582 = vmatpush.bf16.msra.mxu0 %v529
  %583 = vmatpush.bf16.msra.mxu0 %v528
  %584 = vmatmul.bf16.gmra.mxu0 %v356
  %v585 = vpop.f32.mrf.mxu0
  %v586 = vadd.f32 %v430, %v585
  %v587 = vpop.f32.mrf.mxu0
  %v588 = vadd.f32 %v430, %v587
  %589 = vmatmul.bf16.gmra.mxu0 %v359
  %v590 = vpop.f32.mrf.mxu0
  %v591 = vadd.f32 %v430, %v590
  %v592 = vpop.f32.mrf.mxu0
  %v593 = vadd.f32 %v430, %v592
  %594 = vmatmul.bf16.gmra.mxu0 %v362
  %v595 = vpop.f32.mrf.mxu0
  %v596 = vadd.f32 %v430, %v595
  %v597 = vpop.f32.mrf.mxu0
  %v598 = vadd.f32 %v430, %v597
  %599 = vmatmul.bf16.gmra.mxu0 %v365
  %v600 = vpop.f32.mrf.mxu0
  %v601 = vadd.f32 %v430, %v600
  %v602 = vpop.f32.mrf.mxu0
  %v603 = vadd.f32 %v430, %v602
  %604 = vmatmul.bf16.gmra.mxu0 %v368
  %v605 = vpop.f32.mrf.mxu0
  %v606 = vadd.f32 %v430, %v605
  %v607 = vpop.f32.mrf.mxu0
  %v608 = vadd.f32 %v430, %v607
  %609 = vmatmul.bf16.gmra.mxu0 %v371
  %v610 = vpop.f32.mrf.mxu0
  %v611 = vadd.f32 %v430, %v610
  %v612 = vpop.f32.mrf.mxu0
  %v613 = vadd.f32 %v430, %v612
  %614 = vmatmul.bf16.gmra.mxu0 %v374
  %v615 = vpop.f32.mrf.mxu0
  %v616 = vadd.f32 %v430, %v615
  %v617 = vpop.f32.mrf.mxu0
  %v618 = vadd.f32 %v430, %v617
  %619 = vmatmul.bf16.gmra.mxu0 %v377
  %v620 = vpop.f32.mrf.mxu0
  %v621 = vadd.f32 %v430, %v620
  %v622 = vpop.f32.mrf.mxu0
  %v623 = vadd.f32 %v430, %v622
  %624 = vdwg.mxu0
  %625 = vmatpush.bf16.msra.mxu0 %v543
  %626 = vmatpush.bf16.msra.mxu0 %v542
  %627 = vmatpush.bf16.msra.mxu0 %v541
  %628 = vmatpush.bf16.msra.mxu0 %v540
  %629 = vmatpush.bf16.msra.mxu0 %v539
  %630 = vmatpush.bf16.msra.mxu0 %v538
  %631 = vmatpush.bf16.msra.mxu0 %v537
  %632 = vmatpush.bf16.msra.mxu0 %v536
  %633 = vmatmul.bf16.gmra.mxu0 %v357
  %v634 = vpop.f32.mrf.mxu0
  %v635 = vadd.f32 %v586, %v634
  %v636 = vpop.f32.mrf.mxu0
  %v637 = vadd.f32 %v588, %v636
  %638 = vmatmul.bf16.gmra.mxu0 %v360
  %v639 = vpop.f32.mrf.mxu0
  %v640 = vadd.f32 %v591, %v639
  %v641 = vpop.f32.mrf.mxu0
  %v642 = vadd.f32 %v593, %v641
  %643 = vmatmul.bf16.gmra.mxu0 %v363
  %v644 = vpop.f32.mrf.mxu0
  %v645 = vadd.f32 %v596, %v644
  %v646 = vpop.f32.mrf.mxu0
  %v647 = vadd.f32 %v598, %v646
  %648 = vmatmul.bf16.gmra.mxu0 %v366
  %v649 = vpop.f32.mrf.mxu0
  %v650 = vadd.f32 %v601, %v649
  %v651 = vpop.f32.mrf.mxu0
  %v652 = vadd.f32 %v603, %v651
  %653 = vmatmul.bf16.gmra.mxu0 %v369
  %v654 = vpop.f32.mrf.mxu0
  %v655 = vadd.f32 %v606, %v654
  %v656 = vpop.f32.mrf.mxu0
  %v657 = vadd.f32 %v608, %v656
  %658 = vmatmul.bf16.gmra.mxu0 %v372
  %v659 = vpop.f32.mrf.mxu0
  %v660 = vadd.f32 %v611, %v659
  %v661 = vpop.f32.mrf.mxu0
  %v662 = vadd.f32 %v613, %v661
  %663 = vmatmul.bf16.gmra.mxu0 %v375
  %v664 = vpop.f32.mrf.mxu0
  %v665 = vadd.f32 %v616, %v664
  %v666 = vpop.f32.mrf.mxu0
  %v667 = vadd.f32 %v618, %v666
  %668 = vmatmul.bf16.gmra.mxu0 %v378
  %v669 = vpop.f32.mrf.mxu0
  %v670 = vadd.f32 %v621, %v669
  %v671 = vpop.f32.mrf.mxu0
  %v672 = vadd.f32 %v623, %v671
  %673 = vdwg.mxu0
  %674 = vmatpush.bf16.msra.mxu0 %v551
  %675 = vmatpush.bf16.msra.mxu0 %v550
  %676 = vmatpush.bf16.msra.mxu0 %v549
  %677 = vmatpush.bf16.msra.mxu0 %v548
  %678 = vmatpush.bf16.msra.mxu0 %v547
  %679 = vmatpush.bf16.msra.mxu0 %v546
  %680 = vmatpush.bf16.msra.mxu0 %v545
  %681 = vmatpush.bf16.msra.mxu0 %v544
  %682 = vmatmul.bf16.gmra.mxu0 %v358
  %v683 = vpop.f32.mrf.mxu0
  %v684 = vadd.f32 %v635, %v683
  %v685 = vpop.f32.mrf.mxu0
  %v686 = vadd.f32 %v637, %v685
  %687 = vmatmul.bf16.gmra.mxu0 %v361
  %v688 = vpop.f32.mrf.mxu0
  %v689 = vadd.f32 %v640, %v688
  %v690 = vpop.f32.mrf.mxu0
  %v691 = vadd.f32 %v642, %v690
  %692 = vmatmul.bf16.gmra.mxu0 %v364
  %v693 = vpop.f32.mrf.mxu0
  %v694 = vadd.f32 %v645, %v693
  %v695 = vpop.f32.mrf.mxu0
  %v696 = vadd.f32 %v647, %v695
  %697 = vmatmul.bf16.gmra.mxu0 %v367
  %v698 = vpop.f32.mrf.mxu0
  %v699 = vadd.f32 %v650, %v698
  %v700 = vpop.f32.mrf.mxu0
  %v701 = vadd.f32 %v652, %v700
  %702 = vmatmul.bf16.gmra.mxu0 %v370
  %v703 = vpop.f32.mrf.mxu0
  %v704 = vadd.f32 %v655, %v703
  %v705 = vpop.f32.mrf.mxu0
  %v706 = vadd.f32 %v657, %v705
  %707 = vmatmul.bf16.gmra.mxu0 %v373
  %v708 = vpop.f32.mrf.mxu0
  %v709 = vadd.f32 %v660, %v708
  %v710 = vpop.f32.mrf.mxu0
  %v711 = vadd.f32 %v662, %v710
  %712 = vmatmul.bf16.gmra.mxu0 %v376
  %v713 = vpop.f32.mrf.mxu0
  %v714 = vadd.f32 %v665, %v713
  %v715 = vpop.f32.mrf.mxu0
  %v716 = vadd.f32 %v667, %v715
  %717 = vmatmul.bf16.gmra.mxu0 %v379
  %v718 = vpop.f32.mrf.mxu0
  %v719 = vadd.f32 %v670, %v718
  %v720 = vpop.f32.mrf.mxu0
  %v721 = vadd.f32 %v672, %v720
  %722 = vdwg.mxu0
  %v723 = vpack.c.bf16 %v684, %v684
  %v724 = vpack.c.bf16 %v686, %v686
  %v725 = vpack.c.bf16 %v689, %v689
  %v726 = vpack.c.bf16 %v691, %v691
  %v727 = vpack.c.bf16 %v694, %v694
  %v728 = vpack.c.bf16 %v696, %v696
  %v729 = vpack.c.bf16 %v699, %v699
  %v730 = vpack.c.bf16 %v701, %v701
  %v731 = vpack.c.bf16 %v704, %v704
  %v732 = vpack.c.bf16 %v706, %v706
  %v733 = vpack.c.bf16 %v709, %v709
  %v734 = vpack.c.bf16 %v711, %v711
  %v735 = vpack.c.bf16 %v714, %v714
  %v736 = vpack.c.bf16 %v716, %v716
  %v737 = vpack.c.bf16 %v719, %v719
  %v738 = vpack.c.bf16 %v721, %v721
  %739 = vst [vmem:[%s5] sm:$0xf] %v723
  %740 = vst [vmem:[%s5 + $0x4] sm:$0xf] %v724
  %741 = vst [vmem:[%s5 + $0x8] sm:$0xf] %v725
  %742 = vst [vmem:[%s5 + $0xc] sm:$0xf] %v726
  %743 = vst [vmem:[%s5 + $0x10] sm:$0xf] %v727
  %744 = vst [vmem:[%s5 + $0x14] sm:$0xf] %v728
  %745 = vst [vmem:[%s5 + $0x18] sm:$0xf] %v729
  %746 = vst [vmem:[%s5 + $0x1c] sm:$0xf] %v730
  %747 = vst [vmem:[%s5 + $0x20] sm:$0xf] %v731
  %748 = vst [vmem:[%s5 + $0x24] sm:$0xf] %v732
  %749 = vst [vmem:[%s5 + $0x28] sm:$0xf] %v733
  %750 = vst [vmem:[%s5 + $0x2c] sm:$0xf] %v734
  %751 = vst [vmem:[%s5 + $0x30] sm:$0xf] %v735
  %752 = vst [vmem:[%s5 + $0x34] sm:$0xf] %v736
  %753 = vst [vmem:[%s5 + $0x38] sm:$0xf] %v737
  %754 = vst [vmem:[%s5 + $0x3c] sm:$0xf] %v738
  // Predicated region
  $region22: #{encoder_forward.44} parent=0 // pred_check
    _
  $region23: #{encoder_forward.44} parent=0 // pred_check_branch
    %756 = sbr.rel (0) target = $region25
  $region24: #{encoder_forward.44} parent=0 // pred_region
    _
  $region25: #{encoder_forward.44} parent=0 // pred_fallthru
    _
  // Predicated region
  $region26: #{encoder_forward.44} parent=0 // pred_check
    _
  $region27: #{encoder_forward.44} parent=0 // pred_check_branch
    %758 = sbr.rel (0) target = $region29
  $region28: #{encoder_forward.44} parent=0 // pred_region
    _
  $region29: #{encoder_forward.44} parent=0 // pred_fallthru
    _

// kernel: encoder_forward.49
$region0: #{encoder_forward.49}
  #allocation0 [shape = 'u32[]', space=smem, size = 0x4, offset = 0x4, fixed_abs, tag = 'smem constant byte address 0x4 - core index']
  #allocation1 [shape = 'u32[72,128]{1,0:T(1,128)}', space=vmem, size = 0x9000, scoped, tag = 'internal scratch']
  %s0 = inlined_call_operand.vmem [shape: bf16[512,128], index: 0, kind: input, shape index: {}]
  %s1 = inlined_call_operand.vmem [shape: f32[1,128], index: 1, kind: input, shape index: {}]
  %s2 = inlined_call_operand.vmem [shape: f32[1,128], index: 2, kind: input, shape index: {}]
  %s3 = inlined_call_operand.vmem [shape: bf16[128,128], index: 3, kind: input, shape index: {}]
  %s4 = inlined_call_operand.vmem [shape: f32[1,128], index: 4, kind: input, shape index: {}]
  %s5 = inlined_call_operand.vmem [shape: bf16[512,128], index: 5, kind: output, shape index: {}]
  %s6 = sld [smem:[#allocation0]]
  $region30: #{encoder_forward.49} parent=0
    _
  %s8 = ssub.s32 1, %s6
  %s9 = scalar_select 0, %s8, %s6
  // Predicated region
  $region2: #{encoder_forward.49} parent=0 // pred_check
    _
  $region3: #{encoder_forward.49} parent=0 // pred_check_branch
    %11 = sbr.rel (0) target = $region5
  $region4: #{encoder_forward.49} parent=0 // pred_region
    _
  $region5: #{encoder_forward.49} parent=0 // pred_fallthru
    _
  // Predicated region
  $region6: #{encoder_forward.49} parent=0 // pred_check
    _
  $region7: #{encoder_forward.49} parent=0 // pred_check_branch
    %13 = sbr.rel (0) target = $region9
  $region8: #{encoder_forward.49} parent=0 // pred_region
    _
  $region9: #{encoder_forward.49} parent=0 // pred_fallthru
    _
  // Predicated region
  $region10: #{encoder_forward.49} parent=0 // pred_check
    _
  $region11: #{encoder_forward.49} parent=0 // pred_check_branch
    %15 = sbr.rel (0) target = $region13
  $region12: #{encoder_forward.49} parent=0 // pred_region
    _
  $region13: #{encoder_forward.49} parent=0 // pred_fallthru
    _
  // Predicated region
  $region14: #{encoder_forward.49} parent=0 // pred_check
    _
  $region15: #{encoder_forward.49} parent=0 // pred_check_branch
    %17 = sbr.rel (0) target = $region17
  $region16: #{encoder_forward.49} parent=0 // pred_region
    _
  $region17: #{encoder_forward.49} parent=0 // pred_fallthru
    _
  // Predicated region
  $region18: #{encoder_forward.49} parent=0 // pred_check
    _
  $region19: #{encoder_forward.49} parent=0 // pred_check_branch
    %19 = sbr.rel (0) target = $region21
  $region20: #{encoder_forward.49} parent=0 // pred_region
    _
  $region21: #{encoder_forward.49} parent=0 // pred_fallthru
    _
  %v20 = vld [vmem:[%s0] sm:$0xf]
  %v21 = vld [vmem:[%s0 + $0x4] sm:$0xf]
  %v22 = vld [vmem:[%s0 + $0x8] sm:$0xf]
  %v23 = vld [vmem:[%s0 + $0xc] sm:$0xf]
  %v24 = vld [vmem:[%s0 + $0x10] sm:$0xf]
  %v25 = vld [vmem:[%s0 + $0x14] sm:$0xf]
  %v26 = vld [vmem:[%s0 + $0x18] sm:$0xf]
  %v27 = vld [vmem:[%s0 + $0x1c] sm:$0xf]
  %v28 = vld [vmem:[%s0 + $0x20] sm:$0xf]
  %v29 = vld [vmem:[%s0 + $0x24] sm:$0xf]
  %v30 = vld [vmem:[%s0 + $0x28] sm:$0xf]
  %v31 = vld [vmem:[%s0 + $0x2c] sm:$0xf]
  %v32 = vld [vmem:[%s0 + $0x30] sm:$0xf]
  %v33 = vld [vmem:[%s0 + $0x34] sm:$0xf]
  %v34 = vld [vmem:[%s0 + $0x38] sm:$0xf]
  %v35 = vld [vmem:[%s0 + $0x3c] sm:$0xf]
  %v36 = vld [vmem:[%s0 + $0x40] sm:$0xf]
  %v37 = vld [vmem:[%s0 + $0x44] sm:$0xf]
  %v38 = vld [vmem:[%s0 + $0x48] sm:$0xf]
  %v39 = vld [vmem:[%s0 + $0x4c] sm:$0xf]
  %v40 = vld [vmem:[%s0 + $0x50] sm:$0xf]
  %v41 = vld [vmem:[%s0 + $0x54] sm:$0xf]
  %v42 = vld [vmem:[%s0 + $0x58] sm:$0xf]
  %v43 = vld [vmem:[%s0 + $0x5c] sm:$0xf]
  %v44 = vld [vmem:[%s0 + $0x60] sm:$0xf]
  %v45 = vld [vmem:[%s0 + $0x64] sm:$0xf]
  %v46 = vld [vmem:[%s0 + $0x68] sm:$0xf]
  %v47 = vld [vmem:[%s0 + $0x6c] sm:$0xf]
  %v48 = vld [vmem:[%s0 + $0x70] sm:$0xf]
  %v49 = vld [vmem:[%s0 + $0x74] sm:$0xf]
  %v50 = vld [vmem:[%s0 + $0x78] sm:$0xf]
  %v51 = vld [vmem:[%s0 + $0x7c] sm:$0xf]
  %v52 = vld [vmem:[%s0 + $0x80] sm:$0xf]
  %v53 = vld [vmem:[%s0 + $0x84] sm:$0xf]
  %v54 = vld [vmem:[%s0 + $0x88] sm:$0xf]
  %v55 = vld [vmem:[%s0 + $0x8c] sm:$0xf]
  %v56 = vld [vmem:[%s0 + $0x90] sm:$0xf]
  %v57 = vld [vmem:[%s0 + $0x94] sm:$0xf]
  %v58 = vld [vmem:[%s0 + $0x98] sm:$0xf]
  %v59 = vld [vmem:[%s0 + $0x9c] sm:$0xf]
  %v60 = vld [vmem:[%s0 + $0xa0] sm:$0xf]
  %v61 = vld [vmem:[%s0 + $0xa4] sm:$0xf]
  %v62 = vld [vmem:[%s0 + $0xa8] sm:$0xf]
  %v63 = vld [vmem:[%s0 + $0xac] sm:$0xf]
  %v64 = vld [vmem:[%s0 + $0xb0] sm:$0xf]
  %v65 = vld [vmem:[%s0 + $0xb4] sm:$0xf]
  %v66 = vld [vmem:[%s0 + $0xb8] sm:$0xf]
  %v67 = vld [vmem:[%s0 + $0xbc] sm:$0xf]
  %v68 = vld [vmem:[%s0 + $0xc0] sm:$0xf]
  %v69 = vld [vmem:[%s0 + $0xc4] sm:$0xf]
  %v70 = vld [vmem:[%s0 + $0xc8] sm:$0xf]
  %v71 = vld [vmem:[%s0 + $0xcc] sm:$0xf]
  %v72 = vld [vmem:[%s0 + $0xd0] sm:$0xf]
  %v73 = vld [vmem:[%s0 + $0xd4] sm:$0xf]
  %v74 = vld [vmem:[%s0 + $0xd8] sm:$0xf]
  %v75 = vld [vmem:[%s0 + $0xdc] sm:$0xf]
  %v76 = vld [vmem:[%s0 + $0xe0] sm:$0xf]
  %v77 = vld [vmem:[%s0 + $0xe4] sm:$0xf]
  %v78 = vld [vmem:[%s0 + $0xe8] sm:$0xf]
  %v79 = vld [vmem:[%s0 + $0xec] sm:$0xf]
  %v80 = vld [vmem:[%s0 + $0xf0] sm:$0xf]
  %v81 = vld [vmem:[%s0 + $0xf4] sm:$0xf]
  %v82 = vld [vmem:[%s0 + $0xf8] sm:$0xf]
  %v83 = vld [vmem:[%s0 + $0xfc] sm:$0xf]
  %v84 = vunpack.c.l.bf16 %v20
  %v85 = vunpack.c.l.bf16 %v21
  %v86 = vunpack.c.l.bf16 %v22
  %v87 = vunpack.c.l.bf16 %v23
  %v88 = vunpack.c.l.bf16 %v24
  %v89 = vunpack.c.l.bf16 %v25
  %v90 = vunpack.c.l.bf16 %v26
  %v91 = vunpack.c.l.bf16 %v27
  %v92 = vunpack.c.l.bf16 %v28
  %v93 = vunpack.c.l.bf16 %v29
  %v94 = vunpack.c.l.bf16 %v30
  %v95 = vunpack.c.l.bf16 %v31
  %v96 = vunpack.c.l.bf16 %v32
  %v97 = vunpack.c.l.bf16 %v33
  %v98 = vunpack.c.l.bf16 %v34
  %v99 = vunpack.c.l.bf16 %v35
  %v100 = vunpack.c.l.bf16 %v36
  %v101 = vunpack.c.l.bf16 %v37
  %v102 = vunpack.c.l.bf16 %v38
  %v103 = vunpack.c.l.bf16 %v39
  %v104 = vunpack.c.l.bf16 %v40
  %v105 = vunpack.c.l.bf16 %v41
  %v106 = vunpack.c.l.bf16 %v42
  %v107 = vunpack.c.l.bf16 %v43
  %v108 = vunpack.c.l.bf16 %v44
  %v109 = vunpack.c.l.bf16 %v45
  %v110 = vunpack.c.l.bf16 %v46
  %v111 = vunpack.c.l.bf16 %v47
  %v112 = vunpack.c.l.bf16 %v48
  %v113 = vunpack.c.l.bf16 %v49
  %v114 = vunpack.c.l.bf16 %v50
  %v115 = vunpack.c.l.bf16 %v51
  %v116 = vunpack.c.l.bf16 %v52
  %v117 = vunpack.c.l.bf16 %v53
  %v118 = vunpack.c.l.bf16 %v54
  %v119 = vunpack.c.l.bf16 %v55
  %v120 = vunpack.c.l.bf16 %v56
  %v121 = vunpack.c.l.bf16 %v57
  %v122 = vunpack.c.l.bf16 %v58
  %v123 = vunpack.c.l.bf16 %v59
  %v124 = vunpack.c.l.bf16 %v60
  %v125 = vunpack.c.l.bf16 %v61
  %v126 = vunpack.c.l.bf16 %v62
  %v127 = vunpack.c.l.bf16 %v63
  %v128 = vunpack.c.l.bf16 %v64
  %v129 = vunpack.c.l.bf16 %v65
  %v130 = vunpack.c.l.bf16 %v66
  %v131 = vunpack.c.l.bf16 %v67
  %v132 = vunpack.c.l.bf16 %v68
  %v133 = vunpack.c.l.bf16 %v69
  %v134 = vunpack.c.l.bf16 %v70
  %v135 = vunpack.c.l.bf16 %v71
  %v136 = vunpack.c.l.bf16 %v72
  %v137 = vunpack.c.l.bf16 %v73
  %v138 = vunpack.c.l.bf16 %v74
  %v139 = vunpack.c.l.bf16 %v75
  %v140 = vunpack.c.l.bf16 %v76
  %v141 = vunpack.c.l.bf16 %v77
  %v142 = vunpack.c.l.bf16 %v78
  %v143 = vunpack.c.l.bf16 %v79
  %v144 = vunpack.c.l.bf16 %v80
  %v145 = vunpack.c.l.bf16 %v81
  %v146 = vunpack.c.l.bf16 %v82
  %v147 = vunpack.c.l.bf16 %v83
  %v148 = vld [vmem:[%s1] sm:$0x1]
  %v150 = vperm.slane %v148, 0
  %v152 = vmul.f32 %v84, %v150
  %v153 = vmul.f32 %v85, %v150
  %v154 = vmul.f32 %v86, %v150
  %v155 = vmul.f32 %v87, %v150
  %v156 = vmul.f32 %v88, %v150
  %v157 = vmul.f32 %v89, %v150
  %v158 = vmul.f32 %v90, %v150
  %v159 = vmul.f32 %v91, %v150
  %v160 = vmul.f32 %v92, %v150
  %v161 = vmul.f32 %v93, %v150
  %v162 = vmul.f32 %v94, %v150
  %v163 = vmul.f32 %v95, %v150
  %v164 = vmul.f32 %v96, %v150
  %v165 = vmul.f32 %v97, %v150
  %v166 = vmul.f32 %v98, %v150
  %v167 = vmul.f32 %v99, %v150
  %v168 = vmul.f32 %v100, %v150
  %v169 = vmul.f32 %v101, %v150
  %v170 = vmul.f32 %v102, %v150
  %v171 = vmul.f32 %v103, %v150
  %v172 = vmul.f32 %v104, %v150
  %v173 = vmul.f32 %v105, %v150
  %v174 = vmul.f32 %v106, %v150
  %v175 = vmul.f32 %v107, %v150
  %v176 = vmul.f32 %v108, %v150
  %v177 = vmul.f32 %v109, %v150
  %v178 = vmul.f32 %v110, %v150
  %v179 = vmul.f32 %v111, %v150
  %v180 = vmul.f32 %v112, %v150
  %v181 = vmul.f32 %v113, %v150
  %v182 = vmul.f32 %v114, %v150
  %v183 = vmul.f32 %v115, %v150
  %v184 = vmul.f32 %v116, %v150
  %v185 = vmul.f32 %v117, %v150
  %v186 = vmul.f32 %v118, %v150
  %v187 = vmul.f32 %v119, %v150
  %v188 = vmul.f32 %v120, %v150
  %v189 = vmul.f32 %v121, %v150
  %v190 = vmul.f32 %v122, %v150
  %v191 = vmul.f32 %v123, %v150
  %v192 = vmul.f32 %v124, %v150
  %v193 = vmul.f32 %v125, %v150
  %v194 = vmul.f32 %v126, %v150
  %v195 = vmul.f32 %v127, %v150
  %v196 = vmul.f32 %v128, %v150
  %v197 = vmul.f32 %v129, %v150
  %v198 = vmul.f32 %v130, %v150
  %v199 = vmul.f32 %v131, %v150
  %v200 = vmul.f32 %v132, %v150
  %v201 = vmul.f32 %v133, %v150
  %v202 = vmul.f32 %v134, %v150
  %v203 = vmul.f32 %v135, %v150
  %v204 = vmul.f32 %v136, %v150
  %v205 = vmul.f32 %v137, %v150
  %v206 = vmul.f32 %v138, %v150
  %v207 = vmul.f32 %v139, %v150
  %v208 = vmul.f32 %v140, %v150
  %v209 = vmul.f32 %v141, %v150
  %v210 = vmul.f32 %v142, %v150
  %v211 = vmul.f32 %v143, %v150
  %v212 = vmul.f32 %v144, %v150
  %v213 = vmul.f32 %v145, %v150
  %v214 = vmul.f32 %v146, %v150
  %v215 = vmul.f32 %v147, %v150
  %v216 = vld [vmem:[%s2] sm:$0x1]
  %v218 = vperm.slane %v216, 0
  %v220 = vadd.f32 %v152, %v218
  %v221 = vadd.f32 %v153, %v218
  %v222 = vadd.f32 %v154, %v218
  %v223 = vadd.f32 %v155, %v218
  %v224 = vadd.f32 %v156, %v218
  %v225 = vadd.f32 %v157, %v218
  %v226 = vadd.f32 %v158, %v218
  %v227 = vadd.f32 %v159, %v218
  %v228 = vadd.f32 %v160, %v218
  %v229 = vadd.f32 %v161, %v218
  %v230 = vadd.f32 %v162, %v218
  %v231 = vadd.f32 %v163, %v218
  %v232 = vadd.f32 %v164, %v218
  %v233 = vadd.f32 %v165, %v218
  %v234 = vadd.f32 %v166, %v218
  %v235 = vadd.f32 %v167, %v218
  %v236 = vadd.f32 %v168, %v218
  %v237 = vadd.f32 %v169, %v218
  %v238 = vadd.f32 %v170, %v218
  %v239 = vadd.f32 %v171, %v218
  %v240 = vadd.f32 %v172, %v218
  %v241 = vadd.f32 %v173, %v218
  %v242 = vadd.f32 %v174, %v218
  %v243 = vadd.f32 %v175, %v218
  %v244 = vadd.f32 %v176, %v218
  %v245 = vadd.f32 %v177, %v218
  %v246 = vadd.f32 %v178, %v218
  %v247 = vadd.f32 %v179, %v218
  %v248 = vadd.f32 %v180, %v218
  %v249 = vadd.f32 %v181, %v218
  %v250 = vadd.f32 %v182, %v218
  %v251 = vadd.f32 %v183, %v218
  %v252 = vadd.f32 %v184, %v218
  %v253 = vadd.f32 %v185, %v218
  %v254 = vadd.f32 %v186, %v218
  %v255 = vadd.f32 %v187, %v218
  %v256 = vadd.f32 %v188, %v218
  %v257 = vadd.f32 %v189, %v218
  %v258 = vadd.f32 %v190, %v218
  %v259 = vadd.f32 %v191, %v218
  %v260 = vadd.f32 %v192, %v218
  %v261 = vadd.f32 %v193, %v218
  %v262 = vadd.f32 %v194, %v218
  %v263 = vadd.f32 %v195, %v218
  %v264 = vadd.f32 %v196, %v218
  %v265 = vadd.f32 %v197, %v218
  %v266 = vadd.f32 %v198, %v218
  %v267 = vadd.f32 %v199, %v218
  %v268 = vadd.f32 %v200, %v218
  %v269 = vadd.f32 %v201, %v218
  %v270 = vadd.f32 %v202, %v218
  %v271 = vadd.f32 %v203, %v218
  %v272 = vadd.f32 %v204, %v218
  %v273 = vadd.f32 %v205, %v218
  %v274 = vadd.f32 %v206, %v218
  %v275 = vadd.f32 %v207, %v218
  %v276 = vadd.f32 %v208, %v218
  %v277 = vadd.f32 %v209, %v218
  %v278 = vadd.f32 %v210, %v218
  %v279 = vadd.f32 %v211, %v218
  %v280 = vadd.f32 %v212, %v218
  %v281 = vadd.f32 %v213, %v218
  %v282 = vadd.f32 %v214, %v218
  %v283 = vadd.f32 %v215, %v218
  %vm284 = vcmp.gt.f32.partialorder %v220, 0.0
  %vm285 = vcmp.gt.f32.partialorder %v221, 0.0
  %vm286 = vcmp.gt.f32.partialorder %v222, 0.0
  %vm287 = vcmp.gt.f32.partialorder %v223, 0.0
  %vm288 = vcmp.gt.f32.partialorder %v224, 0.0
  %vm289 = vcmp.gt.f32.partialorder %v225, 0.0
  %vm290 = vcmp.gt.f32.partialorder %v226, 0.0
  %vm291 = vcmp.gt.f32.partialorder %v227, 0.0
  %vm292 = vcmp.gt.f32.partialorder %v228, 0.0
  %vm293 = vcmp.gt.f32.partialorder %v229, 0.0
  %vm294 = vcmp.gt.f32.partialorder %v230, 0.0
  %vm295 = vcmp.gt.f32.partialorder %v231, 0.0
  %vm296 = vcmp.gt.f32.partialorder %v232, 0.0
  %vm297 = vcmp.gt.f32.partialorder %v233, 0.0
  %vm298 = vcmp.gt.f32.partialorder %v234, 0.0
  %vm299 = vcmp.gt.f32.partialorder %v235, 0.0
  %vm300 = vcmp.gt.f32.partialorder %v236, 0.0
  %vm301 = vcmp.gt.f32.partialorder %v237, 0.0
  %vm302 = vcmp.gt.f32.partialorder %v238, 0.0
  %vm303 = vcmp.gt.f32.partialorder %v239, 0.0
  %vm304 = vcmp.gt.f32.partialorder %v240, 0.0
  %vm305 = vcmp.gt.f32.partialorder %v241, 0.0
  %vm306 = vcmp.gt.f32.partialorder %v242, 0.0
  %vm307 = vcmp.gt.f32.partialorder %v243, 0.0
  %vm308 = vcmp.gt.f32.partialorder %v244, 0.0
  %vm309 = vcmp.gt.f32.partialorder %v245, 0.0
  %vm310 = vcmp.gt.f32.partialorder %v246, 0.0
  %vm311 = vcmp.gt.f32.partialorder %v247, 0.0
  %vm312 = vcmp.gt.f32.partialorder %v248, 0.0
  %vm313 = vcmp.gt.f32.partialorder %v249, 0.0
  %vm314 = vcmp.gt.f32.partialorder %v250, 0.0
  %vm315 = vcmp.gt.f32.partialorder %v251, 0.0
  %vm316 = vcmp.gt.f32.partialorder %v252, 0.0
  %vm317 = vcmp.gt.f32.partialorder %v253, 0.0
  %vm318 = vcmp.gt.f32.partialorder %v254, 0.0
  %vm319 = vcmp.gt.f32.partialorder %v255, 0.0
  %vm320 = vcmp.gt.f32.partialorder %v256, 0.0
  %vm321 = vcmp.gt.f32.partialorder %v257, 0.0
  %vm322 = vcmp.gt.f32.partialorder %v258, 0.0
  %vm323 = vcmp.gt.f32.partialorder %v259, 0.0
  %vm324 = vcmp.gt.f32.partialorder %v260, 0.0
  %vm325 = vcmp.gt.f32.partialorder %v261, 0.0
  %vm326 = vcmp.gt.f32.partialorder %v262, 0.0
  %vm327 = vcmp.gt.f32.partialorder %v263, 0.0
  %vm328 = vcmp.gt.f32.partialorder %v264, 0.0
  %vm329 = vcmp.gt.f32.partialorder %v265, 0.0
  %vm330 = vcmp.gt.f32.partialorder %v266, 0.0
  %vm331 = vcmp.gt.f32.partialorder %v267, 0.0
  %vm332 = vcmp.gt.f32.partialorder %v268, 0.0
  %vm333 = vcmp.gt.f32.partialorder %v269, 0.0
  %vm334 = vcmp.gt.f32.partialorder %v270, 0.0
  %vm335 = vcmp.gt.f32.partialorder %v271, 0.0
  %vm336 = vcmp.gt.f32.partialorder %v272, 0.0
  %vm337 = vcmp.gt.f32.partialorder %v273, 0.0
  %vm338 = vcmp.gt.f32.partialorder %v274, 0.0
  %vm339 = vcmp.gt.f32.partialorder %v275, 0.0
  %vm340 = vcmp.gt.f32.partialorder %v276, 0.0
  %vm341 = vcmp.gt.f32.partialorder %v277, 0.0
  %vm342 = vcmp.gt.f32.partialorder %v278, 0.0
  %vm343 = vcmp.gt.f32.partialorder %v279, 0.0
  %vm344 = vcmp.gt.f32.partialorder %v280, 0.0
  %vm345 = vcmp.gt.f32.partialorder %v281, 0.0
  %vm346 = vcmp.gt.f32.partialorder %v282, 0.0
  %vm347 = vcmp.gt.f32.partialorder %v283, 0.0
  %v348 = vmul.f32 %v220, 0.01
  %v349 = vmul.f32 %v221, 0.01
  %v350 = vmul.f32 %v222, 0.01
  %v351 = vmul.f32 %v223, 0.01
  %v352 = vmul.f32 %v224, 0.01
  %v353 = vmul.f32 %v225, 0.01
  %v354 = vmul.f32 %v226, 0.01
  %v355 = vmul.f32 %v227, 0.01
  %v356 = vmul.f32 %v228, 0.01
  %v357 = vmul.f32 %v229, 0.01
  %v358 = vmul.f32 %v230, 0.01
  %v359 = vmul.f32 %v231, 0.01
  %v360 = vmul.f32 %v232, 0.01
  %v361 = vmul.f32 %v233, 0.01
  %v362 = vmul.f32 %v234, 0.01
  %v363 = vmul.f32 %v235, 0.01
  %v364 = vmul.f32 %v236, 0.01
  %v365 = vmul.f32 %v237, 0.01
  %v366 = vmul.f32 %v238, 0.01
  %v367 = vmul.f32 %v239, 0.01
  %v368 = vmul.f32 %v240, 0.01
  %v369 = vmul.f32 %v241, 0.01
  %v370 = vmul.f32 %v242, 0.01
  %v371 = vmul.f32 %v243, 0.01
  %v372 = vmul.f32 %v244, 0.01
  %v373 = vmul.f32 %v245, 0.01
  %v374 = vmul.f32 %v246, 0.01
  %v375 = vmul.f32 %v247, 0.01
  %v376 = vmul.f32 %v248, 0.01
  %v377 = vmul.f32 %v249, 0.01
  %v378 = vmul.f32 %v250, 0.01
  %v379 = vmul.f32 %v251, 0.01
  %v380 = vmul.f32 %v252, 0.01
  %v381 = vmul.f32 %v253, 0.01
  %v382 = vmul.f32 %v254, 0.01
  %v383 = vmul.f32 %v255, 0.01
  %v384 = vmul.f32 %v256, 0.01
  %v385 = vmul.f32 %v257, 0.01
  %v386 = vmul.f32 %v258, 0.01
  %v387 = vmul.f32 %v259, 0.01
  %v388 = vmul.f32 %v260, 0.01
  %v389 = vmul.f32 %v261, 0.01
  %v390 = vmul.f32 %v262, 0.01
  %v391 = vmul.f32 %v263, 0.01
  %v392 = vmul.f32 %v264, 0.01
  %v393 = vmul.f32 %v265, 0.01
  %v394 = vmul.f32 %v266, 0.01
  %v395 = vmul.f32 %v267, 0.01
  %v396 = vmul.f32 %v268, 0.01
  %v397 = vmul.f32 %v269, 0.01
  %v398 = vmul.f32 %v270, 0.01
  %v399 = vmul.f32 %v271, 0.01
  %v400 = vmul.f32 %v272, 0.01
  %v401 = vmul.f32 %v273, 0.01
  %v402 = vmul.f32 %v274, 0.01
  %v403 = vmul.f32 %v275, 0.01
  %v404 = vmul.f32 %v276, 0.01
  %v405 = vmul.f32 %v277, 0.01
  %v406 = vmul.f32 %v278, 0.01
  %v407 = vmul.f32 %v279, 0.01
  %v408 = vmul.f32 %v280, 0.01
  %v409 = vmul.f32 %v281, 0.01
  %v410 = vmul.f32 %v282, 0.01
  %v411 = vmul.f32 %v283, 0.01
  %v412 = vsel %vm284, %v220, %v348
  %v413 = vsel %vm285, %v221, %v349
  %v414 = vsel %vm286, %v222, %v350
  %v415 = vsel %vm287, %v223, %v351
  %v416 = vsel %vm288, %v224, %v352
  %v417 = vsel %vm289, %v225, %v353
  %v418 = vsel %vm290, %v226, %v354
  %v419 = vsel %vm291, %v227, %v355
  %v420 = vsel %vm292, %v228, %v356
  %v421 = vsel %vm293, %v229, %v357
  %v422 = vsel %vm294, %v230, %v358
  %v423 = vsel %vm295, %v231, %v359
  %v424 = vsel %vm296, %v232, %v360
  %v425 = vsel %vm297, %v233, %v361
  %v426 = vsel %vm298, %v234, %v362
  %v427 = vsel %vm299, %v235, %v363
  %v428 = vsel %vm300, %v236, %v364
  %v429 = vsel %vm301, %v237, %v365
  %v430 = vsel %vm302, %v238, %v366
  %v431 = vsel %vm303, %v239, %v367
  %v432 = vsel %vm304, %v240, %v368
  %v433 = vsel %vm305, %v241, %v369
  %v434 = vsel %vm306, %v242, %v370
  %v435 = vsel %vm307, %v243, %v371
  %v436 = vsel %vm308, %v244, %v372
  %v437 = vsel %vm309, %v245, %v373
  %v438 = vsel %vm310, %v246, %v374
  %v439 = vsel %vm311, %v247, %v375
  %v440 = vsel %vm312, %v248, %v376
  %v441 = vsel %vm313, %v249, %v377
  %v442 = vsel %vm314, %v250, %v378
  %v443 = vsel %vm315, %v251, %v379
  %v444 = vsel %vm316, %v252, %v380
  %v445 = vsel %vm317, %v253, %v381
  %v446 = vsel %vm318, %v254, %v382
  %v447 = vsel %vm319, %v255, %v383
  %v448 = vsel %vm320, %v256, %v384
  %v449 = vsel %vm321, %v257, %v385
  %v450 = vsel %vm322, %v258, %v386
  %v451 = vsel %vm323, %v259, %v387
  %v452 = vsel %vm324, %v260, %v388
  %v453 = vsel %vm325, %v261, %v389
  %v454 = vsel %vm326, %v262, %v390
  %v455 = vsel %vm327, %v263, %v391
  %v456 = vsel %vm328, %v264, %v392
  %v457 = vsel %vm329, %v265, %v393
  %v458 = vsel %vm330, %v266, %v394
  %v459 = vsel %vm331, %v267, %v395
  %v460 = vsel %vm332, %v268, %v396
  %v461 = vsel %vm333, %v269, %v397
  %v462 = vsel %vm334, %v270, %v398
  %v463 = vsel %vm335, %v271, %v399
  %v464 = vsel %vm336, %v272, %v400
  %v465 = vsel %vm337, %v273, %v401
  %v466 = vsel %vm338, %v274, %v402
  %v467 = vsel %vm339, %v275, %v403
  %v468 = vsel %vm340, %v276, %v404
  %v469 = vsel %vm341, %v277, %v405
  %v470 = vsel %vm342, %v278, %v406
  %v471 = vsel %vm343, %v279, %v407
  %v472 = vsel %vm344, %v280, %v408
  %v473 = vsel %vm345, %v281, %v409
  %v474 = vsel %vm346, %v282, %v410
  %v475 = vsel %vm347, %v283, %v411
  %v476 = vpack.c.bf16 %v413, %v412
  %v477 = vpack.c.bf16 %v415, %v414
  %v478 = vpack.c.bf16 %v417, %v416
  %v479 = vpack.c.bf16 %v419, %v418
  %v480 = vpack.c.bf16 %v421, %v420
  %v481 = vpack.c.bf16 %v423, %v422
  %v482 = vpack.c.bf16 %v425, %v424
  %v483 = vpack.c.bf16 %v427, %v426
  %v484 = vpack.c.bf16 %v429, %v428
  %v485 = vpack.c.bf16 %v431, %v430
  %v486 = vpack.c.bf16 %v433, %v432
  %v487 = vpack.c.bf16 %v435, %v434
  %v488 = vpack.c.bf16 %v437, %v436
  %v489 = vpack.c.bf16 %v439, %v438
  %v490 = vpack.c.bf16 %v441, %v440
  %v491 = vpack.c.bf16 %v443, %v442
  %v492 = vpack.c.bf16 %v445, %v444
  %v493 = vpack.c.bf16 %v447, %v446
  %v494 = vpack.c.bf16 %v449, %v448
  %v495 = vpack.c.bf16 %v451, %v450
  %v496 = vpack.c.bf16 %v453, %v452
  %v497 = vpack.c.bf16 %v455, %v454
  %v498 = vpack.c.bf16 %v457, %v456
  %v499 = vpack.c.bf16 %v459, %v458
  %v500 = vpack.c.bf16 %v461, %v460
  %v501 = vpack.c.bf16 %v463, %v462
  %v502 = vpack.c.bf16 %v465, %v464
  %v503 = vpack.c.bf16 %v467, %v466
  %v504 = vpack.c.bf16 %v469, %v468
  %v505 = vpack.c.bf16 %v471, %v470
  %v506 = vpack.c.bf16 %v473, %v472
  %v507 = vpack.c.bf16 %v475, %v474
  %v508 = vld [vmem:[%s3] sm:$0xf]
  %v509 = vld [vmem:[%s3 + $0x4] sm:$0xf]
  %v510 = vld [vmem:[%s3 + $0x8] sm:$0xf]
  %v511 = vld [vmem:[%s3 + $0xc] sm:$0xf]
  %v512 = vld [vmem:[%s3 + $0x10] sm:$0xf]
  %v513 = vld [vmem:[%s3 + $0x14] sm:$0xf]
  %v514 = vld [vmem:[%s3 + $0x18] sm:$0xf]
  %v515 = vld [vmem:[%s3 + $0x1c] sm:$0xf]
  %v516 = vld [vmem:[%s3 + $0x20] sm:$0xf]
  %v517 = vld [vmem:[%s3 + $0x24] sm:$0xf]
  %v518 = vld [vmem:[%s3 + $0x28] sm:$0xf]
  %v519 = vld [vmem:[%s3 + $0x2c] sm:$0xf]
  %v520 = vld [vmem:[%s3 + $0x30] sm:$0xf]
  %v521 = vld [vmem:[%s3 + $0x34] sm:$0xf]
  %v522 = vld [vmem:[%s3 + $0x38] sm:$0xf]
  %v523 = vld [vmem:[%s3 + $0x3c] sm:$0xf]
  %v524 = vld [vmem:[%s4] sm:$0x1]
  %v526 = vperm.slane %v524, 0
  %v544 = vunpack.c.l.b16 %v508
  %v545 = vunpack.c.l.b16 %v509
  %v546 = vunpack.c.l.b16 %v510
  %v547 = vunpack.c.l.b16 %v511
  %v548 = vunpack.c.l.b16 %v512
  %v549 = vunpack.c.l.b16 %v513
  %v550 = vunpack.c.l.b16 %v514
  %v551 = vunpack.c.l.b16 %v515
  %v552 = vunpack.c.l.b16 %v516
  %v553 = vunpack.c.l.b16 %v517
  %v554 = vunpack.c.l.b16 %v518
  %v555 = vunpack.c.l.b16 %v519
  %v556 = vunpack.c.l.b16 %v520
  %v557 = vunpack.c.l.b16 %v521
  %v558 = vunpack.c.l.b16 %v522
  %v559 = vunpack.c.l.b16 %v523
  %v560 = vpack.c.b16 %v545, %v544
  %v561 = vpack.c.b16 %v547, %v546
  %v562 = vpack.c.b16 %v549, %v548
  %v563 = vpack.c.b16 %v551, %v550
  %v564 = vpack.c.b16 %v553, %v552
  %v565 = vpack.c.b16 %v555, %v554
  %v566 = vpack.c.b16 %v557, %v556
  %v567 = vpack.c.b16 %v559, %v558
  %576 = vmatpush.bf16.msra.mxu0 %v567
  %577 = vmatpush.bf16.msra.mxu0 %v566
  %578 = vmatpush.bf16.msra.mxu0 %v565
  %579 = vmatpush.bf16.msra.mxu0 %v564
  %580 = vmatpush.bf16.msra.mxu0 %v563
  %581 = vmatpush.bf16.msra.mxu0 %v562
  %582 = vmatpush.bf16.msra.mxu0 %v561
  %583 = vmatpush.bf16.msra.mxu0 %v560
  %584 = vmatmul.bf16.gmra.mxu0 %v476
  %v585 = vpop.f32.mrf.mxu0
  %v586 = vadd.f32 %v526, %v585
  %v587 = vpop.f32.mrf.mxu0
  %v588 = vadd.f32 %v526, %v587
  %589 = vmatmul.bf16.gmra.mxu0 %v477
  %v590 = vpop.f32.mrf.mxu0
  %v591 = vadd.f32 %v526, %v590
  %v592 = vpop.f32.mrf.mxu0
  %v593 = vadd.f32 %v526, %v592
  %594 = vmatmul.bf16.gmra.mxu0 %v478
  %v595 = vpop.f32.mrf.mxu0
  %v596 = vadd.f32 %v526, %v595
  %v597 = vpop.f32.mrf.mxu0
  %v598 = vadd.f32 %v526, %v597
  %599 = vmatmul.bf16.gmra.mxu0 %v479
  %v600 = vpop.f32.mrf.mxu0
  %v601 = vadd.f32 %v526, %v600
  %v602 = vpop.f32.mrf.mxu0
  %v603 = vadd.f32 %v526, %v602
  %604 = vmatmul.bf16.gmra.mxu0 %v480
  %v605 = vpop.f32.mrf.mxu0
  %v606 = vadd.f32 %v526, %v605
  %v607 = vpop.f32.mrf.mxu0
  %v608 = vadd.f32 %v526, %v607
  %609 = vmatmul.bf16.gmra.mxu0 %v481
  %v610 = vpop.f32.mrf.mxu0
  %v611 = vadd.f32 %v526, %v610
  %v612 = vpop.f32.mrf.mxu0
  %v613 = vadd.f32 %v526, %v612
  %614 = vmatmul.bf16.gmra.mxu0 %v482
  %v615 = vpop.f32.mrf.mxu0
  %v616 = vadd.f32 %v526, %v615
  %v617 = vpop.f32.mrf.mxu0
  %v618 = vadd.f32 %v526, %v617
  %619 = vmatmul.bf16.gmra.mxu0 %v483
  %v620 = vpop.f32.mrf.mxu0
  %v621 = vadd.f32 %v526, %v620
  %v622 = vpop.f32.mrf.mxu0
  %v623 = vadd.f32 %v526, %v622
  %624 = vmatmul.bf16.gmra.mxu0 %v484
  %v625 = vpop.f32.mrf.mxu0
  %v626 = vadd.f32 %v526, %v625
  %v627 = vpop.f32.mrf.mxu0
  %v628 = vadd.f32 %v526, %v627
  %629 = vmatmul.bf16.gmra.mxu0 %v485
  %v630 = vpop.f32.mrf.mxu0
  %v631 = vadd.f32 %v526, %v630
  %v632 = vpop.f32.mrf.mxu0
  %v633 = vadd.f32 %v526, %v632
  %634 = vmatmul.bf16.gmra.mxu0 %v486
  %v635 = vpop.f32.mrf.mxu0
  %v636 = vadd.f32 %v526, %v635
  %v637 = vpop.f32.mrf.mxu0
  %v638 = vadd.f32 %v526, %v637
  %639 = vmatmul.bf16.gmra.mxu0 %v487
  %v640 = vpop.f32.mrf.mxu0
  %v641 = vadd.f32 %v526, %v640
  %v642 = vpop.f32.mrf.mxu0
  %v643 = vadd.f32 %v526, %v642
  %644 = vmatmul.bf16.gmra.mxu0 %v488
  %v645 = vpop.f32.mrf.mxu0
  %v646 = vadd.f32 %v526, %v645
  %v647 = vpop.f32.mrf.mxu0
  %v648 = vadd.f32 %v526, %v647
  %649 = vmatmul.bf16.gmra.mxu0 %v489
  %v650 = vpop.f32.mrf.mxu0
  %v651 = vadd.f32 %v526, %v650
  %v652 = vpop.f32.mrf.mxu0
  %v653 = vadd.f32 %v526, %v652
  %654 = vmatmul.bf16.gmra.mxu0 %v490
  %v655 = vpop.f32.mrf.mxu0
  %v656 = vadd.f32 %v526, %v655
  %v657 = vpop.f32.mrf.mxu0
  %v658 = vadd.f32 %v526, %v657
  %659 = vmatmul.bf16.gmra.mxu0 %v491
  %v660 = vpop.f32.mrf.mxu0
  %v661 = vadd.f32 %v526, %v660
  %v662 = vpop.f32.mrf.mxu0
  %v663 = vadd.f32 %v526, %v662
  %664 = vmatmul.bf16.gmra.mxu0 %v492
  %v665 = vpop.f32.mrf.mxu0
  %v666 = vadd.f32 %v526, %v665
  %v667 = vpop.f32.mrf.mxu0
  %v668 = vadd.f32 %v526, %v667
  %669 = vmatmul.bf16.gmra.mxu0 %v493
  %v670 = vpop.f32.mrf.mxu0
  %v671 = vadd.f32 %v526, %v670
  %v672 = vpop.f32.mrf.mxu0
  %v673 = vadd.f32 %v526, %v672
  %674 = vmatmul.bf16.gmra.mxu0 %v494
  %v675 = vpop.f32.mrf.mxu0
  %v676 = vadd.f32 %v526, %v675
  %v677 = vpop.f32.mrf.mxu0
  %v678 = vadd.f32 %v526, %v677
  %679 = vmatmul.bf16.gmra.mxu0 %v495
  %v680 = vpop.f32.mrf.mxu0
  %v681 = vadd.f32 %v526, %v680
  %v682 = vpop.f32.mrf.mxu0
  %v683 = vadd.f32 %v526, %v682
  %684 = vmatmul.bf16.gmra.mxu0 %v496
  %v685 = vpop.f32.mrf.mxu0
  %v686 = vadd.f32 %v526, %v685
  %v687 = vpop.f32.mrf.mxu0
  %v688 = vadd.f32 %v526, %v687
  %689 = vmatmul.bf16.gmra.mxu0 %v497
  %v690 = vpop.f32.mrf.mxu0
  %v691 = vadd.f32 %v526, %v690
  %v692 = vpop.f32.mrf.mxu0
  %v693 = vadd.f32 %v526, %v692
  %694 = vmatmul.bf16.gmra.mxu0 %v498
  %v695 = vpop.f32.mrf.mxu0
  %v696 = vadd.f32 %v526, %v695
  %v697 = vpop.f32.mrf.mxu0
  %v698 = vadd.f32 %v526, %v697
  %699 = vmatmul.bf16.gmra.mxu0 %v499
  %v700 = vpop.f32.mrf.mxu0
  %v701 = vadd.f32 %v526, %v700
  %v702 = vpop.f32.mrf.mxu0
  %v703 = vadd.f32 %v526, %v702
  %704 = vmatmul.bf16.gmra.mxu0 %v500
  %v705 = vpop.f32.mrf.mxu0
  %v706 = vadd.f32 %v526, %v705
  %v707 = vpop.f32.mrf.mxu0
  %v708 = vadd.f32 %v526, %v707
  %709 = vmatmul.bf16.gmra.mxu0 %v501
  %v710 = vpop.f32.mrf.mxu0
  %v711 = vadd.f32 %v526, %v710
  %v712 = vpop.f32.mrf.mxu0
  %v713 = vadd.f32 %v526, %v712
  %714 = vmatmul.bf16.gmra.mxu0 %v502
  %v715 = vpop.f32.mrf.mxu0
  %v716 = vadd.f32 %v526, %v715
  %v717 = vpop.f32.mrf.mxu0
  %v718 = vadd.f32 %v526, %v717
  %719 = vmatmul.bf16.gmra.mxu0 %v503
  %v720 = vpop.f32.mrf.mxu0
  %v721 = vadd.f32 %v526, %v720
  %v722 = vpop.f32.mrf.mxu0
  %v723 = vadd.f32 %v526, %v722
  %724 = vmatmul.bf16.gmra.mxu0 %v504
  %v725 = vpop.f32.mrf.mxu0
  %v726 = vadd.f32 %v526, %v725
  %v727 = vpop.f32.mrf.mxu0
  %v728 = vadd.f32 %v526, %v727
  %729 = vmatmul.bf16.gmra.mxu0 %v505
  %v730 = vpop.f32.mrf.mxu0
  %v731 = vadd.f32 %v526, %v730
  %v732 = vpop.f32.mrf.mxu0
  %v733 = vadd.f32 %v526, %v732
  %734 = vmatmul.bf16.gmra.mxu0 %v506
  %v735 = vpop.f32.mrf.mxu0
  %v736 = vadd.f32 %v526, %v735
  %v737 = vpop.f32.mrf.mxu0
  %v738 = vadd.f32 %v526, %v737
  %739 = vmatmul.bf16.gmra.mxu0 %v507
  %v740 = vpop.f32.mrf.mxu0
  %v741 = vadd.f32 %v526, %v740
  %v742 = vpop.f32.mrf.mxu0
  %v743 = vadd.f32 %v526, %v742
  %744 = vdwg.mxu0
  %v745 = vpack.c.bf16 %v586, %v586
  %v746 = vpack.c.bf16 %v588, %v588
  %v747 = vpack.c.bf16 %v591, %v591
  %v748 = vpack.c.bf16 %v593, %v593
  %v749 = vpack.c.bf16 %v596, %v596
  %v750 = vpack.c.bf16 %v598, %v598
  %v751 = vpack.c.bf16 %v601, %v601
  %v752 = vpack.c.bf16 %v603, %v603
  %v753 = vpack.c.bf16 %v606, %v606
  %v754 = vpack.c.bf16 %v608, %v608
  %v755 = vpack.c.bf16 %v611, %v611
  %v756 = vpack.c.bf16 %v613, %v613
  %v757 = vpack.c.bf16 %v616, %v616
  %v758 = vpack.c.bf16 %v618, %v618
  %v759 = vpack.c.bf16 %v621, %v621
  %v760 = vpack.c.bf16 %v623, %v623
  %v761 = vpack.c.bf16 %v626, %v626
  %v762 = vpack.c.bf16 %v628, %v628
  %v763 = vpack.c.bf16 %v631, %v631
  %v764 = vpack.c.bf16 %v633, %v633
  %v765 = vpack.c.bf16 %v636, %v636
  %v766 = vpack.c.bf16 %v638, %v638
  %v767 = vpack.c.bf16 %v641, %v641
  %v768 = vpack.c.bf16 %v643, %v643
  %v769 = vpack.c.bf16 %v646, %v646
  %v770 = vpack.c.bf16 %v648, %v648
  %v771 = vpack.c.bf16 %v651, %v651
  %v772 = vpack.c.bf16 %v653, %v653
  %v773 = vpack.c.bf16 %v656, %v656
  %v774 = vpack.c.bf16 %v658, %v658
  %v775 = vpack.c.bf16 %v661, %v661
  %v776 = vpack.c.bf16 %v663, %v663
  %v777 = vpack.c.bf16 %v666, %v666
  %v778 = vpack.c.bf16 %v668, %v668
  %v779 = vpack.c.bf16 %v671, %v671
  %v780 = vpack.c.bf16 %v673, %v673
  %v781 = vpack.c.bf16 %v676, %v676
  %v782 = vpack.c.bf16 %v678, %v678
  %v783 = vpack.c.bf16 %v681, %v681
  %v784 = vpack.c.bf16 %v683, %v683
  %v785 = vpack.c.bf16 %v686, %v686
  %v786 = vpack.c.bf16 %v688, %v688
  %v787 = vpack.c.bf16 %v691, %v691
  %v788 = vpack.c.bf16 %v693, %v693
  %v789 = vpack.c.bf16 %v696, %v696
  %v790 = vpack.c.bf16 %v698, %v698
  %v791 = vpack.c.bf16 %v701, %v701
  %v792 = vpack.c.bf16 %v703, %v703
  %v793 = vpack.c.bf16 %v706, %v706
  %v794 = vpack.c.bf16 %v708, %v708
  %v795 = vpack.c.bf16 %v711, %v711
  %v796 = vpack.c.bf16 %v713, %v713
  %v797 = vpack.c.bf16 %v716, %v716
  %v798 = vpack.c.bf16 %v718, %v718
  %v799 = vpack.c.bf16 %v721, %v721
  %v800 = vpack.c.bf16 %v723, %v723
  %v801 = vpack.c.bf16 %v726, %v726
  %v802 = vpack.c.bf16 %v728, %v728
  %v803 = vpack.c.bf16 %v731, %v731
  %v804 = vpack.c.bf16 %v733, %v733
  %v805 = vpack.c.bf16 %v736, %v736
  %v806 = vpack.c.bf16 %v738, %v738
  %v807 = vpack.c.bf16 %v741, %v741
  %v808 = vpack.c.bf16 %v743, %v743
  %809 = vst [vmem:[%s5] sm:$0xf] %v745
  %810 = vst [vmem:[%s5 + $0x4] sm:$0xf] %v746
  %811 = vst [vmem:[%s5 + $0x8] sm:$0xf] %v747
  %812 = vst [vmem:[%s5 + $0xc] sm:$0xf] %v748
  %813 = vst [vmem:[%s5 + $0x10] sm:$0xf] %v749
  %814 = vst [vmem:[%s5 + $0x14] sm:$0xf] %v750
  %815 = vst [vmem:[%s5 + $0x18] sm:$0xf] %v751
  %816 = vst [vmem:[%s5 + $0x1c] sm:$0xf] %v752
  %817 = vst [vmem:[%s5 + $0x20] sm:$0xf] %v753
  %818 = vst [vmem:[%s5 + $0x24] sm:$0xf] %v754
  %819 = vst [vmem:[%s5 + $0x28] sm:$0xf] %v755
  %820 = vst [vmem:[%s5 + $0x2c] sm:$0xf] %v756
  %821 = vst [vmem:[%s5 + $0x30] sm:$0xf] %v757
  %822 = vst [vmem:[%s5 + $0x34] sm:$0xf] %v758
  %823 = vst [vmem:[%s5 + $0x38] sm:$0xf] %v759
  %824 = vst [vmem:[%s5 + $0x3c] sm:$0xf] %v760
  %825 = vst [vmem:[%s5 + $0x40] sm:$0xf] %v761
  %826 = vst [vmem:[%s5 + $0x44] sm:$0xf] %v762
  %827 = vst [vmem:[%s5 + $0x48] sm:$0xf] %v763
  %828 = vst [vmem:[%s5 + $0x4c] sm:$0xf] %v764
  %829 = vst [vmem:[%s5 + $0x50] sm:$0xf] %v765
  %830 = vst [vmem:[%s5 + $0x54] sm:$0xf] %v766
  %831 = vst [vmem:[%s5 + $0x58] sm:$0xf] %v767
  %832 = vst [vmem:[%s5 + $0x5c] sm:$0xf] %v768
  %833 = vst [vmem:[%s5 + $0x60] sm:$0xf] %v769
  %834 = vst [vmem:[%s5 + $0x64] sm:$0xf] %v770
  %835 = vst [vmem:[%s5 + $0x68] sm:$0xf] %v771
  %836 = vst [vmem:[%s5 + $0x6c] sm:$0xf] %v772
  %837 = vst [vmem:[%s5 + $0x70] sm:$0xf] %v773
  %838 = vst [vmem:[%s5 + $0x74] sm:$0xf] %v774
  %839 = vst [vmem:[%s5 + $0x78] sm:$0xf] %v775
  %840 = vst [vmem:[%s5 + $0x7c] sm:$0xf] %v776
  %841 = vst [vmem:[%s5 + $0x80] sm:$0xf] %v777
  %842 = vst [vmem:[%s5 + $0x84] sm:$0xf] %v778
  %843 = vst [vmem:[%s5 + $0x88] sm:$0xf] %v779
  %844 = vst [vmem:[%s5 + $0x8c] sm:$0xf] %v780
  %845 = vst [vmem:[%s5 + $0x90] sm:$0xf] %v781
  %846 = vst [vmem:[%s5 + $0x94] sm:$0xf] %v782
  %847 = vst [vmem:[%s5 + $0x98] sm:$0xf] %v783
  %848 = vst [vmem:[%s5 + $0x9c] sm:$0xf] %v784
  %849 = vst [vmem:[%s5 + $0xa0] sm:$0xf] %v785
  %850 = vst [vmem:[%s5 + $0xa4] sm:$0xf] %v786
  %851 = vst [vmem:[%s5 + $0xa8] sm:$0xf] %v787
  %852 = vst [vmem:[%s5 + $0xac] sm:$0xf] %v788
  %853 = vst [vmem:[%s5 + $0xb0] sm:$0xf] %v789
  %854 = vst [vmem:[%s5 + $0xb4] sm:$0xf] %v790
  %855 = vst [vmem:[%s5 + $0xb8] sm:$0xf] %v791
  %856 = vst [vmem:[%s5 + $0xbc] sm:$0xf] %v792
  %857 = vst [vmem:[%s5 + $0xc0] sm:$0xf] %v793
  %858 = vst [vmem:[%s5 + $0xc4] sm:$0xf] %v794
  %859 = vst [vmem:[%s5 + $0xc8] sm:$0xf] %v795
  %860 = vst [vmem:[%s5 + $0xcc] sm:$0xf] %v796
  %861 = vst [vmem:[%s5 + $0xd0] sm:$0xf] %v797
  %862 = vst [vmem:[%s5 + $0xd4] sm:$0xf] %v798
  %863 = vst [vmem:[%s5 + $0xd8] sm:$0xf] %v799
  %864 = vst [vmem:[%s5 + $0xdc] sm:$0xf] %v800
  %865 = vst [vmem:[%s5 + $0xe0] sm:$0xf] %v801
  %866 = vst [vmem:[%s5 + $0xe4] sm:$0xf] %v802
  %867 = vst [vmem:[%s5 + $0xe8] sm:$0xf] %v803
  %868 = vst [vmem:[%s5 + $0xec] sm:$0xf] %v804
  %869 = vst [vmem:[%s5 + $0xf0] sm:$0xf] %v805
  %870 = vst [vmem:[%s5 + $0xf4] sm:$0xf] %v806
  %871 = vst [vmem:[%s5 + $0xf8] sm:$0xf] %v807
  %872 = vst [vmem:[%s5 + $0xfc] sm:$0xf] %v808
  // Predicated region
  $region22: #{encoder_forward.49} parent=0 // pred_check
    _
  $region23: #{encoder_forward.49} parent=0 // pred_check_branch
    %874 = sbr.rel (0) target = $region25
  $region24: #{encoder_forward.49} parent=0 // pred_region
    _
  $region25: #{encoder_forward.49} parent=0 // pred_fallthru
    _
  // Predicated region
  $region26: #{encoder_forward.49} parent=0 // pred_check
    _
  $region27: #{encoder_forward.49} parent=0 // pred_check_branch
    %876 = sbr.rel (0) target = $region29
  $region28: #{encoder_forward.49} parent=0 // pred_region
    _
  $region29: #{encoder_forward.49} parent=0 // pred_fallthru
    _

// kernel: encoder_forward.51
$region0: #{encoder_forward.51}
  #allocation0 [shape = 'u32[]', space=smem, size = 0x4, offset = 0x4, fixed_abs, tag = 'smem constant byte address 0x4 - core index']
  #allocation1 [shape = 'u32[72,128]{1,0:T(1,128)}', space=vmem, size = 0x9000, scoped, tag = 'internal scratch']
  %s0 = inlined_call_operand.vmem [shape: bf16[512,128], index: 0, kind: input, shape index: {}]
  %s1 = inlined_call_operand.vmem [shape: f32[1,128], index: 1, kind: input, shape index: {}]
  %s2 = inlined_call_operand.vmem [shape: f32[1,128], index: 2, kind: input, shape index: {}]
  %s3 = inlined_call_operand.vmem [shape: bf16[128,128], index: 3, kind: input, shape index: {}]
  %s4 = inlined_call_operand.vmem [shape: f32[1,128], index: 4, kind: input, shape index: {}]
  %s5 = inlined_call_operand.vmem [shape: bf16[512,128], index: 5, kind: input, shape index: {}]
  %s6 = inlined_call_operand.vmem [shape: bf16[512,128], index: 6, kind: output, shape index: {}]
  %s7 = sld [smem:[#allocation0]]
  $region34: #{encoder_forward.51} parent=0
    _
  %s9 = ssub.s32 1, %s7
  %s10 = scalar_select 0, %s9, %s7
  // Predicated region
  $region2: #{encoder_forward.51} parent=0 // pred_check
    _
  $region3: #{encoder_forward.51} parent=0 // pred_check_branch
    %12 = sbr.rel (0) target = $region5
  $region4: #{encoder_forward.51} parent=0 // pred_region
    _
  $region5: #{encoder_forward.51} parent=0 // pred_fallthru
    _
  // Predicated region
  $region6: #{encoder_forward.51} parent=0 // pred_check
    _
  $region7: #{encoder_forward.51} parent=0 // pred_check_branch
    %14 = sbr.rel (0) target = $region9
  $region8: #{encoder_forward.51} parent=0 // pred_region
    _
  $region9: #{encoder_forward.51} parent=0 // pred_fallthru
    _
  // Predicated region
  $region10: #{encoder_forward.51} parent=0 // pred_check
    _
  $region11: #{encoder_forward.51} parent=0 // pred_check_branch
    %16 = sbr.rel (0) target = $region13
  $region12: #{encoder_forward.51} parent=0 // pred_region
    _
  $region13: #{encoder_forward.51} parent=0 // pred_fallthru
    _
  // Predicated region
  $region14: #{encoder_forward.51} parent=0 // pred_check
    _
  $region15: #{encoder_forward.51} parent=0 // pred_check_branch
    %18 = sbr.rel (0) target = $region17
  $region16: #{encoder_forward.51} parent=0 // pred_region
    _
  $region17: #{encoder_forward.51} parent=0 // pred_fallthru
    _
  // Predicated region
  $region18: #{encoder_forward.51} parent=0 // pred_check
    _
  $region19: #{encoder_forward.51} parent=0 // pred_check_branch
    %20 = sbr.rel (0) target = $region21
  $region20: #{encoder_forward.51} parent=0 // pred_region
    _
  $region21: #{encoder_forward.51} parent=0 // pred_fallthru
    _
  // Predicated region
  $region22: #{encoder_forward.51} parent=0 // pred_check
    _
  $region23: #{encoder_forward.51} parent=0 // pred_check_branch
    %22 = sbr.rel (0) target = $region25
  $region24: #{encoder_forward.51} parent=0 // pred_region
    _
  $region25: #{encoder_forward.51} parent=0 // pred_fallthru
    _
  %v23 = vld [vmem:[%s0] sm:$0xf]
  %v24 = vld [vmem:[%s0 + $0x4] sm:$0xf]
  %v25 = vld [vmem:[%s0 + $0x8] sm:$0xf]
  %v26 = vld [vmem:[%s0 + $0xc] sm:$0xf]
  %v27 = vld [vmem:[%s0 + $0x10] sm:$0xf]
  %v28 = vld [vmem:[%s0 + $0x14] sm:$0xf]
  %v29 = vld [vmem:[%s0 + $0x18] sm:$0xf]
  %v30 = vld [vmem:[%s0 + $0x1c] sm:$0xf]
  %v31 = vld [vmem:[%s0 + $0x20] sm:$0xf]
  %v32 = vld [vmem:[%s0 + $0x24] sm:$0xf]
  %v33 = vld [vmem:[%s0 + $0x28] sm:$0xf]
  %v34 = vld [vmem:[%s0 + $0x2c] sm:$0xf]
  %v35 = vld [vmem:[%s0 + $0x30] sm:$0xf]
  %v36 = vld [vmem:[%s0 + $0x34] sm:$0xf]
  %v37 = vld [vmem:[%s0 + $0x38] sm:$0xf]
  %v38 = vld [vmem:[%s0 + $0x3c] sm:$0xf]
  %v39 = vld [vmem:[%s0 + $0x40] sm:$0xf]
  %v40 = vld [vmem:[%s0 + $0x44] sm:$0xf]
  %v41 = vld [vmem:[%s0 + $0x48] sm:$0xf]
  %v42 = vld [vmem:[%s0 + $0x4c] sm:$0xf]
  %v43 = vld [vmem:[%s0 + $0x50] sm:$0xf]
  %v44 = vld [vmem:[%s0 + $0x54] sm:$0xf]
  %v45 = vld [vmem:[%s0 + $0x58] sm:$0xf]
  %v46 = vld [vmem:[%s0 + $0x5c] sm:$0xf]
  %v47 = vld [vmem:[%s0 + $0x60] sm:$0xf]
  %v48 = vld [vmem:[%s0 + $0x64] sm:$0xf]
  %v49 = vld [vmem:[%s0 + $0x68] sm:$0xf]
  %v50 = vld [vmem:[%s0 + $0x6c] sm:$0xf]
  %v51 = vld [vmem:[%s0 + $0x70] sm:$0xf]
  %v52 = vld [vmem:[%s0 + $0x74] sm:$0xf]
  %v53 = vld [vmem:[%s0 + $0x78] sm:$0xf]
  %v54 = vld [vmem:[%s0 + $0x7c] sm:$0xf]
  %v55 = vld [vmem:[%s0 + $0x80] sm:$0xf]
  %v56 = vld [vmem:[%s0 + $0x84] sm:$0xf]
  %v57 = vld [vmem:[%s0 + $0x88] sm:$0xf]
  %v58 = vld [vmem:[%s0 + $0x8c] sm:$0xf]
  %v59 = vld [vmem:[%s0 + $0x90] sm:$0xf]
  %v60 = vld [vmem:[%s0 + $0x94] sm:$0xf]
  %v61 = vld [vmem:[%s0 + $0x98] sm:$0xf]
  %v62 = vld [vmem:[%s0 + $0x9c] sm:$0xf]
  %v63 = vld [vmem:[%s0 + $0xa0] sm:$0xf]
  %v64 = vld [vmem:[%s0 + $0xa4] sm:$0xf]
  %v65 = vld [vmem:[%s0 + $0xa8] sm:$0xf]
  %v66 = vld [vmem:[%s0 + $0xac] sm:$0xf]
  %v67 = vld [vmem:[%s0 + $0xb0] sm:$0xf]
  %v68 = vld [vmem:[%s0 + $0xb4] sm:$0xf]
  %v69 = vld [vmem:[%s0 + $0xb8] sm:$0xf]
  %v70 = vld [vmem:[%s0 + $0xbc] sm:$0xf]
  %v71 = vld [vmem:[%s0 + $0xc0] sm:$0xf]
  %v72 = vld [vmem:[%s0 + $0xc4] sm:$0xf]
  %v73 = vld [vmem:[%s0 + $0xc8] sm:$0xf]
  %v74 = vld [vmem:[%s0 + $0xcc] sm:$0xf]
  %v75 = vld [vmem:[%s0 + $0xd0] sm:$0xf]
  %v76 = vld [vmem:[%s0 + $0xd4] sm:$0xf]
  %v77 = vld [vmem:[%s0 + $0xd8] sm:$0xf]
  %v78 = vld [vmem:[%s0 + $0xdc] sm:$0xf]
  %v79 = vld [vmem:[%s0 + $0xe0] sm:$0xf]
  %v80 = vld [vmem:[%s0 + $0xe4] sm:$0xf]
  %v81 = vld [vmem:[%s0 + $0xe8] sm:$0xf]
  %v82 = vld [vmem:[%s0 + $0xec] sm:$0xf]
  %v83 = vld [vmem:[%s0 + $0xf0] sm:$0xf]
  %v84 = vld [vmem:[%s0 + $0xf4] sm:$0xf]
  %v85 = vld [vmem:[%s0 + $0xf8] sm:$0xf]
  %v86 = vld [vmem:[%s0 + $0xfc] sm:$0xf]
  %v87 = vunpack.c.l.bf16 %v23
  %v88 = vunpack.c.l.bf16 %v24
  %v89 = vunpack.c.l.bf16 %v25
  %v90 = vunpack.c.l.bf16 %v26
  %v91 = vunpack.c.l.bf16 %v27
  %v92 = vunpack.c.l.bf16 %v28
  %v93 = vunpack.c.l.bf16 %v29
  %v94 = vunpack.c.l.bf16 %v30
  %v95 = vunpack.c.l.bf16 %v31
  %v96 = vunpack.c.l.bf16 %v32
  %v97 = vunpack.c.l.bf16 %v33
  %v98 = vunpack.c.l.bf16 %v34
  %v99 = vunpack.c.l.bf16 %v35
  %v100 = vunpack.c.l.bf16 %v36
  %v101 = vunpack.c.l.bf16 %v37
  %v102 = vunpack.c.l.bf16 %v38
  %v103 = vunpack.c.l.bf16 %v39
  %v104 = vunpack.c.l.bf16 %v40
  %v105 = vunpack.c.l.bf16 %v41
  %v106 = vunpack.c.l.bf16 %v42
  %v107 = vunpack.c.l.bf16 %v43
  %v108 = vunpack.c.l.bf16 %v44
  %v109 = vunpack.c.l.bf16 %v45
  %v110 = vunpack.c.l.bf16 %v46
  %v111 = vunpack.c.l.bf16 %v47
  %v112 = vunpack.c.l.bf16 %v48
  %v113 = vunpack.c.l.bf16 %v49
  %v114 = vunpack.c.l.bf16 %v50
  %v115 = vunpack.c.l.bf16 %v51
  %v116 = vunpack.c.l.bf16 %v52
  %v117 = vunpack.c.l.bf16 %v53
  %v118 = vunpack.c.l.bf16 %v54
  %v119 = vunpack.c.l.bf16 %v55
  %v120 = vunpack.c.l.bf16 %v56
  %v121 = vunpack.c.l.bf16 %v57
  %v122 = vunpack.c.l.bf16 %v58
  %v123 = vunpack.c.l.bf16 %v59
  %v124 = vunpack.c.l.bf16 %v60
  %v125 = vunpack.c.l.bf16 %v61
  %v126 = vunpack.c.l.bf16 %v62
  %v127 = vunpack.c.l.bf16 %v63
  %v128 = vunpack.c.l.bf16 %v64
  %v129 = vunpack.c.l.bf16 %v65
  %v130 = vunpack.c.l.bf16 %v66
  %v131 = vunpack.c.l.bf16 %v67
  %v132 = vunpack.c.l.bf16 %v68
  %v133 = vunpack.c.l.bf16 %v69
  %v134 = vunpack.c.l.bf16 %v70
  %v135 = vunpack.c.l.bf16 %v71
  %v136 = vunpack.c.l.bf16 %v72
  %v137 = vunpack.c.l.bf16 %v73
  %v138 = vunpack.c.l.bf16 %v74
  %v139 = vunpack.c.l.bf16 %v75
  %v140 = vunpack.c.l.bf16 %v76
  %v141 = vunpack.c.l.bf16 %v77
  %v142 = vunpack.c.l.bf16 %v78
  %v143 = vunpack.c.l.bf16 %v79
  %v144 = vunpack.c.l.bf16 %v80
  %v145 = vunpack.c.l.bf16 %v81
  %v146 = vunpack.c.l.bf16 %v82
  %v147 = vunpack.c.l.bf16 %v83
  %v148 = vunpack.c.l.bf16 %v84
  %v149 = vunpack.c.l.bf16 %v85
  %v150 = vunpack.c.l.bf16 %v86
  %v151 = vld [vmem:[%s1] sm:$0x1]
  %v153 = vperm.slane %v151, 0
  %v155 = vmul.f32 %v87, %v153
  %v156 = vmul.f32 %v88, %v153
  %v157 = vmul.f32 %v89, %v153
  %v158 = vmul.f32 %v90, %v153
  %v159 = vmul.f32 %v91, %v153
  %v160 = vmul.f32 %v92, %v153
  %v161 = vmul.f32 %v93, %v153
  %v162 = vmul.f32 %v94, %v153
  %v163 = vmul.f32 %v95, %v153
  %v164 = vmul.f32 %v96, %v153
  %v165 = vmul.f32 %v97, %v153
  %v166 = vmul.f32 %v98, %v153
  %v167 = vmul.f32 %v99, %v153
  %v168 = vmul.f32 %v100, %v153
  %v169 = vmul.f32 %v101, %v153
  %v170 = vmul.f32 %v102, %v153
  %v171 = vmul.f32 %v103, %v153
  %v172 = vmul.f32 %v104, %v153
  %v173 = vmul.f32 %v105, %v153
  %v174 = vmul.f32 %v106, %v153
  %v175 = vmul.f32 %v107, %v153
  %v176 = vmul.f32 %v108, %v153
  %v177 = vmul.f32 %v109, %v153
  %v178 = vmul.f32 %v110, %v153
  %v179 = vmul.f32 %v111, %v153
  %v180 = vmul.f32 %v112, %v153
  %v181 = vmul.f32 %v113, %v153
  %v182 = vmul.f32 %v114, %v153
  %v183 = vmul.f32 %v115, %v153
  %v184 = vmul.f32 %v116, %v153
  %v185 = vmul.f32 %v117, %v153
  %v186 = vmul.f32 %v118, %v153
  %v187 = vmul.f32 %v119, %v153
  %v188 = vmul.f32 %v120, %v153
  %v189 = vmul.f32 %v121, %v153
  %v190 = vmul.f32 %v122, %v153
  %v191 = vmul.f32 %v123, %v153
  %v192 = vmul.f32 %v124, %v153
  %v193 = vmul.f32 %v125, %v153
  %v194 = vmul.f32 %v126, %v153
  %v195 = vmul.f32 %v127, %v153
  %v196 = vmul.f32 %v128, %v153
  %v197 = vmul.f32 %v129, %v153
  %v198 = vmul.f32 %v130, %v153
  %v199 = vmul.f32 %v131, %v153
  %v200 = vmul.f32 %v132, %v153
  %v201 = vmul.f32 %v133, %v153
  %v202 = vmul.f32 %v134, %v153
  %v203 = vmul.f32 %v135, %v153
  %v204 = vmul.f32 %v136, %v153
  %v205 = vmul.f32 %v137, %v153
  %v206 = vmul.f32 %v138, %v153
  %v207 = vmul.f32 %v139, %v153
  %v208 = vmul.f32 %v140, %v153
  %v209 = vmul.f32 %v141, %v153
  %v210 = vmul.f32 %v142, %v153
  %v211 = vmul.f32 %v143, %v153
  %v212 = vmul.f32 %v144, %v153
  %v213 = vmul.f32 %v145, %v153
  %v214 = vmul.f32 %v146, %v153
  %v215 = vmul.f32 %v147, %v153
  %v216 = vmul.f32 %v148, %v153
  %v217 = vmul.f32 %v149, %v153
  %v218 = vmul.f32 %v150, %v153
  %v219 = vld [vmem:[%s2] sm:$0x1]
  %v221 = vperm.slane %v219, 0
  %v223 = vadd.f32 %v155, %v221
  %v224 = vadd.f32 %v156, %v221
  %v225 = vadd.f32 %v157, %v221
  %v226 = vadd.f32 %v158, %v221
  %v227 = vadd.f32 %v159, %v221
  %v228 = vadd.f32 %v160, %v221
  %v229 = vadd.f32 %v161, %v221
  %v230 = vadd.f32 %v162, %v221
  %v231 = vadd.f32 %v163, %v221
  %v232 = vadd.f32 %v164, %v221
  %v233 = vadd.f32 %v165, %v221
  %v234 = vadd.f32 %v166, %v221
  %v235 = vadd.f32 %v167, %v221
  %v236 = vadd.f32 %v168, %v221
  %v237 = vadd.f32 %v169, %v221
  %v238 = vadd.f32 %v170, %v221
  %v239 = vadd.f32 %v171, %v221
  %v240 = vadd.f32 %v172, %v221
  %v241 = vadd.f32 %v173, %v221
  %v242 = vadd.f32 %v174, %v221
  %v243 = vadd.f32 %v175, %v221
  %v244 = vadd.f32 %v176, %v221
  %v245 = vadd.f32 %v177, %v221
  %v246 = vadd.f32 %v178, %v221
  %v247 = vadd.f32 %v179, %v221
  %v248 = vadd.f32 %v180, %v221
  %v249 = vadd.f32 %v181, %v221
  %v250 = vadd.f32 %v182, %v221
  %v251 = vadd.f32 %v183, %v221
  %v252 = vadd.f32 %v184, %v221
  %v253 = vadd.f32 %v185, %v221
  %v254 = vadd.f32 %v186, %v221
  %v255 = vadd.f32 %v187, %v221
  %v256 = vadd.f32 %v188, %v221
  %v257 = vadd.f32 %v189, %v221
  %v258 = vadd.f32 %v190, %v221
  %v259 = vadd.f32 %v191, %v221
  %v260 = vadd.f32 %v192, %v221
  %v261 = vadd.f32 %v193, %v221
  %v262 = vadd.f32 %v194, %v221
  %v263 = vadd.f32 %v195, %v221
  %v264 = vadd.f32 %v196, %v221
  %v265 = vadd.f32 %v197, %v221
  %v266 = vadd.f32 %v198, %v221
  %v267 = vadd.f32 %v199, %v221
  %v268 = vadd.f32 %v200, %v221
  %v269 = vadd.f32 %v201, %v221
  %v270 = vadd.f32 %v202, %v221
  %v271 = vadd.f32 %v203, %v221
  %v272 = vadd.f32 %v204, %v221
  %v273 = vadd.f32 %v205, %v221
  %v274 = vadd.f32 %v206, %v221
  %v275 = vadd.f32 %v207, %v221
  %v276 = vadd.f32 %v208, %v221
  %v277 = vadd.f32 %v209, %v221
  %v278 = vadd.f32 %v210, %v221
  %v279 = vadd.f32 %v211, %v221
  %v280 = vadd.f32 %v212, %v221
  %v281 = vadd.f32 %v213, %v221
  %v282 = vadd.f32 %v214, %v221
  %v283 = vadd.f32 %v215, %v221
  %v284 = vadd.f32 %v216, %v221
  %v285 = vadd.f32 %v217, %v221
  %v286 = vadd.f32 %v218, %v221
  %vm287 = vcmp.gt.f32.partialorder %v223, 0.0
  %vm288 = vcmp.gt.f32.partialorder %v224, 0.0
  %vm289 = vcmp.gt.f32.partialorder %v225, 0.0
  %vm290 = vcmp.gt.f32.partialorder %v226, 0.0
  %vm291 = vcmp.gt.f32.partialorder %v227, 0.0
  %vm292 = vcmp.gt.f32.partialorder %v228, 0.0
  %vm293 = vcmp.gt.f32.partialorder %v229, 0.0
  %vm294 = vcmp.gt.f32.partialorder %v230, 0.0
  %vm295 = vcmp.gt.f32.partialorder %v231, 0.0
  %vm296 = vcmp.gt.f32.partialorder %v232, 0.0
  %vm297 = vcmp.gt.f32.partialorder %v233, 0.0
  %vm298 = vcmp.gt.f32.partialorder %v234, 0.0
  %vm299 = vcmp.gt.f32.partialorder %v235, 0.0
  %vm300 = vcmp.gt.f32.partialorder %v236, 0.0
  %vm301 = vcmp.gt.f32.partialorder %v237, 0.0
  %vm302 = vcmp.gt.f32.partialorder %v238, 0.0
  %vm303 = vcmp.gt.f32.partialorder %v239, 0.0
  %vm304 = vcmp.gt.f32.partialorder %v240, 0.0
  %vm305 = vcmp.gt.f32.partialorder %v241, 0.0
  %vm306 = vcmp.gt.f32.partialorder %v242, 0.0
  %vm307 = vcmp.gt.f32.partialorder %v243, 0.0
  %vm308 = vcmp.gt.f32.partialorder %v244, 0.0
  %vm309 = vcmp.gt.f32.partialorder %v245, 0.0
  %vm310 = vcmp.gt.f32.partialorder %v246, 0.0
  %vm311 = vcmp.gt.f32.partialorder %v247, 0.0
  %vm312 = vcmp.gt.f32.partialorder %v248, 0.0
  %vm313 = vcmp.gt.f32.partialorder %v249, 0.0
  %vm314 = vcmp.gt.f32.partialorder %v250, 0.0
  %vm315 = vcmp.gt.f32.partialorder %v251, 0.0
  %vm316 = vcmp.gt.f32.partialorder %v252, 0.0
  %vm317 = vcmp.gt.f32.partialorder %v253, 0.0
  %vm318 = vcmp.gt.f32.partialorder %v254, 0.0
  %vm319 = vcmp.gt.f32.partialorder %v255, 0.0
  %vm320 = vcmp.gt.f32.partialorder %v256, 0.0
  %vm321 = vcmp.gt.f32.partialorder %v257, 0.0
  %vm322 = vcmp.gt.f32.partialorder %v258, 0.0
  %vm323 = vcmp.gt.f32.partialorder %v259, 0.0
  %vm324 = vcmp.gt.f32.partialorder %v260, 0.0
  %vm325 = vcmp.gt.f32.partialorder %v261, 0.0
  %vm326 = vcmp.gt.f32.partialorder %v262, 0.0
  %vm327 = vcmp.gt.f32.partialorder %v263, 0.0
  %vm328 = vcmp.gt.f32.partialorder %v264, 0.0
  %vm329 = vcmp.gt.f32.partialorder %v265, 0.0
  %vm330 = vcmp.gt.f32.partialorder %v266, 0.0
  %vm331 = vcmp.gt.f32.partialorder %v267, 0.0
  %vm332 = vcmp.gt.f32.partialorder %v268, 0.0
  %vm333 = vcmp.gt.f32.partialorder %v269, 0.0
  %vm334 = vcmp.gt.f32.partialorder %v270, 0.0
  %vm335 = vcmp.gt.f32.partialorder %v271, 0.0
  %vm336 = vcmp.gt.f32.partialorder %v272, 0.0
  %vm337 = vcmp.gt.f32.partialorder %v273, 0.0
  %vm338 = vcmp.gt.f32.partialorder %v274, 0.0
  %vm339 = vcmp.gt.f32.partialorder %v275, 0.0
  %vm340 = vcmp.gt.f32.partialorder %v276, 0.0
  %vm341 = vcmp.gt.f32.partialorder %v277, 0.0
  %vm342 = vcmp.gt.f32.partialorder %v278, 0.0
  %vm343 = vcmp.gt.f32.partialorder %v279, 0.0
  %vm344 = vcmp.gt.f32.partialorder %v280, 0.0
  %vm345 = vcmp.gt.f32.partialorder %v281, 0.0
  %vm346 = vcmp.gt.f32.partialorder %v282, 0.0
  %vm347 = vcmp.gt.f32.partialorder %v283, 0.0
  %vm348 = vcmp.gt.f32.partialorder %v284, 0.0
  %vm349 = vcmp.gt.f32.partialorder %v285, 0.0
  %vm350 = vcmp.gt.f32.partialorder %v286, 0.0
  %v351 = vmul.f32 %v223, 0.01
  %v352 = vmul.f32 %v224, 0.01
  %v353 = vmul.f32 %v225, 0.01
  %v354 = vmul.f32 %v226, 0.01
  %v355 = vmul.f32 %v227, 0.01
  %v356 = vmul.f32 %v228, 0.01
  %v357 = vmul.f32 %v229, 0.01
  %v358 = vmul.f32 %v230, 0.01
  %v359 = vmul.f32 %v231, 0.01
  %v360 = vmul.f32 %v232, 0.01
  %v361 = vmul.f32 %v233, 0.01
  %v362 = vmul.f32 %v234, 0.01
  %v363 = vmul.f32 %v235, 0.01
  %v364 = vmul.f32 %v236, 0.01
  %v365 = vmul.f32 %v237, 0.01
  %v366 = vmul.f32 %v238, 0.01
  %v367 = vmul.f32 %v239, 0.01
  %v368 = vmul.f32 %v240, 0.01
  %v369 = vmul.f32 %v241, 0.01
  %v370 = vmul.f32 %v242, 0.01
  %v371 = vmul.f32 %v243, 0.01
  %v372 = vmul.f32 %v244, 0.01
  %v373 = vmul.f32 %v245, 0.01
  %v374 = vmul.f32 %v246, 0.01
  %v375 = vmul.f32 %v247, 0.01
  %v376 = vmul.f32 %v248, 0.01
  %v377 = vmul.f32 %v249, 0.01
  %v378 = vmul.f32 %v250, 0.01
  %v379 = vmul.f32 %v251, 0.01
  %v380 = vmul.f32 %v252, 0.01
  %v381 = vmul.f32 %v253, 0.01
  %v382 = vmul.f32 %v254, 0.01
  %v383 = vmul.f32 %v255, 0.01
  %v384 = vmul.f32 %v256, 0.01
  %v385 = vmul.f32 %v257, 0.01
  %v386 = vmul.f32 %v258, 0.01
  %v387 = vmul.f32 %v259, 0.01
  %v388 = vmul.f32 %v260, 0.01
  %v389 = vmul.f32 %v261, 0.01
  %v390 = vmul.f32 %v262, 0.01
  %v391 = vmul.f32 %v263, 0.01
  %v392 = vmul.f32 %v264, 0.01
  %v393 = vmul.f32 %v265, 0.01
  %v394 = vmul.f32 %v266, 0.01
  %v395 = vmul.f32 %v267, 0.01
  %v396 = vmul.f32 %v268, 0.01
  %v397 = vmul.f32 %v269, 0.01
  %v398 = vmul.f32 %v270, 0.01
  %v399 = vmul.f32 %v271, 0.01
  %v400 = vmul.f32 %v272, 0.01
  %v401 = vmul.f32 %v273, 0.01
  %v402 = vmul.f32 %v274, 0.01
  %v403 = vmul.f32 %v275, 0.01
  %v404 = vmul.f32 %v276, 0.01
  %v405 = vmul.f32 %v277, 0.01
  %v406 = vmul.f32 %v278, 0.01
  %v407 = vmul.f32 %v279, 0.01
  %v408 = vmul.f32 %v280, 0.01
  %v409 = vmul.f32 %v281, 0.01
  %v410 = vmul.f32 %v282, 0.01
  %v411 = vmul.f32 %v283, 0.01
  %v412 = vmul.f32 %v284, 0.01
  %v413 = vmul.f32 %v285, 0.01
  %v414 = vmul.f32 %v286, 0.01
  %v415 = vsel %vm287, %v223, %v351
  %v416 = vsel %vm288, %v224, %v352
  %v417 = vsel %vm289, %v225, %v353
  %v418 = vsel %vm290, %v226, %v354
  %v419 = vsel %vm291, %v227, %v355
  %v420 = vsel %vm292, %v228, %v356
  %v421 = vsel %vm293, %v229, %v357
  %v422 = vsel %vm294, %v230, %v358
  %v423 = vsel %vm295, %v231, %v359
  %v424 = vsel %vm296, %v232, %v360
  %v425 = vsel %vm297, %v233, %v361
  %v426 = vsel %vm298, %v234, %v362
  %v427 = vsel %vm299, %v235, %v363
  %v428 = vsel %vm300, %v236, %v364
  %v429 = vsel %vm301, %v237, %v365
  %v430 = vsel %vm302, %v238, %v366
  %v431 = vsel %vm303, %v239, %v367
  %v432 = vsel %vm304, %v240, %v368
  %v433 = vsel %vm305, %v241, %v369
  %v434 = vsel %vm306, %v242, %v370
  %v435 = vsel %vm307, %v243, %v371
  %v436 = vsel %vm308, %v244, %v372
  %v437 = vsel %vm309, %v245, %v373
  %v438 = vsel %vm310, %v246, %v374
  %v439 = vsel %vm311, %v247, %v375
  %v440 = vsel %vm312, %v248, %v376
  %v441 = vsel %vm313, %v249, %v377
  %v442 = vsel %vm314, %v250, %v378
  %v443 = vsel %vm315, %v251, %v379
  %v444 = vsel %vm316, %v252, %v380
  %v445 = vsel %vm317, %v253, %v381
  %v446 = vsel %vm318, %v254, %v382
  %v447 = vsel %vm319, %v255, %v383
  %v448 = vsel %vm320, %v256, %v384
  %v449 = vsel %vm321, %v257, %v385
  %v450 = vsel %vm322, %v258, %v386
  %v451 = vsel %vm323, %v259, %v387
  %v452 = vsel %vm324, %v260, %v388
  %v453 = vsel %vm325, %v261, %v389
  %v454 = vsel %vm326, %v262, %v390
  %v455 = vsel %vm327, %v263, %v391
  %v456 = vsel %vm328, %v264, %v392
  %v457 = vsel %vm329, %v265, %v393
  %v458 = vsel %vm330, %v266, %v394
  %v459 = vsel %vm331, %v267, %v395
  %v460 = vsel %vm332, %v268, %v396
  %v461 = vsel %vm333, %v269, %v397
  %v462 = vsel %vm334, %v270, %v398
  %v463 = vsel %vm335, %v271, %v399
  %v464 = vsel %vm336, %v272, %v400
  %v465 = vsel %vm337, %v273, %v401
  %v466 = vsel %vm338, %v274, %v402
  %v467 = vsel %vm339, %v275, %v403
  %v468 = vsel %vm340, %v276, %v404
  %v469 = vsel %vm341, %v277, %v405
  %v470 = vsel %vm342, %v278, %v406
  %v471 = vsel %vm343, %v279, %v407
  %v472 = vsel %vm344, %v280, %v408
  %v473 = vsel %vm345, %v281, %v409
  %v474 = vsel %vm346, %v282, %v410
  %v475 = vsel %vm347, %v283, %v411
  %v476 = vsel %vm348, %v284, %v412
  %v477 = vsel %vm349, %v285, %v413
  %v478 = vsel %vm350, %v286, %v414
  %v479 = vpack.c.bf16 %v416, %v415
  %v480 = vpack.c.bf16 %v418, %v417
  %v481 = vpack.c.bf16 %v420, %v419
  %v482 = vpack.c.bf16 %v422, %v421
  %v483 = vpack.c.bf16 %v424, %v423
  %v484 = vpack.c.bf16 %v426, %v425
  %v485 = vpack.c.bf16 %v428, %v427
  %v486 = vpack.c.bf16 %v430, %v429
  %v487 = vpack.c.bf16 %v432, %v431
  %v488 = vpack.c.bf16 %v434, %v433
  %v489 = vpack.c.bf16 %v436, %v435
  %v490 = vpack.c.bf16 %v438, %v437
  %v491 = vpack.c.bf16 %v440, %v439
  %v492 = vpack.c.bf16 %v442, %v441
  %v493 = vpack.c.bf16 %v444, %v443
  %v494 = vpack.c.bf16 %v446, %v445
  %v495 = vpack.c.bf16 %v448, %v447
  %v496 = vpack.c.bf16 %v450, %v449
  %v497 = vpack.c.bf16 %v452, %v451
  %v498 = vpack.c.bf16 %v454, %v453
  %v499 = vpack.c.bf16 %v456, %v455
  %v500 = vpack.c.bf16 %v458, %v457
  %v501 = vpack.c.bf16 %v460, %v459
  %v502 = vpack.c.bf16 %v462, %v461
  %v503 = vpack.c.bf16 %v464, %v463
  %v504 = vpack.c.bf16 %v466, %v465
  %v505 = vpack.c.bf16 %v468, %v467
  %v506 = vpack.c.bf16 %v470, %v469
  %v507 = vpack.c.bf16 %v472, %v471
  %v508 = vpack.c.bf16 %v474, %v473
  %v509 = vpack.c.bf16 %v476, %v475
  %v510 = vpack.c.bf16 %v478, %v477
  %v511 = vld [vmem:[%s3] sm:$0xf]
  %v512 = vld [vmem:[%s3 + $0x4] sm:$0xf]
  %v513 = vld [vmem:[%s3 + $0x8] sm:$0xf]
  %v514 = vld [vmem:[%s3 + $0xc] sm:$0xf]
  %v515 = vld [vmem:[%s3 + $0x10] sm:$0xf]
  %v516 = vld [vmem:[%s3 + $0x14] sm:$0xf]
  %v517 = vld [vmem:[%s3 + $0x18] sm:$0xf]
  %v518 = vld [vmem:[%s3 + $0x1c] sm:$0xf]
  %v519 = vld [vmem:[%s3 + $0x20] sm:$0xf]
  %v520 = vld [vmem:[%s3 + $0x24] sm:$0xf]
  %v521 = vld [vmem:[%s3 + $0x28] sm:$0xf]
  %v522 = vld [vmem:[%s3 + $0x2c] sm:$0xf]
  %v523 = vld [vmem:[%s3 + $0x30] sm:$0xf]
  %v524 = vld [vmem:[%s3 + $0x34] sm:$0xf]
  %v525 = vld [vmem:[%s3 + $0x38] sm:$0xf]
  %v526 = vld [vmem:[%s3 + $0x3c] sm:$0xf]
  %v527 = vld [vmem:[%s4] sm:$0x1]
  %v529 = vperm.slane %v527, 0
  %v547 = vunpack.c.l.b16 %v511
  %v548 = vunpack.c.l.b16 %v512
  %v549 = vunpack.c.l.b16 %v513
  %v550 = vunpack.c.l.b16 %v514
  %v551 = vunpack.c.l.b16 %v515
  %v552 = vunpack.c.l.b16 %v516
  %v553 = vunpack.c.l.b16 %v517
  %v554 = vunpack.c.l.b16 %v518
  %v555 = vunpack.c.l.b16 %v519
  %v556 = vunpack.c.l.b16 %v520
  %v557 = vunpack.c.l.b16 %v521
  %v558 = vunpack.c.l.b16 %v522
  %v559 = vunpack.c.l.b16 %v523
  %v560 = vunpack.c.l.b16 %v524
  %v561 = vunpack.c.l.b16 %v525
  %v562 = vunpack.c.l.b16 %v526
  %v563 = vpack.c.b16 %v548, %v547
  %v564 = vpack.c.b16 %v550, %v549
  %v565 = vpack.c.b16 %v552, %v551
  %v566 = vpack.c.b16 %v554, %v553
  %v567 = vpack.c.b16 %v556, %v555
  %v568 = vpack.c.b16 %v558, %v557
  %v569 = vpack.c.b16 %v560, %v559
  %v570 = vpack.c.b16 %v562, %v561
  %579 = vmatpush.bf16.msra.mxu0 %v570
  %580 = vmatpush.bf16.msra.mxu0 %v569
  %581 = vmatpush.bf16.msra.mxu0 %v568
  %582 = vmatpush.bf16.msra.mxu0 %v567
  %583 = vmatpush.bf16.msra.mxu0 %v566
  %584 = vmatpush.bf16.msra.mxu0 %v565
  %585 = vmatpush.bf16.msra.mxu0 %v564
  %586 = vmatpush.bf16.msra.mxu0 %v563
  %587 = vmatmul.bf16.gmra.mxu0 %v479
  %v588 = vpop.f32.mrf.mxu0
  %v589 = vadd.f32 %v529, %v588
  %v590 = vpop.f32.mrf.mxu0
  %v591 = vadd.f32 %v529, %v590
  %592 = vmatmul.bf16.gmra.mxu0 %v480
  %v593 = vpop.f32.mrf.mxu0
  %v594 = vadd.f32 %v529, %v593
  %v595 = vpop.f32.mrf.mxu0
  %v596 = vadd.f32 %v529, %v595
  %597 = vmatmul.bf16.gmra.mxu0 %v481
  %v598 = vpop.f32.mrf.mxu0
  %v599 = vadd.f32 %v529, %v598
  %v600 = vpop.f32.mrf.mxu0
  %v601 = vadd.f32 %v529, %v600
  %602 = vmatmul.bf16.gmra.mxu0 %v482
  %v603 = vpop.f32.mrf.mxu0
  %v604 = vadd.f32 %v529, %v603
  %v605 = vpop.f32.mrf.mxu0
  %v606 = vadd.f32 %v529, %v605
  %607 = vmatmul.bf16.gmra.mxu0 %v483
  %v608 = vpop.f32.mrf.mxu0
  %v609 = vadd.f32 %v529, %v608
  %v610 = vpop.f32.mrf.mxu0
  %v611 = vadd.f32 %v529, %v610
  %612 = vmatmul.bf16.gmra.mxu0 %v484
  %v613 = vpop.f32.mrf.mxu0
  %v614 = vadd.f32 %v529, %v613
  %v615 = vpop.f32.mrf.mxu0
  %v616 = vadd.f32 %v529, %v615
  %617 = vmatmul.bf16.gmra.mxu0 %v485
  %v618 = vpop.f32.mrf.mxu0
  %v619 = vadd.f32 %v529, %v618
  %v620 = vpop.f32.mrf.mxu0
  %v621 = vadd.f32 %v529, %v620
  %622 = vmatmul.bf16.gmra.mxu0 %v486
  %v623 = vpop.f32.mrf.mxu0
  %v624 = vadd.f32 %v529, %v623
  %v625 = vpop.f32.mrf.mxu0
  %v626 = vadd.f32 %v529, %v625
  %627 = vmatmul.bf16.gmra.mxu0 %v487
  %v628 = vpop.f32.mrf.mxu0
  %v629 = vadd.f32 %v529, %v628
  %v630 = vpop.f32.mrf.mxu0
  %v631 = vadd.f32 %v529, %v630
  %632 = vmatmul.bf16.gmra.mxu0 %v488
  %v633 = vpop.f32.mrf.mxu0
  %v634 = vadd.f32 %v529, %v633
  %v635 = vpop.f32.mrf.mxu0
  %v636 = vadd.f32 %v529, %v635
  %637 = vmatmul.bf16.gmra.mxu0 %v489
  %v638 = vpop.f32.mrf.mxu0
  %v639 = vadd.f32 %v529, %v638
  %v640 = vpop.f32.mrf.mxu0
  %v641 = vadd.f32 %v529, %v640
  %642 = vmatmul.bf16.gmra.mxu0 %v490
  %v643 = vpop.f32.mrf.mxu0
  %v644 = vadd.f32 %v529, %v643
  %v645 = vpop.f32.mrf.mxu0
  %v646 = vadd.f32 %v529, %v645
  %647 = vmatmul.bf16.gmra.mxu0 %v491
  %v648 = vpop.f32.mrf.mxu0
  %v649 = vadd.f32 %v529, %v648
  %v650 = vpop.f32.mrf.mxu0
  %v651 = vadd.f32 %v529, %v650
  %652 = vmatmul.bf16.gmra.mxu0 %v492
  %v653 = vpop.f32.mrf.mxu0
  %v654 = vadd.f32 %v529, %v653
  %v655 = vpop.f32.mrf.mxu0
  %v656 = vadd.f32 %v529, %v655
  %657 = vmatmul.bf16.gmra.mxu0 %v493
  %v658 = vpop.f32.mrf.mxu0
  %v659 = vadd.f32 %v529, %v658
  %v660 = vpop.f32.mrf.mxu0
  %v661 = vadd.f32 %v529, %v660
  %662 = vmatmul.bf16.gmra.mxu0 %v494
  %v663 = vpop.f32.mrf.mxu0
  %v664 = vadd.f32 %v529, %v663
  %v665 = vpop.f32.mrf.mxu0
  %v666 = vadd.f32 %v529, %v665
  %667 = vmatmul.bf16.gmra.mxu0 %v495
  %v668 = vpop.f32.mrf.mxu0
  %v669 = vadd.f32 %v529, %v668
  %v670 = vpop.f32.mrf.mxu0
  %v671 = vadd.f32 %v529, %v670
  %672 = vmatmul.bf16.gmra.mxu0 %v496
  %v673 = vpop.f32.mrf.mxu0
  %v674 = vadd.f32 %v529, %v673
  %v675 = vpop.f32.mrf.mxu0
  %v676 = vadd.f32 %v529, %v675
  %677 = vmatmul.bf16.gmra.mxu0 %v497
  %v678 = vpop.f32.mrf.mxu0
  %v679 = vadd.f32 %v529, %v678
  %v680 = vpop.f32.mrf.mxu0
  %v681 = vadd.f32 %v529, %v680
  %682 = vmatmul.bf16.gmra.mxu0 %v498
  %v683 = vpop.f32.mrf.mxu0
  %v684 = vadd.f32 %v529, %v683
  %v685 = vpop.f32.mrf.mxu0
  %v686 = vadd.f32 %v529, %v685
  %687 = vmatmul.bf16.gmra.mxu0 %v499
  %v688 = vpop.f32.mrf.mxu0
  %v689 = vadd.f32 %v529, %v688
  %v690 = vpop.f32.mrf.mxu0
  %v691 = vadd.f32 %v529, %v690
  %692 = vmatmul.bf16.gmra.mxu0 %v500
  %v693 = vpop.f32.mrf.mxu0
  %v694 = vadd.f32 %v529, %v693
  %v695 = vpop.f32.mrf.mxu0
  %v696 = vadd.f32 %v529, %v695
  %697 = vmatmul.bf16.gmra.mxu0 %v501
  %v698 = vpop.f32.mrf.mxu0
  %v699 = vadd.f32 %v529, %v698
  %v700 = vpop.f32.mrf.mxu0
  %v701 = vadd.f32 %v529, %v700
  %702 = vmatmul.bf16.gmra.mxu0 %v502
  %v703 = vpop.f32.mrf.mxu0
  %v704 = vadd.f32 %v529, %v703
  %v705 = vpop.f32.mrf.mxu0
  %v706 = vadd.f32 %v529, %v705
  %707 = vmatmul.bf16.gmra.mxu0 %v503
  %v708 = vpop.f32.mrf.mxu0
  %v709 = vadd.f32 %v529, %v708
  %v710 = vpop.f32.mrf.mxu0
  %v711 = vadd.f32 %v529, %v710
  %712 = vmatmul.bf16.gmra.mxu0 %v504
  %v713 = vpop.f32.mrf.mxu0
  %v714 = vadd.f32 %v529, %v713
  %v715 = vpop.f32.mrf.mxu0
  %v716 = vadd.f32 %v529, %v715
  %717 = vmatmul.bf16.gmra.mxu0 %v505
  %v718 = vpop.f32.mrf.mxu0
  %v719 = vadd.f32 %v529, %v718
  %v720 = vpop.f32.mrf.mxu0
  %v721 = vadd.f32 %v529, %v720
  %722 = vmatmul.bf16.gmra.mxu0 %v506
  %v723 = vpop.f32.mrf.mxu0
  %v724 = vadd.f32 %v529, %v723
  %v725 = vpop.f32.mrf.mxu0
  %v726 = vadd.f32 %v529, %v725
  %727 = vmatmul.bf16.gmra.mxu0 %v507
  %v728 = vpop.f32.mrf.mxu0
  %v729 = vadd.f32 %v529, %v728
  %v730 = vpop.f32.mrf.mxu0
  %v731 = vadd.f32 %v529, %v730
  %732 = vmatmul.bf16.gmra.mxu0 %v508
  %v733 = vpop.f32.mrf.mxu0
  %v734 = vadd.f32 %v529, %v733
  %v735 = vpop.f32.mrf.mxu0
  %v736 = vadd.f32 %v529, %v735
  %737 = vmatmul.bf16.gmra.mxu0 %v509
  %v738 = vpop.f32.mrf.mxu0
  %v739 = vadd.f32 %v529, %v738
  %v740 = vpop.f32.mrf.mxu0
  %v741 = vadd.f32 %v529, %v740
  %742 = vmatmul.bf16.gmra.mxu0 %v510
  %v743 = vpop.f32.mrf.mxu0
  %v744 = vadd.f32 %v529, %v743
  %v745 = vpop.f32.mrf.mxu0
  %v746 = vadd.f32 %v529, %v745
  %747 = vdwg.mxu0
  %v748 = vld [vmem:[%s5] sm:$0xf]
  %v749 = vld [vmem:[%s5 + $0x4] sm:$0xf]
  %v750 = vld [vmem:[%s5 + $0x8] sm:$0xf]
  %v751 = vld [vmem:[%s5 + $0xc] sm:$0xf]
  %v752 = vld [vmem:[%s5 + $0x10] sm:$0xf]
  %v753 = vld [vmem:[%s5 + $0x14] sm:$0xf]
  %v754 = vld [vmem:[%s5 + $0x18] sm:$0xf]
  %v755 = vld [vmem:[%s5 + $0x1c] sm:$0xf]
  %v756 = vld [vmem:[%s5 + $0x20] sm:$0xf]
  %v757 = vld [vmem:[%s5 + $0x24] sm:$0xf]
  %v758 = vld [vmem:[%s5 + $0x28] sm:$0xf]
  %v759 = vld [vmem:[%s5 + $0x2c] sm:$0xf]
  %v760 = vld [vmem:[%s5 + $0x30] sm:$0xf]
  %v761 = vld [vmem:[%s5 + $0x34] sm:$0xf]
  %v762 = vld [vmem:[%s5 + $0x38] sm:$0xf]
  %v763 = vld [vmem:[%s5 + $0x3c] sm:$0xf]
  %v764 = vld [vmem:[%s5 + $0x40] sm:$0xf]
  %v765 = vld [vmem:[%s5 + $0x44] sm:$0xf]
  %v766 = vld [vmem:[%s5 + $0x48] sm:$0xf]
  %v767 = vld [vmem:[%s5 + $0x4c] sm:$0xf]
  %v768 = vld [vmem:[%s5 + $0x50] sm:$0xf]
  %v769 = vld [vmem:[%s5 + $0x54] sm:$0xf]
  %v770 = vld [vmem:[%s5 + $0x58] sm:$0xf]
  %v771 = vld [vmem:[%s5 + $0x5c] sm:$0xf]
  %v772 = vld [vmem:[%s5 + $0x60] sm:$0xf]
  %v773 = vld [vmem:[%s5 + $0x64] sm:$0xf]
  %v774 = vld [vmem:[%s5 + $0x68] sm:$0xf]
  %v775 = vld [vmem:[%s5 + $0x6c] sm:$0xf]
  %v776 = vld [vmem:[%s5 + $0x70] sm:$0xf]
  %v777 = vld [vmem:[%s5 + $0x74] sm:$0xf]
  %v778 = vld [vmem:[%s5 + $0x78] sm:$0xf]
  %v779 = vld [vmem:[%s5 + $0x7c] sm:$0xf]
  %v780 = vld [vmem:[%s5 + $0x80] sm:$0xf]
  %v781 = vld [vmem:[%s5 + $0x84] sm:$0xf]
  %v782 = vld [vmem:[%s5 + $0x88] sm:$0xf]
  %v783 = vld [vmem:[%s5 + $0x8c] sm:$0xf]
  %v784 = vld [vmem:[%s5 + $0x90] sm:$0xf]
  %v785 = vld [vmem:[%s5 + $0x94] sm:$0xf]
  %v786 = vld [vmem:[%s5 + $0x98] sm:$0xf]
  %v787 = vld [vmem:[%s5 + $0x9c] sm:$0xf]
  %v788 = vld [vmem:[%s5 + $0xa0] sm:$0xf]
  %v789 = vld [vmem:[%s5 + $0xa4] sm:$0xf]
  %v790 = vld [vmem:[%s5 + $0xa8] sm:$0xf]
  %v791 = vld [vmem:[%s5 + $0xac] sm:$0xf]
  %v792 = vld [vmem:[%s5 + $0xb0] sm:$0xf]
  %v793 = vld [vmem:[%s5 + $0xb4] sm:$0xf]
  %v794 = vld [vmem:[%s5 + $0xb8] sm:$0xf]
  %v795 = vld [vmem:[%s5 + $0xbc] sm:$0xf]
  %v796 = vld [vmem:[%s5 + $0xc0] sm:$0xf]
  %v797 = vld [vmem:[%s5 + $0xc4] sm:$0xf]
  %v798 = vld [vmem:[%s5 + $0xc8] sm:$0xf]
  %v799 = vld [vmem:[%s5 + $0xcc] sm:$0xf]
  %v800 = vld [vmem:[%s5 + $0xd0] sm:$0xf]
  %v801 = vld [vmem:[%s5 + $0xd4] sm:$0xf]
  %v802 = vld [vmem:[%s5 + $0xd8] sm:$0xf]
  %v803 = vld [vmem:[%s5 + $0xdc] sm:$0xf]
  %v804 = vld [vmem:[%s5 + $0xe0] sm:$0xf]
  %v805 = vld [vmem:[%s5 + $0xe4] sm:$0xf]
  %v806 = vld [vmem:[%s5 + $0xe8] sm:$0xf]
  %v807 = vld [vmem:[%s5 + $0xec] sm:$0xf]
  %v808 = vld [vmem:[%s5 + $0xf0] sm:$0xf]
  %v809 = vld [vmem:[%s5 + $0xf4] sm:$0xf]
  %v810 = vld [vmem:[%s5 + $0xf8] sm:$0xf]
  %v811 = vld [vmem:[%s5 + $0xfc] sm:$0xf]
  %v812 = vunpack.c.l.bf16 %v748
  %v813 = vunpack.c.l.bf16 %v749
  %v814 = vunpack.c.l.bf16 %v750
  %v815 = vunpack.c.l.bf16 %v751
  %v816 = vunpack.c.l.bf16 %v752
  %v817 = vunpack.c.l.bf16 %v753
  %v818 = vunpack.c.l.bf16 %v754
  %v819 = vunpack.c.l.bf16 %v755
  %v820 = vunpack.c.l.bf16 %v756
  %v821 = vunpack.c.l.bf16 %v757
  %v822 = vunpack.c.l.bf16 %v758
  %v823 = vunpack.c.l.bf16 %v759
  %v824 = vunpack.c.l.bf16 %v760
  %v825 = vunpack.c.l.bf16 %v761
  %v826 = vunpack.c.l.bf16 %v762
  %v827 = vunpack.c.l.bf16 %v763
  %v828 = vunpack.c.l.bf16 %v764
  %v829 = vunpack.c.l.bf16 %v765
  %v830 = vunpack.c.l.bf16 %v766
  %v831 = vunpack.c.l.bf16 %v767
  %v832 = vunpack.c.l.bf16 %v768
  %v833 = vunpack.c.l.bf16 %v769
  %v834 = vunpack.c.l.bf16 %v770
  %v835 = vunpack.c.l.bf16 %v771
  %v836 = vunpack.c.l.bf16 %v772
  %v837 = vunpack.c.l.bf16 %v773
  %v838 = vunpack.c.l.bf16 %v774
  %v839 = vunpack.c.l.bf16 %v775
  %v840 = vunpack.c.l.bf16 %v776
  %v841 = vunpack.c.l.bf16 %v777
  %v842 = vunpack.c.l.bf16 %v778
  %v843 = vunpack.c.l.bf16 %v779
  %v844 = vunpack.c.l.bf16 %v780
  %v845 = vunpack.c.l.bf16 %v781
  %v846 = vunpack.c.l.bf16 %v782
  %v847 = vunpack.c.l.bf16 %v783
  %v848 = vunpack.c.l.bf16 %v784
  %v849 = vunpack.c.l.bf16 %v785
  %v850 = vunpack.c.l.bf16 %v786
  %v851 = vunpack.c.l.bf16 %v787
  %v852 = vunpack.c.l.bf16 %v788
  %v853 = vunpack.c.l.bf16 %v789
  %v854 = vunpack.c.l.bf16 %v790
  %v855 = vunpack.c.l.bf16 %v791
  %v856 = vunpack.c.l.bf16 %v792
  %v857 = vunpack.c.l.bf16 %v793
  %v858 = vunpack.c.l.bf16 %v794
  %v859 = vunpack.c.l.bf16 %v795
  %v860 = vunpack.c.l.bf16 %v796
  %v861 = vunpack.c.l.bf16 %v797
  %v862 = vunpack.c.l.bf16 %v798
  %v863 = vunpack.c.l.bf16 %v799
  %v864 = vunpack.c.l.bf16 %v800
  %v865 = vunpack.c.l.bf16 %v801
  %v866 = vunpack.c.l.bf16 %v802
  %v867 = vunpack.c.l.bf16 %v803
  %v868 = vunpack.c.l.bf16 %v804
  %v869 = vunpack.c.l.bf16 %v805
  %v870 = vunpack.c.l.bf16 %v806
  %v871 = vunpack.c.l.bf16 %v807
  %v872 = vunpack.c.l.bf16 %v808
  %v873 = vunpack.c.l.bf16 %v809
  %v874 = vunpack.c.l.bf16 %v810
  %v875 = vunpack.c.l.bf16 %v811
  %v876 = vadd.f32 %v589, %v812
  %v877 = vadd.f32 %v591, %v813
  %v878 = vadd.f32 %v594, %v814
  %v879 = vadd.f32 %v596, %v815
  %v880 = vadd.f32 %v599, %v816
  %v881 = vadd.f32 %v601, %v817
  %v882 = vadd.f32 %v604, %v818
  %v883 = vadd.f32 %v606, %v819
  %v884 = vadd.f32 %v609, %v820
  %v885 = vadd.f32 %v611, %v821
  %v886 = vadd.f32 %v614, %v822
  %v887 = vadd.f32 %v616, %v823
  %v888 = vadd.f32 %v619, %v824
  %v889 = vadd.f32 %v621, %v825
  %v890 = vadd.f32 %v624, %v826
  %v891 = vadd.f32 %v626, %v827
  %v892 = vadd.f32 %v629, %v828
  %v893 = vadd.f32 %v631, %v829
  %v894 = vadd.f32 %v634, %v830
  %v895 = vadd.f32 %v636, %v831
  %v896 = vadd.f32 %v639, %v832
  %v897 = vadd.f32 %v641, %v833
  %v898 = vadd.f32 %v644, %v834
  %v899 = vadd.f32 %v646, %v835
  %v900 = vadd.f32 %v649, %v836
  %v901 = vadd.f32 %v651, %v837
  %v902 = vadd.f32 %v654, %v838
  %v903 = vadd.f32 %v656, %v839
  %v904 = vadd.f32 %v659, %v840
  %v905 = vadd.f32 %v661, %v841
  %v906 = vadd.f32 %v664, %v842
  %v907 = vadd.f32 %v666, %v843
  %v908 = vadd.f32 %v669, %v844
  %v909 = vadd.f32 %v671, %v845
  %v910 = vadd.f32 %v674, %v846
  %v911 = vadd.f32 %v676, %v847
  %v912 = vadd.f32 %v679, %v848
  %v913 = vadd.f32 %v681, %v849
  %v914 = vadd.f32 %v684, %v850
  %v915 = vadd.f32 %v686, %v851
  %v916 = vadd.f32 %v689, %v852
  %v917 = vadd.f32 %v691, %v853
  %v918 = vadd.f32 %v694, %v854
  %v919 = vadd.f32 %v696, %v855
  %v920 = vadd.f32 %v699, %v856
  %v921 = vadd.f32 %v701, %v857
  %v922 = vadd.f32 %v704, %v858
  %v923 = vadd.f32 %v706, %v859
  %v924 = vadd.f32 %v709, %v860
  %v925 = vadd.f32 %v711, %v861
  %v926 = vadd.f32 %v714, %v862
  %v927 = vadd.f32 %v716, %v863
  %v928 = vadd.f32 %v719, %v864
  %v929 = vadd.f32 %v721, %v865
  %v930 = vadd.f32 %v724, %v866
  %v931 = vadd.f32 %v726, %v867
  %v932 = vadd.f32 %v729, %v868
  %v933 = vadd.f32 %v731, %v869
  %v934 = vadd.f32 %v734, %v870
  %v935 = vadd.f32 %v736, %v871
  %v936 = vadd.f32 %v739, %v872
  %v937 = vadd.f32 %v741, %v873
  %v938 = vadd.f32 %v744, %v874
  %v939 = vadd.f32 %v746, %v875
  %v940 = vpack.c.bf16 %v876, %v876
  %v941 = vpack.c.bf16 %v877, %v877
  %v942 = vpack.c.bf16 %v878, %v878
  %v943 = vpack.c.bf16 %v879, %v879
  %v944 = vpack.c.bf16 %v880, %v880
  %v945 = vpack.c.bf16 %v881, %v881
  %v946 = vpack.c.bf16 %v882, %v882
  %v947 = vpack.c.bf16 %v883, %v883
  %v948 = vpack.c.bf16 %v884, %v884
  %v949 = vpack.c.bf16 %v885, %v885
  %v950 = vpack.c.bf16 %v886, %v886
  %v951 = vpack.c.bf16 %v887, %v887
  %v952 = vpack.c.bf16 %v888, %v888
  %v953 = vpack.c.bf16 %v889, %v889
  %v954 = vpack.c.bf16 %v890, %v890
  %v955 = vpack.c.bf16 %v891, %v891
  %v956 = vpack.c.bf16 %v892, %v892
  %v957 = vpack.c.bf16 %v893, %v893
  %v958 = vpack.c.bf16 %v894, %v894
  %v959 = vpack.c.bf16 %v895, %v895
  %v960 = vpack.c.bf16 %v896, %v896
  %v961 = vpack.c.bf16 %v897, %v897
  %v962 = vpack.c.bf16 %v898, %v898
  %v963 = vpack.c.bf16 %v899, %v899
  %v964 = vpack.c.bf16 %v900, %v900
  %v965 = vpack.c.bf16 %v901, %v901
  %v966 = vpack.c.bf16 %v902, %v902
  %v967 = vpack.c.bf16 %v903, %v903
  %v968 = vpack.c.bf16 %v904, %v904
  %v969 = vpack.c.bf16 %v905, %v905
  %v970 = vpack.c.bf16 %v906, %v906
  %v971 = vpack.c.bf16 %v907, %v907
  %v972 = vpack.c.bf16 %v908, %v908
  %v973 = vpack.c.bf16 %v909, %v909
  %v974 = vpack.c.bf16 %v910, %v910
  %v975 = vpack.c.bf16 %v911, %v911
  %v976 = vpack.c.bf16 %v912, %v912
  %v977 = vpack.c.bf16 %v913, %v913
  %v978 = vpack.c.bf16 %v914, %v914
  %v979 = vpack.c.bf16 %v915, %v915
  %v980 = vpack.c.bf16 %v916, %v916
  %v981 = vpack.c.bf16 %v917, %v917
  %v982 = vpack.c.bf16 %v918, %v918
  %v983 = vpack.c.bf16 %v919, %v919
  %v984 = vpack.c.bf16 %v920, %v920
  %v985 = vpack.c.bf16 %v921, %v921
  %v986 = vpack.c.bf16 %v922, %v922
  %v987 = vpack.c.bf16 %v923, %v923
  %v988 = vpack.c.bf16 %v924, %v924
  %v989 = vpack.c.bf16 %v925, %v925
  %v990 = vpack.c.bf16 %v926, %v926
  %v991 = vpack.c.bf16 %v927, %v927
  %v992 = vpack.c.bf16 %v928, %v928
  %v993 = vpack.c.bf16 %v929, %v929
  %v994 = vpack.c.bf16 %v930, %v930
  %v995 = vpack.c.bf16 %v931, %v931
  %v996 = vpack.c.bf16 %v932, %v932
  %v997 = vpack.c.bf16 %v933, %v933
  %v998 = vpack.c.bf16 %v934, %v934
  %v999 = vpack.c.bf16 %v935, %v935
  %v1000 = vpack.c.bf16 %v936, %v936
  %v1001 = vpack.c.bf16 %v937, %v937
  %v1002 = vpack.c.bf16 %v938, %v938
  %v1003 = vpack.c.bf16 %v939, %v939
  %1004 = vst [vmem:[%s6] sm:$0xf] %v940
  %1005 = vst [vmem:[%s6 + $0x4] sm:$0xf] %v941
  %1006 = vst [vmem:[%s6 + $0x8] sm:$0xf] %v942
  %1007 = vst [vmem:[%s6 + $0xc] sm:$0xf] %v943
  %1008 = vst [vmem:[%s6 + $0x10] sm:$0xf] %v944
  %1009 = vst [vmem:[%s6 + $0x14] sm:$0xf] %v945
  %1010 = vst [vmem:[%s6 + $0x18] sm:$0xf] %v946
  %1011 = vst [vmem:[%s6 + $0x1c] sm:$0xf] %v947
  %1012 = vst [vmem:[%s6 + $0x20] sm:$0xf] %v948
  %1013 = vst [vmem:[%s6 + $0x24] sm:$0xf] %v949
  %1014 = vst [vmem:[%s6 + $0x28] sm:$0xf] %v950
  %1015 = vst [vmem:[%s6 + $0x2c] sm:$0xf] %v951
  %1016 = vst [vmem:[%s6 + $0x30] sm:$0xf] %v952
  %1017 = vst [vmem:[%s6 + $0x34] sm:$0xf] %v953
  %1018 = vst [vmem:[%s6 + $0x38] sm:$0xf] %v954
  %1019 = vst [vmem:[%s6 + $0x3c] sm:$0xf] %v955
  %1020 = vst [vmem:[%s6 + $0x40] sm:$0xf] %v956
  %1021 = vst [vmem:[%s6 + $0x44] sm:$0xf] %v957
  %1022 = vst [vmem:[%s6 + $0x48] sm:$0xf] %v958
  %1023 = vst [vmem:[%s6 + $0x4c] sm:$0xf] %v959
  %1024 = vst [vmem:[%s6 + $0x50] sm:$0xf] %v960
  %1025 = vst [vmem:[%s6 + $0x54] sm:$0xf] %v961
  %1026 = vst [vmem:[%s6 + $0x58] sm:$0xf] %v962
  %1027 = vst [vmem:[%s6 + $0x5c] sm:$0xf] %v963
  %1028 = vst [vmem:[%s6 + $0x60] sm:$0xf] %v964
  %1029 = vst [vmem:[%s6 + $0x64] sm:$0xf] %v965
  %1030 = vst [vmem:[%s6 + $0x68] sm:$0xf] %v966
  %1031 = vst [vmem:[%s6 + $0x6c] sm:$0xf] %v967
  %1032 = vst [vmem:[%s6 + $0x70] sm:$0xf] %v968
  %1033 = vst [vmem:[%s6 + $0x74] sm:$0xf] %v969
  %1034 = vst [vmem:[%s6 + $0x78] sm:$0xf] %v970
  %1035 = vst [vmem:[%s6 + $0x7c] sm:$0xf] %v971
  %1036 = vst [vmem:[%s6 + $0x80] sm:$0xf] %v972
  %1037 = vst [vmem:[%s6 + $0x84] sm:$0xf] %v973
  %1038 = vst [vmem:[%s6 + $0x88] sm:$0xf] %v974
  %1039 = vst [vmem:[%s6 + $0x8c] sm:$0xf] %v975
  %1040 = vst [vmem:[%s6 + $0x90] sm:$0xf] %v976
  %1041 = vst [vmem:[%s6 + $0x94] sm:$0xf] %v977
  %1042 = vst [vmem:[%s6 + $0x98] sm:$0xf] %v978
  %1043 = vst [vmem:[%s6 + $0x9c] sm:$0xf] %v979
  %1044 = vst [vmem:[%s6 + $0xa0] sm:$0xf] %v980
  %1045 = vst [vmem:[%s6 + $0xa4] sm:$0xf] %v981
  %1046 = vst [vmem:[%s6 + $0xa8] sm:$0xf] %v982
  %1047 = vst [vmem:[%s6 + $0xac] sm:$0xf] %v983
  %1048 = vst [vmem:[%s6 + $0xb0] sm:$0xf] %v984
  %1049 = vst [vmem:[%s6 + $0xb4] sm:$0xf] %v985
  %1050 = vst [vmem:[%s6 + $0xb8] sm:$0xf] %v986
  %1051 = vst [vmem:[%s6 + $0xbc] sm:$0xf] %v987
  %1052 = vst [vmem:[%s6 + $0xc0] sm:$0xf] %v988
  %1053 = vst [vmem:[%s6 + $0xc4] sm:$0xf] %v989
  %1054 = vst [vmem:[%s6 + $0xc8] sm:$0xf] %v990
  %1055 = vst [vmem:[%s6 + $0xcc] sm:$0xf] %v991
  %1056 = vst [vmem:[%s6 + $0xd0] sm:$0xf] %v992
  %1057 = vst [vmem:[%s6 + $0xd4] sm:$0xf] %v993
  %1058 = vst [vmem:[%s6 + $0xd8] sm:$0xf] %v994
  %1059 = vst [vmem:[%s6 + $0xdc] sm:$0xf] %v995
  %1060 = vst [vmem:[%s6 + $0xe0] sm:$0xf] %v996
  %1061 = vst [vmem:[%s6 + $0xe4] sm:$0xf] %v997
  %1062 = vst [vmem:[%s6 + $0xe8] sm:$0xf] %v998
  %1063 = vst [vmem:[%s6 + $0xec] sm:$0xf] %v999
  %1064 = vst [vmem:[%s6 + $0xf0] sm:$0xf] %v1000
  %1065 = vst [vmem:[%s6 + $0xf4] sm:$0xf] %v1001
  %1066 = vst [vmem:[%s6 + $0xf8] sm:$0xf] %v1002
  %1067 = vst [vmem:[%s6 + $0xfc] sm:$0xf] %v1003
  // Predicated region
  $region26: #{encoder_forward.51} parent=0 // pred_check
    _
  $region27: #{encoder_forward.51} parent=0 // pred_check_branch
    %1069 = sbr.rel (0) target = $region29
  $region28: #{encoder_forward.51} parent=0 // pred_region
    _
  $region29: #{encoder_forward.51} parent=0 // pred_fallthru
    _
  // Predicated region
  $region30: #{encoder_forward.51} parent=0 // pred_check
    _
  $region31: #{encoder_forward.51} parent=0 // pred_check_branch
    %1071 = sbr.rel (0) target = $region33
  $region32: #{encoder_forward.51} parent=0 // pred_region
    _
  $region33: #{encoder_forward.51} parent=0 // pred_fallthru
    _

// kernel: encoder_forward.53
$region0: #{encoder_forward.53}
  #allocation0 [shape = 'u32[]', space=smem, size = 0x4, offset = 0x4, fixed_abs, tag = 'smem constant byte address 0x4 - core index']
  #allocation1 [shape = 'u32[72,128]{1,0:T(1,128)}', space=vmem, size = 0x9000, scoped, tag = 'internal scratch']
  %s0 = inlined_call_operand.vmem [shape: bf16[512,128], index: 0, kind: input, shape index: {}]
  %s1 = inlined_call_operand.vmem [shape: f32[1,128], index: 1, kind: input, shape index: {}]
  %s2 = inlined_call_operand.vmem [shape: f32[1,128], index: 2, kind: input, shape index: {}]
  %s3 = inlined_call_operand.vmem [shape: bf16[128,128], index: 3, kind: input, shape index: {}]
  %s4 = inlined_call_operand.vmem [shape: f32[1,128], index: 4, kind: input, shape index: {}]
  %s5 = inlined_call_operand.vmem [shape: bf16[128,128], index: 5, kind: input, shape index: {}]
  %s6 = inlined_call_operand.vmem [shape: f32[1,128], index: 6, kind: input, shape index: {}]
  %s7 = inlined_call_operand.vmem [shape: f32[512,128], index: 7, kind: output, shape index: {}]
  %s8 = sld [smem:[#allocation0]]
  $region38: #{encoder_forward.53} parent=0
    _
  %s10 = ssub.s32 1, %s8
  %s11 = scalar_select 0, %s10, %s8
  // Predicated region
  $region2: #{encoder_forward.53} parent=0 // pred_check
    _
  $region3: #{encoder_forward.53} parent=0 // pred_check_branch
    %13 = sbr.rel (0) target = $region5
  $region4: #{encoder_forward.53} parent=0 // pred_region
    _
  $region5: #{encoder_forward.53} parent=0 // pred_fallthru
    _
  // Predicated region
  $region6: #{encoder_forward.53} parent=0 // pred_check
    _
  $region7: #{encoder_forward.53} parent=0 // pred_check_branch
    %15 = sbr.rel (0) target = $region9
  $region8: #{encoder_forward.53} parent=0 // pred_region
    _
  $region9: #{encoder_forward.53} parent=0 // pred_fallthru
    _
  // Predicated region
  $region10: #{encoder_forward.53} parent=0 // pred_check
    _
  $region11: #{encoder_forward.53} parent=0 // pred_check_branch
    %17 = sbr.rel (0) target = $region13
  $region12: #{encoder_forward.53} parent=0 // pred_region
    _
  $region13: #{encoder_forward.53} parent=0 // pred_fallthru
    _
  // Predicated region
  $region14: #{encoder_forward.53} parent=0 // pred_check
    _
  $region15: #{encoder_forward.53} parent=0 // pred_check_branch
    %19 = sbr.rel (0) target = $region17
  $region16: #{encoder_forward.53} parent=0 // pred_region
    _
  $region17: #{encoder_forward.53} parent=0 // pred_fallthru
    _
  // Predicated region
  $region18: #{encoder_forward.53} parent=0 // pred_check
    _
  $region19: #{encoder_forward.53} parent=0 // pred_check_branch
    %21 = sbr.rel (0) target = $region21
  $region20: #{encoder_forward.53} parent=0 // pred_region
    _
  $region21: #{encoder_forward.53} parent=0 // pred_fallthru
    _
  // Predicated region
  $region22: #{encoder_forward.53} parent=0 // pred_check
    _
  $region23: #{encoder_forward.53} parent=0 // pred_check_branch
    %23 = sbr.rel (0) target = $region25
  $region24: #{encoder_forward.53} parent=0 // pred_region
    _
  $region25: #{encoder_forward.53} parent=0 // pred_fallthru
    _
  // Predicated region
  $region26: #{encoder_forward.53} parent=0 // pred_check
    _
  $region27: #{encoder_forward.53} parent=0 // pred_check_branch
    %25 = sbr.rel (0) target = $region29
  $region28: #{encoder_forward.53} parent=0 // pred_region
    _
  $region29: #{encoder_forward.53} parent=0 // pred_fallthru
    _
  %v26 = vld [vmem:[%s0] sm:$0xf]
  %v27 = vld [vmem:[%s0 + $0x4] sm:$0xf]
  %v28 = vld [vmem:[%s0 + $0x8] sm:$0xf]
  %v29 = vld [vmem:[%s0 + $0xc] sm:$0xf]
  %v30 = vld [vmem:[%s0 + $0x10] sm:$0xf]
  %v31 = vld [vmem:[%s0 + $0x14] sm:$0xf]
  %v32 = vld [vmem:[%s0 + $0x18] sm:$0xf]
  %v33 = vld [vmem:[%s0 + $0x1c] sm:$0xf]
  %v34 = vld [vmem:[%s0 + $0x20] sm:$0xf]
  %v35 = vld [vmem:[%s0 + $0x24] sm:$0xf]
  %v36 = vld [vmem:[%s0 + $0x28] sm:$0xf]
  %v37 = vld [vmem:[%s0 + $0x2c] sm:$0xf]
  %v38 = vld [vmem:[%s0 + $0x30] sm:$0xf]
  %v39 = vld [vmem:[%s0 + $0x34] sm:$0xf]
  %v40 = vld [vmem:[%s0 + $0x38] sm:$0xf]
  %v41 = vld [vmem:[%s0 + $0x3c] sm:$0xf]
  %v42 = vld [vmem:[%s0 + $0x40] sm:$0xf]
  %v43 = vld [vmem:[%s0 + $0x44] sm:$0xf]
  %v44 = vld [vmem:[%s0 + $0x48] sm:$0xf]
  %v45 = vld [vmem:[%s0 + $0x4c] sm:$0xf]
  %v46 = vld [vmem:[%s0 + $0x50] sm:$0xf]
  %v47 = vld [vmem:[%s0 + $0x54] sm:$0xf]
  %v48 = vld [vmem:[%s0 + $0x58] sm:$0xf]
  %v49 = vld [vmem:[%s0 + $0x5c] sm:$0xf]
  %v50 = vld [vmem:[%s0 + $0x60] sm:$0xf]
  %v51 = vld [vmem:[%s0 + $0x64] sm:$0xf]
  %v52 = vld [vmem:[%s0 + $0x68] sm:$0xf]
  %v53 = vld [vmem:[%s0 + $0x6c] sm:$0xf]
  %v54 = vld [vmem:[%s0 + $0x70] sm:$0xf]
  %v55 = vld [vmem:[%s0 + $0x74] sm:$0xf]
  %v56 = vld [vmem:[%s0 + $0x78] sm:$0xf]
  %v57 = vld [vmem:[%s0 + $0x7c] sm:$0xf]
  %v58 = vld [vmem:[%s0 + $0x80] sm:$0xf]
  %v59 = vld [vmem:[%s0 + $0x84] sm:$0xf]
  %v60 = vld [vmem:[%s0 + $0x88] sm:$0xf]
  %v61 = vld [vmem:[%s0 + $0x8c] sm:$0xf]
  %v62 = vld [vmem:[%s0 + $0x90] sm:$0xf]
  %v63 = vld [vmem:[%s0 + $0x94] sm:$0xf]
  %v64 = vld [vmem:[%s0 + $0x98] sm:$0xf]
  %v65 = vld [vmem:[%s0 + $0x9c] sm:$0xf]
  %v66 = vld [vmem:[%s0 + $0xa0] sm:$0xf]
  %v67 = vld [vmem:[%s0 + $0xa4] sm:$0xf]
  %v68 = vld [vmem:[%s0 + $0xa8] sm:$0xf]
  %v69 = vld [vmem:[%s0 + $0xac] sm:$0xf]
  %v70 = vld [vmem:[%s0 + $0xb0] sm:$0xf]
  %v71 = vld [vmem:[%s0 + $0xb4] sm:$0xf]
  %v72 = vld [vmem:[%s0 + $0xb8] sm:$0xf]
  %v73 = vld [vmem:[%s0 + $0xbc] sm:$0xf]
  %v74 = vld [vmem:[%s0 + $0xc0] sm:$0xf]
  %v75 = vld [vmem:[%s0 + $0xc4] sm:$0xf]
  %v76 = vld [vmem:[%s0 + $0xc8] sm:$0xf]
  %v77 = vld [vmem:[%s0 + $0xcc] sm:$0xf]
  %v78 = vld [vmem:[%s0 + $0xd0] sm:$0xf]
  %v79 = vld [vmem:[%s0 + $0xd4] sm:$0xf]
  %v80 = vld [vmem:[%s0 + $0xd8] sm:$0xf]
  %v81 = vld [vmem:[%s0 + $0xdc] sm:$0xf]
  %v82 = vld [vmem:[%s0 + $0xe0] sm:$0xf]
  %v83 = vld [vmem:[%s0 + $0xe4] sm:$0xf]
  %v84 = vld [vmem:[%s0 + $0xe8] sm:$0xf]
  %v85 = vld [vmem:[%s0 + $0xec] sm:$0xf]
  %v86 = vld [vmem:[%s0 + $0xf0] sm:$0xf]
  %v87 = vld [vmem:[%s0 + $0xf4] sm:$0xf]
  %v88 = vld [vmem:[%s0 + $0xf8] sm:$0xf]
  %v89 = vld [vmem:[%s0 + $0xfc] sm:$0xf]
  %v90 = vunpack.c.l.bf16 %v26
  %v91 = vunpack.c.l.bf16 %v27
  %v92 = vunpack.c.l.bf16 %v28
  %v93 = vunpack.c.l.bf16 %v29
  %v94 = vunpack.c.l.bf16 %v30
  %v95 = vunpack.c.l.bf16 %v31
  %v96 = vunpack.c.l.bf16 %v32
  %v97 = vunpack.c.l.bf16 %v33
  %v98 = vunpack.c.l.bf16 %v34
  %v99 = vunpack.c.l.bf16 %v35
  %v100 = vunpack.c.l.bf16 %v36
  %v101 = vunpack.c.l.bf16 %v37
  %v102 = vunpack.c.l.bf16 %v38
  %v103 = vunpack.c.l.bf16 %v39
  %v104 = vunpack.c.l.bf16 %v40
  %v105 = vunpack.c.l.bf16 %v41
  %v106 = vunpack.c.l.bf16 %v42
  %v107 = vunpack.c.l.bf16 %v43
  %v108 = vunpack.c.l.bf16 %v44
  %v109 = vunpack.c.l.bf16 %v45
  %v110 = vunpack.c.l.bf16 %v46
  %v111 = vunpack.c.l.bf16 %v47
  %v112 = vunpack.c.l.bf16 %v48
  %v113 = vunpack.c.l.bf16 %v49
  %v114 = vunpack.c.l.bf16 %v50
  %v115 = vunpack.c.l.bf16 %v51
  %v116 = vunpack.c.l.bf16 %v52
  %v117 = vunpack.c.l.bf16 %v53
  %v118 = vunpack.c.l.bf16 %v54
  %v119 = vunpack.c.l.bf16 %v55
  %v120 = vunpack.c.l.bf16 %v56
  %v121 = vunpack.c.l.bf16 %v57
  %v122 = vunpack.c.l.bf16 %v58
  %v123 = vunpack.c.l.bf16 %v59
  %v124 = vunpack.c.l.bf16 %v60
  %v125 = vunpack.c.l.bf16 %v61
  %v126 = vunpack.c.l.bf16 %v62
  %v127 = vunpack.c.l.bf16 %v63
  %v128 = vunpack.c.l.bf16 %v64
  %v129 = vunpack.c.l.bf16 %v65
  %v130 = vunpack.c.l.bf16 %v66
  %v131 = vunpack.c.l.bf16 %v67
  %v132 = vunpack.c.l.bf16 %v68
  %v133 = vunpack.c.l.bf16 %v69
  %v134 = vunpack.c.l.bf16 %v70
  %v135 = vunpack.c.l.bf16 %v71
  %v136 = vunpack.c.l.bf16 %v72
  %v137 = vunpack.c.l.bf16 %v73
  %v138 = vunpack.c.l.bf16 %v74
  %v139 = vunpack.c.l.bf16 %v75
  %v140 = vunpack.c.l.bf16 %v76
  %v141 = vunpack.c.l.bf16 %v77
  %v142 = vunpack.c.l.bf16 %v78
  %v143 = vunpack.c.l.bf16 %v79
  %v144 = vunpack.c.l.bf16 %v80
  %v145 = vunpack.c.l.bf16 %v81
  %v146 = vunpack.c.l.bf16 %v82
  %v147 = vunpack.c.l.bf16 %v83
  %v148 = vunpack.c.l.bf16 %v84
  %v149 = vunpack.c.l.bf16 %v85
  %v150 = vunpack.c.l.bf16 %v86
  %v151 = vunpack.c.l.bf16 %v87
  %v152 = vunpack.c.l.bf16 %v88
  %v153 = vunpack.c.l.bf16 %v89
  %v154 = vld [vmem:[%s1] sm:$0x1]
  %v156 = vperm.slane %v154, 0
  %v158 = vmul.f32 %v90, %v156
  %v159 = vmul.f32 %v91, %v156
  %v160 = vmul.f32 %v92, %v156
  %v161 = vmul.f32 %v93, %v156
  %v162 = vmul.f32 %v94, %v156
  %v163 = vmul.f32 %v95, %v156
  %v164 = vmul.f32 %v96, %v156
  %v165 = vmul.f32 %v97, %v156
  %v166 = vmul.f32 %v98, %v156
  %v167 = vmul.f32 %v99, %v156
  %v168 = vmul.f32 %v100, %v156
  %v169 = vmul.f32 %v101, %v156
  %v170 = vmul.f32 %v102, %v156
  %v171 = vmul.f32 %v103, %v156
  %v172 = vmul.f32 %v104, %v156
  %v173 = vmul.f32 %v105, %v156
  %v174 = vmul.f32 %v106, %v156
  %v175 = vmul.f32 %v107, %v156
  %v176 = vmul.f32 %v108, %v156
  %v177 = vmul.f32 %v109, %v156
  %v178 = vmul.f32 %v110, %v156
  %v179 = vmul.f32 %v111, %v156
  %v180 = vmul.f32 %v112, %v156
  %v181 = vmul.f32 %v113, %v156
  %v182 = vmul.f32 %v114, %v156
  %v183 = vmul.f32 %v115, %v156
  %v184 = vmul.f32 %v116, %v156
  %v185 = vmul.f32 %v117, %v156
  %v186 = vmul.f32 %v118, %v156
  %v187 = vmul.f32 %v119, %v156
  %v188 = vmul.f32 %v120, %v156
  %v189 = vmul.f32 %v121, %v156
  %v190 = vmul.f32 %v122, %v156
  %v191 = vmul.f32 %v123, %v156
  %v192 = vmul.f32 %v124, %v156
  %v193 = vmul.f32 %v125, %v156
  %v194 = vmul.f32 %v126, %v156
  %v195 = vmul.f32 %v127, %v156
  %v196 = vmul.f32 %v128, %v156
  %v197 = vmul.f32 %v129, %v156
  %v198 = vmul.f32 %v130, %v156
  %v199 = vmul.f32 %v131, %v156
  %v200 = vmul.f32 %v132, %v156
  %v201 = vmul.f32 %v133, %v156
  %v202 = vmul.f32 %v134, %v156
  %v203 = vmul.f32 %v135, %v156
  %v204 = vmul.f32 %v136, %v156
  %v205 = vmul.f32 %v137, %v156
  %v206 = vmul.f32 %v138, %v156
  %v207 = vmul.f32 %v139, %v156
  %v208 = vmul.f32 %v140, %v156
  %v209 = vmul.f32 %v141, %v156
  %v210 = vmul.f32 %v142, %v156
  %v211 = vmul.f32 %v143, %v156
  %v212 = vmul.f32 %v144, %v156
  %v213 = vmul.f32 %v145, %v156
  %v214 = vmul.f32 %v146, %v156
  %v215 = vmul.f32 %v147, %v156
  %v216 = vmul.f32 %v148, %v156
  %v217 = vmul.f32 %v149, %v156
  %v218 = vmul.f32 %v150, %v156
  %v219 = vmul.f32 %v151, %v156
  %v220 = vmul.f32 %v152, %v156
  %v221 = vmul.f32 %v153, %v156
  %v222 = vld [vmem:[%s2] sm:$0x1]
  %v224 = vperm.slane %v222, 0
  %v226 = vadd.f32 %v158, %v224
  %v227 = vadd.f32 %v159, %v224
  %v228 = vadd.f32 %v160, %v224
  %v229 = vadd.f32 %v161, %v224
  %v230 = vadd.f32 %v162, %v224
  %v231 = vadd.f32 %v163, %v224
  %v232 = vadd.f32 %v164, %v224
  %v233 = vadd.f32 %v165, %v224
  %v234 = vadd.f32 %v166, %v224
  %v235 = vadd.f32 %v167, %v224
  %v236 = vadd.f32 %v168, %v224
  %v237 = vadd.f32 %v169, %v224
  %v238 = vadd.f32 %v170, %v224
  %v239 = vadd.f32 %v171, %v224
  %v240 = vadd.f32 %v172, %v224
  %v241 = vadd.f32 %v173, %v224
  %v242 = vadd.f32 %v174, %v224
  %v243 = vadd.f32 %v175, %v224
  %v244 = vadd.f32 %v176, %v224
  %v245 = vadd.f32 %v177, %v224
  %v246 = vadd.f32 %v178, %v224
  %v247 = vadd.f32 %v179, %v224
  %v248 = vadd.f32 %v180, %v224
  %v249 = vadd.f32 %v181, %v224
  %v250 = vadd.f32 %v182, %v224
  %v251 = vadd.f32 %v183, %v224
  %v252 = vadd.f32 %v184, %v224
  %v253 = vadd.f32 %v185, %v224
  %v254 = vadd.f32 %v186, %v224
  %v255 = vadd.f32 %v187, %v224
  %v256 = vadd.f32 %v188, %v224
  %v257 = vadd.f32 %v189, %v224
  %v258 = vadd.f32 %v190, %v224
  %v259 = vadd.f32 %v191, %v224
  %v260 = vadd.f32 %v192, %v224
  %v261 = vadd.f32 %v193, %v224
  %v262 = vadd.f32 %v194, %v224
  %v263 = vadd.f32 %v195, %v224
  %v264 = vadd.f32 %v196, %v224
  %v265 = vadd.f32 %v197, %v224
  %v266 = vadd.f32 %v198, %v224
  %v267 = vadd.f32 %v199, %v224
  %v268 = vadd.f32 %v200, %v224
  %v269 = vadd.f32 %v201, %v224
  %v270 = vadd.f32 %v202, %v224
  %v271 = vadd.f32 %v203, %v224
  %v272 = vadd.f32 %v204, %v224
  %v273 = vadd.f32 %v205, %v224
  %v274 = vadd.f32 %v206, %v224
  %v275 = vadd.f32 %v207, %v224
  %v276 = vadd.f32 %v208, %v224
  %v277 = vadd.f32 %v209, %v224
  %v278 = vadd.f32 %v210, %v224
  %v279 = vadd.f32 %v211, %v224
  %v280 = vadd.f32 %v212, %v224
  %v281 = vadd.f32 %v213, %v224
  %v282 = vadd.f32 %v214, %v224
  %v283 = vadd.f32 %v215, %v224
  %v284 = vadd.f32 %v216, %v224
  %v285 = vadd.f32 %v217, %v224
  %v286 = vadd.f32 %v218, %v224
  %v287 = vadd.f32 %v219, %v224
  %v288 = vadd.f32 %v220, %v224
  %v289 = vadd.f32 %v221, %v224
  %vm290 = vcmp.gt.f32.partialorder %v226, 0.0
  %vm291 = vcmp.gt.f32.partialorder %v227, 0.0
  %vm292 = vcmp.gt.f32.partialorder %v228, 0.0
  %vm293 = vcmp.gt.f32.partialorder %v229, 0.0
  %vm294 = vcmp.gt.f32.partialorder %v230, 0.0
  %vm295 = vcmp.gt.f32.partialorder %v231, 0.0
  %vm296 = vcmp.gt.f32.partialorder %v232, 0.0
  %vm297 = vcmp.gt.f32.partialorder %v233, 0.0
  %vm298 = vcmp.gt.f32.partialorder %v234, 0.0
  %vm299 = vcmp.gt.f32.partialorder %v235, 0.0
  %vm300 = vcmp.gt.f32.partialorder %v236, 0.0
  %vm301 = vcmp.gt.f32.partialorder %v237, 0.0
  %vm302 = vcmp.gt.f32.partialorder %v238, 0.0
  %vm303 = vcmp.gt.f32.partialorder %v239, 0.0
  %vm304 = vcmp.gt.f32.partialorder %v240, 0.0
  %vm305 = vcmp.gt.f32.partialorder %v241, 0.0
  %vm306 = vcmp.gt.f32.partialorder %v242, 0.0
  %vm307 = vcmp.gt.f32.partialorder %v243, 0.0
  %vm308 = vcmp.gt.f32.partialorder %v244, 0.0
  %vm309 = vcmp.gt.f32.partialorder %v245, 0.0
  %vm310 = vcmp.gt.f32.partialorder %v246, 0.0
  %vm311 = vcmp.gt.f32.partialorder %v247, 0.0
  %vm312 = vcmp.gt.f32.partialorder %v248, 0.0
  %vm313 = vcmp.gt.f32.partialorder %v249, 0.0
  %vm314 = vcmp.gt.f32.partialorder %v250, 0.0
  %vm315 = vcmp.gt.f32.partialorder %v251, 0.0
  %vm316 = vcmp.gt.f32.partialorder %v252, 0.0
  %vm317 = vcmp.gt.f32.partialorder %v253, 0.0
  %vm318 = vcmp.gt.f32.partialorder %v254, 0.0
  %vm319 = vcmp.gt.f32.partialorder %v255, 0.0
  %vm320 = vcmp.gt.f32.partialorder %v256, 0.0
  %vm321 = vcmp.gt.f32.partialorder %v257, 0.0
  %vm322 = vcmp.gt.f32.partialorder %v258, 0.0
  %vm323 = vcmp.gt.f32.partialorder %v259, 0.0
  %vm324 = vcmp.gt.f32.partialorder %v260, 0.0
  %vm325 = vcmp.gt.f32.partialorder %v261, 0.0
  %vm326 = vcmp.gt.f32.partialorder %v262, 0.0
  %vm327 = vcmp.gt.f32.partialorder %v263, 0.0
  %vm328 = vcmp.gt.f32.partialorder %v264, 0.0
  %vm329 = vcmp.gt.f32.partialorder %v265, 0.0
  %vm330 = vcmp.gt.f32.partialorder %v266, 0.0
  %vm331 = vcmp.gt.f32.partialorder %v267, 0.0
  %vm332 = vcmp.gt.f32.partialorder %v268, 0.0
  %vm333 = vcmp.gt.f32.partialorder %v269, 0.0
  %vm334 = vcmp.gt.f32.partialorder %v270, 0.0
  %vm335 = vcmp.gt.f32.partialorder %v271, 0.0
  %vm336 = vcmp.gt.f32.partialorder %v272, 0.0
  %vm337 = vcmp.gt.f32.partialorder %v273, 0.0
  %vm338 = vcmp.gt.f32.partialorder %v274, 0.0
  %vm339 = vcmp.gt.f32.partialorder %v275, 0.0
  %vm340 = vcmp.gt.f32.partialorder %v276, 0.0
  %vm341 = vcmp.gt.f32.partialorder %v277, 0.0
  %vm342 = vcmp.gt.f32.partialorder %v278, 0.0
  %vm343 = vcmp.gt.f32.partialorder %v279, 0.0
  %vm344 = vcmp.gt.f32.partialorder %v280, 0.0
  %vm345 = vcmp.gt.f32.partialorder %v281, 0.0
  %vm346 = vcmp.gt.f32.partialorder %v282, 0.0
  %vm347 = vcmp.gt.f32.partialorder %v283, 0.0
  %vm348 = vcmp.gt.f32.partialorder %v284, 0.0
  %vm349 = vcmp.gt.f32.partialorder %v285, 0.0
  %vm350 = vcmp.gt.f32.partialorder %v286, 0.0
  %vm351 = vcmp.gt.f32.partialorder %v287, 0.0
  %vm352 = vcmp.gt.f32.partialorder %v288, 0.0
  %vm353 = vcmp.gt.f32.partialorder %v289, 0.0
  %v354 = vmul.f32 %v226, 0.01
  %v355 = vmul.f32 %v227, 0.01
  %v356 = vmul.f32 %v228, 0.01
  %v357 = vmul.f32 %v229, 0.01
  %v358 = vmul.f32 %v230, 0.01
  %v359 = vmul.f32 %v231, 0.01
  %v360 = vmul.f32 %v232, 0.01
  %v361 = vmul.f32 %v233, 0.01
  %v362 = vmul.f32 %v234, 0.01
  %v363 = vmul.f32 %v235, 0.01
  %v364 = vmul.f32 %v236, 0.01
  %v365 = vmul.f32 %v237, 0.01
  %v366 = vmul.f32 %v238, 0.01
  %v367 = vmul.f32 %v239, 0.01
  %v368 = vmul.f32 %v240, 0.01
  %v369 = vmul.f32 %v241, 0.01
  %v370 = vmul.f32 %v242, 0.01
  %v371 = vmul.f32 %v243, 0.01
  %v372 = vmul.f32 %v244, 0.01
  %v373 = vmul.f32 %v245, 0.01
  %v374 = vmul.f32 %v246, 0.01
  %v375 = vmul.f32 %v247, 0.01
  %v376 = vmul.f32 %v248, 0.01
  %v377 = vmul.f32 %v249, 0.01
  %v378 = vmul.f32 %v250, 0.01
  %v379 = vmul.f32 %v251, 0.01
  %v380 = vmul.f32 %v252, 0.01
  %v381 = vmul.f32 %v253, 0.01
  %v382 = vmul.f32 %v254, 0.01
  %v383 = vmul.f32 %v255, 0.01
  %v384 = vmul.f32 %v256, 0.01
  %v385 = vmul.f32 %v257, 0.01
  %v386 = vmul.f32 %v258, 0.01
  %v387 = vmul.f32 %v259, 0.01
  %v388 = vmul.f32 %v260, 0.01
  %v389 = vmul.f32 %v261, 0.01
  %v390 = vmul.f32 %v262, 0.01
  %v391 = vmul.f32 %v263, 0.01
  %v392 = vmul.f32 %v264, 0.01
  %v393 = vmul.f32 %v265, 0.01
  %v394 = vmul.f32 %v266, 0.01
  %v395 = vmul.f32 %v267, 0.01
  %v396 = vmul.f32 %v268, 0.01
  %v397 = vmul.f32 %v269, 0.01
  %v398 = vmul.f32 %v270, 0.01
  %v399 = vmul.f32 %v271, 0.01
  %v400 = vmul.f32 %v272, 0.01
  %v401 = vmul.f32 %v273, 0.01
  %v402 = vmul.f32 %v274, 0.01
  %v403 = vmul.f32 %v275, 0.01
  %v404 = vmul.f32 %v276, 0.01
  %v405 = vmul.f32 %v277, 0.01
  %v406 = vmul.f32 %v278, 0.01
  %v407 = vmul.f32 %v279, 0.01
  %v408 = vmul.f32 %v280, 0.01
  %v409 = vmul.f32 %v281, 0.01
  %v410 = vmul.f32 %v282, 0.01
  %v411 = vmul.f32 %v283, 0.01
  %v412 = vmul.f32 %v284, 0.01
  %v413 = vmul.f32 %v285, 0.01
  %v414 = vmul.f32 %v286, 0.01
  %v415 = vmul.f32 %v287, 0.01
  %v416 = vmul.f32 %v288, 0.01
  %v417 = vmul.f32 %v289, 0.01
  %v418 = vsel %vm290, %v226, %v354
  %v419 = vsel %vm291, %v227, %v355
  %v420 = vsel %vm292, %v228, %v356
  %v421 = vsel %vm293, %v229, %v357
  %v422 = vsel %vm294, %v230, %v358
  %v423 = vsel %vm295, %v231, %v359
  %v424 = vsel %vm296, %v232, %v360
  %v425 = vsel %vm297, %v233, %v361
  %v426 = vsel %vm298, %v234, %v362
  %v427 = vsel %vm299, %v235, %v363
  %v428 = vsel %vm300, %v236, %v364
  %v429 = vsel %vm301, %v237, %v365
  %v430 = vsel %vm302, %v238, %v366
  %v431 = vsel %vm303, %v239, %v367
  %v432 = vsel %vm304, %v240, %v368
  %v433 = vsel %vm305, %v241, %v369
  %v434 = vsel %vm306, %v242, %v370
  %v435 = vsel %vm307, %v243, %v371
  %v436 = vsel %vm308, %v244, %v372
  %v437 = vsel %vm309, %v245, %v373
  %v438 = vsel %vm310, %v246, %v374
  %v439 = vsel %vm311, %v247, %v375
  %v440 = vsel %vm312, %v248, %v376
  %v441 = vsel %vm313, %v249, %v377
  %v442 = vsel %vm314, %v250, %v378
  %v443 = vsel %vm315, %v251, %v379
  %v444 = vsel %vm316, %v252, %v380
  %v445 = vsel %vm317, %v253, %v381
  %v446 = vsel %vm318, %v254, %v382
  %v447 = vsel %vm319, %v255, %v383
  %v448 = vsel %vm320, %v256, %v384
  %v449 = vsel %vm321, %v257, %v385
  %v450 = vsel %vm322, %v258, %v386
  %v451 = vsel %vm323, %v259, %v387
  %v452 = vsel %vm324, %v260, %v388
  %v453 = vsel %vm325, %v261, %v389
  %v454 = vsel %vm326, %v262, %v390
  %v455 = vsel %vm327, %v263, %v391
  %v456 = vsel %vm328, %v264, %v392
  %v457 = vsel %vm329, %v265, %v393
  %v458 = vsel %vm330, %v266, %v394
  %v459 = vsel %vm331, %v267, %v395
  %v460 = vsel %vm332, %v268, %v396
  %v461 = vsel %vm333, %v269, %v397
  %v462 = vsel %vm334, %v270, %v398
  %v463 = vsel %vm335, %v271, %v399
  %v464 = vsel %vm336, %v272, %v400
  %v465 = vsel %vm337, %v273, %v401
  %v466 = vsel %vm338, %v274, %v402
  %v467 = vsel %vm339, %v275, %v403
  %v468 = vsel %vm340, %v276, %v404
  %v469 = vsel %vm341, %v277, %v405
  %v470 = vsel %vm342, %v278, %v406
  %v471 = vsel %vm343, %v279, %v407
  %v472 = vsel %vm344, %v280, %v408
  %v473 = vsel %vm345, %v281, %v409
  %v474 = vsel %vm346, %v282, %v410
  %v475 = vsel %vm347, %v283, %v411
  %v476 = vsel %vm348, %v284, %v412
  %v477 = vsel %vm349, %v285, %v413
  %v478 = vsel %vm350, %v286, %v414
  %v479 = vsel %vm351, %v287, %v415
  %v480 = vsel %vm352, %v288, %v416
  %v481 = vsel %vm353, %v289, %v417
  %v482 = vpack.c.bf16 %v419, %v418
  %v483 = vpack.c.bf16 %v421, %v420
  %v484 = vpack.c.bf16 %v423, %v422
  %v485 = vpack.c.bf16 %v425, %v424
  %v486 = vpack.c.bf16 %v427, %v426
  %v487 = vpack.c.bf16 %v429, %v428
  %v488 = vpack.c.bf16 %v431, %v430
  %v489 = vpack.c.bf16 %v433, %v432
  %v490 = vpack.c.bf16 %v435, %v434
  %v491 = vpack.c.bf16 %v437, %v436
  %v492 = vpack.c.bf16 %v439, %v438
  %v493 = vpack.c.bf16 %v441, %v440
  %v494 = vpack.c.bf16 %v443, %v442
  %v495 = vpack.c.bf16 %v445, %v444
  %v496 = vpack.c.bf16 %v447, %v446
  %v497 = vpack.c.bf16 %v449, %v448
  %v498 = vpack.c.bf16 %v451, %v450
  %v499 = vpack.c.bf16 %v453, %v452
  %v500 = vpack.c.bf16 %v455, %v454
  %v501 = vpack.c.bf16 %v457, %v456
  %v502 = vpack.c.bf16 %v459, %v458
  %v503 = vpack.c.bf16 %v461, %v460
  %v504 = vpack.c.bf16 %v463, %v462
  %v505 = vpack.c.bf16 %v465, %v464
  %v506 = vpack.c.bf16 %v467, %v466
  %v507 = vpack.c.bf16 %v469, %v468
  %v508 = vpack.c.bf16 %v471, %v470
  %v509 = vpack.c.bf16 %v473, %v472
  %v510 = vpack.c.bf16 %v475, %v474
  %v511 = vpack.c.bf16 %v477, %v476
  %v512 = vpack.c.bf16 %v479, %v478
  %v513 = vpack.c.bf16 %v481, %v480
  %v514 = vld [vmem:[%s3] sm:$0xf]
  %v515 = vld [vmem:[%s3 + $0x4] sm:$0xf]
  %v516 = vld [vmem:[%s3 + $0x8] sm:$0xf]
  %v517 = vld [vmem:[%s3 + $0xc] sm:$0xf]
  %v518 = vld [vmem:[%s3 + $0x10] sm:$0xf]
  %v519 = vld [vmem:[%s3 + $0x14] sm:$0xf]
  %v520 = vld [vmem:[%s3 + $0x18] sm:$0xf]
  %v521 = vld [vmem:[%s3 + $0x1c] sm:$0xf]
  %v522 = vld [vmem:[%s3 + $0x20] sm:$0xf]
  %v523 = vld [vmem:[%s3 + $0x24] sm:$0xf]
  %v524 = vld [vmem:[%s3 + $0x28] sm:$0xf]
  %v525 = vld [vmem:[%s3 + $0x2c] sm:$0xf]
  %v526 = vld [vmem:[%s3 + $0x30] sm:$0xf]
  %v527 = vld [vmem:[%s3 + $0x34] sm:$0xf]
  %v528 = vld [vmem:[%s3 + $0x38] sm:$0xf]
  %v529 = vld [vmem:[%s3 + $0x3c] sm:$0xf]
  %v530 = vld [vmem:[%s4] sm:$0x1]
  %v532 = vperm.slane %v530, 0
  %v550 = vunpack.c.l.b16 %v514
  %v551 = vunpack.c.l.b16 %v515
  %v552 = vunpack.c.l.b16 %v516
  %v553 = vunpack.c.l.b16 %v517
  %v554 = vunpack.c.l.b16 %v518
  %v555 = vunpack.c.l.b16 %v519
  %v556 = vunpack.c.l.b16 %v520
  %v557 = vunpack.c.l.b16 %v521
  %v558 = vunpack.c.l.b16 %v522
  %v559 = vunpack.c.l.b16 %v523
  %v560 = vunpack.c.l.b16 %v524
  %v561 = vunpack.c.l.b16 %v525
  %v562 = vunpack.c.l.b16 %v526
  %v563 = vunpack.c.l.b16 %v527
  %v564 = vunpack.c.l.b16 %v528
  %v565 = vunpack.c.l.b16 %v529
  %v566 = vpack.c.b16 %v551, %v550
  %v567 = vpack.c.b16 %v553, %v552
  %v568 = vpack.c.b16 %v555, %v554
  %v569 = vpack.c.b16 %v557, %v556
  %v570 = vpack.c.b16 %v559, %v558
  %v571 = vpack.c.b16 %v561, %v560
  %v572 = vpack.c.b16 %v563, %v562
  %v573 = vpack.c.b16 %v565, %v564
  %582 = vmatpush.bf16.msra.mxu0 %v573
  %583 = vmatpush.bf16.msra.mxu0 %v572
  %584 = vmatpush.bf16.msra.mxu0 %v571
  %585 = vmatpush.bf16.msra.mxu0 %v570
  %586 = vmatpush.bf16.msra.mxu0 %v569
  %587 = vmatpush.bf16.msra.mxu0 %v568
  %588 = vmatpush.bf16.msra.mxu0 %v567
  %589 = vmatpush.bf16.msra.mxu0 %v566
  %590 = vmatmul.bf16.gmra.mxu0 %v482
  %v591 = vpop.f32.mrf.mxu0
  %v592 = vadd.f32 %v532, %v591
  %v593 = vpop.f32.mrf.mxu0
  %v594 = vadd.f32 %v532, %v593
  %595 = vmatmul.bf16.gmra.mxu0 %v483
  %v596 = vpop.f32.mrf.mxu0
  %v597 = vadd.f32 %v532, %v596
  %v598 = vpop.f32.mrf.mxu0
  %v599 = vadd.f32 %v532, %v598
  %600 = vmatmul.bf16.gmra.mxu0 %v484
  %v601 = vpop.f32.mrf.mxu0
  %v602 = vadd.f32 %v532, %v601
  %v603 = vpop.f32.mrf.mxu0
  %v604 = vadd.f32 %v532, %v603
  %605 = vmatmul.bf16.gmra.mxu0 %v485
  %v606 = vpop.f32.mrf.mxu0
  %v607 = vadd.f32 %v532, %v606
  %v608 = vpop.f32.mrf.mxu0
  %v609 = vadd.f32 %v532, %v608
  %610 = vmatmul.bf16.gmra.mxu0 %v486
  %v611 = vpop.f32.mrf.mxu0
  %v612 = vadd.f32 %v532, %v611
  %v613 = vpop.f32.mrf.mxu0
  %v614 = vadd.f32 %v532, %v613
  %615 = vmatmul.bf16.gmra.mxu0 %v487
  %v616 = vpop.f32.mrf.mxu0
  %v617 = vadd.f32 %v532, %v616
  %v618 = vpop.f32.mrf.mxu0
  %v619 = vadd.f32 %v532, %v618
  %620 = vmatmul.bf16.gmra.mxu0 %v488
  %v621 = vpop.f32.mrf.mxu0
  %v622 = vadd.f32 %v532, %v621
  %v623 = vpop.f32.mrf.mxu0
  %v624 = vadd.f32 %v532, %v623
  %625 = vmatmul.bf16.gmra.mxu0 %v489
  %v626 = vpop.f32.mrf.mxu0
  %v627 = vadd.f32 %v532, %v626
  %v628 = vpop.f32.mrf.mxu0
  %v629 = vadd.f32 %v532, %v628
  %630 = vmatmul.bf16.gmra.mxu0 %v490
  %v631 = vpop.f32.mrf.mxu0
  %v632 = vadd.f32 %v532, %v631
  %v633 = vpop.f32.mrf.mxu0
  %v634 = vadd.f32 %v532, %v633
  %635 = vmatmul.bf16.gmra.mxu0 %v491
  %v636 = vpop.f32.mrf.mxu0
  %v637 = vadd.f32 %v532, %v636
  %v638 = vpop.f32.mrf.mxu0
  %v639 = vadd.f32 %v532, %v638
  %640 = vmatmul.bf16.gmra.mxu0 %v492
  %v641 = vpop.f32.mrf.mxu0
  %v642 = vadd.f32 %v532, %v641
  %v643 = vpop.f32.mrf.mxu0
  %v644 = vadd.f32 %v532, %v643
  %645 = vmatmul.bf16.gmra.mxu0 %v493
  %v646 = vpop.f32.mrf.mxu0
  %v647 = vadd.f32 %v532, %v646
  %v648 = vpop.f32.mrf.mxu0
  %v649 = vadd.f32 %v532, %v648
  %650 = vmatmul.bf16.gmra.mxu0 %v494
  %v651 = vpop.f32.mrf.mxu0
  %v652 = vadd.f32 %v532, %v651
  %v653 = vpop.f32.mrf.mxu0
  %v654 = vadd.f32 %v532, %v653
  %655 = vmatmul.bf16.gmra.mxu0 %v495
  %v656 = vpop.f32.mrf.mxu0
  %v657 = vadd.f32 %v532, %v656
  %v658 = vpop.f32.mrf.mxu0
  %v659 = vadd.f32 %v532, %v658
  %660 = vmatmul.bf16.gmra.mxu0 %v496
  %v661 = vpop.f32.mrf.mxu0
  %v662 = vadd.f32 %v532, %v661
  %v663 = vpop.f32.mrf.mxu0
  %v664 = vadd.f32 %v532, %v663
  %665 = vmatmul.bf16.gmra.mxu0 %v497
  %v666 = vpop.f32.mrf.mxu0
  %v667 = vadd.f32 %v532, %v666
  %v668 = vpop.f32.mrf.mxu0
  %v669 = vadd.f32 %v532, %v668
  %670 = vmatmul.bf16.gmra.mxu0 %v498
  %v671 = vpop.f32.mrf.mxu0
  %v672 = vadd.f32 %v532, %v671
  %v673 = vpop.f32.mrf.mxu0
  %v674 = vadd.f32 %v532, %v673
  %675 = vmatmul.bf16.gmra.mxu0 %v499
  %v676 = vpop.f32.mrf.mxu0
  %v677 = vadd.f32 %v532, %v676
  %v678 = vpop.f32.mrf.mxu0
  %v679 = vadd.f32 %v532, %v678
  %680 = vmatmul.bf16.gmra.mxu0 %v500
  %v681 = vpop.f32.mrf.mxu0
  %v682 = vadd.f32 %v532, %v681
  %v683 = vpop.f32.mrf.mxu0
  %v684 = vadd.f32 %v532, %v683
  %685 = vmatmul.bf16.gmra.mxu0 %v501
  %v686 = vpop.f32.mrf.mxu0
  %v687 = vadd.f32 %v532, %v686
  %v688 = vpop.f32.mrf.mxu0
  %v689 = vadd.f32 %v532, %v688
  %690 = vmatmul.bf16.gmra.mxu0 %v502
  %v691 = vpop.f32.mrf.mxu0
  %v692 = vadd.f32 %v532, %v691
  %v693 = vpop.f32.mrf.mxu0
  %v694 = vadd.f32 %v532, %v693
  %695 = vmatmul.bf16.gmra.mxu0 %v503
  %v696 = vpop.f32.mrf.mxu0
  %v697 = vadd.f32 %v532, %v696
  %v698 = vpop.f32.mrf.mxu0
  %v699 = vadd.f32 %v532, %v698
  %700 = vmatmul.bf16.gmra.mxu0 %v504
  %v701 = vpop.f32.mrf.mxu0
  %v702 = vadd.f32 %v532, %v701
  %v703 = vpop.f32.mrf.mxu0
  %v704 = vadd.f32 %v532, %v703
  %705 = vmatmul.bf16.gmra.mxu0 %v505
  %v706 = vpop.f32.mrf.mxu0
  %v707 = vadd.f32 %v532, %v706
  %v708 = vpop.f32.mrf.mxu0
  %v709 = vadd.f32 %v532, %v708
  %710 = vmatmul.bf16.gmra.mxu0 %v506
  %v711 = vpop.f32.mrf.mxu0
  %v712 = vadd.f32 %v532, %v711
  %v713 = vpop.f32.mrf.mxu0
  %v714 = vadd.f32 %v532, %v713
  %715 = vmatmul.bf16.gmra.mxu0 %v507
  %v716 = vpop.f32.mrf.mxu0
  %v717 = vadd.f32 %v532, %v716
  %v718 = vpop.f32.mrf.mxu0
  %v719 = vadd.f32 %v532, %v718
  %720 = vmatmul.bf16.gmra.mxu0 %v508
  %v721 = vpop.f32.mrf.mxu0
  %v722 = vadd.f32 %v532, %v721
  %v723 = vpop.f32.mrf.mxu0
  %v724 = vadd.f32 %v532, %v723
  %725 = vmatmul.bf16.gmra.mxu0 %v509
  %v726 = vpop.f32.mrf.mxu0
  %v727 = vadd.f32 %v532, %v726
  %v728 = vpop.f32.mrf.mxu0
  %v729 = vadd.f32 %v532, %v728
  %730 = vmatmul.bf16.gmra.mxu0 %v510
  %v731 = vpop.f32.mrf.mxu0
  %v732 = vadd.f32 %v532, %v731
  %v733 = vpop.f32.mrf.mxu0
  %v734 = vadd.f32 %v532, %v733
  %735 = vmatmul.bf16.gmra.mxu0 %v511
  %v736 = vpop.f32.mrf.mxu0
  %v737 = vadd.f32 %v532, %v736
  %v738 = vpop.f32.mrf.mxu0
  %v739 = vadd.f32 %v532, %v738
  %740 = vmatmul.bf16.gmra.mxu0 %v512
  %v741 = vpop.f32.mrf.mxu0
  %v742 = vadd.f32 %v532, %v741
  %v743 = vpop.f32.mrf.mxu0
  %v744 = vadd.f32 %v532, %v743
  %745 = vmatmul.bf16.gmra.mxu0 %v513
  %v746 = vpop.f32.mrf.mxu0
  %v747 = vadd.f32 %v532, %v746
  %v748 = vpop.f32.mrf.mxu0
  %v749 = vadd.f32 %v532, %v748
  %750 = vdwg.mxu0
  %v751 = vpack.c.bf16 %v594, %v592
  %v752 = vpack.c.bf16 %v599, %v597
  %v753 = vpack.c.bf16 %v604, %v602
  %v754 = vpack.c.bf16 %v609, %v607
  %v755 = vpack.c.bf16 %v614, %v612
  %v756 = vpack.c.bf16 %v619, %v617
  %v757 = vpack.c.bf16 %v624, %v622
  %v758 = vpack.c.bf16 %v629, %v627
  %v759 = vpack.c.bf16 %v634, %v632
  %v760 = vpack.c.bf16 %v639, %v637
  %v761 = vpack.c.bf16 %v644, %v642
  %v762 = vpack.c.bf16 %v649, %v647
  %v763 = vpack.c.bf16 %v654, %v652
  %v764 = vpack.c.bf16 %v659, %v657
  %v765 = vpack.c.bf16 %v664, %v662
  %v766 = vpack.c.bf16 %v669, %v667
  %v767 = vpack.c.bf16 %v674, %v672
  %v768 = vpack.c.bf16 %v679, %v677
  %v769 = vpack.c.bf16 %v684, %v682
  %v770 = vpack.c.bf16 %v689, %v687
  %v771 = vpack.c.bf16 %v694, %v692
  %v772 = vpack.c.bf16 %v699, %v697
  %v773 = vpack.c.bf16 %v704, %v702
  %v774 = vpack.c.bf16 %v709, %v707
  %v775 = vpack.c.bf16 %v714, %v712
  %v776 = vpack.c.bf16 %v719, %v717
  %v777 = vpack.c.bf16 %v724, %v722
  %v778 = vpack.c.bf16 %v729, %v727
  %v779 = vpack.c.bf16 %v734, %v732
  %v780 = vpack.c.bf16 %v739, %v737
  %v781 = vpack.c.bf16 %v744, %v742
  %v782 = vpack.c.bf16 %v749, %v747
  %v783 = vld [vmem:[%s5] sm:$0xf]
  %v784 = vld [vmem:[%s5 + $0x4] sm:$0xf]
  %v785 = vld [vmem:[%s5 + $0x8] sm:$0xf]
  %v786 = vld [vmem:[%s5 + $0xc] sm:$0xf]
  %v787 = vld [vmem:[%s5 + $0x10] sm:$0xf]
  %v788 = vld [vmem:[%s5 + $0x14] sm:$0xf]
  %v789 = vld [vmem:[%s5 + $0x18] sm:$0xf]
  %v790 = vld [vmem:[%s5 + $0x1c] sm:$0xf]
  %v791 = vld [vmem:[%s5 + $0x20] sm:$0xf]
  %v792 = vld [vmem:[%s5 + $0x24] sm:$0xf]
  %v793 = vld [vmem:[%s5 + $0x28] sm:$0xf]
  %v794 = vld [vmem:[%s5 + $0x2c] sm:$0xf]
  %v795 = vld [vmem:[%s5 + $0x30] sm:$0xf]
  %v796 = vld [vmem:[%s5 + $0x34] sm:$0xf]
  %v797 = vld [vmem:[%s5 + $0x38] sm:$0xf]
  %v798 = vld [vmem:[%s5 + $0x3c] sm:$0xf]
  %v799 = vld [vmem:[%s6] sm:$0x1]
  %v801 = vperm.slane %v799, 0
  %v819 = vunpack.c.l.b16 %v783
  %v820 = vunpack.c.l.b16 %v784
  %v821 = vunpack.c.l.b16 %v785
  %v822 = vunpack.c.l.b16 %v786
  %v823 = vunpack.c.l.b16 %v787
  %v824 = vunpack.c.l.b16 %v788
  %v825 = vunpack.c.l.b16 %v789
  %v826 = vunpack.c.l.b16 %v790
  %v827 = vunpack.c.l.b16 %v791
  %v828 = vunpack.c.l.b16 %v792
  %v829 = vunpack.c.l.b16 %v793
  %v830 = vunpack.c.l.b16 %v794
  %v831 = vunpack.c.l.b16 %v795
  %v832 = vunpack.c.l.b16 %v796
  %v833 = vunpack.c.l.b16 %v797
  %v834 = vunpack.c.l.b16 %v798
  %v835 = vpack.c.b16 %v820, %v819
  %v836 = vpack.c.b16 %v822, %v821
  %v837 = vpack.c.b16 %v824, %v823
  %v838 = vpack.c.b16 %v826, %v825
  %v839 = vpack.c.b16 %v828, %v827
  %v840 = vpack.c.b16 %v830, %v829
  %v841 = vpack.c.b16 %v832, %v831
  %v842 = vpack.c.b16 %v834, %v833
  %851 = vmatpush.bf16.msra.mxu0 %v842
  %852 = vmatpush.bf16.msra.mxu0 %v841
  %853 = vmatpush.bf16.msra.mxu0 %v840
  %854 = vmatpush.bf16.msra.mxu0 %v839
  %855 = vmatpush.bf16.msra.mxu0 %v838
  %856 = vmatpush.bf16.msra.mxu0 %v837
  %857 = vmatpush.bf16.msra.mxu0 %v836
  %858 = vmatpush.bf16.msra.mxu0 %v835
  %859 = vmatmul.bf16.gmra.mxu0 %v751
  %v860 = vpop.f32.mrf.mxu0
  %v861 = vadd.f32 %v801, %v860
  %v862 = vpop.f32.mrf.mxu0
  %v863 = vadd.f32 %v801, %v862
  %864 = vmatmul.bf16.gmra.mxu0 %v752
  %v865 = vpop.f32.mrf.mxu0
  %v866 = vadd.f32 %v801, %v865
  %v867 = vpop.f32.mrf.mxu0
  %v868 = vadd.f32 %v801, %v867
  %869 = vmatmul.bf16.gmra.mxu0 %v753
  %v870 = vpop.f32.mrf.mxu0
  %v871 = vadd.f32 %v801, %v870
  %v872 = vpop.f32.mrf.mxu0
  %v873 = vadd.f32 %v801, %v872
  %874 = vmatmul.bf16.gmra.mxu0 %v754
  %v875 = vpop.f32.mrf.mxu0
  %v876 = vadd.f32 %v801, %v875
  %v877 = vpop.f32.mrf.mxu0
  %v878 = vadd.f32 %v801, %v877
  %879 = vmatmul.bf16.gmra.mxu0 %v755
  %v880 = vpop.f32.mrf.mxu0
  %v881 = vadd.f32 %v801, %v880
  %v882 = vpop.f32.mrf.mxu0
  %v883 = vadd.f32 %v801, %v882
  %884 = vmatmul.bf16.gmra.mxu0 %v756
  %v885 = vpop.f32.mrf.mxu0
  %v886 = vadd.f32 %v801, %v885
  %v887 = vpop.f32.mrf.mxu0
  %v888 = vadd.f32 %v801, %v887
  %889 = vmatmul.bf16.gmra.mxu0 %v757
  %v890 = vpop.f32.mrf.mxu0
  %v891 = vadd.f32 %v801, %v890
  %v892 = vpop.f32.mrf.mxu0
  %v893 = vadd.f32 %v801, %v892
  %894 = vmatmul.bf16.gmra.mxu0 %v758
  %v895 = vpop.f32.mrf.mxu0
  %v896 = vadd.f32 %v801, %v895
  %v897 = vpop.f32.mrf.mxu0
  %v898 = vadd.f32 %v801, %v897
  %899 = vmatmul.bf16.gmra.mxu0 %v759
  %v900 = vpop.f32.mrf.mxu0
  %v901 = vadd.f32 %v801, %v900
  %v902 = vpop.f32.mrf.mxu0
  %v903 = vadd.f32 %v801, %v902
  %904 = vmatmul.bf16.gmra.mxu0 %v760
  %v905 = vpop.f32.mrf.mxu0
  %v906 = vadd.f32 %v801, %v905
  %v907 = vpop.f32.mrf.mxu0
  %v908 = vadd.f32 %v801, %v907
  %909 = vmatmul.bf16.gmra.mxu0 %v761
  %v910 = vpop.f32.mrf.mxu0
  %v911 = vadd.f32 %v801, %v910
  %v912 = vpop.f32.mrf.mxu0
  %v913 = vadd.f32 %v801, %v912
  %914 = vmatmul.bf16.gmra.mxu0 %v762
  %v915 = vpop.f32.mrf.mxu0
  %v916 = vadd.f32 %v801, %v915
  %v917 = vpop.f32.mrf.mxu0
  %v918 = vadd.f32 %v801, %v917
  %919 = vmatmul.bf16.gmra.mxu0 %v763
  %v920 = vpop.f32.mrf.mxu0
  %v921 = vadd.f32 %v801, %v920
  %v922 = vpop.f32.mrf.mxu0
  %v923 = vadd.f32 %v801, %v922
  %924 = vmatmul.bf16.gmra.mxu0 %v764
  %v925 = vpop.f32.mrf.mxu0
  %v926 = vadd.f32 %v801, %v925
  %v927 = vpop.f32.mrf.mxu0
  %v928 = vadd.f32 %v801, %v927
  %929 = vmatmul.bf16.gmra.mxu0 %v765
  %v930 = vpop.f32.mrf.mxu0
  %v931 = vadd.f32 %v801, %v930
  %v932 = vpop.f32.mrf.mxu0
  %v933 = vadd.f32 %v801, %v932
  %934 = vmatmul.bf16.gmra.mxu0 %v766
  %v935 = vpop.f32.mrf.mxu0
  %v936 = vadd.f32 %v801, %v935
  %v937 = vpop.f32.mrf.mxu0
  %v938 = vadd.f32 %v801, %v937
  %939 = vmatmul.bf16.gmra.mxu0 %v767
  %v940 = vpop.f32.mrf.mxu0
  %v941 = vadd.f32 %v801, %v940
  %v942 = vpop.f32.mrf.mxu0
  %v943 = vadd.f32 %v801, %v942
  %944 = vmatmul.bf16.gmra.mxu0 %v768
  %v945 = vpop.f32.mrf.mxu0
  %v946 = vadd.f32 %v801, %v945
  %v947 = vpop.f32.mrf.mxu0
  %v948 = vadd.f32 %v801, %v947
  %949 = vmatmul.bf16.gmra.mxu0 %v769
  %v950 = vpop.f32.mrf.mxu0
  %v951 = vadd.f32 %v801, %v950
  %v952 = vpop.f32.mrf.mxu0
  %v953 = vadd.f32 %v801, %v952
  %954 = vmatmul.bf16.gmra.mxu0 %v770
  %v955 = vpop.f32.mrf.mxu0
  %v956 = vadd.f32 %v801, %v955
  %v957 = vpop.f32.mrf.mxu0
  %v958 = vadd.f32 %v801, %v957
  %959 = vmatmul.bf16.gmra.mxu0 %v771
  %v960 = vpop.f32.mrf.mxu0
  %v961 = vadd.f32 %v801, %v960
  %v962 = vpop.f32.mrf.mxu0
  %v963 = vadd.f32 %v801, %v962
  %964 = vmatmul.bf16.gmra.mxu0 %v772
  %v965 = vpop.f32.mrf.mxu0
  %v966 = vadd.f32 %v801, %v965
  %v967 = vpop.f32.mrf.mxu0
  %v968 = vadd.f32 %v801, %v967
  %969 = vmatmul.bf16.gmra.mxu0 %v773
  %v970 = vpop.f32.mrf.mxu0
  %v971 = vadd.f32 %v801, %v970
  %v972 = vpop.f32.mrf.mxu0
  %v973 = vadd.f32 %v801, %v972
  %974 = vmatmul.bf16.gmra.mxu0 %v774
  %v975 = vpop.f32.mrf.mxu0
  %v976 = vadd.f32 %v801, %v975
  %v977 = vpop.f32.mrf.mxu0
  %v978 = vadd.f32 %v801, %v977
  %979 = vmatmul.bf16.gmra.mxu0 %v775
  %v980 = vpop.f32.mrf.mxu0
  %v981 = vadd.f32 %v801, %v980
  %v982 = vpop.f32.mrf.mxu0
  %v983 = vadd.f32 %v801, %v982
  %984 = vmatmul.bf16.gmra.mxu0 %v776
  %v985 = vpop.f32.mrf.mxu0
  %v986 = vadd.f32 %v801, %v985
  %v987 = vpop.f32.mrf.mxu0
  %v988 = vadd.f32 %v801, %v987
  %989 = vmatmul.bf16.gmra.mxu0 %v777
  %v990 = vpop.f32.mrf.mxu0
  %v991 = vadd.f32 %v801, %v990
  %v992 = vpop.f32.mrf.mxu0
  %v993 = vadd.f32 %v801, %v992
  %994 = vmatmul.bf16.gmra.mxu0 %v778
  %v995 = vpop.f32.mrf.mxu0
  %v996 = vadd.f32 %v801, %v995
  %v997 = vpop.f32.mrf.mxu0
  %v998 = vadd.f32 %v801, %v997
  %999 = vmatmul.bf16.gmra.mxu0 %v779
  %v1000 = vpop.f32.mrf.mxu0
  %v1001 = vadd.f32 %v801, %v1000
  %v1002 = vpop.f32.mrf.mxu0
  %v1003 = vadd.f32 %v801, %v1002
  %1004 = vmatmul.bf16.gmra.mxu0 %v780
  %v1005 = vpop.f32.mrf.mxu0
  %v1006 = vadd.f32 %v801, %v1005
  %v1007 = vpop.f32.mrf.mxu0
  %v1008 = vadd.f32 %v801, %v1007
  %1009 = vmatmul.bf16.gmra.mxu0 %v781
  %v1010 = vpop.f32.mrf.mxu0
  %v1011 = vadd.f32 %v801, %v1010
  %v1012 = vpop.f32.mrf.mxu0
  %v1013 = vadd.f32 %v801, %v1012
  %1014 = vmatmul.bf16.gmra.mxu0 %v782
  %v1015 = vpop.f32.mrf.mxu0
  %v1016 = vadd.f32 %v801, %v1015
  %v1017 = vpop.f32.mrf.mxu0
  %v1018 = vadd.f32 %v801, %v1017
  %1019 = vdwg.mxu0
  %1020 = vst [vmem:[%s7] sm:$0xff] %v861
  %1021 = vst [vmem:[%s7 + $0x8] sm:$0xff] %v863
  %1022 = vst [vmem:[%s7 + $0x10] sm:$0xff] %v866
  %1023 = vst [vmem:[%s7 + $0x18] sm:$0xff] %v868
  %1024 = vst [vmem:[%s7 + $0x20] sm:$0xff] %v871
  %1025 = vst [vmem:[%s7 + $0x28] sm:$0xff] %v873
  %1026 = vst [vmem:[%s7 + $0x30] sm:$0xff] %v876
  %1027 = vst [vmem:[%s7 + $0x38] sm:$0xff] %v878
  %1028 = vst [vmem:[%s7 + $0x40] sm:$0xff] %v881
  %1029 = vst [vmem:[%s7 + $0x48] sm:$0xff] %v883
  %1030 = vst [vmem:[%s7 + $0x50] sm:$0xff] %v886
  %1031 = vst [vmem:[%s7 + $0x58] sm:$0xff] %v888
  %1032 = vst [vmem:[%s7 + $0x60] sm:$0xff] %v891
  %1033 = vst [vmem:[%s7 + $0x68] sm:$0xff] %v893
  %1034 = vst [vmem:[%s7 + $0x70] sm:$0xff] %v896
  %1035 = vst [vmem:[%s7 + $0x78] sm:$0xff] %v898
  %1036 = vst [vmem:[%s7 + $0x80] sm:$0xff] %v901
  %1037 = vst [vmem:[%s7 + $0x88] sm:$0xff] %v903
  %1038 = vst [vmem:[%s7 + $0x90] sm:$0xff] %v906
  %1039 = vst [vmem:[%s7 + $0x98] sm:$0xff] %v908
  %1040 = vst [vmem:[%s7 + $0xa0] sm:$0xff] %v911
  %1041 = vst [vmem:[%s7 + $0xa8] sm:$0xff] %v913
  %1042 = vst [vmem:[%s7 + $0xb0] sm:$0xff] %v916
  %1043 = vst [vmem:[%s7 + $0xb8] sm:$0xff] %v918
  %1044 = vst [vmem:[%s7 + $0xc0] sm:$0xff] %v921
  %1045 = vst [vmem:[%s7 + $0xc8] sm:$0xff] %v923
  %1046 = vst [vmem:[%s7 + $0xd0] sm:$0xff] %v926
  %1047 = vst [vmem:[%s7 + $0xd8] sm:$0xff] %v928
  %1048 = vst [vmem:[%s7 + $0xe0] sm:$0xff] %v931
  %1049 = vst [vmem:[%s7 + $0xe8] sm:$0xff] %v933
  %1050 = vst [vmem:[%s7 + $0xf0] sm:$0xff] %v936
  %1051 = vst [vmem:[%s7 + $0xf8] sm:$0xff] %v938
  %1052 = vst [vmem:[%s7 + $0x100] sm:$0xff] %v941
  %1053 = vst [vmem:[%s7 + $0x108] sm:$0xff] %v943
  %1054 = vst [vmem:[%s7 + $0x110] sm:$0xff] %v946
  %1055 = vst [vmem:[%s7 + $0x118] sm:$0xff] %v948
  %1056 = vst [vmem:[%s7 + $0x120] sm:$0xff] %v951
  %1057 = vst [vmem:[%s7 + $0x128] sm:$0xff] %v953
  %1058 = vst [vmem:[%s7 + $0x130] sm:$0xff] %v956
  %1059 = vst [vmem:[%s7 + $0x138] sm:$0xff] %v958
  %1060 = vst [vmem:[%s7 + $0x140] sm:$0xff] %v961
  %1061 = vst [vmem:[%s7 + $0x148] sm:$0xff] %v963
  %1062 = vst [vmem:[%s7 + $0x150] sm:$0xff] %v966
  %1063 = vst [vmem:[%s7 + $0x158] sm:$0xff] %v968
  %1064 = vst [vmem:[%s7 + $0x160] sm:$0xff] %v971
  %1065 = vst [vmem:[%s7 + $0x168] sm:$0xff] %v973
  %1066 = vst [vmem:[%s7 + $0x170] sm:$0xff] %v976
  %1067 = vst [vmem:[%s7 + $0x178] sm:$0xff] %v978
  %1068 = vst [vmem:[%s7 + $0x180] sm:$0xff] %v981
  %1069 = vst [vmem:[%s7 + $0x188] sm:$0xff] %v983
  %1070 = vst [vmem:[%s7 + $0x190] sm:$0xff] %v986
  %1071 = vst [vmem:[%s7 + $0x198] sm:$0xff] %v988
  %1072 = vst [vmem:[%s7 + $0x1a0] sm:$0xff] %v991
  %1073 = vst [vmem:[%s7 + $0x1a8] sm:$0xff] %v993
  %1074 = vst [vmem:[%s7 + $0x1b0] sm:$0xff] %v996
  %1075 = vst [vmem:[%s7 + $0x1b8] sm:$0xff] %v998
  %1076 = vst [vmem:[%s7 + $0x1c0] sm:$0xff] %v1001
  %1077 = vst [vmem:[%s7 + $0x1c8] sm:$0xff] %v1003
  %1078 = vst [vmem:[%s7 + $0x1d0] sm:$0xff] %v1006
  %1079 = vst [vmem:[%s7 + $0x1d8] sm:$0xff] %v1008
  %1080 = vst [vmem:[%s7 + $0x1e0] sm:$0xff] %v1011
  %1081 = vst [vmem:[%s7 + $0x1e8] sm:$0xff] %v1013
  %1082 = vst [vmem:[%s7 + $0x1f0] sm:$0xff] %v1016
  %1083 = vst [vmem:[%s7 + $0x1f8] sm:$0xff] %v1018
  // Predicated region
  $region30: #{encoder_forward.53} parent=0 // pred_check
    _
  $region31: #{encoder_forward.53} parent=0 // pred_check_branch
    %1085 = sbr.rel (0) target = $region33
  $region32: #{encoder_forward.53} parent=0 // pred_region
    _
  $region33: #{encoder_forward.53} parent=0 // pred_fallthru
    _
  // Predicated region
  $region34: #{encoder_forward.53} parent=0 // pred_check
    _
  $region35: #{encoder_forward.53} parent=0 // pred_check_branch
    %1087 = sbr.rel (0) target = $region37
  $region36: #{encoder_forward.53} parent=0 // pred_region
    _
  $region37: #{encoder_forward.53} parent=0 // pred_fallthru
    _

</llo_original>
